<compile_context>
chip_gen: v6e
topology: v6e:2x2x1
jax: 0.10.0
libtpu: 0.0.40
codegen_flags: <defaults>
</compile_context>

<pallas_src>
import functools

import jax
import jax.numpy as jnp
from jax.experimental import pallas as pl
from jax.experimental.pallas import tpu as pltpu

N_EMBD = 384      # from the PyTorch module
BLOCK_SIZE = 64   # causal-mask extent (tril buffer) in the PyTorch module
DROPOUT_P = 0.2   # unused in eval-mode forward


def _mha_kernel(x_ref, wqkv_ref, wo_ref, bo_ref, o_ref, qkv_ref, heads_ref,
                *, num_heads, head_size, bt, seq_len):
    nh, hs, T = num_heads, head_size, seq_len
    C = x_ref.shape[-1]
    M = bt * T
    scale = float(hs) ** -0.5

    # ---- fused QKV projection: one (M, C) @ (C, 3*nh*hs) bf16 MXU pass ----
    x2d = x_ref[...].reshape(M, C).astype(jnp.bfloat16)
    qkv_ref[...] = jnp.dot(
        x2d, wqkv_ref[...],
        preferred_element_type=jnp.float32).astype(jnp.bfloat16)

    # Additive causal mask, built once per grid step (hoisted out of the loop).
    row = jax.lax.broadcasted_iota(jnp.int32, (T, T), 0)
    col = jax.lax.broadcasted_iota(jnp.int32, (T, T), 1)
    mask_bias = jnp.where(row >= col, 0.0, -1e30).astype(jnp.float32)

    # ---- per (batch-in-tile, head) attention: scores / softmax / @V ----
    for b in range(bt):                     # static unroll (bt, nh small)
        r0 = b * T
        for h in range(nh):
            q = qkv_ref[r0:r0 + T, h * hs:(h + 1) * hs]
            k = qkv_ref[r0:r0 + T, (nh + h) * hs:(nh + h + 1) * hs]
            v = qkv_ref[r0:r0 + T, (2 * nh + h) * hs:(2 * nh + h + 1) * hs]

            # scores = q @ k^T (contract last dims directly, no transpose)
            s = jax.lax.dot_general(q, k, (((1,), (1,)), ((), ())),
                                    preferred_element_type=jnp.float32)
            s = s * scale + mask_bias              # masked_fill(tril==0, -inf)
            s = s - s.max(axis=-1, keepdims=True)  # numerically stable softmax
            p = jnp.exp(s)
            p = p * pl.reciprocal(p.sum(axis=-1, keepdims=True), approx=True)
            # TODO(synk): training-mode dropout on the attention probabilities
            # (p=0.2) not implemented; this is the eval-mode forward.

            heads_ref[r0:r0 + T, h * hs:(h + 1) * hs] = jnp.dot(
                p.astype(jnp.bfloat16), v,
                preferred_element_type=jnp.float32).astype(jnp.bfloat16)

    # ---- fused output projection + bias: one (M, nh*hs) @ (nh*hs, C) pass ----
    out = jnp.dot(heads_ref[...], wo_ref[...],
                  preferred_element_type=jnp.float32)
    out = out + bo_ref[...]
    # TODO(synk): training-mode output dropout (p=0.2) not implemented.
    o_ref[...] = out.reshape(bt, T, C).astype(o_ref.dtype)   # single store


def _choose_bt(B, T, target_rows=256):
    """Largest batch tile Bt dividing B with >=2 grid steps (keeps both v7x
    TensorCores busy), growing until Bt*T reaches the MXU row target."""
    best = 1
    for bt in range(1, B + 1):
        if B % bt != 0:
            continue
        if (B // bt) < 2 and B >= 2:
            continue                       # never collapse to a single step
        best = bt
        if bt * T >= target_rows:
            break
    return best


def pack_params(wq, wk, wv, wo, bo):
    """Pre-pack weights once (would live in HBM as bf16 in production).

    wq, wk, wv : (nh, C, hs) per-head projection weights (stored (in, out))
    wo : (nh, hs, C) output projection, rows grouped per head
    bo : (C,) output projection bias
    """
    nh, C, hs = wq.shape
    wq2 = jnp.transpose(wq, (1, 0, 2)).reshape(C, nh * hs)
    wk2 = jnp.transpose(wk, (1, 0, 2)).reshape(C, nh * hs)
    wv2 = jnp.transpose(wv, (1, 0, 2)).reshape(C, nh * hs)
    wqkv = jnp.concatenate([wq2, wk2, wv2], axis=1).astype(jnp.bfloat16)
    wo2 = wo.reshape(nh * hs, C).astype(jnp.bfloat16)    # contiguous reshape
    bo2 = bo.reshape(1, C).astype(jnp.float32)
    return wqkv, wo2, bo2


def multi_head_attention(x, wqkv, wo, bo, num_heads):
    """Causal multi-head self-attention (eval mode).

    x    : (B, T, C) activations, T <= block_size
    wqkv : (C, 3*nh*hs) packed bf16 Q|K|V weights (per-head column groups)
    wo   : (nh*hs, C) bf16 output projection (per-head row groups)
    bo   : (1, C) f32 output projection bias
    """
    B, T, C = x.shape
    nh = num_heads
    hs = wqkv.shape[1] // (3 * nh)
    bt = _choose_bt(B, T)
    grid = (B // bt,)

    kernel = functools.partial(_mha_kernel, num_heads=nh, head_size=hs,
                               bt=bt, seq_len=T)
    return pl.pallas_call(
        kernel,
        out_shape=jax.ShapeDtypeStruct((B, T, C), x.dtype),
        grid=grid,
        in_specs=[
            pl.BlockSpec((bt, T, C), lambda i: (i, 0, 0)),      # x batch tile
            pl.BlockSpec((C, 3 * nh * hs), lambda i: (0, 0)),   # packed Wqkv
            pl.BlockSpec((nh * hs, C), lambda i: (0, 0)),       # Wproj
            pl.BlockSpec((1, C), lambda i: (0, 0)),             # proj bias
        ],
        out_specs=pl.BlockSpec((bt, T, C), lambda i: (i, 0, 0)),
        scratch_shapes=[
            pltpu.VMEM((bt * T, 3 * nh * hs), jnp.bfloat16),    # qkv tile
            pltpu.VMEM((bt * T, nh * hs), jnp.bfloat16),        # head outputs
        ],
        compiler_params=pltpu.CompilerParams(
            dimension_semantics=("parallel",)),   # batch tiles across TCs (v7x)
    )(x, wqkv, wo, bo)


def init_params(key, n_embd, num_heads, head_size, dtype=jnp.float32):
    """Deterministic init with torch.nn.Linear-like uniform bounds."""
    kq, kk, kv, kw, kb = jax.random.split(key, 5)
    lim_in = 1.0 / (n_embd ** 0.5)
    lim_pr = 1.0 / ((num_heads * head_size) ** 0.5)
    wq = jax.random.uniform(kq, (num_heads, n_embd, head_size), dtype, -lim_in, lim_in)
    wk = jax.random.uniform(kk, (num_heads, n_embd, head_size), dtype, -lim_in, lim_in)
    wv = jax.random.uniform(kv, (num_heads, n_embd, head_size), dtype, -lim_in, lim_in)
    wo = jax.random.uniform(kw, (num_heads, head_size, n_embd), dtype, -lim_pr, lim_pr)
    bo = jax.random.uniform(kb, (n_embd,), dtype, -lim_pr, lim_pr)
    return wq, wk, wv, wo, bo


def ref_mha(x, wq, wk, wv, wo, bo):
    """Pure-JAX f32 reference of the same math (torch: concat heads -> Linear)."""
    B, T, C = x.shape
    nh, _, hs = wq.shape
    tril = jnp.tril(jnp.ones((T, T), dtype=bool))
    heads = []
    for h in range(nh):
        q = x @ wq[h]
        k = x @ wk[h]
        v = x @ wv[h]
        wei = (q @ jnp.swapaxes(k, -1, -2)) * (hs ** -0.5)
        wei = jnp.where(tril, wei, -jnp.inf)
        wei = jax.nn.softmax(wei, axis=-1)
        heads.append(wei @ v)
    cat = jnp.concatenate(heads, axis=-1)            # (B, T, nh*hs)
    w_proj = wo.reshape(nh * hs, C)                  # rows grouped per head
    return cat @ w_proj + bo


if __name__ == "__main__":
    B, T = 4, BLOCK_SIZE               # B=4 -> Bt=2 (M=128 rows), 2 grid steps
    num_heads = 6
    head_size = N_EMBD // num_heads    # 64

    key = jax.random.PRNGKey(0)
    kx, kp = jax.random.split(key)
    x = jax.random.normal(kx, (B, T, N_EMBD), dtype=jnp.float32)
    wq, wk, wv, wo, bo = init_params(kp, N_EMBD, num_heads, head_size)
    wqkv, wo2, bo2 = pack_params(wq, wk, wv, wo, bo)

    y = multi_head_attention(x, wqkv, wo2, bo2, num_heads)
    jax.block_until_ready(y)

    ref = ref_mha(x, wq, wk, wv, wo, bo)
    # bf16 MXU inputs (f32 accumulation) -> relaxed tolerance vs the f32 ref.
    assert jnp.allclose(y, ref, atol=2e-2, rtol=2e-2), \
        f"max abs err {float(jnp.max(jnp.abs(y - ref)))}"

    print("KERNEL_OK")
</pallas_src>

<mosaic_0001>
module attributes {stable_mosaic.version = 11 : i64} {
  func.func @_mha_kernel(%arg0: i32, %arg1: memref<2x64x384xf32, #tpu.memory_space<vmem>>, %arg2: memref<384x1152xbf16, #tpu.memory_space<vmem>>, %arg3: memref<384x384xbf16, #tpu.memory_space<vmem>>, %arg4: memref<1x384xf32, #tpu.memory_space<vmem>>, %arg5: memref<2x64x384xf32, #tpu.memory_space<vmem>>, %arg6: memref<128x1152xbf16, #tpu.memory_space<vmem>>, %arg7: memref<128x384xbf16, #tpu.memory_space<vmem>>) attributes {dimension_semantics = [#tpu.dimension_semantics<parallel>], iteration_bounds = array<i64: 2>, scalar_prefetch = 0 : i64, scratch_operands = 2 : i64, tpu.core_type = #tpu.core_type<tc>, window_params = [{transform_indices = @transform_0, window_bounds = array<i64: 2, 64, 384>}, {pipeline_mode = #tpu.pipeline_mode<synchronous>, transform_indices = @transform_1, window_bounds = array<i64: 384, 1152>}, {pipeline_mode = #tpu.pipeline_mode<synchronous>, transform_indices = @transform_2, window_bounds = array<i64: 384, 384>}, {pipeline_mode = #tpu.pipeline_mode<synchronous>, transform_indices = @transform_3, window_bounds = array<i64: 1, 384>}, {transform_indices = @transform_4, window_bounds = array<i64: 2, 64, 384>}]} {
    %c0 = arith.constant 0 : index
    %c0_0 = arith.constant 0 : index
    %c0_1 = arith.constant 0 : index
    %0 = vector.load %arg1[%c0, %c0_0, %c0_1] : memref<2x64x384xf32, #tpu.memory_space<vmem>>, vector<2x64x384xf32>
    %1 = vector.shape_cast %0 : vector<2x64x384xf32> to vector<128x384xf32>
    %2 = arith.truncf %1 : vector<128x384xf32> to vector<128x384xbf16>
    %c0_2 = arith.constant 0 : index
    %c0_3 = arith.constant 0 : index
    %3 = vector.load %arg2[%c0_2, %c0_3] : memref<384x1152xbf16, #tpu.memory_space<vmem>>, vector<384x1152xbf16>
    %cst = arith.constant dense<0.000000e+00> : vector<128x1152xf32>
    %4 = tpu.matmul %2, %3, %cst {dimension_numbers = #tpu.dot_dimension_numbers<[1], [0], [0], [1], [0, 0, 1, 1], [], []>} : vector<128x384xbf16>, vector<384x1152xbf16>, vector<128x1152xf32> -> vector<128x1152xf32>
    %5 = arith.truncf %4 : vector<128x1152xf32> to vector<128x1152xbf16>
    %c0_4 = arith.constant 0 : index
    %c0_5 = arith.constant 0 : index
    %6 = vector.load %arg6[%c0_4, %c0_5] : memref<128x1152xbf16, #tpu.memory_space<vmem>>, vector<128x1152xbf16>
    tpu.vector_store %arg6[%c0_4, %c0_5], %5 {strides = array<i32>} : memref<128x1152xbf16, #tpu.memory_space<vmem>>, vector<128x1152xbf16>,
    %7 = tpu.iota {dimensions = array<i32: 0>} : vector<64x64xi32>
    %8 = tpu.iota {dimensions = array<i32: 1>} : vector<64x64xi32>
    %9 = arith.cmpi sge, %7, %8 : vector<64x64xi32>
    %cst_6 = arith.constant 0.000000e+00 : f32
    %cst_7 = arith.constant -1.000000e+30 : f32
    %10 = vector.broadcast %cst_6 : f32 to vector<64x64xf32>
    %11 = vector.broadcast %cst_7 : f32 to vector<64x64xf32>
    %12 = arith.select %9, %10, %11 : vector<64x64xi1>, vector<64x64xf32>
    %c0_8 = arith.constant 0 : index
    %c0_9 = arith.constant 0 : index
    %13 = vector.load %arg6[%c0_8, %c0_9] : memref<128x1152xbf16, #tpu.memory_space<vmem>>, vector<64x64xbf16>
    %c0_10 = arith.constant 0 : index
    %c384 = arith.constant 384 : index
    %14 = vector.load %arg6[%c0_10, %c384] : memref<128x1152xbf16, #tpu.memory_space<vmem>>, vector<64x64xbf16>
    %c0_11 = arith.constant 0 : index
    %c768 = arith.constant 768 : index
    %15 = vector.load %arg6[%c0_11, %c768] : memref<128x1152xbf16, #tpu.memory_space<vmem>>, vector<64x64xbf16>
    %cst_12 = arith.constant dense<0.000000e+00> : vector<64x64xf32>
    %16 = tpu.matmul %13, %14, %cst_12 {dimension_numbers = #tpu.dot_dimension_numbers<[1], [1], [0], [0], [0, 0, 1, 0], [], []>} : vector<64x64xbf16>, vector<64x64xbf16>, vector<64x64xf32> -> vector<64x64xf32>
    %cst_13 = arith.constant 1.250000e-01 : f32
    %17 = vector.broadcast %cst_13 : f32 to vector<64x64xf32>
    %18 = arith.mulf %16, %17 : vector<64x64xf32>
    %19 = arith.addf %18, %12 : vector<64x64xf32>
    %cst_14 = arith.constant dense<0xFF800000> : vector<64xf32>
    %20 = vector.multi_reduction <maximumf>, %19, %cst_14 [1] : vector<64x64xf32> to vector<64xf32>
    %21 = vector.shape_cast %20 : vector<64xf32> to vector<64x1xf32>
    %22 = vector.broadcast %21 : vector<64x1xf32> to vector<64x64xf32>
    %23 = arith.subf %19, %22 : vector<64x64xf32>
    %24 = math.exp %23 : vector<64x64xf32>
    %cst_15 = arith.constant dense<0.000000e+00> : vector<64xf32>
    %25 = vector.multi_reduction <add>, %24, %cst_15 [1] : vector<64x64xf32> to vector<64xf32>
    %26 = vector.shape_cast %25 : vector<64xf32> to vector<64x1xf32>
    %27 = tpu.reciprocal %26 {approx = true} : vector<64x1xf32> -> vector<64x1xf32>
    %28 = vector.broadcast %27 : vector<64x1xf32> to vector<64x64xf32>
    %29 = arith.mulf %24, %28 : vector<64x64xf32>
    %30 = arith.truncf %29 : vector<64x64xf32> to vector<64x64xbf16>
    %cst_16 = arith.constant dense<0.000000e+00> : vector<64x64xf32>
    %31 = tpu.matmul %30, %15, %cst_16 {dimension_numbers = #tpu.dot_dimension_numbers<[1], [0], [0], [1], [0, 0, 1, 1], [], []>} : vector<64x64xbf16>, vector<64x64xbf16>, vector<64x64xf32> -> vector<64x64xf32>
    %32 = arith.truncf %31 : vector<64x64xf32> to vector<64x64xbf16>
    %c0_17 = arith.constant 0 : index
    %c0_18 = arith.constant 0 : index
    %33 = vector.load %arg7[%c0_17, %c0_18] : memref<128x384xbf16, #tpu.memory_space<vmem>>, vector<64x64xbf16>
    tpu.vector_store %arg7[%c0_17, %c0_18], %32 {strides = array<i32>} : memref<128x384xbf16, #tpu.memory_space<vmem>>, vector<64x64xbf16>,
    %c0_19 = arith.constant 0 : index
    %c64 = arith.constant 64 : index
    %34 = vector.load %arg6[%c0_19, %c64] : memref<128x1152xbf16, #tpu.memory_space<vmem>>, vector<64x64xbf16>
    %c0_20 = arith.constant 0 : index
    %c448 = arith.constant 448 : index
    %35 = vector.load %arg6[%c0_20, %c448] : memref<128x1152xbf16, #tpu.memory_space<vmem>>, vector<64x64xbf16>
    %c0_21 = arith.constant 0 : index
    %c832 = arith.constant 832 : index
    %36 = vector.load %arg6[%c0_21, %c832] : memref<128x1152xbf16, #tpu.memory_space<vmem>>, vector<64x64xbf16>
    %cst_22 = arith.constant dense<0.000000e+00> : vector<64x64xf32>
    %37 = tpu.matmul %34, %35, %cst_22 {dimension_numbers = #tpu.dot_dimension_numbers<[1], [1], [0], [0], [0, 0, 1, 0], [], []>} : vector<64x64xbf16>, vector<64x64xbf16>, vector<64x64xf32> -> vector<64x64xf32>
    %cst_23 = arith.constant 1.250000e-01 : f32
    %38 = vector.broadcast %cst_23 : f32 to vector<64x64xf32>
    %39 = arith.mulf %37, %38 : vector<64x64xf32>
    %40 = arith.addf %39, %12 : vector<64x64xf32>
    %cst_24 = arith.constant dense<0xFF800000> : vector<64xf32>
    %41 = vector.multi_reduction <maximumf>, %40, %cst_24 [1] : vector<64x64xf32> to vector<64xf32>
    %42 = vector.shape_cast %41 : vector<64xf32> to vector<64x1xf32>
    %43 = vector.broadcast %42 : vector<64x1xf32> to vector<64x64xf32>
    %44 = arith.subf %40, %43 : vector<64x64xf32>
    %45 = math.exp %44 : vector<64x64xf32>
    %cst_25 = arith.constant dense<0.000000e+00> : vector<64xf32>
    %46 = vector.multi_reduction <add>, %45, %cst_25 [1] : vector<64x64xf32> to vector<64xf32>
    %47 = vector.shape_cast %46 : vector<64xf32> to vector<64x1xf32>
    %48 = tpu.reciprocal %47 {approx = true} : vector<64x1xf32> -> vector<64x1xf32>
    %49 = vector.broadcast %48 : vector<64x1xf32> to vector<64x64xf32>
    %50 = arith.mulf %45, %49 : vector<64x64xf32>
    %51 = arith.truncf %50 : vector<64x64xf32> to vector<64x64xbf16>
    %cst_26 = arith.constant dense<0.000000e+00> : vector<64x64xf32>
    %52 = tpu.matmul %51, %36, %cst_26 {dimension_numbers = #tpu.dot_dimension_numbers<[1], [0], [0], [1], [0, 0, 1, 1], [], []>} : vector<64x64xbf16>, vector<64x64xbf16>, vector<64x64xf32> -> vector<64x64xf32>
    %53 = arith.truncf %52 : vector<64x64xf32> to vector<64x64xbf16>
    %c0_27 = arith.constant 0 : index
    %c64_28 = arith.constant 64 : index
    %54 = vector.load %arg7[%c0_27, %c64_28] : memref<128x384xbf16, #tpu.memory_space<vmem>>, vector<64x64xbf16>
    tpu.vector_store %arg7[%c0_27, %c64_28], %53 {strides = array<i32>} : memref<128x384xbf16, #tpu.memory_space<vmem>>, vector<64x64xbf16>,
    %c0_29 = arith.constant 0 : index
    %c128 = arith.constant 128 : index
    %55 = vector.load %arg6[%c0_29, %c128] : memref<128x1152xbf16, #tpu.memory_space<vmem>>, vector<64x64xbf16>
    %c0_30 = arith.constant 0 : index
    %c512 = arith.constant 512 : index
    %56 = vector.load %arg6[%c0_30, %c512] : memref<128x1152xbf16, #tpu.memory_space<vmem>>, vector<64x64xbf16>
    %c0_31 = arith.constant 0 : index
    %c896 = arith.constant 896 : index
    %57 = vector.load %arg6[%c0_31, %c896] : memref<128x1152xbf16, #tpu.memory_space<vmem>>, vector<64x64xbf16>
    %cst_32 = arith.constant dense<0.000000e+00> : vector<64x64xf32>
    %58 = tpu.matmul %55, %56, %cst_32 {dimension_numbers = #tpu.dot_dimension_numbers<[1], [1], [0], [0], [0, 0, 1, 0], [], []>} : vector<64x64xbf16>, vector<64x64xbf16>, vector<64x64xf32> -> vector<64x64xf32>
    %cst_33 = arith.constant 1.250000e-01 : f32
    %59 = vector.broadcast %cst_33 : f32 to vector<64x64xf32>
    %60 = arith.mulf %58, %59 : vector<64x64xf32>
    %61 = arith.addf %60, %12 : vector<64x64xf32>
    %cst_34 = arith.constant dense<0xFF800000> : vector<64xf32>
    %62 = vector.multi_reduction <maximumf>, %61, %cst_34 [1] : vector<64x64xf32> to vector<64xf32>
    %63 = vector.shape_cast %62 : vector<64xf32> to vector<64x1xf32>
    %64 = vector.broadcast %63 : vector<64x1xf32> to vector<64x64xf32>
    %65 = arith.subf %61, %64 : vector<64x64xf32>
    %66 = math.exp %65 : vector<64x64xf32>
    %cst_35 = arith.constant dense<0.000000e+00> : vector<64xf32>
    %67 = vector.multi_reduction <add>, %66, %cst_35 [1] : vector<64x64xf32> to vector<64xf32>
    %68 = vector.shape_cast %67 : vector<64xf32> to vector<64x1xf32>
    %69 = tpu.reciprocal %68 {approx = true} : vector<64x1xf32> -> vector<64x1xf32>
    %70 = vector.broadcast %69 : vector<64x1xf32> to vector<64x64xf32>
    %71 = arith.mulf %66, %70 : vector<64x64xf32>
    %72 = arith.truncf %71 : vector<64x64xf32> to vector<64x64xbf16>
    %cst_36 = arith.constant dense<0.000000e+00> : vector<64x64xf32>
    %73 = tpu.matmul %72, %57, %cst_36 {dimension_numbers = #tpu.dot_dimension_numbers<[1], [0], [0], [1], [0, 0, 1, 1], [], []>} : vector<64x64xbf16>, vector<64x64xbf16>, vector<64x64xf32> -> vector<64x64xf32>
    %74 = arith.truncf %73 : vector<64x64xf32> to vector<64x64xbf16>
    %c0_37 = arith.constant 0 : index
    %c128_38 = arith.constant 128 : index
    %75 = vector.load %arg7[%c0_37, %c128_38] : memref<128x384xbf16, #tpu.memory_space<vmem>>, vector<64x64xbf16>
    tpu.vector_store %arg7[%c0_37, %c128_38], %74 {strides = array<i32>} : memref<128x384xbf16, #tpu.memory_space<vmem>>, vector<64x64xbf16>,
    %c0_39 = arith.constant 0 : index
    %c192 = arith.constant 192 : index
    %76 = vector.load %arg6[%c0_39, %c192] : memref<128x1152xbf16, #tpu.memory_space<vmem>>, vector<64x64xbf16>
    %c0_40 = arith.constant 0 : index
    %c576 = arith.constant 576 : index
    %77 = vector.load %arg6[%c0_40, %c576] : memref<128x1152xbf16, #tpu.memory_space<vmem>>, vector<64x64xbf16>
    %c0_41 = arith.constant 0 : index
    %c960 = arith.constant 960 : index
    %78 = vector.load %arg6[%c0_41, %c960] : memref<128x1152xbf16, #tpu.memory_space<vmem>>, vector<64x64xbf16>
    %cst_42 = arith.constant dense<0.000000e+00> : vector<64x64xf32>
    %79 = tpu.matmul %76, %77, %cst_42 {dimension_numbers = #tpu.dot_dimension_numbers<[1], [1], [0], [0], [0, 0, 1, 0], [], []>} : vector<64x64xbf16>, vector<64x64xbf16>, vector<64x64xf32> -> vector<64x64xf32>
    %cst_43 = arith.constant 1.250000e-01 : f32
    %80 = vector.broadcast %cst_43 : f32 to vector<64x64xf32>
    %81 = arith.mulf %79, %80 : vector<64x64xf32>
    %82 = arith.addf %81, %12 : vector<64x64xf32>
    %cst_44 = arith.constant dense<0xFF800000> : vector<64xf32>
    %83 = vector.multi_reduction <maximumf>, %82, %cst_44 [1] : vector<64x64xf32> to vector<64xf32>
    %84 = vector.shape_cast %83 : vector<64xf32> to vector<64x1xf32>
    %85 = vector.broadcast %84 : vector<64x1xf32> to vector<64x64xf32>
    %86 = arith.subf %82, %85 : vector<64x64xf32>
    %87 = math.exp %86 : vector<64x64xf32>
    %cst_45 = arith.constant dense<0.000000e+00> : vector<64xf32>
    %88 = vector.multi_reduction <add>, %87, %cst_45 [1] : vector<64x64xf32> to vector<64xf32>
    %89 = vector.shape_cast %88 : vector<64xf32> to vector<64x1xf32>
    %90 = tpu.reciprocal %89 {approx = true} : vector<64x1xf32> -> vector<64x1xf32>
    %91 = vector.broadcast %90 : vector<64x1xf32> to vector<64x64xf32>
    %92 = arith.mulf %87, %91 : vector<64x64xf32>
    %93 = arith.truncf %92 : vector<64x64xf32> to vector<64x64xbf16>
    %cst_46 = arith.constant dense<0.000000e+00> : vector<64x64xf32>
    %94 = tpu.matmul %93, %78, %cst_46 {dimension_numbers = #tpu.dot_dimension_numbers<[1], [0], [0], [1], [0, 0, 1, 1], [], []>} : vector<64x64xbf16>, vector<64x64xbf16>, vector<64x64xf32> -> vector<64x64xf32>
    %95 = arith.truncf %94 : vector<64x64xf32> to vector<64x64xbf16>
    %c0_47 = arith.constant 0 : index
    %c192_48 = arith.constant 192 : index
    %96 = vector.load %arg7[%c0_47, %c192_48] : memref<128x384xbf16, #tpu.memory_space<vmem>>, vector<64x64xbf16>
    tpu.vector_store %arg7[%c0_47, %c192_48], %95 {strides = array<i32>} : memref<128x384xbf16, #tpu.memory_space<vmem>>, vector<64x64xbf16>,
    %c0_49 = arith.constant 0 : index
    %c256 = arith.constant 256 : index
    %97 = vector.load %arg6[%c0_49, %c256] : memref<128x1152xbf16, #tpu.memory_space<vmem>>, vector<64x64xbf16>
    %c0_50 = arith.constant 0 : index
    %c640 = arith.constant 640 : index
    %98 = vector.load %arg6[%c0_50, %c640] : memref<128x1152xbf16, #tpu.memory_space<vmem>>, vector<64x64xbf16>
    %c0_51 = arith.constant 0 : index
    %c1024 = arith.constant 1024 : index
    %99 = vector.load %arg6[%c0_51, %c1024] : memref<128x1152xbf16, #tpu.memory_space<vmem>>, vector<64x64xbf16>
    %cst_52 = arith.constant dense<0.000000e+00> : vector<64x64xf32>
    %100 = tpu.matmul %97, %98, %cst_52 {dimension_numbers = #tpu.dot_dimension_numbers<[1], [1], [0], [0], [0, 0, 1, 0], [], []>} : vector<64x64xbf16>, vector<64x64xbf16>, vector<64x64xf32> -> vector<64x64xf32>
    %cst_53 = arith.constant 1.250000e-01 : f32
    %101 = vector.broadcast %cst_53 : f32 to vector<64x64xf32>
    %102 = arith.mulf %100, %101 : vector<64x64xf32>
    %103 = arith.addf %102, %12 : vector<64x64xf32>
    %cst_54 = arith.constant dense<0xFF800000> : vector<64xf32>
    %104 = vector.multi_reduction <maximumf>, %103, %cst_54 [1] : vector<64x64xf32> to vector<64xf32>
    %105 = vector.shape_cast %104 : vector<64xf32> to vector<64x1xf32>
    %106 = vector.broadcast %105 : vector<64x1xf32> to vector<64x64xf32>
    %107 = arith.subf %103, %106 : vector<64x64xf32>
    %108 = math.exp %107 : vector<64x64xf32>
    %cst_55 = arith.constant dense<0.000000e+00> : vector<64xf32>
    %109 = vector.multi_reduction <add>, %108, %cst_55 [1] : vector<64x64xf32> to vector<64xf32>
    %110 = vector.shape_cast %109 : vector<64xf32> to vector<64x1xf32>
    %111 = tpu.reciprocal %110 {approx = true} : vector<64x1xf32> -> vector<64x1xf32>
    %112 = vector.broadcast %111 : vector<64x1xf32> to vector<64x64xf32>
    %113 = arith.mulf %108, %112 : vector<64x64xf32>
    %114 = arith.truncf %113 : vector<64x64xf32> to vector<64x64xbf16>
    %cst_56 = arith.constant dense<0.000000e+00> : vector<64x64xf32>
    %115 = tpu.matmul %114, %99, %cst_56 {dimension_numbers = #tpu.dot_dimension_numbers<[1], [0], [0], [1], [0, 0, 1, 1], [], []>} : vector<64x64xbf16>, vector<64x64xbf16>, vector<64x64xf32> -> vector<64x64xf32>
    %116 = arith.truncf %115 : vector<64x64xf32> to vector<64x64xbf16>
    %c0_57 = arith.constant 0 : index
    %c256_58 = arith.constant 256 : index
    %117 = vector.load %arg7[%c0_57, %c256_58] : memref<128x384xbf16, #tpu.memory_space<vmem>>, vector<64x64xbf16>
    tpu.vector_store %arg7[%c0_57, %c256_58], %116 {strides = array<i32>} : memref<128x384xbf16, #tpu.memory_space<vmem>>, vector<64x64xbf16>,
    %c0_59 = arith.constant 0 : index
    %c320 = arith.constant 320 : index
    %118 = vector.load %arg6[%c0_59, %c320] : memref<128x1152xbf16, #tpu.memory_space<vmem>>, vector<64x64xbf16>
    %c0_60 = arith.constant 0 : index
    %c704 = arith.constant 704 : index
    %119 = vector.load %arg6[%c0_60, %c704] : memref<128x1152xbf16, #tpu.memory_space<vmem>>, vector<64x64xbf16>
    %c0_61 = arith.constant 0 : index
    %c1088 = arith.constant 1088 : index
    %120 = vector.load %arg6[%c0_61, %c1088] : memref<128x1152xbf16, #tpu.memory_space<vmem>>, vector<64x64xbf16>
    %cst_62 = arith.constant dense<0.000000e+00> : vector<64x64xf32>
    %121 = tpu.matmul %118, %119, %cst_62 {dimension_numbers = #tpu.dot_dimension_numbers<[1], [1], [0], [0], [0, 0, 1, 0], [], []>} : vector<64x64xbf16>, vector<64x64xbf16>, vector<64x64xf32> -> vector<64x64xf32>
    %cst_63 = arith.constant 1.250000e-01 : f32
    %122 = vector.broadcast %cst_63 : f32 to vector<64x64xf32>
    %123 = arith.mulf %121, %122 : vector<64x64xf32>
    %124 = arith.addf %123, %12 : vector<64x64xf32>
    %cst_64 = arith.constant dense<0xFF800000> : vector<64xf32>
    %125 = vector.multi_reduction <maximumf>, %124, %cst_64 [1] : vector<64x64xf32> to vector<64xf32>
    %126 = vector.shape_cast %125 : vector<64xf32> to vector<64x1xf32>
    %127 = vector.broadcast %126 : vector<64x1xf32> to vector<64x64xf32>
    %128 = arith.subf %124, %127 : vector<64x64xf32>
    %129 = math.exp %128 : vector<64x64xf32>
    %cst_65 = arith.constant dense<0.000000e+00> : vector<64xf32>
    %130 = vector.multi_reduction <add>, %129, %cst_65 [1] : vector<64x64xf32> to vector<64xf32>
    %131 = vector.shape_cast %130 : vector<64xf32> to vector<64x1xf32>
    %132 = tpu.reciprocal %131 {approx = true} : vector<64x1xf32> -> vector<64x1xf32>
    %133 = vector.broadcast %132 : vector<64x1xf32> to vector<64x64xf32>
    %134 = arith.mulf %129, %133 : vector<64x64xf32>
    %135 = arith.truncf %134 : vector<64x64xf32> to vector<64x64xbf16>
    %cst_66 = arith.constant dense<0.000000e+00> : vector<64x64xf32>
    %136 = tpu.matmul %135, %120, %cst_66 {dimension_numbers = #tpu.dot_dimension_numbers<[1], [0], [0], [1], [0, 0, 1, 1], [], []>} : vector<64x64xbf16>, vector<64x64xbf16>, vector<64x64xf32> -> vector<64x64xf32>
    %137 = arith.truncf %136 : vector<64x64xf32> to vector<64x64xbf16>
    %c0_67 = arith.constant 0 : index
    %c320_68 = arith.constant 320 : index
    %138 = vector.load %arg7[%c0_67, %c320_68] : memref<128x384xbf16, #tpu.memory_space<vmem>>, vector<64x64xbf16>
    tpu.vector_store %arg7[%c0_67, %c320_68], %137 {strides = array<i32>} : memref<128x384xbf16, #tpu.memory_space<vmem>>, vector<64x64xbf16>,
    %c64_69 = arith.constant 64 : index
    %c0_70 = arith.constant 0 : index
    %139 = vector.load %arg6[%c64_69, %c0_70] : memref<128x1152xbf16, #tpu.memory_space<vmem>>, vector<64x64xbf16>
    %c64_71 = arith.constant 64 : index
    %c384_72 = arith.constant 384 : index
    %140 = vector.load %arg6[%c64_71, %c384_72] : memref<128x1152xbf16, #tpu.memory_space<vmem>>, vector<64x64xbf16>
    %c64_73 = arith.constant 64 : index
    %c768_74 = arith.constant 768 : index
    %141 = vector.load %arg6[%c64_73, %c768_74] : memref<128x1152xbf16, #tpu.memory_space<vmem>>, vector<64x64xbf16>
    %cst_75 = arith.constant dense<0.000000e+00> : vector<64x64xf32>
    %142 = tpu.matmul %139, %140, %cst_75 {dimension_numbers = #tpu.dot_dimension_numbers<[1], [1], [0], [0], [0, 0, 1, 0], [], []>} : vector<64x64xbf16>, vector<64x64xbf16>, vector<64x64xf32> -> vector<64x64xf32>
    %cst_76 = arith.constant 1.250000e-01 : f32
    %143 = vector.broadcast %cst_76 : f32 to vector<64x64xf32>
    %144 = arith.mulf %142, %143 : vector<64x64xf32>
    %145 = arith.addf %144, %12 : vector<64x64xf32>
    %cst_77 = arith.constant dense<0xFF800000> : vector<64xf32>
    %146 = vector.multi_reduction <maximumf>, %145, %cst_77 [1] : vector<64x64xf32> to vector<64xf32>
    %147 = vector.shape_cast %146 : vector<64xf32> to vector<64x1xf32>
    %148 = vector.broadcast %147 : vector<64x1xf32> to vector<64x64xf32>
    %149 = arith.subf %145, %148 : vector<64x64xf32>
    %150 = math.exp %149 : vector<64x64xf32>
    %cst_78 = arith.constant dense<0.000000e+00> : vector<64xf32>
    %151 = vector.multi_reduction <add>, %150, %cst_78 [1] : vector<64x64xf32> to vector<64xf32>
    %152 = vector.shape_cast %151 : vector<64xf32> to vector<64x1xf32>
    %153 = tpu.reciprocal %152 {approx = true} : vector<64x1xf32> -> vector<64x1xf32>
    %154 = vector.broadcast %153 : vector<64x1xf32> to vector<64x64xf32>
    %155 = arith.mulf %150, %154 : vector<64x64xf32>
    %156 = arith.truncf %155 : vector<64x64xf32> to vector<64x64xbf16>
    %cst_79 = arith.constant dense<0.000000e+00> : vector<64x64xf32>
    %157 = tpu.matmul %156, %141, %cst_79 {dimension_numbers = #tpu.dot_dimension_numbers<[1], [0], [0], [1], [0, 0, 1, 1], [], []>} : vector<64x64xbf16>, vector<64x64xbf16>, vector<64x64xf32> -> vector<64x64xf32>
    %158 = arith.truncf %157 : vector<64x64xf32> to vector<64x64xbf16>
    %c64_80 = arith.constant 64 : index
    %c0_81 = arith.constant 0 : index
    %159 = vector.load %arg7[%c64_80, %c0_81] : memref<128x384xbf16, #tpu.memory_space<vmem>>, vector<64x64xbf16>
    tpu.vector_store %arg7[%c64_80, %c0_81], %158 {strides = array<i32>} : memref<128x384xbf16, #tpu.memory_space<vmem>>, vector<64x64xbf16>,
    %c64_82 = arith.constant 64 : index
    %c64_83 = arith.constant 64 : index
    %160 = vector.load %arg6[%c64_82, %c64_83] : memref<128x1152xbf16, #tpu.memory_space<vmem>>, vector<64x64xbf16>
    %c64_84 = arith.constant 64 : index
    %c448_85 = arith.constant 448 : index
    %161 = vector.load %arg6[%c64_84, %c448_85] : memref<128x1152xbf16, #tpu.memory_space<vmem>>, vector<64x64xbf16>
    %c64_86 = arith.constant 64 : index
    %c832_87 = arith.constant 832 : index
    %162 = vector.load %arg6[%c64_86, %c832_87] : memref<128x1152xbf16, #tpu.memory_space<vmem>>, vector<64x64xbf16>
    %cst_88 = arith.constant dense<0.000000e+00> : vector<64x64xf32>
    %163 = tpu.matmul %160, %161, %cst_88 {dimension_numbers = #tpu.dot_dimension_numbers<[1], [1], [0], [0], [0, 0, 1, 0], [], []>} : vector<64x64xbf16>, vector<64x64xbf16>, vector<64x64xf32> -> vector<64x64xf32>
    %cst_89 = arith.constant 1.250000e-01 : f32
    %164 = vector.broadcast %cst_89 : f32 to vector<64x64xf32>
    %165 = arith.mulf %163, %164 : vector<64x64xf32>
    %166 = arith.addf %165, %12 : vector<64x64xf32>
    %cst_90 = arith.constant dense<0xFF800000> : vector<64xf32>
    %167 = vector.multi_reduction <maximumf>, %166, %cst_90 [1] : vector<64x64xf32> to vector<64xf32>
    %168 = vector.shape_cast %167 : vector<64xf32> to vector<64x1xf32>
    %169 = vector.broadcast %168 : vector<64x1xf32> to vector<64x64xf32>
    %170 = arith.subf %166, %169 : vector<64x64xf32>
    %171 = math.exp %170 : vector<64x64xf32>
    %cst_91 = arith.constant dense<0.000000e+00> : vector<64xf32>
    %172 = vector.multi_reduction <add>, %171, %cst_91 [1] : vector<64x64xf32> to vector<64xf32>
    %173 = vector.shape_cast %172 : vector<64xf32> to vector<64x1xf32>
    %174 = tpu.reciprocal %173 {approx = true} : vector<64x1xf32> -> vector<64x1xf32>
    %175 = vector.broadcast %174 : vector<64x1xf32> to vector<64x64xf32>
    %176 = arith.mulf %171, %175 : vector<64x64xf32>
    %177 = arith.truncf %176 : vector<64x64xf32> to vector<64x64xbf16>
    %cst_92 = arith.constant dense<0.000000e+00> : vector<64x64xf32>
    %178 = tpu.matmul %177, %162, %cst_92 {dimension_numbers = #tpu.dot_dimension_numbers<[1], [0], [0], [1], [0, 0, 1, 1], [], []>} : vector<64x64xbf16>, vector<64x64xbf16>, vector<64x64xf32> -> vector<64x64xf32>
    %179 = arith.truncf %178 : vector<64x64xf32> to vector<64x64xbf16>
    %c64_93 = arith.constant 64 : index
    %c64_94 = arith.constant 64 : index
    %180 = vector.load %arg7[%c64_93, %c64_94] : memref<128x384xbf16, #tpu.memory_space<vmem>>, vector<64x64xbf16>
    tpu.vector_store %arg7[%c64_93, %c64_94], %179 {strides = array<i32>} : memref<128x384xbf16, #tpu.memory_space<vmem>>, vector<64x64xbf16>,
    %c64_95 = arith.constant 64 : index
    %c128_96 = arith.constant 128 : index
    %181 = vector.load %arg6[%c64_95, %c128_96] : memref<128x1152xbf16, #tpu.memory_space<vmem>>, vector<64x64xbf16>
    %c64_97 = arith.constant 64 : index
    %c512_98 = arith.constant 512 : index
    %182 = vector.load %arg6[%c64_97, %c512_98] : memref<128x1152xbf16, #tpu.memory_space<vmem>>, vector<64x64xbf16>
    %c64_99 = arith.constant 64 : index
    %c896_100 = arith.constant 896 : index
    %183 = vector.load %arg6[%c64_99, %c896_100] : memref<128x1152xbf16, #tpu.memory_space<vmem>>, vector<64x64xbf16>
    %cst_101 = arith.constant dense<0.000000e+00> : vector<64x64xf32>
    %184 = tpu.matmul %181, %182, %cst_101 {dimension_numbers = #tpu.dot_dimension_numbers<[1], [1], [0], [0], [0, 0, 1, 0], [], []>} : vector<64x64xbf16>, vector<64x64xbf16>, vector<64x64xf32> -> vector<64x64xf32>
    %cst_102 = arith.constant 1.250000e-01 : f32
    %185 = vector.broadcast %cst_102 : f32 to vector<64x64xf32>
    %186 = arith.mulf %184, %185 : vector<64x64xf32>
    %187 = arith.addf %186, %12 : vector<64x64xf32>
    %cst_103 = arith.constant dense<0xFF800000> : vector<64xf32>
    %188 = vector.multi_reduction <maximumf>, %187, %cst_103 [1] : vector<64x64xf32> to vector<64xf32>
    %189 = vector.shape_cast %188 : vector<64xf32> to vector<64x1xf32>
    %190 = vector.broadcast %189 : vector<64x1xf32> to vector<64x64xf32>
    %191 = arith.subf %187, %190 : vector<64x64xf32>
    %192 = math.exp %191 : vector<64x64xf32>
    %cst_104 = arith.constant dense<0.000000e+00> : vector<64xf32>
    %193 = vector.multi_reduction <add>, %192, %cst_104 [1] : vector<64x64xf32> to vector<64xf32>
    %194 = vector.shape_cast %193 : vector<64xf32> to vector<64x1xf32>
    %195 = tpu.reciprocal %194 {approx = true} : vector<64x1xf32> -> vector<64x1xf32>
    %196 = vector.broadcast %195 : vector<64x1xf32> to vector<64x64xf32>
    %197 = arith.mulf %192, %196 : vector<64x64xf32>
    %198 = arith.truncf %197 : vector<64x64xf32> to vector<64x64xbf16>
    %cst_105 = arith.constant dense<0.000000e+00> : vector<64x64xf32>
    %199 = tpu.matmul %198, %183, %cst_105 {dimension_numbers = #tpu.dot_dimension_numbers<[1], [0], [0], [1], [0, 0, 1, 1], [], []>} : vector<64x64xbf16>, vector<64x64xbf16>, vector<64x64xf32> -> vector<64x64xf32>
    %200 = arith.truncf %199 : vector<64x64xf32> to vector<64x64xbf16>
    %c64_106 = arith.constant 64 : index
    %c128_107 = arith.constant 128 : index
    %201 = vector.load %arg7[%c64_106, %c128_107] : memref<128x384xbf16, #tpu.memory_space<vmem>>, vector<64x64xbf16>
    tpu.vector_store %arg7[%c64_106, %c128_107], %200 {strides = array<i32>} : memref<128x384xbf16, #tpu.memory_space<vmem>>, vector<64x64xbf16>,
    %c64_108 = arith.constant 64 : index
    %c192_109 = arith.constant 192 : index
    %202 = vector.load %arg6[%c64_108, %c192_109] : memref<128x1152xbf16, #tpu.memory_space<vmem>>, vector<64x64xbf16>
    %c64_110 = arith.constant 64 : index
    %c576_111 = arith.constant 576 : index
    %203 = vector.load %arg6[%c64_110, %c576_111] : memref<128x1152xbf16, #tpu.memory_space<vmem>>, vector<64x64xbf16>
    %c64_112 = arith.constant 64 : index
    %c960_113 = arith.constant 960 : index
    %204 = vector.load %arg6[%c64_112, %c960_113] : memref<128x1152xbf16, #tpu.memory_space<vmem>>, vector<64x64xbf16>
    %cst_114 = arith.constant dense<0.000000e+00> : vector<64x64xf32>
    %205 = tpu.matmul %202, %203, %cst_114 {dimension_numbers = #tpu.dot_dimension_numbers<[1], [1], [0], [0], [0, 0, 1, 0], [], []>} : vector<64x64xbf16>, vector<64x64xbf16>, vector<64x64xf32> -> vector<64x64xf32>
    %cst_115 = arith.constant 1.250000e-01 : f32
    %206 = vector.broadcast %cst_115 : f32 to vector<64x64xf32>
    %207 = arith.mulf %205, %206 : vector<64x64xf32>
    %208 = arith.addf %207, %12 : vector<64x64xf32>
    %cst_116 = arith.constant dense<0xFF800000> : vector<64xf32>
    %209 = vector.multi_reduction <maximumf>, %208, %cst_116 [1] : vector<64x64xf32> to vector<64xf32>
    %210 = vector.shape_cast %209 : vector<64xf32> to vector<64x1xf32>
    %211 = vector.broadcast %210 : vector<64x1xf32> to vector<64x64xf32>
    %212 = arith.subf %208, %211 : vector<64x64xf32>
    %213 = math.exp %212 : vector<64x64xf32>
    %cst_117 = arith.constant dense<0.000000e+00> : vector<64xf32>
    %214 = vector.multi_reduction <add>, %213, %cst_117 [1] : vector<64x64xf32> to vector<64xf32>
    %215 = vector.shape_cast %214 : vector<64xf32> to vector<64x1xf32>
    %216 = tpu.reciprocal %215 {approx = true} : vector<64x1xf32> -> vector<64x1xf32>
    %217 = vector.broadcast %216 : vector<64x1xf32> to vector<64x64xf32>
    %218 = arith.mulf %213, %217 : vector<64x64xf32>
    %219 = arith.truncf %218 : vector<64x64xf32> to vector<64x64xbf16>
    %cst_118 = arith.constant dense<0.000000e+00> : vector<64x64xf32>
    %220 = tpu.matmul %219, %204, %cst_118 {dimension_numbers = #tpu.dot_dimension_numbers<[1], [0], [0], [1], [0, 0, 1, 1], [], []>} : vector<64x64xbf16>, vector<64x64xbf16>, vector<64x64xf32> -> vector<64x64xf32>
    %221 = arith.truncf %220 : vector<64x64xf32> to vector<64x64xbf16>
    %c64_119 = arith.constant 64 : index
    %c192_120 = arith.constant 192 : index
    %222 = vector.load %arg7[%c64_119, %c192_120] : memref<128x384xbf16, #tpu.memory_space<vmem>>, vector<64x64xbf16>
    tpu.vector_store %arg7[%c64_119, %c192_120], %221 {strides = array<i32>} : memref<128x384xbf16, #tpu.memory_space<vmem>>, vector<64x64xbf16>,
    %c64_121 = arith.constant 64 : index
    %c256_122 = arith.constant 256 : index
    %223 = vector.load %arg6[%c64_121, %c256_122] : memref<128x1152xbf16, #tpu.memory_space<vmem>>, vector<64x64xbf16>
    %c64_123 = arith.constant 64 : index
    %c640_124 = arith.constant 640 : index
    %224 = vector.load %arg6[%c64_123, %c640_124] : memref<128x1152xbf16, #tpu.memory_space<vmem>>, vector<64x64xbf16>
    %c64_125 = arith.constant 64 : index
    %c1024_126 = arith.constant 1024 : index
    %225 = vector.load %arg6[%c64_125, %c1024_126] : memref<128x1152xbf16, #tpu.memory_space<vmem>>, vector<64x64xbf16>
    %cst_127 = arith.constant dense<0.000000e+00> : vector<64x64xf32>
    %226 = tpu.matmul %223, %224, %cst_127 {dimension_numbers = #tpu.dot_dimension_numbers<[1], [1], [0], [0], [0, 0, 1, 0], [], []>} : vector<64x64xbf16>, vector<64x64xbf16>, vector<64x64xf32> -> vector<64x64xf32>
    %cst_128 = arith.constant 1.250000e-01 : f32
    %227 = vector.broadcast %cst_128 : f32 to vector<64x64xf32>
    %228 = arith.mulf %226, %227 : vector<64x64xf32>
    %229 = arith.addf %228, %12 : vector<64x64xf32>
    %cst_129 = arith.constant dense<0xFF800000> : vector<64xf32>
    %230 = vector.multi_reduction <maximumf>, %229, %cst_129 [1] : vector<64x64xf32> to vector<64xf32>
    %231 = vector.shape_cast %230 : vector<64xf32> to vector<64x1xf32>
    %232 = vector.broadcast %231 : vector<64x1xf32> to vector<64x64xf32>
    %233 = arith.subf %229, %232 : vector<64x64xf32>
    %234 = math.exp %233 : vector<64x64xf32>
    %cst_130 = arith.constant dense<0.000000e+00> : vector<64xf32>
    %235 = vector.multi_reduction <add>, %234, %cst_130 [1] : vector<64x64xf32> to vector<64xf32>
    %236 = vector.shape_cast %235 : vector<64xf32> to vector<64x1xf32>
    %237 = tpu.reciprocal %236 {approx = true} : vector<64x1xf32> -> vector<64x1xf32>
    %238 = vector.broadcast %237 : vector<64x1xf32> to vector<64x64xf32>
    %239 = arith.mulf %234, %238 : vector<64x64xf32>
    %240 = arith.truncf %239 : vector<64x64xf32> to vector<64x64xbf16>
    %cst_131 = arith.constant dense<0.000000e+00> : vector<64x64xf32>
    %241 = tpu.matmul %240, %225, %cst_131 {dimension_numbers = #tpu.dot_dimension_numbers<[1], [0], [0], [1], [0, 0, 1, 1], [], []>} : vector<64x64xbf16>, vector<64x64xbf16>, vector<64x64xf32> -> vector<64x64xf32>
    %242 = arith.truncf %241 : vector<64x64xf32> to vector<64x64xbf16>
    %c64_132 = arith.constant 64 : index
    %c256_133 = arith.constant 256 : index
    %243 = vector.load %arg7[%c64_132, %c256_133] : memref<128x384xbf16, #tpu.memory_space<vmem>>, vector<64x64xbf16>
    tpu.vector_store %arg7[%c64_132, %c256_133], %242 {strides = array<i32>} : memref<128x384xbf16, #tpu.memory_space<vmem>>, vector<64x64xbf16>,
    %c64_134 = arith.constant 64 : index
    %c320_135 = arith.constant 320 : index
    %244 = vector.load %arg6[%c64_134, %c320_135] : memref<128x1152xbf16, #tpu.memory_space<vmem>>, vector<64x64xbf16>
    %c64_136 = arith.constant 64 : index
    %c704_137 = arith.constant 704 : index
    %245 = vector.load %arg6[%c64_136, %c704_137] : memref<128x1152xbf16, #tpu.memory_space<vmem>>, vector<64x64xbf16>
    %c64_138 = arith.constant 64 : index
    %c1088_139 = arith.constant 1088 : index
    %246 = vector.load %arg6[%c64_138, %c1088_139] : memref<128x1152xbf16, #tpu.memory_space<vmem>>, vector<64x64xbf16>
    %cst_140 = arith.constant dense<0.000000e+00> : vector<64x64xf32>
    %247 = tpu.matmul %244, %245, %cst_140 {dimension_numbers = #tpu.dot_dimension_numbers<[1], [1], [0], [0], [0, 0, 1, 0], [], []>} : vector<64x64xbf16>, vector<64x64xbf16>, vector<64x64xf32> -> vector<64x64xf32>
    %cst_141 = arith.constant 1.250000e-01 : f32
    %248 = vector.broadcast %cst_141 : f32 to vector<64x64xf32>
    %249 = arith.mulf %247, %248 : vector<64x64xf32>
    %250 = arith.addf %249, %12 : vector<64x64xf32>
    %cst_142 = arith.constant dense<0xFF800000> : vector<64xf32>
    %251 = vector.multi_reduction <maximumf>, %250, %cst_142 [1] : vector<64x64xf32> to vector<64xf32>
    %252 = vector.shape_cast %251 : vector<64xf32> to vector<64x1xf32>
    %253 = vector.broadcast %252 : vector<64x1xf32> to vector<64x64xf32>
    %254 = arith.subf %250, %253 : vector<64x64xf32>
    %255 = math.exp %254 : vector<64x64xf32>
    %cst_143 = arith.constant dense<0.000000e+00> : vector<64xf32>
    %256 = vector.multi_reduction <add>, %255, %cst_143 [1] : vector<64x64xf32> to vector<64xf32>
    %257 = vector.shape_cast %256 : vector<64xf32> to vector<64x1xf32>
    %258 = tpu.reciprocal %257 {approx = true} : vector<64x1xf32> -> vector<64x1xf32>
    %259 = vector.broadcast %258 : vector<64x1xf32> to vector<64x64xf32>
    %260 = arith.mulf %255, %259 : vector<64x64xf32>
    %261 = arith.truncf %260 : vector<64x64xf32> to vector<64x64xbf16>
    %cst_144 = arith.constant dense<0.000000e+00> : vector<64x64xf32>
    %262 = tpu.matmul %261, %246, %cst_144 {dimension_numbers = #tpu.dot_dimension_numbers<[1], [0], [0], [1], [0, 0, 1, 1], [], []>} : vector<64x64xbf16>, vector<64x64xbf16>, vector<64x64xf32> -> vector<64x64xf32>
    %263 = arith.truncf %262 : vector<64x64xf32> to vector<64x64xbf16>
    %c64_145 = arith.constant 64 : index
    %c320_146 = arith.constant 320 : index
    %264 = vector.load %arg7[%c64_145, %c320_146] : memref<128x384xbf16, #tpu.memory_space<vmem>>, vector<64x64xbf16>
    tpu.vector_store %arg7[%c64_145, %c320_146], %263 {strides = array<i32>} : memref<128x384xbf16, #tpu.memory_space<vmem>>, vector<64x64xbf16>,
    %c0_147 = arith.constant 0 : index
    %c0_148 = arith.constant 0 : index
    %265 = vector.load %arg7[%c0_147, %c0_148] : memref<128x384xbf16, #tpu.memory_space<vmem>>, vector<128x384xbf16>
    %c0_149 = arith.constant 0 : index
    %c0_150 = arith.constant 0 : index
    %266 = vector.load %arg3[%c0_149, %c0_150] : memref<384x384xbf16, #tpu.memory_space<vmem>>, vector<384x384xbf16>
    %cst_151 = arith.constant dense<0.000000e+00> : vector<128x384xf32>
    %267 = tpu.matmul %265, %266, %cst_151 {dimension_numbers = #tpu.dot_dimension_numbers<[1], [0], [0], [1], [0, 0, 1, 1], [], []>} : vector<128x384xbf16>, vector<384x384xbf16>, vector<128x384xf32> -> vector<128x384xf32>
    %c0_152 = arith.constant 0 : index
    %c0_153 = arith.constant 0 : index
    %268 = vector.load %arg4[%c0_152, %c0_153] : memref<1x384xf32, #tpu.memory_space<vmem>>, vector<1x384xf32>
    %269 = vector.broadcast %268 : vector<1x384xf32> to vector<128x384xf32>
    %270 = arith.addf %267, %269 : vector<128x384xf32>
    %271 = vector.shape_cast %270 : vector<128x384xf32> to vector<2x64x384xf32>
    %c0_154 = arith.constant 0 : index
    %c0_155 = arith.constant 0 : index
    %c0_156 = arith.constant 0 : index
    %272 = vector.load %arg5[%c0_154, %c0_155, %c0_156] : memref<2x64x384xf32, #tpu.memory_space<vmem>>, vector<2x64x384xf32>
    tpu.vector_store %arg5[%c0_154, %c0_155, %c0_156], %271 {strides = array<i32>} : memref<2x64x384xf32, #tpu.memory_space<vmem>>, vector<2x64x384xf32>,
    return
  }
  func.func @transform_0(%arg0: i32) -> (i32, i32, i32) {
    %c0_i32 = arith.constant 0 : i32
    %c0_i32_0 = arith.constant 0 : i32
    %c0_i32_1 = arith.constant 0 : i32
    return %arg0, %c0_i32, %c0_i32_0 : i32, i32, i32
  }
  func.func @transform_1(%arg0: i32) -> (i32, i32) {
    %c0_i32 = arith.constant 0 : i32
    %c0_i32_0 = arith.constant 0 : i32
    %c0_i32_1 = arith.constant 0 : i32
    return %c0_i32, %c0_i32_0 : i32, i32
  }
  func.func @transform_2(%arg0: i32) -> (i32, i32) {
    %c0_i32 = arith.constant 0 : i32
    %c0_i32_0 = arith.constant 0 : i32
    %c0_i32_1 = arith.constant 0 : i32
    return %c0_i32, %c0_i32_0 : i32, i32
  }
  func.func @transform_3(%arg0: i32) -> (i32, i32) {
    %c0_i32 = arith.constant 0 : i32
    %c0_i32_0 = arith.constant 0 : i32
    %c0_i32_1 = arith.constant 0 : i32
    return %c0_i32, %c0_i32_0 : i32, i32
  }
  func.func @transform_4(%arg0: i32) -> (i32, i32, i32) {
    %c0_i32 = arith.constant 0 : i32
    %c0_i32_0 = arith.constant 0 : i32
    %c0_i32_1 = arith.constant 0 : i32
    return %arg0, %c0_i32, %c0_i32_0 : i32, i32, i32
  }
}

</mosaic_0001>

<llo_original>
// kernel: tpu_custom_call.1
$region0: #{tpu_custom_call.1}
  #allocation0 [shape = 'u32[]', space=smem, size = 0x4, offset = 0x4, fixed_abs, tag = 'smem constant byte address 0x4 - core index']
  #allocation1 [shape = 'u32[144,128]{1,0:T(1,128)}', space=vmem, size = 0x12000, scoped, tag = 'internal scratch']
  #allocation2 [shape = 'bf16[128,1152]{1,0:T(8,128)(2,1)}', space=vmem, size = 0x48000, scoped, tag = 'scratch operand']
  #allocation3 [shape = 'bf16[128,384]{1,0:T(8,128)(2,1)}', space=vmem, size = 0x18000, scoped, tag = 'scratch operand']
  %s0 = inlined_call_operand.hbm [shape: f32[4,64,384], index: 0, kind: input, shape index: {}]
  %s1 = inlined_call_operand.hbm [shape: bf16[384,1152], index: 1, kind: input, shape index: {}]
  %s2 = inlined_call_operand.hbm [shape: bf16[384,384], index: 2, kind: input, shape index: {}]
  %s3 = inlined_call_operand.vmem [shape: f32[1,384], index: 3, kind: input, shape index: {}]
  %s4 = inlined_call_operand.hbm [shape: f32[4,64,384], index: 4, kind: output, shape index: {}]
  %s5 = sld [smem:[#allocation0]]
  $region61: #{tpu_custom_call.1} parent=0
    _
  %s7 = ssub.s32 1, %s5
  %s8 = scalar_select 0, %s7, %s5
  $region1: #{tpu_custom_call.1} parent=0
    #allocation4 [shape = 'u8[393216]{0}', space=vmem, size = 0x60000, scoped, tag = 'input window, operand 0']
    #allocation5 [shape = 's32[2]{0}', space=sflag, size = 0x8, scoped, tag = 'scoped memory for tpu_custom_call.1']
    #allocation6 [shape = 's32[2]{0}', space=sflag, size = 0x8, scoped, tag = 'scoped memory for tpu_custom_call.1']
    #allocation7 [shape = 'u8[884736]{0}', space=vmem, size = 0xd8000, scoped, tag = 'input window, operand 1, single buffered']
    #allocation8 [shape = 's32[1]{0}', space=sflag, size = 0x4, scoped, tag = 'scoped memory for tpu_custom_call.1']
    #allocation9 [shape = 'u8[294912]{0}', space=vmem, size = 0x48000, scoped, tag = 'input window, operand 2, single buffered']
    #allocation10 [shape = 'u8[393216]{0}', space=vmem, size = 0x60000, scoped, tag = 'output window, operand 0']
    %9 = vsyncpa [#allocation5], 0
    %s10 = scalar_lea.sflag [#allocation5], 1
    %11 = vsyncpa %s10, 0
    %12 = vsyncpa [#allocation8], 0
    %13 = vsyncpa [#allocation6], 0
    %s14 = scalar_lea.sflag [#allocation6], 1
    %15 = vsyncpa %s14, 0
    loop: start=0, step=1, limit=4
    $region2: #{tpu_custom_call.1} parent=1 // loop_pre_header
      _
    $region3: #{tpu_custom_call.1} parent=1 // loop_header
      %s17 = sphi 0, %s21
      %p18 = scmp.ge.s32.totalorder %s17, 4
      %s27 = sphi 0, %s29
      %s30 = sphi 0, %s27
      %s31 = sphi 0, %s30
      %s47 = sphi 0, %s31
      %s51 = sphi 0, %s51
      %s53 = sphi 0, %s51
      %s54 = sphi 0, %s53
      %s68 = sphi 0, %s54
      %s72 = sphi 0, %s72
      %s74 = sphi 0, %s72
      %s75 = sphi 0, %s74
      %s89 = sphi 0, %s75
      %s93 = sphi 0, %s93
      %s95 = sphi 0, %s93
      %s96 = sphi 0, %s95
      %s110 = sphi 0, %s96
      %s116 = sphi 0, %s118
      %s119 = sphi 0, %s116
      %s120 = sphi 0, %s119
      %s136 = sphi 0, %s120
    $region4: #{tpu_custom_call.1} parent=1 // loop_header_branch
      %20 = sbr.rel (%p18) target = $region8
    $region5: #{tpu_custom_call.1} parent=1 // loop_body
      %s22 = ssub.s32 %s17, 1
      %s23 = ssub.s32 %s17, 2
      %s24 = sadd.s32 %s17, 1
      %s25 = ssub.s32 %s17, %s24
      %p26 = scmp.eq.s32.totalorder %s25, 0
      %s28 = sadd.s32 %s27, 1
      %s29 = scalar_select %p26, %s27, %s28
      %p32 = pneg %p26
      %p33 = scmp.eq.s32.totalorder %s17, 1
      %p34 = por %p32, %p33
      %p35 = scmp.ne.s32.totalorder %s27, %s30
      %p36 = scmp.eq.s32.totalorder %s17, 0
      %p37 = por %p35, %p36
      %p38 = scmp.ne.s32.totalorder %s27, %s30
      %p39 = scmp.eq.s32.totalorder %s22, 1
      %p40 = por %p38, %p39
      %p41 = scmp.ne.s32.totalorder %s30, %s31
      %p42 = scmp.eq.s32.totalorder %s22, 0
      %p43 = por %p41, %p42
      %p44 = scmp.ne.s32.totalorder %s30, %s31
      %p45 = scmp.eq.s32.totalorder %s23, 1
      %p46 = por %p44, %p45
      %p48 = scmp.ne.s32.totalorder %s31, %s47
      %p49 = scmp.eq.s32.totalorder %s23, 0
      %p50 = por %p48, %p49
      %s52 = sadd.s32 %s51, 1
      %p55 = scmp.eq.s32.totalorder %s17, 1
      %p56 = scmp.ne.s32.totalorder %s51, %s53
      %p57 = scmp.eq.s32.totalorder %s17, 0
      %p58 = por %p56, %p57
      %p59 = scmp.ne.s32.totalorder %s51, %s53
      %p60 = scmp.eq.s32.totalorder %s22, 1
      %p61 = por %p59, %p60
      %p62 = scmp.ne.s32.totalorder %s53, %s54
      %p63 = scmp.eq.s32.totalorder %s22, 0
      %p64 = por %p62, %p63
      %p65 = scmp.ne.s32.totalorder %s53, %s54
      %p66 = scmp.eq.s32.totalorder %s23, 1
      %p67 = por %p65, %p66
      %p69 = scmp.ne.s32.totalorder %s54, %s68
      %p70 = scmp.eq.s32.totalorder %s23, 0
      %p71 = por %p69, %p70
      %s73 = sadd.s32 %s72, 1
      %p76 = scmp.eq.s32.totalorder %s17, 1
      %p77 = scmp.ne.s32.totalorder %s72, %s74
      %p78 = scmp.eq.s32.totalorder %s17, 0
      %p79 = por %p77, %p78
      %p80 = scmp.ne.s32.totalorder %s72, %s74
      %p81 = scmp.eq.s32.totalorder %s22, 1
      %p82 = por %p80, %p81
      %p83 = scmp.ne.s32.totalorder %s74, %s75
      %p84 = scmp.eq.s32.totalorder %s22, 0
      %p85 = por %p83, %p84
      %p86 = scmp.ne.s32.totalorder %s74, %s75
      %p87 = scmp.eq.s32.totalorder %s23, 1
      %p88 = por %p86, %p87
      %p90 = scmp.ne.s32.totalorder %s75, %s89
      %p91 = scmp.eq.s32.totalorder %s23, 0
      %p92 = por %p90, %p91
      %s94 = sadd.s32 %s93, 1
      %p97 = scmp.eq.s32.totalorder %s17, 1
      %p98 = scmp.ne.s32.totalorder %s93, %s95
      %p99 = scmp.eq.s32.totalorder %s17, 0
      %p100 = por %p98, %p99
      %p101 = scmp.ne.s32.totalorder %s93, %s95
      %p102 = scmp.eq.s32.totalorder %s22, 1
      %p103 = por %p101, %p102
      %p104 = scmp.ne.s32.totalorder %s95, %s96
      %p105 = scmp.eq.s32.totalorder %s22, 0
      %p106 = por %p104, %p105
      %p107 = scmp.ne.s32.totalorder %s95, %s96
      %p108 = scmp.eq.s32.totalorder %s23, 1
      %p109 = por %p107, %p108
      %p111 = scmp.ne.s32.totalorder %s96, %s110
      %p112 = scmp.eq.s32.totalorder %s23, 0
      %p113 = por %p111, %p112
      %s114 = ssub.s32 %s17, %s24
      %p115 = scmp.eq.s32.totalorder %s114, 0
      %s117 = sadd.s32 %s116, 1
      %s118 = scalar_select %p115, %s116, %s117
      %p121 = pneg %p115
      %p122 = scmp.eq.s32.totalorder %s17, 1
      %p123 = por %p121, %p122
      %p124 = scmp.ne.s32.totalorder %s116, %s119
      %p125 = scmp.eq.s32.totalorder %s17, 0
      %p126 = por %p124, %p125
      %p127 = scmp.ne.s32.totalorder %s116, %s119
      %p128 = scmp.eq.s32.totalorder %s22, 1
      %p129 = por %p127, %p128
      %p130 = scmp.ne.s32.totalorder %s119, %s120
      %p131 = scmp.eq.s32.totalorder %s22, 0
      %p132 = por %p130, %p131
      %p133 = scmp.ne.s32.totalorder %s119, %s120
      %p134 = scmp.eq.s32.totalorder %s23, 1
      %p135 = por %p133, %p134
      %p137 = scmp.ne.s32.totalorder %s120, %s136
      %p138 = scmp.eq.s32.totalorder %s23, 0
      %p139 = por %p137, %p138
      %p140 = scmp.le.s32.totalorder 1, %s17
      %p141 = scmp.lt.s32.totalorder %s17, 3
      %p142 = pnand %p140, %p141
      %p143 = pneg %p142
      // Predicated region
      $region9: #{tpu_custom_call.1} parent=5 // pred_check
        _
      $region10: #{tpu_custom_call.1} parent=5 // pred_check_branch
        %145 = sbr.rel (%p142) target = $region12
      $region11: #{tpu_custom_call.1} parent=5 // pred_region
        %s146 = ssub.s32 %s17, 1
        // Predicated region
        $region13: #{tpu_custom_call.1} parent=11 // pred_check
          %p147 = pneg %p64
        $region14: #{tpu_custom_call.1} parent=11 // pred_check_branch
          %149 = sbr.rel (%p147) target = $region16
        $region15: #{tpu_custom_call.1} parent=11 // pred_region
          %s151 = ssub.s32 27648, 27648
          %152 = vsyncadd [#allocation8], %s151
          %s153 = sshll.u32 [#allocation7], 4
          %s154 = int_to_ptr.vmem [resolvable:$true] %s153
          %159 = dma.hbm_to_vmem [thread:$0]  %s1, 27648, %s154, [#allocation8], 576, 576, 36
        $region16: #{tpu_custom_call.1} parent=11 // pred_fallthru
          _
        // Predicated region
        $region17: #{tpu_custom_call.1} parent=11 // pred_check
          %p160 = pneg %p85
        $region18: #{tpu_custom_call.1} parent=11 // pred_check_branch
          %162 = sbr.rel (%p160) target = $region20
        $region19: #{tpu_custom_call.1} parent=11 // pred_region
          %s164 = ssub.s32 9216, 9216
          %165 = vsyncadd [#allocation8], %s164
          %s166 = sshll.u32 [#allocation9], 4
          %s167 = int_to_ptr.vmem [resolvable:$true] %s166
          %172 = dma.hbm_to_vmem [thread:$0]  %s2, 9216, %s167, [#allocation8], 192, 192, 12
        $region20: #{tpu_custom_call.1} parent=11 // pred_fallthru
          _
        // Predicated region
        $region21: #{tpu_custom_call.1} parent=11 // pred_check
          %p173 = pneg %p106
        $region22: #{tpu_custom_call.1} parent=11 // pred_check_branch
          %175 = sbr.rel (%p173) target = $region24
        $region23: #{tpu_custom_call.1} parent=11 // pred_region
          _
        $region24: #{tpu_custom_call.1} parent=11 // pred_fallthru
          _
      $region12: #{tpu_custom_call.1} parent=5 // pred_fallthru
        _
      %p176 = scmp.lt.s32.totalorder %s17, 2
      // Predicated region
      $region25: #{tpu_custom_call.1} parent=5 // pred_check
        %p177 = pneg %p176
      $region26: #{tpu_custom_call.1} parent=5 // pred_check_branch
        %179 = sbr.rel (%p177) target = $region28
      $region27: #{tpu_custom_call.1} parent=5 // pred_region
        // Predicated region
        $region29: #{tpu_custom_call.1} parent=27 // pred_check
          %p180 = pneg %p37
        $region30: #{tpu_custom_call.1} parent=27 // pred_check_branch
          %182 = sbr.rel (%p180) target = $region32
        $region31: #{tpu_custom_call.1} parent=27 // pred_region
          %s183 = sand.u32 %s27, 1
          %s184 = scalar_lea.sflag [#allocation5], %s183
          %s185 = sand.u32 %s27, 1
          %s186 = smul.addr %s185, 384
          %s187 = scalar_lea.vmem [#allocation4], %s186
          %s188 = smul.u32 2, %s17
          %s190 = ssub.s32 6144, 6144
          %191 = vsyncadd %s184, %s190
          %s192 = smul.addr %s188, 24
          %s193 = smul.addr %s192, 128
          %s194 = scalar_lea.hbm %s0, %s193
          %s195 = sshll.u32 %s187, 4
          %s196 = int_to_ptr.vmem [resolvable:$true] %s195
          %201 = dma.hbm_to_vmem [thread:$0]  %s194, 6144, %s196, %s184, 384, 384, 24
        $region32: #{tpu_custom_call.1} parent=27 // pred_fallthru
          _
      $region28: #{tpu_custom_call.1} parent=5 // pred_fallthru
        _
      %p202 = scmp.le.s32.totalorder 1, %s17
      %p203 = scmp.lt.s32.totalorder %s17, 3
      %p204 = pnand %p202, %p203
      %p205 = pneg %p204
      // Predicated region
      $region33: #{tpu_custom_call.1} parent=5 // pred_check
        _
      $region34: #{tpu_custom_call.1} parent=5 // pred_check_branch
        %207 = sbr.rel (%p204) target = $region36
      $region35: #{tpu_custom_call.1} parent=5 // pred_region
        %s208 = ssub.s32 %s17, 1
        %s209 = sand.u32 %s30, 1
        %s210 = scalar_lea.sflag [#allocation5], %s209
        %s211 = sand.u32 %s30, 1
        %s212 = smul.addr %s211, 384
        %s213 = scalar_lea.vmem [#allocation4], %s212
        // Predicated region
        $region37: #{tpu_custom_call.1} parent=35 // pred_check
          %p214 = pneg %p43
        $region38: #{tpu_custom_call.1} parent=35 // pred_check_branch
          %216 = sbr.rel (%p214) target = $region40
        $region39: #{tpu_custom_call.1} parent=35 // pred_region
          %217 = dma.done %s210, 6144
        $region40: #{tpu_custom_call.1} parent=35 // pred_fallthru
          _
        // Predicated region
        $region41: #{tpu_custom_call.1} parent=35 // pred_check
          %p218 = pneg %p64
        $region42: #{tpu_custom_call.1} parent=35 // pred_check_branch
          %220 = sbr.rel (%p218) target = $region44
        $region43: #{tpu_custom_call.1} parent=35 // pred_region
          %221 = dma.done [#allocation8], 27648
        $region44: #{tpu_custom_call.1} parent=35 // pred_fallthru
          _
        // Predicated region
        $region45: #{tpu_custom_call.1} parent=35 // pred_check
          %p222 = pneg %p85
        $region46: #{tpu_custom_call.1} parent=35 // pred_check_branch
          %224 = sbr.rel (%p222) target = $region48
        $region47: #{tpu_custom_call.1} parent=35 // pred_region
          %225 = dma.done [#allocation8], 9216
        $region48: #{tpu_custom_call.1} parent=35 // pred_fallthru
          _
        %s226 = sand.u32 %s30, 1
        %s227 = scalar_lea.sflag [#allocation5], %s226
        %s228 = sand.u32 %s30, 1
        %s229 = smul.addr %s228, 384
        %s230 = scalar_lea.vmem [#allocation4], %s229
        %p231 = pneg %p43
        %p232 = pneg %p40
        %p233 = pneg %p64
        %p234 = pneg %p61
        %p235 = pneg %p85
        %p236 = pneg %p82
        %p237 = pneg %p106
        %p238 = pneg %p103
        %p239 = pneg %p132
        %p240 = pneg %p129
        %s241 = sand.u32 %s119, 1
        %s242 = scalar_lea.sflag [#allocation6], %s241
        %s243 = sand.u32 %s119, 1
        %s244 = smul.addr %s243, 384
        %s245 = scalar_lea.vmem [#allocation10], %s244
        %s246 = smul.u32 2, %s22
        %s247 = smul.u32 2, %s22
        %v249 = vld [vmem:[%s213] sm:$0xff]
        %v250 = vld [vmem:[%s213 + $0x8] sm:$0xff]
        %v251 = vld [vmem:[%s213 + $0x10] sm:$0xff]
        %v252 = vld [vmem:[%s213 + $0x18] sm:$0xff]
        %v253 = vld [vmem:[%s213 + $0x20] sm:$0xff]
        %v254 = vld [vmem:[%s213 + $0x28] sm:$0xff]
        %v255 = vld [vmem:[%s213 + $0x30] sm:$0xff]
        %v256 = vld [vmem:[%s213 + $0x38] sm:$0xff]
        %v257 = vld [vmem:[%s213 + $0x40] sm:$0xff]
        %v258 = vld [vmem:[%s213 + $0x48] sm:$0xff]
        %v259 = vld [vmem:[%s213 + $0x50] sm:$0xff]
        %v260 = vld [vmem:[%s213 + $0x58] sm:$0xff]
        %v261 = vld [vmem:[%s213 + $0x60] sm:$0xff]
        %v262 = vld [vmem:[%s213 + $0x68] sm:$0xff]
        %v263 = vld [vmem:[%s213 + $0x70] sm:$0xff]
        %v264 = vld [vmem:[%s213 + $0x78] sm:$0xff]
        %v265 = vld [vmem:[%s213 + $0x80] sm:$0xff]
        %v266 = vld [vmem:[%s213 + $0x88] sm:$0xff]
        %v267 = vld [vmem:[%s213 + $0x90] sm:$0xff]
        %v268 = vld [vmem:[%s213 + $0x98] sm:$0xff]
        %v269 = vld [vmem:[%s213 + $0xa0] sm:$0xff]
        %v270 = vld [vmem:[%s213 + $0xa8] sm:$0xff]
        %v271 = vld [vmem:[%s213 + $0xb0] sm:$0xff]
        %v272 = vld [vmem:[%s213 + $0xb8] sm:$0xff]
        %v273 = vld [vmem:[%s213 + $0xc0] sm:$0xff]
        %v274 = vld [vmem:[%s213 + $0xc8] sm:$0xff]
        %v275 = vld [vmem:[%s213 + $0xd0] sm:$0xff]
        %v276 = vld [vmem:[%s213 + $0xd8] sm:$0xff]
        %v277 = vld [vmem:[%s213 + $0xe0] sm:$0xff]
        %v278 = vld [vmem:[%s213 + $0xe8] sm:$0xff]
        %v279 = vld [vmem:[%s213 + $0xf0] sm:$0xff]
        %v280 = vld [vmem:[%s213 + $0xf8] sm:$0xff]
        %v281 = vld [vmem:[%s213 + $0x100] sm:$0xff]
        %v282 = vld [vmem:[%s213 + $0x108] sm:$0xff]
        %v283 = vld [vmem:[%s213 + $0x110] sm:$0xff]
        %v284 = vld [vmem:[%s213 + $0x118] sm:$0xff]
        %v285 = vld [vmem:[%s213 + $0x120] sm:$0xff]
        %v286 = vld [vmem:[%s213 + $0x128] sm:$0xff]
        %v287 = vld [vmem:[%s213 + $0x130] sm:$0xff]
        %v288 = vld [vmem:[%s213 + $0x138] sm:$0xff]
        %v289 = vld [vmem:[%s213 + $0x140] sm:$0xff]
        %v290 = vld [vmem:[%s213 + $0x148] sm:$0xff]
        %v291 = vld [vmem:[%s213 + $0x150] sm:$0xff]
        %v292 = vld [vmem:[%s213 + $0x158] sm:$0xff]
        %v293 = vld [vmem:[%s213 + $0x160] sm:$0xff]
        %v294 = vld [vmem:[%s213 + $0x168] sm:$0xff]
        %v295 = vld [vmem:[%s213 + $0x170] sm:$0xff]
        %v296 = vld [vmem:[%s213 + $0x178] sm:$0xff]
        %v297 = vpack.c.bf16 %v252, %v249
        %v298 = vpack.c.bf16 %v253, %v250
        %v299 = vpack.c.bf16 %v254, %v251
        %v300 = vpack.c.bf16 %v258, %v255
        %v301 = vpack.c.bf16 %v259, %v256
        %v302 = vpack.c.bf16 %v260, %v257
        %v303 = vpack.c.bf16 %v264, %v261
        %v304 = vpack.c.bf16 %v265, %v262
        %v305 = vpack.c.bf16 %v266, %v263
        %v306 = vpack.c.bf16 %v270, %v267
        %v307 = vpack.c.bf16 %v271, %v268
        %v308 = vpack.c.bf16 %v272, %v269
        %v309 = vpack.c.bf16 %v276, %v273
        %v310 = vpack.c.bf16 %v277, %v274
        %v311 = vpack.c.bf16 %v278, %v275
        %v312 = vpack.c.bf16 %v282, %v279
        %v313 = vpack.c.bf16 %v283, %v280
        %v314 = vpack.c.bf16 %v284, %v281
        %v315 = vpack.c.bf16 %v288, %v285
        %v316 = vpack.c.bf16 %v289, %v286
        %v317 = vpack.c.bf16 %v290, %v287
        %v318 = vpack.c.bf16 %v294, %v291
        %v319 = vpack.c.bf16 %v295, %v292
        %v320 = vpack.c.bf16 %v296, %v293
        %v321 = vld [vmem:[#allocation7] sm:$0xff]
        %v322 = vld [vmem:[#allocation7 + $0x8] sm:$0xff]
        %v323 = vld [vmem:[#allocation7 + $0x10] sm:$0xff]
        %v324 = vld [vmem:[#allocation7 + $0x18] sm:$0xff]
        %v325 = vld [vmem:[#allocation7 + $0x20] sm:$0xf]
        %v326 = vld [vmem:[#allocation7 + $0x24] sm:$0xff]
        %v327 = vld [vmem:[#allocation7 + $0x2c] sm:$0xff]
        %v328 = vld [vmem:[#allocation7 + $0x34] sm:$0xff]
        %v329 = vld [vmem:[#allocation7 + $0x3c] sm:$0xff]
        %v330 = vld [vmem:[#allocation7 + $0x44] sm:$0xf]
        %v331 = vld [vmem:[#allocation7 + $0x48] sm:$0xff]
        %v332 = vld [vmem:[#allocation7 + $0x50] sm:$0xff]
        %v333 = vld [vmem:[#allocation7 + $0x58] sm:$0xff]
        %v334 = vld [vmem:[#allocation7 + $0x60] sm:$0xff]
        %v335 = vld [vmem:[#allocation7 + $0x68] sm:$0xf]
        %v336 = vld [vmem:[#allocation7 + $0x6c] sm:$0xff]
        %v337 = vld [vmem:[#allocation7 + $0x74] sm:$0xff]
        %v338 = vld [vmem:[#allocation7 + $0x7c] sm:$0xff]
        %v339 = vld [vmem:[#allocation7 + $0x84] sm:$0xff]
        %v340 = vld [vmem:[#allocation7 + $0x8c] sm:$0xf]
        %v341 = vld [vmem:[#allocation7 + $0x90] sm:$0xff]
        %v342 = vld [vmem:[#allocation7 + $0x98] sm:$0xff]
        %v343 = vld [vmem:[#allocation7 + $0xa0] sm:$0xff]
        %v344 = vld [vmem:[#allocation7 + $0xa8] sm:$0xff]
        %v345 = vld [vmem:[#allocation7 + $0xb0] sm:$0xf]
        %v346 = vld [vmem:[#allocation7 + $0xb4] sm:$0xff]
        %v347 = vld [vmem:[#allocation7 + $0xbc] sm:$0xff]
        %v348 = vld [vmem:[#allocation7 + $0xc4] sm:$0xff]
        %v349 = vld [vmem:[#allocation7 + $0xcc] sm:$0xff]
        %v350 = vld [vmem:[#allocation7 + $0xd4] sm:$0xf]
        %v351 = vld [vmem:[#allocation7 + $0xd8] sm:$0xff]
        %v352 = vld [vmem:[#allocation7 + $0xe0] sm:$0xff]
        %v353 = vld [vmem:[#allocation7 + $0xe8] sm:$0xff]
        %v354 = vld [vmem:[#allocation7 + $0xf0] sm:$0xff]
        %v355 = vld [vmem:[#allocation7 + $0xf8] sm:$0xf]
        %v356 = vld [vmem:[#allocation7 + $0xfc] sm:$0xff]
        %v357 = vld [vmem:[#allocation7 + $0x104] sm:$0xff]
        %v358 = vld [vmem:[#allocation7 + $0x10c] sm:$0xff]
        %v359 = vld [vmem:[#allocation7 + $0x114] sm:$0xff]
        %v360 = vld [vmem:[#allocation7 + $0x11c] sm:$0xf]
        %v361 = vld [vmem:[#allocation7 + $0x120] sm:$0xff]
        %v362 = vld [vmem:[#allocation7 + $0x128] sm:$0xff]
        %v363 = vld [vmem:[#allocation7 + $0x130] sm:$0xff]
        %v364 = vld [vmem:[#allocation7 + $0x138] sm:$0xff]
        %v365 = vld [vmem:[#allocation7 + $0x140] sm:$0xf]
        %v366 = vld [vmem:[#allocation7 + $0x144] sm:$0xff]
        %v367 = vld [vmem:[#allocation7 + $0x14c] sm:$0xff]
        %v368 = vld [vmem:[#allocation7 + $0x154] sm:$0xff]
        %v369 = vld [vmem:[#allocation7 + $0x15c] sm:$0xff]
        %v370 = vld [vmem:[#allocation7 + $0x164] sm:$0xf]
        %v371 = vld [vmem:[#allocation7 + $0x168] sm:$0xff]
        %v372 = vld [vmem:[#allocation7 + $0x170] sm:$0xff]
        %v373 = vld [vmem:[#allocation7 + $0x178] sm:$0xff]
        %v374 = vld [vmem:[#allocation7 + $0x180] sm:$0xff]
        %v375 = vld [vmem:[#allocation7 + $0x188] sm:$0xf]
        %v376 = vld [vmem:[#allocation7 + $0x18c] sm:$0xff]
        %v377 = vld [vmem:[#allocation7 + $0x194] sm:$0xff]
        %v378 = vld [vmem:[#allocation7 + $0x19c] sm:$0xff]
        %v379 = vld [vmem:[#allocation7 + $0x1a4] sm:$0xff]
        %v380 = vld [vmem:[#allocation7 + $0x1ac] sm:$0xf]
        %v381 = vld [vmem:[#allocation7 + $0x1b0] sm:$0xff]
        %v382 = vld [vmem:[#allocation7 + $0x1b8] sm:$0xff]
        %v383 = vld [vmem:[#allocation7 + $0x1c0] sm:$0xff]
        %v384 = vld [vmem:[#allocation7 + $0x1c8] sm:$0xff]
        %v385 = vld [vmem:[#allocation7 + $0x1d0] sm:$0xf]
        %v386 = vld [vmem:[#allocation7 + $0x1d4] sm:$0xff]
        %v387 = vld [vmem:[#allocation7 + $0x1dc] sm:$0xff]
        %v388 = vld [vmem:[#allocation7 + $0x1e4] sm:$0xff]
        %v389 = vld [vmem:[#allocation7 + $0x1ec] sm:$0xff]
        %v390 = vld [vmem:[#allocation7 + $0x1f4] sm:$0xf]
        %v391 = vld [vmem:[#allocation7 + $0x1f8] sm:$0xff]
        %v392 = vld [vmem:[#allocation7 + $0x200] sm:$0xff]
        %v393 = vld [vmem:[#allocation7 + $0x208] sm:$0xff]
        %v394 = vld [vmem:[#allocation7 + $0x210] sm:$0xff]
        %v395 = vld [vmem:[#allocation7 + $0x218] sm:$0xf]
        %v396 = vld [vmem:[#allocation7 + $0x21c] sm:$0xff]
        %v397 = vld [vmem:[#allocation7 + $0x224] sm:$0xff]
        %v398 = vld [vmem:[#allocation7 + $0x22c] sm:$0xff]
        %v399 = vld [vmem:[#allocation7 + $0x234] sm:$0xff]
        %v400 = vld [vmem:[#allocation7 + $0x23c] sm:$0xf]
        %v401 = vld [vmem:[#allocation7 + $0x240] sm:$0xff]
        %v402 = vld [vmem:[#allocation7 + $0x248] sm:$0xff]
        %v403 = vld [vmem:[#allocation7 + $0x250] sm:$0xff]
        %v404 = vld [vmem:[#allocation7 + $0x258] sm:$0xff]
        %v405 = vld [vmem:[#allocation7 + $0x260] sm:$0xf]
        %v406 = vld [vmem:[#allocation7 + $0x264] sm:$0xff]
        %v407 = vld [vmem:[#allocation7 + $0x26c] sm:$0xff]
        %v408 = vld [vmem:[#allocation7 + $0x274] sm:$0xff]
        %v409 = vld [vmem:[#allocation7 + $0x27c] sm:$0xff]
        %v410 = vld [vmem:[#allocation7 + $0x284] sm:$0xf]
        %v411 = vld [vmem:[#allocation7 + $0x288] sm:$0xff]
        %v412 = vld [vmem:[#allocation7 + $0x290] sm:$0xff]
        %v413 = vld [vmem:[#allocation7 + $0x298] sm:$0xff]
        %v414 = vld [vmem:[#allocation7 + $0x2a0] sm:$0xff]
        %v415 = vld [vmem:[#allocation7 + $0x2a8] sm:$0xf]
        %v416 = vld [vmem:[#allocation7 + $0x2ac] sm:$0xff]
        %v417 = vld [vmem:[#allocation7 + $0x2b4] sm:$0xff]
        %v418 = vld [vmem:[#allocation7 + $0x2bc] sm:$0xff]
        %v419 = vld [vmem:[#allocation7 + $0x2c4] sm:$0xff]
        %v420 = vld [vmem:[#allocation7 + $0x2cc] sm:$0xf]
        %v421 = vld [vmem:[#allocation7 + $0x2d0] sm:$0xff]
        %v422 = vld [vmem:[#allocation7 + $0x2d8] sm:$0xff]
        %v423 = vld [vmem:[#allocation7 + $0x2e0] sm:$0xff]
        %v424 = vld [vmem:[#allocation7 + $0x2e8] sm:$0xff]
        %v425 = vld [vmem:[#allocation7 + $0x2f0] sm:$0xf]
        %v426 = vld [vmem:[#allocation7 + $0x2f4] sm:$0xff]
        %v427 = vld [vmem:[#allocation7 + $0x2fc] sm:$0xff]
        %v428 = vld [vmem:[#allocation7 + $0x304] sm:$0xff]
        %v429 = vld [vmem:[#allocation7 + $0x30c] sm:$0xff]
        %v430 = vld [vmem:[#allocation7 + $0x314] sm:$0xf]
        %v431 = vld [vmem:[#allocation7 + $0x318] sm:$0xff]
        %v432 = vld [vmem:[#allocation7 + $0x320] sm:$0xff]
        %v433 = vld [vmem:[#allocation7 + $0x328] sm:$0xff]
        %v434 = vld [vmem:[#allocation7 + $0x330] sm:$0xff]
        %v435 = vld [vmem:[#allocation7 + $0x338] sm:$0xf]
        %v436 = vld [vmem:[#allocation7 + $0x33c] sm:$0xff]
        %v437 = vld [vmem:[#allocation7 + $0x344] sm:$0xff]
        %v438 = vld [vmem:[#allocation7 + $0x34c] sm:$0xff]
        %v439 = vld [vmem:[#allocation7 + $0x354] sm:$0xff]
        %v440 = vld [vmem:[#allocation7 + $0x35c] sm:$0xf]
        %v441 = vld [vmem:[#allocation7 + $0x360] sm:$0xff]
        %v442 = vld [vmem:[#allocation7 + $0x368] sm:$0xff]
        %v443 = vld [vmem:[#allocation7 + $0x370] sm:$0xff]
        %v444 = vld [vmem:[#allocation7 + $0x378] sm:$0xff]
        %v445 = vld [vmem:[#allocation7 + $0x380] sm:$0xf]
        %v446 = vld [vmem:[#allocation7 + $0x384] sm:$0xff]
        %v447 = vld [vmem:[#allocation7 + $0x38c] sm:$0xff]
        %v448 = vld [vmem:[#allocation7 + $0x394] sm:$0xff]
        %v449 = vld [vmem:[#allocation7 + $0x39c] sm:$0xff]
        %v450 = vld [vmem:[#allocation7 + $0x3a4] sm:$0xf]
        %v451 = vld [vmem:[#allocation7 + $0x3a8] sm:$0xff]
        %v452 = vld [vmem:[#allocation7 + $0x3b0] sm:$0xff]
        %v453 = vld [vmem:[#allocation7 + $0x3b8] sm:$0xff]
        %v454 = vld [vmem:[#allocation7 + $0x3c0] sm:$0xff]
        %v455 = vld [vmem:[#allocation7 + $0x3c8] sm:$0xf]
        %v456 = vld [vmem:[#allocation7 + $0x3cc] sm:$0xff]
        %v457 = vld [vmem:[#allocation7 + $0x3d4] sm:$0xff]
        %v458 = vld [vmem:[#allocation7 + $0x3dc] sm:$0xff]
        %v459 = vld [vmem:[#allocation7 + $0x3e4] sm:$0xff]
        %v460 = vld [vmem:[#allocation7 + $0x3ec] sm:$0xf]
        %v461 = vld [vmem:[#allocation7 + $0x3f0] sm:$0xff]
        %v462 = vld [vmem:[#allocation7 + $0x3f8] sm:$0xff]
        %v463 = vld [vmem:[#allocation7 + $0x400] sm:$0xff]
        %v464 = vld [vmem:[#allocation7 + $0x408] sm:$0xff]
        %v465 = vld [vmem:[#allocation7 + $0x410] sm:$0xf]
        %v466 = vld [vmem:[#allocation7 + $0x414] sm:$0xff]
        %v467 = vld [vmem:[#allocation7 + $0x41c] sm:$0xff]
        %v468 = vld [vmem:[#allocation7 + $0x424] sm:$0xff]
        %v469 = vld [vmem:[#allocation7 + $0x42c] sm:$0xff]
        %v470 = vld [vmem:[#allocation7 + $0x434] sm:$0xf]
        %v471 = vld [vmem:[#allocation7 + $0x438] sm:$0xff]
        %v472 = vld [vmem:[#allocation7 + $0x440] sm:$0xff]
        %v473 = vld [vmem:[#allocation7 + $0x448] sm:$0xff]
        %v474 = vld [vmem:[#allocation7 + $0x450] sm:$0xff]
        %v475 = vld [vmem:[#allocation7 + $0x458] sm:$0xf]
        %v476 = vld [vmem:[#allocation7 + $0x45c] sm:$0xff]
        %v477 = vld [vmem:[#allocation7 + $0x464] sm:$0xff]
        %v478 = vld [vmem:[#allocation7 + $0x46c] sm:$0xff]
        %v479 = vld [vmem:[#allocation7 + $0x474] sm:$0xff]
        %v480 = vld [vmem:[#allocation7 + $0x47c] sm:$0xf]
        %v481 = vld [vmem:[#allocation7 + $0x480] sm:$0xff]
        %v482 = vld [vmem:[#allocation7 + $0x488] sm:$0xff]
        %v483 = vld [vmem:[#allocation7 + $0x490] sm:$0xff]
        %v484 = vld [vmem:[#allocation7 + $0x498] sm:$0xff]
        %v485 = vld [vmem:[#allocation7 + $0x4a0] sm:$0xf]
        %v486 = vld [vmem:[#allocation7 + $0x4a4] sm:$0xff]
        %v487 = vld [vmem:[#allocation7 + $0x4ac] sm:$0xff]
        %v488 = vld [vmem:[#allocation7 + $0x4b4] sm:$0xff]
        %v489 = vld [vmem:[#allocation7 + $0x4bc] sm:$0xff]
        %v490 = vld [vmem:[#allocation7 + $0x4c4] sm:$0xf]
        %v491 = vld [vmem:[#allocation7 + $0x4c8] sm:$0xff]
        %v492 = vld [vmem:[#allocation7 + $0x4d0] sm:$0xff]
        %v493 = vld [vmem:[#allocation7 + $0x4d8] sm:$0xff]
        %v494 = vld [vmem:[#allocation7 + $0x4e0] sm:$0xff]
        %v495 = vld [vmem:[#allocation7 + $0x4e8] sm:$0xf]
        %v496 = vld [vmem:[#allocation7 + $0x4ec] sm:$0xff]
        %v497 = vld [vmem:[#allocation7 + $0x4f4] sm:$0xff]
        %v498 = vld [vmem:[#allocation7 + $0x4fc] sm:$0xff]
        %v499 = vld [vmem:[#allocation7 + $0x504] sm:$0xff]
        %v500 = vld [vmem:[#allocation7 + $0x50c] sm:$0xf]
        %v501 = vld [vmem:[#allocation7 + $0x510] sm:$0xff]
        %v502 = vld [vmem:[#allocation7 + $0x518] sm:$0xff]
        %v503 = vld [vmem:[#allocation7 + $0x520] sm:$0xff]
        %v504 = vld [vmem:[#allocation7 + $0x528] sm:$0xff]
        %v505 = vld [vmem:[#allocation7 + $0x530] sm:$0xf]
        %v506 = vld [vmem:[#allocation7 + $0x534] sm:$0xff]
        %v507 = vld [vmem:[#allocation7 + $0x53c] sm:$0xff]
        %v508 = vld [vmem:[#allocation7 + $0x544] sm:$0xff]
        %v509 = vld [vmem:[#allocation7 + $0x54c] sm:$0xff]
        %v510 = vld [vmem:[#allocation7 + $0x554] sm:$0xf]
        %v511 = vld [vmem:[#allocation7 + $0x558] sm:$0xff]
        %v512 = vld [vmem:[#allocation7 + $0x560] sm:$0xff]
        %v513 = vld [vmem:[#allocation7 + $0x568] sm:$0xff]
        %v514 = vld [vmem:[#allocation7 + $0x570] sm:$0xff]
        %v515 = vld [vmem:[#allocation7 + $0x578] sm:$0xf]
        %v516 = vld [vmem:[#allocation7 + $0x57c] sm:$0xff]
        %v517 = vld [vmem:[#allocation7 + $0x584] sm:$0xff]
        %v518 = vld [vmem:[#allocation7 + $0x58c] sm:$0xff]
        %v519 = vld [vmem:[#allocation7 + $0x594] sm:$0xff]
        %v520 = vld [vmem:[#allocation7 + $0x59c] sm:$0xf]
        %v521 = vld [vmem:[#allocation7 + $0x5a0] sm:$0xff]
        %v522 = vld [vmem:[#allocation7 + $0x5a8] sm:$0xff]
        %v523 = vld [vmem:[#allocation7 + $0x5b0] sm:$0xff]
        %v524 = vld [vmem:[#allocation7 + $0x5b8] sm:$0xff]
        %v525 = vld [vmem:[#allocation7 + $0x5c0] sm:$0xf]
        %v526 = vld [vmem:[#allocation7 + $0x5c4] sm:$0xff]
        %v527 = vld [vmem:[#allocation7 + $0x5cc] sm:$0xff]
        %v528 = vld [vmem:[#allocation7 + $0x5d4] sm:$0xff]
        %v529 = vld [vmem:[#allocation7 + $0x5dc] sm:$0xff]
        %v530 = vld [vmem:[#allocation7 + $0x5e4] sm:$0xf]
        %v531 = vld [vmem:[#allocation7 + $0x5e8] sm:$0xff]
        %v532 = vld [vmem:[#allocation7 + $0x5f0] sm:$0xff]
        %v533 = vld [vmem:[#allocation7 + $0x5f8] sm:$0xff]
        %v534 = vld [vmem:[#allocation7 + $0x600] sm:$0xff]
        %v535 = vld [vmem:[#allocation7 + $0x608] sm:$0xf]
        %v536 = vld [vmem:[#allocation7 + $0x60c] sm:$0xff]
        %v537 = vld [vmem:[#allocation7 + $0x614] sm:$0xff]
        %v538 = vld [vmem:[#allocation7 + $0x61c] sm:$0xff]
        %v539 = vld [vmem:[#allocation7 + $0x624] sm:$0xff]
        %v540 = vld [vmem:[#allocation7 + $0x62c] sm:$0xf]
        %v541 = vld [vmem:[#allocation7 + $0x630] sm:$0xff]
        %v542 = vld [vmem:[#allocation7 + $0x638] sm:$0xff]
        %v543 = vld [vmem:[#allocation7 + $0x640] sm:$0xff]
        %v544 = vld [vmem:[#allocation7 + $0x648] sm:$0xff]
        %v545 = vld [vmem:[#allocation7 + $0x650] sm:$0xf]
        %v546 = vld [vmem:[#allocation7 + $0x654] sm:$0xff]
        %v547 = vld [vmem:[#allocation7 + $0x65c] sm:$0xff]
        %v548 = vld [vmem:[#allocation7 + $0x664] sm:$0xff]
        %v549 = vld [vmem:[#allocation7 + $0x66c] sm:$0xff]
        %v550 = vld [vmem:[#allocation7 + $0x674] sm:$0xf]
        %v551 = vld [vmem:[#allocation7 + $0x678] sm:$0xff]
        %v552 = vld [vmem:[#allocation7 + $0x680] sm:$0xff]
        %v553 = vld [vmem:[#allocation7 + $0x688] sm:$0xff]
        %v554 = vld [vmem:[#allocation7 + $0x690] sm:$0xff]
        %v555 = vld [vmem:[#allocation7 + $0x698] sm:$0xf]
        %v556 = vld [vmem:[#allocation7 + $0x69c] sm:$0xff]
        %v557 = vld [vmem:[#allocation7 + $0x6a4] sm:$0xff]
        %v558 = vld [vmem:[#allocation7 + $0x6ac] sm:$0xff]
        %v559 = vld [vmem:[#allocation7 + $0x6b4] sm:$0xff]
        %v560 = vld [vmem:[#allocation7 + $0x6bc] sm:$0xf]
        %v801 = vunpack.c.l.b16 %v321
        %v802 = vunpack.c.h.b16 %v321
        %v803 = vunpack.c.l.b16 %v322
        %v804 = vunpack.c.h.b16 %v322
        %v805 = vunpack.c.l.b16 %v323
        %v806 = vunpack.c.h.b16 %v323
        %v807 = vunpack.c.l.b16 %v324
        %v808 = vunpack.c.h.b16 %v324
        %v809 = vunpack.c.l.b16 %v325
        %v810 = vunpack.c.l.b16 %v326
        %v811 = vunpack.c.h.b16 %v326
        %v812 = vunpack.c.l.b16 %v327
        %v813 = vunpack.c.h.b16 %v327
        %v814 = vunpack.c.l.b16 %v328
        %v815 = vunpack.c.h.b16 %v328
        %v816 = vunpack.c.l.b16 %v329
        %v817 = vunpack.c.h.b16 %v329
        %v818 = vunpack.c.l.b16 %v330
        %v819 = vunpack.c.l.b16 %v331
        %v820 = vunpack.c.h.b16 %v331
        %v821 = vunpack.c.l.b16 %v332
        %v822 = vunpack.c.h.b16 %v332
        %v823 = vunpack.c.l.b16 %v333
        %v824 = vunpack.c.h.b16 %v333
        %v825 = vunpack.c.l.b16 %v334
        %v826 = vunpack.c.h.b16 %v334
        %v827 = vunpack.c.l.b16 %v335
        %v828 = vunpack.c.l.b16 %v336
        %v829 = vunpack.c.h.b16 %v336
        %v830 = vunpack.c.l.b16 %v337
        %v831 = vunpack.c.h.b16 %v337
        %v832 = vunpack.c.l.b16 %v338
        %v833 = vunpack.c.h.b16 %v338
        %v834 = vunpack.c.l.b16 %v339
        %v835 = vunpack.c.h.b16 %v339
        %v836 = vunpack.c.l.b16 %v340
        %v837 = vunpack.c.l.b16 %v341
        %v838 = vunpack.c.h.b16 %v341
        %v839 = vunpack.c.l.b16 %v342
        %v840 = vunpack.c.h.b16 %v342
        %v841 = vunpack.c.l.b16 %v343
        %v842 = vunpack.c.h.b16 %v343
        %v843 = vunpack.c.l.b16 %v344
        %v844 = vunpack.c.h.b16 %v344
        %v845 = vunpack.c.l.b16 %v345
        %v846 = vunpack.c.l.b16 %v346
        %v847 = vunpack.c.h.b16 %v346
        %v848 = vunpack.c.l.b16 %v347
        %v849 = vunpack.c.h.b16 %v347
        %v850 = vunpack.c.l.b16 %v348
        %v851 = vunpack.c.h.b16 %v348
        %v852 = vunpack.c.l.b16 %v349
        %v853 = vunpack.c.h.b16 %v349
        %v854 = vunpack.c.l.b16 %v350
        %v855 = vunpack.c.l.b16 %v351
        %v856 = vunpack.c.h.b16 %v351
        %v857 = vunpack.c.l.b16 %v352
        %v858 = vunpack.c.h.b16 %v352
        %v859 = vunpack.c.l.b16 %v353
        %v860 = vunpack.c.h.b16 %v353
        %v861 = vunpack.c.l.b16 %v354
        %v862 = vunpack.c.h.b16 %v354
        %v863 = vunpack.c.l.b16 %v355
        %v864 = vunpack.c.l.b16 %v356
        %v865 = vunpack.c.h.b16 %v356
        %v866 = vunpack.c.l.b16 %v357
        %v867 = vunpack.c.h.b16 %v357
        %v868 = vunpack.c.l.b16 %v358
        %v869 = vunpack.c.h.b16 %v358
        %v870 = vunpack.c.l.b16 %v359
        %v871 = vunpack.c.h.b16 %v359
        %v872 = vunpack.c.l.b16 %v360
        %v873 = vunpack.c.l.b16 %v361
        %v874 = vunpack.c.h.b16 %v361
        %v875 = vunpack.c.l.b16 %v362
        %v876 = vunpack.c.h.b16 %v362
        %v877 = vunpack.c.l.b16 %v363
        %v878 = vunpack.c.h.b16 %v363
        %v879 = vunpack.c.l.b16 %v364
        %v880 = vunpack.c.h.b16 %v364
        %v881 = vunpack.c.l.b16 %v365
        %v882 = vunpack.c.l.b16 %v366
        %v883 = vunpack.c.h.b16 %v366
        %v884 = vunpack.c.l.b16 %v367
        %v885 = vunpack.c.h.b16 %v367
        %v886 = vunpack.c.l.b16 %v368
        %v887 = vunpack.c.h.b16 %v368
        %v888 = vunpack.c.l.b16 %v369
        %v889 = vunpack.c.h.b16 %v369
        %v890 = vunpack.c.l.b16 %v370
        %v891 = vunpack.c.l.b16 %v371
        %v892 = vunpack.c.h.b16 %v371
        %v893 = vunpack.c.l.b16 %v372
        %v894 = vunpack.c.h.b16 %v372
        %v895 = vunpack.c.l.b16 %v373
        %v896 = vunpack.c.h.b16 %v373
        %v897 = vunpack.c.l.b16 %v374
        %v898 = vunpack.c.h.b16 %v374
        %v899 = vunpack.c.l.b16 %v375
        %v900 = vunpack.c.l.b16 %v376
        %v901 = vunpack.c.h.b16 %v376
        %v902 = vunpack.c.l.b16 %v377
        %v903 = vunpack.c.h.b16 %v377
        %v904 = vunpack.c.l.b16 %v378
        %v905 = vunpack.c.h.b16 %v378
        %v906 = vunpack.c.l.b16 %v379
        %v907 = vunpack.c.h.b16 %v379
        %v908 = vunpack.c.l.b16 %v380
        %v909 = vunpack.c.l.b16 %v381
        %v910 = vunpack.c.h.b16 %v381
        %v911 = vunpack.c.l.b16 %v382
        %v912 = vunpack.c.h.b16 %v382
        %v913 = vunpack.c.l.b16 %v383
        %v914 = vunpack.c.h.b16 %v383
        %v915 = vunpack.c.l.b16 %v384
        %v916 = vunpack.c.h.b16 %v384
        %v917 = vunpack.c.l.b16 %v385
        %v918 = vunpack.c.l.b16 %v386
        %v919 = vunpack.c.h.b16 %v386
        %v920 = vunpack.c.l.b16 %v387
        %v921 = vunpack.c.h.b16 %v387
        %v922 = vunpack.c.l.b16 %v388
        %v923 = vunpack.c.h.b16 %v388
        %v924 = vunpack.c.l.b16 %v389
        %v925 = vunpack.c.h.b16 %v389
        %v926 = vunpack.c.l.b16 %v390
        %v927 = vunpack.c.l.b16 %v391
        %v928 = vunpack.c.h.b16 %v391
        %v929 = vunpack.c.l.b16 %v392
        %v930 = vunpack.c.h.b16 %v392
        %v931 = vunpack.c.l.b16 %v393
        %v932 = vunpack.c.h.b16 %v393
        %v933 = vunpack.c.l.b16 %v394
        %v934 = vunpack.c.h.b16 %v394
        %v935 = vunpack.c.l.b16 %v395
        %v936 = vunpack.c.l.b16 %v396
        %v937 = vunpack.c.h.b16 %v396
        %v938 = vunpack.c.l.b16 %v397
        %v939 = vunpack.c.h.b16 %v397
        %v940 = vunpack.c.l.b16 %v398
        %v941 = vunpack.c.h.b16 %v398
        %v942 = vunpack.c.l.b16 %v399
        %v943 = vunpack.c.h.b16 %v399
        %v944 = vunpack.c.l.b16 %v400
        %v945 = vunpack.c.l.b16 %v401
        %v946 = vunpack.c.h.b16 %v401
        %v947 = vunpack.c.l.b16 %v402
        %v948 = vunpack.c.h.b16 %v402
        %v949 = vunpack.c.l.b16 %v403
        %v950 = vunpack.c.h.b16 %v403
        %v951 = vunpack.c.l.b16 %v404
        %v952 = vunpack.c.h.b16 %v404
        %v953 = vunpack.c.l.b16 %v405
        %v954 = vunpack.c.l.b16 %v406
        %v955 = vunpack.c.h.b16 %v406
        %v956 = vunpack.c.l.b16 %v407
        %v957 = vunpack.c.h.b16 %v407
        %v958 = vunpack.c.l.b16 %v408
        %v959 = vunpack.c.h.b16 %v408
        %v960 = vunpack.c.l.b16 %v409
        %v961 = vunpack.c.h.b16 %v409
        %v962 = vunpack.c.l.b16 %v410
        %v963 = vunpack.c.l.b16 %v411
        %v964 = vunpack.c.h.b16 %v411
        %v965 = vunpack.c.l.b16 %v412
        %v966 = vunpack.c.h.b16 %v412
        %v967 = vunpack.c.l.b16 %v413
        %v968 = vunpack.c.h.b16 %v413
        %v969 = vunpack.c.l.b16 %v414
        %v970 = vunpack.c.h.b16 %v414
        %v971 = vunpack.c.l.b16 %v415
        %v972 = vunpack.c.l.b16 %v416
        %v973 = vunpack.c.h.b16 %v416
        %v974 = vunpack.c.l.b16 %v417
        %v975 = vunpack.c.h.b16 %v417
        %v976 = vunpack.c.l.b16 %v418
        %v977 = vunpack.c.h.b16 %v418
        %v978 = vunpack.c.l.b16 %v419
        %v979 = vunpack.c.h.b16 %v419
        %v980 = vunpack.c.l.b16 %v420
        %v981 = vunpack.c.l.b16 %v421
        %v982 = vunpack.c.h.b16 %v421
        %v983 = vunpack.c.l.b16 %v422
        %v984 = vunpack.c.h.b16 %v422
        %v985 = vunpack.c.l.b16 %v423
        %v986 = vunpack.c.h.b16 %v423
        %v987 = vunpack.c.l.b16 %v424
        %v988 = vunpack.c.h.b16 %v424
        %v989 = vunpack.c.l.b16 %v425
        %v990 = vunpack.c.l.b16 %v426
        %v991 = vunpack.c.h.b16 %v426
        %v992 = vunpack.c.l.b16 %v427
        %v993 = vunpack.c.h.b16 %v427
        %v994 = vunpack.c.l.b16 %v428
        %v995 = vunpack.c.h.b16 %v428
        %v996 = vunpack.c.l.b16 %v429
        %v997 = vunpack.c.h.b16 %v429
        %v998 = vunpack.c.l.b16 %v430
        %v999 = vunpack.c.l.b16 %v431
        %v1000 = vunpack.c.h.b16 %v431
        %v1001 = vunpack.c.l.b16 %v432
        %v1002 = vunpack.c.h.b16 %v432
        %v1003 = vunpack.c.l.b16 %v433
        %v1004 = vunpack.c.h.b16 %v433
        %v1005 = vunpack.c.l.b16 %v434
        %v1006 = vunpack.c.h.b16 %v434
        %v1007 = vunpack.c.l.b16 %v435
        %v1008 = vunpack.c.l.b16 %v436
        %v1009 = vunpack.c.h.b16 %v436
        %v1010 = vunpack.c.l.b16 %v437
        %v1011 = vunpack.c.h.b16 %v437
        %v1012 = vunpack.c.l.b16 %v438
        %v1013 = vunpack.c.h.b16 %v438
        %v1014 = vunpack.c.l.b16 %v439
        %v1015 = vunpack.c.h.b16 %v439
        %v1016 = vunpack.c.l.b16 %v440
        %v1017 = vunpack.c.l.b16 %v441
        %v1018 = vunpack.c.h.b16 %v441
        %v1019 = vunpack.c.l.b16 %v442
        %v1020 = vunpack.c.h.b16 %v442
        %v1021 = vunpack.c.l.b16 %v443
        %v1022 = vunpack.c.h.b16 %v443
        %v1023 = vunpack.c.l.b16 %v444
        %v1024 = vunpack.c.h.b16 %v444
        %v1025 = vunpack.c.l.b16 %v445
        %v1026 = vunpack.c.l.b16 %v446
        %v1027 = vunpack.c.h.b16 %v446
        %v1028 = vunpack.c.l.b16 %v447
        %v1029 = vunpack.c.h.b16 %v447
        %v1030 = vunpack.c.l.b16 %v448
        %v1031 = vunpack.c.h.b16 %v448
        %v1032 = vunpack.c.l.b16 %v449
        %v1033 = vunpack.c.h.b16 %v449
        %v1034 = vunpack.c.l.b16 %v450
        %v1035 = vunpack.c.l.b16 %v451
        %v1036 = vunpack.c.h.b16 %v451
        %v1037 = vunpack.c.l.b16 %v452
        %v1038 = vunpack.c.h.b16 %v452
        %v1039 = vunpack.c.l.b16 %v453
        %v1040 = vunpack.c.h.b16 %v453
        %v1041 = vunpack.c.l.b16 %v454
        %v1042 = vunpack.c.h.b16 %v454
        %v1043 = vunpack.c.l.b16 %v455
        %v1044 = vunpack.c.l.b16 %v456
        %v1045 = vunpack.c.h.b16 %v456
        %v1046 = vunpack.c.l.b16 %v457
        %v1047 = vunpack.c.h.b16 %v457
        %v1048 = vunpack.c.l.b16 %v458
        %v1049 = vunpack.c.h.b16 %v458
        %v1050 = vunpack.c.l.b16 %v459
        %v1051 = vunpack.c.h.b16 %v459
        %v1052 = vunpack.c.l.b16 %v460
        %v1053 = vunpack.c.l.b16 %v461
        %v1054 = vunpack.c.h.b16 %v461
        %v1055 = vunpack.c.l.b16 %v462
        %v1056 = vunpack.c.h.b16 %v462
        %v1057 = vunpack.c.l.b16 %v463
        %v1058 = vunpack.c.h.b16 %v463
        %v1059 = vunpack.c.l.b16 %v464
        %v1060 = vunpack.c.h.b16 %v464
        %v1061 = vunpack.c.l.b16 %v465
        %v1062 = vunpack.c.l.b16 %v466
        %v1063 = vunpack.c.h.b16 %v466
        %v1064 = vunpack.c.l.b16 %v467
        %v1065 = vunpack.c.h.b16 %v467
        %v1066 = vunpack.c.l.b16 %v468
        %v1067 = vunpack.c.h.b16 %v468
        %v1068 = vunpack.c.l.b16 %v469
        %v1069 = vunpack.c.h.b16 %v469
        %v1070 = vunpack.c.l.b16 %v470
        %v1071 = vunpack.c.l.b16 %v471
        %v1072 = vunpack.c.h.b16 %v471
        %v1073 = vunpack.c.l.b16 %v472
        %v1074 = vunpack.c.h.b16 %v472
        %v1075 = vunpack.c.l.b16 %v473
        %v1076 = vunpack.c.h.b16 %v473
        %v1077 = vunpack.c.l.b16 %v474
        %v1078 = vunpack.c.h.b16 %v474
        %v1079 = vunpack.c.l.b16 %v475
        %v1080 = vunpack.c.l.b16 %v476
        %v1081 = vunpack.c.h.b16 %v476
        %v1082 = vunpack.c.l.b16 %v477
        %v1083 = vunpack.c.h.b16 %v477
        %v1084 = vunpack.c.l.b16 %v478
        %v1085 = vunpack.c.h.b16 %v478
        %v1086 = vunpack.c.l.b16 %v479
        %v1087 = vunpack.c.h.b16 %v479
        %v1088 = vunpack.c.l.b16 %v480
        %v1089 = vunpack.c.l.b16 %v481
        %v1090 = vunpack.c.h.b16 %v481
        %v1091 = vunpack.c.l.b16 %v482
        %v1092 = vunpack.c.h.b16 %v482
        %v1093 = vunpack.c.l.b16 %v483
        %v1094 = vunpack.c.h.b16 %v483
        %v1095 = vunpack.c.l.b16 %v484
        %v1096 = vunpack.c.h.b16 %v484
        %v1097 = vunpack.c.l.b16 %v485
        %v1098 = vunpack.c.l.b16 %v486
        %v1099 = vunpack.c.h.b16 %v486
        %v1100 = vunpack.c.l.b16 %v487
        %v1101 = vunpack.c.h.b16 %v487
        %v1102 = vunpack.c.l.b16 %v488
        %v1103 = vunpack.c.h.b16 %v488
        %v1104 = vunpack.c.l.b16 %v489
        %v1105 = vunpack.c.h.b16 %v489
        %v1106 = vunpack.c.l.b16 %v490
        %v1107 = vunpack.c.l.b16 %v491
        %v1108 = vunpack.c.h.b16 %v491
        %v1109 = vunpack.c.l.b16 %v492
        %v1110 = vunpack.c.h.b16 %v492
        %v1111 = vunpack.c.l.b16 %v493
        %v1112 = vunpack.c.h.b16 %v493
        %v1113 = vunpack.c.l.b16 %v494
        %v1114 = vunpack.c.h.b16 %v494
        %v1115 = vunpack.c.l.b16 %v495
        %v1116 = vunpack.c.l.b16 %v496
        %v1117 = vunpack.c.h.b16 %v496
        %v1118 = vunpack.c.l.b16 %v497
        %v1119 = vunpack.c.h.b16 %v497
        %v1120 = vunpack.c.l.b16 %v498
        %v1121 = vunpack.c.h.b16 %v498
        %v1122 = vunpack.c.l.b16 %v499
        %v1123 = vunpack.c.h.b16 %v499
        %v1124 = vunpack.c.l.b16 %v500
        %v1125 = vunpack.c.l.b16 %v501
        %v1126 = vunpack.c.h.b16 %v501
        %v1127 = vunpack.c.l.b16 %v502
        %v1128 = vunpack.c.h.b16 %v502
        %v1129 = vunpack.c.l.b16 %v503
        %v1130 = vunpack.c.h.b16 %v503
        %v1131 = vunpack.c.l.b16 %v504
        %v1132 = vunpack.c.h.b16 %v504
        %v1133 = vunpack.c.l.b16 %v505
        %v1134 = vunpack.c.l.b16 %v506
        %v1135 = vunpack.c.h.b16 %v506
        %v1136 = vunpack.c.l.b16 %v507
        %v1137 = vunpack.c.h.b16 %v507
        %v1138 = vunpack.c.l.b16 %v508
        %v1139 = vunpack.c.h.b16 %v508
        %v1140 = vunpack.c.l.b16 %v509
        %v1141 = vunpack.c.h.b16 %v509
        %v1142 = vunpack.c.l.b16 %v510
        %v1143 = vunpack.c.l.b16 %v511
        %v1144 = vunpack.c.h.b16 %v511
        %v1145 = vunpack.c.l.b16 %v512
        %v1146 = vunpack.c.h.b16 %v512
        %v1147 = vunpack.c.l.b16 %v513
        %v1148 = vunpack.c.h.b16 %v513
        %v1149 = vunpack.c.l.b16 %v514
        %v1150 = vunpack.c.h.b16 %v514
        %v1151 = vunpack.c.l.b16 %v515
        %v1152 = vunpack.c.l.b16 %v516
        %v1153 = vunpack.c.h.b16 %v516
        %v1154 = vunpack.c.l.b16 %v517
        %v1155 = vunpack.c.h.b16 %v517
        %v1156 = vunpack.c.l.b16 %v518
        %v1157 = vunpack.c.h.b16 %v518
        %v1158 = vunpack.c.l.b16 %v519
        %v1159 = vunpack.c.h.b16 %v519
        %v1160 = vunpack.c.l.b16 %v520
        %v1161 = vunpack.c.l.b16 %v521
        %v1162 = vunpack.c.h.b16 %v521
        %v1163 = vunpack.c.l.b16 %v522
        %v1164 = vunpack.c.h.b16 %v522
        %v1165 = vunpack.c.l.b16 %v523
        %v1166 = vunpack.c.h.b16 %v523
        %v1167 = vunpack.c.l.b16 %v524
        %v1168 = vunpack.c.h.b16 %v524
        %v1169 = vunpack.c.l.b16 %v525
        %v1170 = vunpack.c.l.b16 %v526
        %v1171 = vunpack.c.h.b16 %v526
        %v1172 = vunpack.c.l.b16 %v527
        %v1173 = vunpack.c.h.b16 %v527
        %v1174 = vunpack.c.l.b16 %v528
        %v1175 = vunpack.c.h.b16 %v528
        %v1176 = vunpack.c.l.b16 %v529
        %v1177 = vunpack.c.h.b16 %v529
        %v1178 = vunpack.c.l.b16 %v530
        %v1179 = vunpack.c.l.b16 %v531
        %v1180 = vunpack.c.h.b16 %v531
        %v1181 = vunpack.c.l.b16 %v532
        %v1182 = vunpack.c.h.b16 %v532
        %v1183 = vunpack.c.l.b16 %v533
        %v1184 = vunpack.c.h.b16 %v533
        %v1185 = vunpack.c.l.b16 %v534
        %v1186 = vunpack.c.h.b16 %v534
        %v1187 = vunpack.c.l.b16 %v535
        %v1188 = vunpack.c.l.b16 %v536
        %v1189 = vunpack.c.h.b16 %v536
        %v1190 = vunpack.c.l.b16 %v537
        %v1191 = vunpack.c.h.b16 %v537
        %v1192 = vunpack.c.l.b16 %v538
        %v1193 = vunpack.c.h.b16 %v538
        %v1194 = vunpack.c.l.b16 %v539
        %v1195 = vunpack.c.h.b16 %v539
        %v1196 = vunpack.c.l.b16 %v540
        %v1197 = vunpack.c.l.b16 %v541
        %v1198 = vunpack.c.h.b16 %v541
        %v1199 = vunpack.c.l.b16 %v542
        %v1200 = vunpack.c.h.b16 %v542
        %v1201 = vunpack.c.l.b16 %v543
        %v1202 = vunpack.c.h.b16 %v543
        %v1203 = vunpack.c.l.b16 %v544
        %v1204 = vunpack.c.h.b16 %v544
        %v1205 = vunpack.c.l.b16 %v545
        %v1206 = vunpack.c.l.b16 %v546
        %v1207 = vunpack.c.h.b16 %v546
        %v1208 = vunpack.c.l.b16 %v547
        %v1209 = vunpack.c.h.b16 %v547
        %v1210 = vunpack.c.l.b16 %v548
        %v1211 = vunpack.c.h.b16 %v548
        %v1212 = vunpack.c.l.b16 %v549
        %v1213 = vunpack.c.h.b16 %v549
        %v1214 = vunpack.c.l.b16 %v550
        %v1215 = vunpack.c.l.b16 %v551
        %v1216 = vunpack.c.h.b16 %v551
        %v1217 = vunpack.c.l.b16 %v552
        %v1218 = vunpack.c.h.b16 %v552
        %v1219 = vunpack.c.l.b16 %v553
        %v1220 = vunpack.c.h.b16 %v553
        %v1221 = vunpack.c.l.b16 %v554
        %v1222 = vunpack.c.h.b16 %v554
        %v1223 = vunpack.c.l.b16 %v555
        %v1224 = vunpack.c.l.b16 %v556
        %v1225 = vunpack.c.h.b16 %v556
        %v1226 = vunpack.c.l.b16 %v557
        %v1227 = vunpack.c.h.b16 %v557
        %v1228 = vunpack.c.l.b16 %v558
        %v1229 = vunpack.c.h.b16 %v558
        %v1230 = vunpack.c.l.b16 %v559
        %v1231 = vunpack.c.h.b16 %v559
        %v1232 = vunpack.c.l.b16 %v560
        %v1233 = vpack.c.b16 %v810, %v801
        %v1234 = vpack.c.b16 %v811, %v802
        %v1235 = vpack.c.b16 %v812, %v803
        %v1236 = vpack.c.b16 %v813, %v804
        %v1237 = vpack.c.b16 %v814, %v805
        %v1238 = vpack.c.b16 %v815, %v806
        %v1239 = vpack.c.b16 %v816, %v807
        %v1240 = vpack.c.b16 %v817, %v808
        %v1241 = vpack.c.b16 %v818, %v809
        %v1242 = vpack.c.b16 %v828, %v819
        %v1243 = vpack.c.b16 %v829, %v820
        %v1244 = vpack.c.b16 %v830, %v821
        %v1245 = vpack.c.b16 %v831, %v822
        %v1246 = vpack.c.b16 %v832, %v823
        %v1247 = vpack.c.b16 %v833, %v824
        %v1248 = vpack.c.b16 %v834, %v825
        %v1249 = vpack.c.b16 %v835, %v826
        %v1250 = vpack.c.b16 %v836, %v827
        %v1251 = vpack.c.b16 %v846, %v837
        %v1252 = vpack.c.b16 %v847, %v838
        %v1253 = vpack.c.b16 %v848, %v839
        %v1254 = vpack.c.b16 %v849, %v840
        %v1255 = vpack.c.b16 %v850, %v841
        %v1256 = vpack.c.b16 %v851, %v842
        %v1257 = vpack.c.b16 %v852, %v843
        %v1258 = vpack.c.b16 %v853, %v844
        %v1259 = vpack.c.b16 %v854, %v845
        %v1260 = vpack.c.b16 %v864, %v855
        %v1261 = vpack.c.b16 %v865, %v856
        %v1262 = vpack.c.b16 %v866, %v857
        %v1263 = vpack.c.b16 %v867, %v858
        %v1264 = vpack.c.b16 %v868, %v859
        %v1265 = vpack.c.b16 %v869, %v860
        %v1266 = vpack.c.b16 %v870, %v861
        %v1267 = vpack.c.b16 %v871, %v862
        %v1268 = vpack.c.b16 %v872, %v863
        %v1269 = vpack.c.b16 %v882, %v873
        %v1270 = vpack.c.b16 %v883, %v874
        %v1271 = vpack.c.b16 %v884, %v875
        %v1272 = vpack.c.b16 %v885, %v876
        %v1273 = vpack.c.b16 %v886, %v877
        %v1274 = vpack.c.b16 %v887, %v878
        %v1275 = vpack.c.b16 %v888, %v879
        %v1276 = vpack.c.b16 %v889, %v880
        %v1277 = vpack.c.b16 %v890, %v881
        %v1278 = vpack.c.b16 %v900, %v891
        %v1279 = vpack.c.b16 %v901, %v892
        %v1280 = vpack.c.b16 %v902, %v893
        %v1281 = vpack.c.b16 %v903, %v894
        %v1282 = vpack.c.b16 %v904, %v895
        %v1283 = vpack.c.b16 %v905, %v896
        %v1284 = vpack.c.b16 %v906, %v897
        %v1285 = vpack.c.b16 %v907, %v898
        %v1286 = vpack.c.b16 %v908, %v899
        %v1287 = vpack.c.b16 %v918, %v909
        %v1288 = vpack.c.b16 %v919, %v910
        %v1289 = vpack.c.b16 %v920, %v911
        %v1290 = vpack.c.b16 %v921, %v912
        %v1291 = vpack.c.b16 %v922, %v913
        %v1292 = vpack.c.b16 %v923, %v914
        %v1293 = vpack.c.b16 %v924, %v915
        %v1294 = vpack.c.b16 %v925, %v916
        %v1295 = vpack.c.b16 %v926, %v917
        %v1296 = vpack.c.b16 %v936, %v927
        %v1297 = vpack.c.b16 %v937, %v928
        %v1298 = vpack.c.b16 %v938, %v929
        %v1299 = vpack.c.b16 %v939, %v930
        %v1300 = vpack.c.b16 %v940, %v931
        %v1301 = vpack.c.b16 %v941, %v932
        %v1302 = vpack.c.b16 %v942, %v933
        %v1303 = vpack.c.b16 %v943, %v934
        %v1304 = vpack.c.b16 %v944, %v935
        %v1305 = vpack.c.b16 %v954, %v945
        %v1306 = vpack.c.b16 %v955, %v946
        %v1307 = vpack.c.b16 %v956, %v947
        %v1308 = vpack.c.b16 %v957, %v948
        %v1309 = vpack.c.b16 %v958, %v949
        %v1310 = vpack.c.b16 %v959, %v950
        %v1311 = vpack.c.b16 %v960, %v951
        %v1312 = vpack.c.b16 %v961, %v952
        %v1313 = vpack.c.b16 %v962, %v953
        %v1314 = vpack.c.b16 %v972, %v963
        %v1315 = vpack.c.b16 %v973, %v964
        %v1316 = vpack.c.b16 %v974, %v965
        %v1317 = vpack.c.b16 %v975, %v966
        %v1318 = vpack.c.b16 %v976, %v967
        %v1319 = vpack.c.b16 %v977, %v968
        %v1320 = vpack.c.b16 %v978, %v969
        %v1321 = vpack.c.b16 %v979, %v970
        %v1322 = vpack.c.b16 %v980, %v971
        %v1323 = vpack.c.b16 %v990, %v981
        %v1324 = vpack.c.b16 %v991, %v982
        %v1325 = vpack.c.b16 %v992, %v983
        %v1326 = vpack.c.b16 %v993, %v984
        %v1327 = vpack.c.b16 %v994, %v985
        %v1328 = vpack.c.b16 %v995, %v986
        %v1329 = vpack.c.b16 %v996, %v987
        %v1330 = vpack.c.b16 %v997, %v988
        %v1331 = vpack.c.b16 %v998, %v989
        %v1332 = vpack.c.b16 %v1008, %v999
        %v1333 = vpack.c.b16 %v1009, %v1000
        %v1334 = vpack.c.b16 %v1010, %v1001
        %v1335 = vpack.c.b16 %v1011, %v1002
        %v1336 = vpack.c.b16 %v1012, %v1003
        %v1337 = vpack.c.b16 %v1013, %v1004
        %v1338 = vpack.c.b16 %v1014, %v1005
        %v1339 = vpack.c.b16 %v1015, %v1006
        %v1340 = vpack.c.b16 %v1016, %v1007
        %v1341 = vpack.c.b16 %v1026, %v1017
        %v1342 = vpack.c.b16 %v1027, %v1018
        %v1343 = vpack.c.b16 %v1028, %v1019
        %v1344 = vpack.c.b16 %v1029, %v1020
        %v1345 = vpack.c.b16 %v1030, %v1021
        %v1346 = vpack.c.b16 %v1031, %v1022
        %v1347 = vpack.c.b16 %v1032, %v1023
        %v1348 = vpack.c.b16 %v1033, %v1024
        %v1349 = vpack.c.b16 %v1034, %v1025
        %v1350 = vpack.c.b16 %v1044, %v1035
        %v1351 = vpack.c.b16 %v1045, %v1036
        %v1352 = vpack.c.b16 %v1046, %v1037
        %v1353 = vpack.c.b16 %v1047, %v1038
        %v1354 = vpack.c.b16 %v1048, %v1039
        %v1355 = vpack.c.b16 %v1049, %v1040
        %v1356 = vpack.c.b16 %v1050, %v1041
        %v1357 = vpack.c.b16 %v1051, %v1042
        %v1358 = vpack.c.b16 %v1052, %v1043
        %v1359 = vpack.c.b16 %v1062, %v1053
        %v1360 = vpack.c.b16 %v1063, %v1054
        %v1361 = vpack.c.b16 %v1064, %v1055
        %v1362 = vpack.c.b16 %v1065, %v1056
        %v1363 = vpack.c.b16 %v1066, %v1057
        %v1364 = vpack.c.b16 %v1067, %v1058
        %v1365 = vpack.c.b16 %v1068, %v1059
        %v1366 = vpack.c.b16 %v1069, %v1060
        %v1367 = vpack.c.b16 %v1070, %v1061
        %v1368 = vpack.c.b16 %v1080, %v1071
        %v1369 = vpack.c.b16 %v1081, %v1072
        %v1370 = vpack.c.b16 %v1082, %v1073
        %v1371 = vpack.c.b16 %v1083, %v1074
        %v1372 = vpack.c.b16 %v1084, %v1075
        %v1373 = vpack.c.b16 %v1085, %v1076
        %v1374 = vpack.c.b16 %v1086, %v1077
        %v1375 = vpack.c.b16 %v1087, %v1078
        %v1376 = vpack.c.b16 %v1088, %v1079
        %v1377 = vpack.c.b16 %v1098, %v1089
        %v1378 = vpack.c.b16 %v1099, %v1090
        %v1379 = vpack.c.b16 %v1100, %v1091
        %v1380 = vpack.c.b16 %v1101, %v1092
        %v1381 = vpack.c.b16 %v1102, %v1093
        %v1382 = vpack.c.b16 %v1103, %v1094
        %v1383 = vpack.c.b16 %v1104, %v1095
        %v1384 = vpack.c.b16 %v1105, %v1096
        %v1385 = vpack.c.b16 %v1106, %v1097
        %v1386 = vpack.c.b16 %v1116, %v1107
        %v1387 = vpack.c.b16 %v1117, %v1108
        %v1388 = vpack.c.b16 %v1118, %v1109
        %v1389 = vpack.c.b16 %v1119, %v1110
        %v1390 = vpack.c.b16 %v1120, %v1111
        %v1391 = vpack.c.b16 %v1121, %v1112
        %v1392 = vpack.c.b16 %v1122, %v1113
        %v1393 = vpack.c.b16 %v1123, %v1114
        %v1394 = vpack.c.b16 %v1124, %v1115
        %v1395 = vpack.c.b16 %v1134, %v1125
        %v1396 = vpack.c.b16 %v1135, %v1126
        %v1397 = vpack.c.b16 %v1136, %v1127
        %v1398 = vpack.c.b16 %v1137, %v1128
        %v1399 = vpack.c.b16 %v1138, %v1129
        %v1400 = vpack.c.b16 %v1139, %v1130
        %v1401 = vpack.c.b16 %v1140, %v1131
        %v1402 = vpack.c.b16 %v1141, %v1132
        %v1403 = vpack.c.b16 %v1142, %v1133
        %v1404 = vpack.c.b16 %v1152, %v1143
        %v1405 = vpack.c.b16 %v1153, %v1144
        %v1406 = vpack.c.b16 %v1154, %v1145
        %v1407 = vpack.c.b16 %v1155, %v1146
        %v1408 = vpack.c.b16 %v1156, %v1147
        %v1409 = vpack.c.b16 %v1157, %v1148
        %v1410 = vpack.c.b16 %v1158, %v1149
        %v1411 = vpack.c.b16 %v1159, %v1150
        %v1412 = vpack.c.b16 %v1160, %v1151
        %v1413 = vpack.c.b16 %v1170, %v1161
        %v1414 = vpack.c.b16 %v1171, %v1162
        %v1415 = vpack.c.b16 %v1172, %v1163
        %v1416 = vpack.c.b16 %v1173, %v1164
        %v1417 = vpack.c.b16 %v1174, %v1165
        %v1418 = vpack.c.b16 %v1175, %v1166
        %v1419 = vpack.c.b16 %v1176, %v1167
        %v1420 = vpack.c.b16 %v1177, %v1168
        %v1421 = vpack.c.b16 %v1178, %v1169
        %v1422 = vpack.c.b16 %v1188, %v1179
        %v1423 = vpack.c.b16 %v1189, %v1180
        %v1424 = vpack.c.b16 %v1190, %v1181
        %v1425 = vpack.c.b16 %v1191, %v1182
        %v1426 = vpack.c.b16 %v1192, %v1183
        %v1427 = vpack.c.b16 %v1193, %v1184
        %v1428 = vpack.c.b16 %v1194, %v1185
        %v1429 = vpack.c.b16 %v1195, %v1186
        %v1430 = vpack.c.b16 %v1196, %v1187
        %v1431 = vpack.c.b16 %v1206, %v1197
        %v1432 = vpack.c.b16 %v1207, %v1198
        %v1433 = vpack.c.b16 %v1208, %v1199
        %v1434 = vpack.c.b16 %v1209, %v1200
        %v1435 = vpack.c.b16 %v1210, %v1201
        %v1436 = vpack.c.b16 %v1211, %v1202
        %v1437 = vpack.c.b16 %v1212, %v1203
        %v1438 = vpack.c.b16 %v1213, %v1204
        %v1439 = vpack.c.b16 %v1214, %v1205
        %v1440 = vpack.c.b16 %v1224, %v1215
        %v1441 = vpack.c.b16 %v1225, %v1216
        %v1442 = vpack.c.b16 %v1226, %v1217
        %v1443 = vpack.c.b16 %v1227, %v1218
        %v1444 = vpack.c.b16 %v1228, %v1219
        %v1445 = vpack.c.b16 %v1229, %v1220
        %v1446 = vpack.c.b16 %v1230, %v1221
        %v1447 = vpack.c.b16 %v1231, %v1222
        %v1448 = vpack.c.b16 %v1232, %v1223
        %1665 = vmatprep.subr.bf16.mxu0 %v1297
        %1666 = vmatpush1.bf16.msra.mxu0 %v1296
        %1667 = vmatprep.subr.bf16.mxu0 %v1288
        %1668 = vmatpush1.bf16.msra.mxu0 %v1287
        %1669 = vmatprep.subr.bf16.mxu0 %v1279
        %1670 = vmatpush1.bf16.msra.mxu0 %v1278
        %1671 = vmatprep.subr.bf16.mxu0 %v1270
        %1672 = vmatpush1.bf16.msra.mxu0 %v1269
        %1673 = vmatprep.subr.bf16.mxu0 %v1261
        %1674 = vmatpush1.bf16.msra.mxu0 %v1260
        %1675 = vmatprep.subr.bf16.mxu0 %v1252
        %1676 = vmatpush1.bf16.msra.mxu0 %v1251
        %1677 = vmatprep.subr.bf16.mxu0 %v1243
        %1678 = vmatpush1.bf16.msra.mxu0 %v1242
        %1679 = vmatprep.subr.bf16.mxu0 %v1234
        %1680 = vmatpush1.bf16.msra.mxu0 %v1233
        %1681 = vmatprep.subr.bf16.mxu0 %v1369
        %1682 = vmatpush2.bf16.msra.mxu0 %v1368
        %1683 = vmatprep.subr.bf16.mxu0 %v1360
        %1684 = vmatpush2.bf16.msra.mxu0 %v1359
        %1685 = vmatprep.subr.bf16.mxu0 %v1351
        %1686 = vmatpush2.bf16.msra.mxu0 %v1350
        %1687 = vmatprep.subr.bf16.mxu0 %v1342
        %1688 = vmatpush2.bf16.msra.mxu0 %v1341
        %1689 = vmatprep.subr.bf16.mxu0 %v1333
        %1690 = vmatpush2.bf16.msra.mxu0 %v1332
        %1691 = vmatprep.subr.bf16.mxu0 %v1324
        %1692 = vmatpush2.bf16.msra.mxu0 %v1323
        %1693 = vmatprep.subr.bf16.mxu0 %v1315
        %1694 = vmatpush2.bf16.msra.mxu0 %v1314
        %1695 = vmatprep.subr.bf16.mxu0 %v1306
        %1696 = vmatpush2.bf16.msra.mxu0 %v1305
        %1697 = vmatprep.mubr.bf16.mxu0 %v298
        %1698 = vmatmul.mubr.bf16.gmra.mxu0 %v297
        %v1699 = vpop.f32.mrf.mxu0
        %v1700 = vadd.f32 0.0, %v1699
        %v1701 = vpop.f32.mrf.mxu0
        %v1702 = vadd.f32 0.0, %v1701
        %v1703 = vpop.f32.mrf.mxu0
        %v1704 = vadd.f32 0.0, %v1703
        %v1705 = vpop.f32.mrf.mxu0
        %v1706 = vadd.f32 0.0, %v1705
        %1707 = vmatprep.mubr.bf16.mxu0 %v301
        %1708 = vmatmul.mubr.bf16.gmra.mxu0 %v300
        %v1709 = vpop.f32.mrf.mxu0
        %v1710 = vadd.f32 0.0, %v1709
        %v1711 = vpop.f32.mrf.mxu0
        %v1712 = vadd.f32 0.0, %v1711
        %v1713 = vpop.f32.mrf.mxu0
        %v1714 = vadd.f32 0.0, %v1713
        %v1715 = vpop.f32.mrf.mxu0
        %v1716 = vadd.f32 0.0, %v1715
        %1717 = vmatprep.mubr.bf16.mxu0 %v304
        %1718 = vmatmul.mubr.bf16.gmra.mxu0 %v303
        %v1719 = vpop.f32.mrf.mxu0
        %v1720 = vadd.f32 0.0, %v1719
        %v1721 = vpop.f32.mrf.mxu0
        %v1722 = vadd.f32 0.0, %v1721
        %v1723 = vpop.f32.mrf.mxu0
        %v1724 = vadd.f32 0.0, %v1723
        %v1725 = vpop.f32.mrf.mxu0
        %v1726 = vadd.f32 0.0, %v1725
        %1727 = vmatprep.mubr.bf16.mxu0 %v307
        %1728 = vmatmul.mubr.bf16.gmra.mxu0 %v306
        %v1729 = vpop.f32.mrf.mxu0
        %v1730 = vadd.f32 0.0, %v1729
        %v1731 = vpop.f32.mrf.mxu0
        %v1732 = vadd.f32 0.0, %v1731
        %v1733 = vpop.f32.mrf.mxu0
        %v1734 = vadd.f32 0.0, %v1733
        %v1735 = vpop.f32.mrf.mxu0
        %v1736 = vadd.f32 0.0, %v1735
        %1737 = vmatprep.mubr.bf16.mxu0 %v310
        %1738 = vmatmul.mubr.bf16.gmra.mxu0 %v309
        %v1739 = vpop.f32.mrf.mxu0
        %v1740 = vadd.f32 0.0, %v1739
        %v1741 = vpop.f32.mrf.mxu0
        %v1742 = vadd.f32 0.0, %v1741
        %v1743 = vpop.f32.mrf.mxu0
        %v1744 = vadd.f32 0.0, %v1743
        %v1745 = vpop.f32.mrf.mxu0
        %v1746 = vadd.f32 0.0, %v1745
        %1747 = vmatprep.mubr.bf16.mxu0 %v313
        %1748 = vmatmul.mubr.bf16.gmra.mxu0 %v312
        %v1749 = vpop.f32.mrf.mxu0
        %v1750 = vadd.f32 0.0, %v1749
        %v1751 = vpop.f32.mrf.mxu0
        %v1752 = vadd.f32 0.0, %v1751
        %v1753 = vpop.f32.mrf.mxu0
        %v1754 = vadd.f32 0.0, %v1753
        %v1755 = vpop.f32.mrf.mxu0
        %v1756 = vadd.f32 0.0, %v1755
        %1757 = vmatprep.mubr.bf16.mxu0 %v316
        %1758 = vmatmul.mubr.bf16.gmra.mxu0 %v315
        %v1759 = vpop.f32.mrf.mxu0
        %v1760 = vadd.f32 0.0, %v1759
        %v1761 = vpop.f32.mrf.mxu0
        %v1762 = vadd.f32 0.0, %v1761
        %v1763 = vpop.f32.mrf.mxu0
        %v1764 = vadd.f32 0.0, %v1763
        %v1765 = vpop.f32.mrf.mxu0
        %v1766 = vadd.f32 0.0, %v1765
        %1767 = vmatprep.mubr.bf16.mxu0 %v319
        %1768 = vmatmul.mubr.bf16.gmra.mxu0 %v318
        %v1769 = vpop.f32.mrf.mxu0
        %v1770 = vadd.f32 0.0, %v1769
        %v1771 = vpop.f32.mrf.mxu0
        %v1772 = vadd.f32 0.0, %v1771
        %v1773 = vpop.f32.mrf.mxu0
        %v1774 = vadd.f32 0.0, %v1773
        %v1775 = vpop.f32.mrf.mxu0
        %v1776 = vadd.f32 0.0, %v1775
        %1777 = vdwg.mxu0
        %1778 = vmatprep.subr.bf16.mxu0 %v1441
        %1779 = vmatpush1.bf16.msra.mxu0 %v1440
        %1780 = vmatprep.subr.bf16.mxu0 %v1432
        %1781 = vmatpush1.bf16.msra.mxu0 %v1431
        %1782 = vmatprep.subr.bf16.mxu0 %v1423
        %1783 = vmatpush1.bf16.msra.mxu0 %v1422
        %1784 = vmatprep.subr.bf16.mxu0 %v1414
        %1785 = vmatpush1.bf16.msra.mxu0 %v1413
        %1786 = vmatprep.subr.bf16.mxu0 %v1405
        %1787 = vmatpush1.bf16.msra.mxu0 %v1404
        %1788 = vmatprep.subr.bf16.mxu0 %v1396
        %1789 = vmatpush1.bf16.msra.mxu0 %v1395
        %1790 = vmatprep.subr.bf16.mxu0 %v1387
        %1791 = vmatpush1.bf16.msra.mxu0 %v1386
        %1792 = vmatprep.subr.bf16.mxu0 %v1378
        %1793 = vmatpush1.bf16.msra.mxu0 %v1377
        %1794 = vmatprep.subr.bf16.mxu0 0
        %1795 = vmatpush2.bf16.msra.mxu0 0
        %1796 = vmatprep.subr.bf16.mxu0 0
        %1797 = vmatpush2.bf16.msra.mxu0 0
        %1798 = vmatprep.subr.bf16.mxu0 0
        %1799 = vmatpush2.bf16.msra.mxu0 0
        %1800 = vmatprep.subr.bf16.mxu0 0
        %1801 = vmatpush2.bf16.msra.mxu0 0
        %1802 = vmatprep.subr.bf16.mxu0 0
        %1803 = vmatpush2.bf16.msra.mxu0 0
        %1804 = vmatprep.subr.bf16.mxu0 0
        %1805 = vmatpush2.bf16.msra.mxu0 0
        %1806 = vmatprep.subr.bf16.mxu0 0
        %1807 = vmatpush2.bf16.msra.mxu0 0
        %1808 = vmatprep.subr.bf16.mxu0 0
        %1809 = vmatpush2.bf16.msra.mxu0 0
        %1810 = vmatprep.mubr.bf16.mxu0 0
        %1811 = vmatmul.mubr.bf16.gmra.mxu0 %v299
        %v1812 = vpop.f32.mrf.mxu0
        %v1813 = vadd.f32 %v1700, %v1812
        %v1814 = vpop.f32.mrf.mxu0
        %v1815 = vadd.f32 %v1702, %v1814
        %v1816 = vpop.f32.mrf.mxu0
        %v1817 = vadd.f32 %v1704, %v1816
        %v1818 = vpop.f32.mrf.mxu0
        %v1819 = vadd.f32 %v1706, %v1818
        %1820 = vmatprep.mubr.bf16.mxu0 0
        %1821 = vmatmul.mubr.bf16.gmra.mxu0 %v302
        %v1822 = vpop.f32.mrf.mxu0
        %v1823 = vadd.f32 %v1710, %v1822
        %v1824 = vpop.f32.mrf.mxu0
        %v1825 = vadd.f32 %v1712, %v1824
        %v1826 = vpop.f32.mrf.mxu0
        %v1827 = vadd.f32 %v1714, %v1826
        %v1828 = vpop.f32.mrf.mxu0
        %v1829 = vadd.f32 %v1716, %v1828
        %1830 = vmatprep.mubr.bf16.mxu0 0
        %1831 = vmatmul.mubr.bf16.gmra.mxu0 %v305
        %v1832 = vpop.f32.mrf.mxu0
        %v1833 = vadd.f32 %v1720, %v1832
        %v1834 = vpop.f32.mrf.mxu0
        %v1835 = vadd.f32 %v1722, %v1834
        %v1836 = vpop.f32.mrf.mxu0
        %v1837 = vadd.f32 %v1724, %v1836
        %v1838 = vpop.f32.mrf.mxu0
        %v1839 = vadd.f32 %v1726, %v1838
        %1840 = vmatprep.mubr.bf16.mxu0 0
        %1841 = vmatmul.mubr.bf16.gmra.mxu0 %v308
        %v1842 = vpop.f32.mrf.mxu0
        %v1843 = vadd.f32 %v1730, %v1842
        %v1844 = vpop.f32.mrf.mxu0
        %v1845 = vadd.f32 %v1732, %v1844
        %v1846 = vpop.f32.mrf.mxu0
        %v1847 = vadd.f32 %v1734, %v1846
        %v1848 = vpop.f32.mrf.mxu0
        %v1849 = vadd.f32 %v1736, %v1848
        %1850 = vmatprep.mubr.bf16.mxu0 0
        %1851 = vmatmul.mubr.bf16.gmra.mxu0 %v311
        %v1852 = vpop.f32.mrf.mxu0
        %v1853 = vadd.f32 %v1740, %v1852
        %v1854 = vpop.f32.mrf.mxu0
        %v1855 = vadd.f32 %v1742, %v1854
        %v1856 = vpop.f32.mrf.mxu0
        %v1857 = vadd.f32 %v1744, %v1856
        %v1858 = vpop.f32.mrf.mxu0
        %v1859 = vadd.f32 %v1746, %v1858
        %1860 = vmatprep.mubr.bf16.mxu0 0
        %1861 = vmatmul.mubr.bf16.gmra.mxu0 %v314
        %v1862 = vpop.f32.mrf.mxu0
        %v1863 = vadd.f32 %v1750, %v1862
        %v1864 = vpop.f32.mrf.mxu0
        %v1865 = vadd.f32 %v1752, %v1864
        %v1866 = vpop.f32.mrf.mxu0
        %v1867 = vadd.f32 %v1754, %v1866
        %v1868 = vpop.f32.mrf.mxu0
        %v1869 = vadd.f32 %v1756, %v1868
        %1870 = vmatprep.mubr.bf16.mxu0 0
        %1871 = vmatmul.mubr.bf16.gmra.mxu0 %v317
        %v1872 = vpop.f32.mrf.mxu0
        %v1873 = vadd.f32 %v1760, %v1872
        %v1874 = vpop.f32.mrf.mxu0
        %v1875 = vadd.f32 %v1762, %v1874
        %v1876 = vpop.f32.mrf.mxu0
        %v1877 = vadd.f32 %v1764, %v1876
        %v1878 = vpop.f32.mrf.mxu0
        %v1879 = vadd.f32 %v1766, %v1878
        %1880 = vmatprep.mubr.bf16.mxu0 0
        %1881 = vmatmul.mubr.bf16.gmra.mxu0 %v320
        %v1882 = vpop.f32.mrf.mxu0
        %v1883 = vadd.f32 %v1770, %v1882
        %v1884 = vpop.f32.mrf.mxu0
        %v1885 = vadd.f32 %v1772, %v1884
        %v1886 = vpop.f32.mrf.mxu0
        %v1887 = vadd.f32 %v1774, %v1886
        %v1888 = vpop.f32.mrf.mxu0
        %v1889 = vadd.f32 %v1776, %v1888
        %1890 = vdwg.mxu0
        %1891 = vmatprep.subr.bf16.mxu0 %v1299
        %1892 = vmatpush1.bf16.msra.mxu0 %v1298
        %1893 = vmatprep.subr.bf16.mxu0 %v1290
        %1894 = vmatpush1.bf16.msra.mxu0 %v1289
        %1895 = vmatprep.subr.bf16.mxu0 %v1281
        %1896 = vmatpush1.bf16.msra.mxu0 %v1280
        %1897 = vmatprep.subr.bf16.mxu0 %v1272
        %1898 = vmatpush1.bf16.msra.mxu0 %v1271
        %1899 = vmatprep.subr.bf16.mxu0 %v1263
        %1900 = vmatpush1.bf16.msra.mxu0 %v1262
        %1901 = vmatprep.subr.bf16.mxu0 %v1254
        %1902 = vmatpush1.bf16.msra.mxu0 %v1253
        %1903 = vmatprep.subr.bf16.mxu0 %v1245
        %1904 = vmatpush1.bf16.msra.mxu0 %v1244
        %1905 = vmatprep.subr.bf16.mxu0 %v1236
        %1906 = vmatpush1.bf16.msra.mxu0 %v1235
        %1907 = vmatprep.subr.bf16.mxu0 %v1371
        %1908 = vmatpush2.bf16.msra.mxu0 %v1370
        %1909 = vmatprep.subr.bf16.mxu0 %v1362
        %1910 = vmatpush2.bf16.msra.mxu0 %v1361
        %1911 = vmatprep.subr.bf16.mxu0 %v1353
        %1912 = vmatpush2.bf16.msra.mxu0 %v1352
        %1913 = vmatprep.subr.bf16.mxu0 %v1344
        %1914 = vmatpush2.bf16.msra.mxu0 %v1343
        %1915 = vmatprep.subr.bf16.mxu0 %v1335
        %1916 = vmatpush2.bf16.msra.mxu0 %v1334
        %1917 = vmatprep.subr.bf16.mxu0 %v1326
        %1918 = vmatpush2.bf16.msra.mxu0 %v1325
        %1919 = vmatprep.subr.bf16.mxu0 %v1317
        %1920 = vmatpush2.bf16.msra.mxu0 %v1316
        %1921 = vmatprep.subr.bf16.mxu0 %v1308
        %1922 = vmatpush2.bf16.msra.mxu0 %v1307
        %1923 = vmatprep.mubr.bf16.mxu0 %v298
        %1924 = vmatmul.mubr.bf16.gmra.mxu0 %v297
        %v1925 = vpop.f32.mrf.mxu0
        %v1926 = vadd.f32 0.0, %v1925
        %v1927 = vpop.f32.mrf.mxu0
        %v1928 = vadd.f32 0.0, %v1927
        %v1929 = vpop.f32.mrf.mxu0
        %v1930 = vadd.f32 0.0, %v1929
        %v1931 = vpop.f32.mrf.mxu0
        %v1932 = vadd.f32 0.0, %v1931
        %1933 = vmatprep.mubr.bf16.mxu0 %v301
        %1934 = vmatmul.mubr.bf16.gmra.mxu0 %v300
        %v1935 = vpop.f32.mrf.mxu0
        %v1936 = vadd.f32 0.0, %v1935
        %v1937 = vpop.f32.mrf.mxu0
        %v1938 = vadd.f32 0.0, %v1937
        %v1939 = vpop.f32.mrf.mxu0
        %v1940 = vadd.f32 0.0, %v1939
        %v1941 = vpop.f32.mrf.mxu0
        %v1942 = vadd.f32 0.0, %v1941
        %1943 = vmatprep.mubr.bf16.mxu0 %v304
        %1944 = vmatmul.mubr.bf16.gmra.mxu0 %v303
        %v1945 = vpop.f32.mrf.mxu0
        %v1946 = vadd.f32 0.0, %v1945
        %v1947 = vpop.f32.mrf.mxu0
        %v1948 = vadd.f32 0.0, %v1947
        %v1949 = vpop.f32.mrf.mxu0
        %v1950 = vadd.f32 0.0, %v1949
        %v1951 = vpop.f32.mrf.mxu0
        %v1952 = vadd.f32 0.0, %v1951
        %1953 = vmatprep.mubr.bf16.mxu0 %v307
        %1954 = vmatmul.mubr.bf16.gmra.mxu0 %v306
        %v1955 = vpop.f32.mrf.mxu0
        %v1956 = vadd.f32 0.0, %v1955
        %v1957 = vpop.f32.mrf.mxu0
        %v1958 = vadd.f32 0.0, %v1957
        %v1959 = vpop.f32.mrf.mxu0
        %v1960 = vadd.f32 0.0, %v1959
        %v1961 = vpop.f32.mrf.mxu0
        %v1962 = vadd.f32 0.0, %v1961
        %1963 = vmatprep.mubr.bf16.mxu0 %v310
        %1964 = vmatmul.mubr.bf16.gmra.mxu0 %v309
        %v1965 = vpop.f32.mrf.mxu0
        %v1966 = vadd.f32 0.0, %v1965
        %v1967 = vpop.f32.mrf.mxu0
        %v1968 = vadd.f32 0.0, %v1967
        %v1969 = vpop.f32.mrf.mxu0
        %v1970 = vadd.f32 0.0, %v1969
        %v1971 = vpop.f32.mrf.mxu0
        %v1972 = vadd.f32 0.0, %v1971
        %1973 = vmatprep.mubr.bf16.mxu0 %v313
        %1974 = vmatmul.mubr.bf16.gmra.mxu0 %v312
        %v1975 = vpop.f32.mrf.mxu0
        %v1976 = vadd.f32 0.0, %v1975
        %v1977 = vpop.f32.mrf.mxu0
        %v1978 = vadd.f32 0.0, %v1977
        %v1979 = vpop.f32.mrf.mxu0
        %v1980 = vadd.f32 0.0, %v1979
        %v1981 = vpop.f32.mrf.mxu0
        %v1982 = vadd.f32 0.0, %v1981
        %1983 = vmatprep.mubr.bf16.mxu0 %v316
        %1984 = vmatmul.mubr.bf16.gmra.mxu0 %v315
        %v1985 = vpop.f32.mrf.mxu0
        %v1986 = vadd.f32 0.0, %v1985
        %v1987 = vpop.f32.mrf.mxu0
        %v1988 = vadd.f32 0.0, %v1987
        %v1989 = vpop.f32.mrf.mxu0
        %v1990 = vadd.f32 0.0, %v1989
        %v1991 = vpop.f32.mrf.mxu0
        %v1992 = vadd.f32 0.0, %v1991
        %1993 = vmatprep.mubr.bf16.mxu0 %v319
        %1994 = vmatmul.mubr.bf16.gmra.mxu0 %v318
        %v1995 = vpop.f32.mrf.mxu0
        %v1996 = vadd.f32 0.0, %v1995
        %v1997 = vpop.f32.mrf.mxu0
        %v1998 = vadd.f32 0.0, %v1997
        %v1999 = vpop.f32.mrf.mxu0
        %v2000 = vadd.f32 0.0, %v1999
        %v2001 = vpop.f32.mrf.mxu0
        %v2002 = vadd.f32 0.0, %v2001
        %2003 = vdwg.mxu0
        %2004 = vmatprep.subr.bf16.mxu0 %v1443
        %2005 = vmatpush1.bf16.msra.mxu0 %v1442
        %2006 = vmatprep.subr.bf16.mxu0 %v1434
        %2007 = vmatpush1.bf16.msra.mxu0 %v1433
        %2008 = vmatprep.subr.bf16.mxu0 %v1425
        %2009 = vmatpush1.bf16.msra.mxu0 %v1424
        %2010 = vmatprep.subr.bf16.mxu0 %v1416
        %2011 = vmatpush1.bf16.msra.mxu0 %v1415
        %2012 = vmatprep.subr.bf16.mxu0 %v1407
        %2013 = vmatpush1.bf16.msra.mxu0 %v1406
        %2014 = vmatprep.subr.bf16.mxu0 %v1398
        %2015 = vmatpush1.bf16.msra.mxu0 %v1397
        %2016 = vmatprep.subr.bf16.mxu0 %v1389
        %2017 = vmatpush1.bf16.msra.mxu0 %v1388
        %2018 = vmatprep.subr.bf16.mxu0 %v1380
        %2019 = vmatpush1.bf16.msra.mxu0 %v1379
        %2020 = vmatprep.subr.bf16.mxu0 0
        %2021 = vmatpush2.bf16.msra.mxu0 0
        %2022 = vmatprep.subr.bf16.mxu0 0
        %2023 = vmatpush2.bf16.msra.mxu0 0
        %2024 = vmatprep.subr.bf16.mxu0 0
        %2025 = vmatpush2.bf16.msra.mxu0 0
        %2026 = vmatprep.subr.bf16.mxu0 0
        %2027 = vmatpush2.bf16.msra.mxu0 0
        %2028 = vmatprep.subr.bf16.mxu0 0
        %2029 = vmatpush2.bf16.msra.mxu0 0
        %2030 = vmatprep.subr.bf16.mxu0 0
        %2031 = vmatpush2.bf16.msra.mxu0 0
        %2032 = vmatprep.subr.bf16.mxu0 0
        %2033 = vmatpush2.bf16.msra.mxu0 0
        %2034 = vmatprep.subr.bf16.mxu0 0
        %2035 = vmatpush2.bf16.msra.mxu0 0
        %2036 = vmatprep.mubr.bf16.mxu0 0
        %2037 = vmatmul.mubr.bf16.gmra.mxu0 %v299
        %v2038 = vpop.f32.mrf.mxu0
        %v2039 = vadd.f32 %v1926, %v2038
        %v2040 = vpop.f32.mrf.mxu0
        %v2041 = vadd.f32 %v1928, %v2040
        %v2042 = vpop.f32.mrf.mxu0
        %v2043 = vadd.f32 %v1930, %v2042
        %v2044 = vpop.f32.mrf.mxu0
        %v2045 = vadd.f32 %v1932, %v2044
        %2046 = vmatprep.mubr.bf16.mxu0 0
        %2047 = vmatmul.mubr.bf16.gmra.mxu0 %v302
        %v2048 = vpop.f32.mrf.mxu0
        %v2049 = vadd.f32 %v1936, %v2048
        %v2050 = vpop.f32.mrf.mxu0
        %v2051 = vadd.f32 %v1938, %v2050
        %v2052 = vpop.f32.mrf.mxu0
        %v2053 = vadd.f32 %v1940, %v2052
        %v2054 = vpop.f32.mrf.mxu0
        %v2055 = vadd.f32 %v1942, %v2054
        %2056 = vmatprep.mubr.bf16.mxu0 0
        %2057 = vmatmul.mubr.bf16.gmra.mxu0 %v305
        %v2058 = vpop.f32.mrf.mxu0
        %v2059 = vadd.f32 %v1946, %v2058
        %v2060 = vpop.f32.mrf.mxu0
        %v2061 = vadd.f32 %v1948, %v2060
        %v2062 = vpop.f32.mrf.mxu0
        %v2063 = vadd.f32 %v1950, %v2062
        %v2064 = vpop.f32.mrf.mxu0
        %v2065 = vadd.f32 %v1952, %v2064
        %2066 = vmatprep.mubr.bf16.mxu0 0
        %2067 = vmatmul.mubr.bf16.gmra.mxu0 %v308
        %v2068 = vpop.f32.mrf.mxu0
        %v2069 = vadd.f32 %v1956, %v2068
        %v2070 = vpop.f32.mrf.mxu0
        %v2071 = vadd.f32 %v1958, %v2070
        %v2072 = vpop.f32.mrf.mxu0
        %v2073 = vadd.f32 %v1960, %v2072
        %v2074 = vpop.f32.mrf.mxu0
        %v2075 = vadd.f32 %v1962, %v2074
        %2076 = vmatprep.mubr.bf16.mxu0 0
        %2077 = vmatmul.mubr.bf16.gmra.mxu0 %v311
        %v2078 = vpop.f32.mrf.mxu0
        %v2079 = vadd.f32 %v1966, %v2078
        %v2080 = vpop.f32.mrf.mxu0
        %v2081 = vadd.f32 %v1968, %v2080
        %v2082 = vpop.f32.mrf.mxu0
        %v2083 = vadd.f32 %v1970, %v2082
        %v2084 = vpop.f32.mrf.mxu0
        %v2085 = vadd.f32 %v1972, %v2084
        %2086 = vmatprep.mubr.bf16.mxu0 0
        %2087 = vmatmul.mubr.bf16.gmra.mxu0 %v314
        %v2088 = vpop.f32.mrf.mxu0
        %v2089 = vadd.f32 %v1976, %v2088
        %v2090 = vpop.f32.mrf.mxu0
        %v2091 = vadd.f32 %v1978, %v2090
        %v2092 = vpop.f32.mrf.mxu0
        %v2093 = vadd.f32 %v1980, %v2092
        %v2094 = vpop.f32.mrf.mxu0
        %v2095 = vadd.f32 %v1982, %v2094
        %2096 = vmatprep.mubr.bf16.mxu0 0
        %2097 = vmatmul.mubr.bf16.gmra.mxu0 %v317
        %v2098 = vpop.f32.mrf.mxu0
        %v2099 = vadd.f32 %v1986, %v2098
        %v2100 = vpop.f32.mrf.mxu0
        %v2101 = vadd.f32 %v1988, %v2100
        %v2102 = vpop.f32.mrf.mxu0
        %v2103 = vadd.f32 %v1990, %v2102
        %v2104 = vpop.f32.mrf.mxu0
        %v2105 = vadd.f32 %v1992, %v2104
        %2106 = vmatprep.mubr.bf16.mxu0 0
        %2107 = vmatmul.mubr.bf16.gmra.mxu0 %v320
        %v2108 = vpop.f32.mrf.mxu0
        %v2109 = vadd.f32 %v1996, %v2108
        %v2110 = vpop.f32.mrf.mxu0
        %v2111 = vadd.f32 %v1998, %v2110
        %v2112 = vpop.f32.mrf.mxu0
        %v2113 = vadd.f32 %v2000, %v2112
        %v2114 = vpop.f32.mrf.mxu0
        %v2115 = vadd.f32 %v2002, %v2114
        %2116 = vdwg.mxu0
        %2117 = vmatprep.subr.bf16.mxu0 %v1301
        %2118 = vmatpush1.bf16.msra.mxu0 %v1300
        %2119 = vmatprep.subr.bf16.mxu0 %v1292
        %2120 = vmatpush1.bf16.msra.mxu0 %v1291
        %2121 = vmatprep.subr.bf16.mxu0 %v1283
        %2122 = vmatpush1.bf16.msra.mxu0 %v1282
        %2123 = vmatprep.subr.bf16.mxu0 %v1274
        %2124 = vmatpush1.bf16.msra.mxu0 %v1273
        %2125 = vmatprep.subr.bf16.mxu0 %v1265
        %2126 = vmatpush1.bf16.msra.mxu0 %v1264
        %2127 = vmatprep.subr.bf16.mxu0 %v1256
        %2128 = vmatpush1.bf16.msra.mxu0 %v1255
        %2129 = vmatprep.subr.bf16.mxu0 %v1247
        %2130 = vmatpush1.bf16.msra.mxu0 %v1246
        %2131 = vmatprep.subr.bf16.mxu0 %v1238
        %2132 = vmatpush1.bf16.msra.mxu0 %v1237
        %2133 = vmatprep.subr.bf16.mxu0 %v1373
        %2134 = vmatpush2.bf16.msra.mxu0 %v1372
        %2135 = vmatprep.subr.bf16.mxu0 %v1364
        %2136 = vmatpush2.bf16.msra.mxu0 %v1363
        %2137 = vmatprep.subr.bf16.mxu0 %v1355
        %2138 = vmatpush2.bf16.msra.mxu0 %v1354
        %2139 = vmatprep.subr.bf16.mxu0 %v1346
        %2140 = vmatpush2.bf16.msra.mxu0 %v1345
        %2141 = vmatprep.subr.bf16.mxu0 %v1337
        %2142 = vmatpush2.bf16.msra.mxu0 %v1336
        %2143 = vmatprep.subr.bf16.mxu0 %v1328
        %2144 = vmatpush2.bf16.msra.mxu0 %v1327
        %2145 = vmatprep.subr.bf16.mxu0 %v1319
        %2146 = vmatpush2.bf16.msra.mxu0 %v1318
        %2147 = vmatprep.subr.bf16.mxu0 %v1310
        %2148 = vmatpush2.bf16.msra.mxu0 %v1309
        %2149 = vmatprep.mubr.bf16.mxu0 %v298
        %2150 = vmatmul.mubr.bf16.gmra.mxu0 %v297
        %v2151 = vpop.f32.mrf.mxu0
        %v2152 = vadd.f32 0.0, %v2151
        %v2153 = vpop.f32.mrf.mxu0
        %v2154 = vadd.f32 0.0, %v2153
        %v2155 = vpop.f32.mrf.mxu0
        %v2156 = vadd.f32 0.0, %v2155
        %v2157 = vpop.f32.mrf.mxu0
        %v2158 = vadd.f32 0.0, %v2157
        %2159 = vmatprep.mubr.bf16.mxu0 %v301
        %2160 = vmatmul.mubr.bf16.gmra.mxu0 %v300
        %v2161 = vpop.f32.mrf.mxu0
        %v2162 = vadd.f32 0.0, %v2161
        %v2163 = vpop.f32.mrf.mxu0
        %v2164 = vadd.f32 0.0, %v2163
        %v2165 = vpop.f32.mrf.mxu0
        %v2166 = vadd.f32 0.0, %v2165
        %v2167 = vpop.f32.mrf.mxu0
        %v2168 = vadd.f32 0.0, %v2167
        %2169 = vmatprep.mubr.bf16.mxu0 %v304
        %2170 = vmatmul.mubr.bf16.gmra.mxu0 %v303
        %v2171 = vpop.f32.mrf.mxu0
        %v2172 = vadd.f32 0.0, %v2171
        %v2173 = vpop.f32.mrf.mxu0
        %v2174 = vadd.f32 0.0, %v2173
        %v2175 = vpop.f32.mrf.mxu0
        %v2176 = vadd.f32 0.0, %v2175
        %v2177 = vpop.f32.mrf.mxu0
        %v2178 = vadd.f32 0.0, %v2177
        %2179 = vmatprep.mubr.bf16.mxu0 %v307
        %2180 = vmatmul.mubr.bf16.gmra.mxu0 %v306
        %v2181 = vpop.f32.mrf.mxu0
        %v2182 = vadd.f32 0.0, %v2181
        %v2183 = vpop.f32.mrf.mxu0
        %v2184 = vadd.f32 0.0, %v2183
        %v2185 = vpop.f32.mrf.mxu0
        %v2186 = vadd.f32 0.0, %v2185
        %v2187 = vpop.f32.mrf.mxu0
        %v2188 = vadd.f32 0.0, %v2187
        %2189 = vmatprep.mubr.bf16.mxu0 %v310
        %2190 = vmatmul.mubr.bf16.gmra.mxu0 %v309
        %v2191 = vpop.f32.mrf.mxu0
        %v2192 = vadd.f32 0.0, %v2191
        %v2193 = vpop.f32.mrf.mxu0
        %v2194 = vadd.f32 0.0, %v2193
        %v2195 = vpop.f32.mrf.mxu0
        %v2196 = vadd.f32 0.0, %v2195
        %v2197 = vpop.f32.mrf.mxu0
        %v2198 = vadd.f32 0.0, %v2197
        %2199 = vmatprep.mubr.bf16.mxu0 %v313
        %2200 = vmatmul.mubr.bf16.gmra.mxu0 %v312
        %v2201 = vpop.f32.mrf.mxu0
        %v2202 = vadd.f32 0.0, %v2201
        %v2203 = vpop.f32.mrf.mxu0
        %v2204 = vadd.f32 0.0, %v2203
        %v2205 = vpop.f32.mrf.mxu0
        %v2206 = vadd.f32 0.0, %v2205
        %v2207 = vpop.f32.mrf.mxu0
        %v2208 = vadd.f32 0.0, %v2207
        %2209 = vmatprep.mubr.bf16.mxu0 %v316
        %2210 = vmatmul.mubr.bf16.gmra.mxu0 %v315
        %v2211 = vpop.f32.mrf.mxu0
        %v2212 = vadd.f32 0.0, %v2211
        %v2213 = vpop.f32.mrf.mxu0
        %v2214 = vadd.f32 0.0, %v2213
        %v2215 = vpop.f32.mrf.mxu0
        %v2216 = vadd.f32 0.0, %v2215
        %v2217 = vpop.f32.mrf.mxu0
        %v2218 = vadd.f32 0.0, %v2217
        %2219 = vmatprep.mubr.bf16.mxu0 %v319
        %2220 = vmatmul.mubr.bf16.gmra.mxu0 %v318
        %v2221 = vpop.f32.mrf.mxu0
        %v2222 = vadd.f32 0.0, %v2221
        %v2223 = vpop.f32.mrf.mxu0
        %v2224 = vadd.f32 0.0, %v2223
        %v2225 = vpop.f32.mrf.mxu0
        %v2226 = vadd.f32 0.0, %v2225
        %v2227 = vpop.f32.mrf.mxu0
        %v2228 = vadd.f32 0.0, %v2227
        %2229 = vdwg.mxu0
        %2230 = vmatprep.subr.bf16.mxu0 %v1445
        %2231 = vmatpush1.bf16.msra.mxu0 %v1444
        %2232 = vmatprep.subr.bf16.mxu0 %v1436
        %2233 = vmatpush1.bf16.msra.mxu0 %v1435
        %2234 = vmatprep.subr.bf16.mxu0 %v1427
        %2235 = vmatpush1.bf16.msra.mxu0 %v1426
        %2236 = vmatprep.subr.bf16.mxu0 %v1418
        %2237 = vmatpush1.bf16.msra.mxu0 %v1417
        %2238 = vmatprep.subr.bf16.mxu0 %v1409
        %2239 = vmatpush1.bf16.msra.mxu0 %v1408
        %2240 = vmatprep.subr.bf16.mxu0 %v1400
        %2241 = vmatpush1.bf16.msra.mxu0 %v1399
        %2242 = vmatprep.subr.bf16.mxu0 %v1391
        %2243 = vmatpush1.bf16.msra.mxu0 %v1390
        %2244 = vmatprep.subr.bf16.mxu0 %v1382
        %2245 = vmatpush1.bf16.msra.mxu0 %v1381
        %2246 = vmatprep.subr.bf16.mxu0 0
        %2247 = vmatpush2.bf16.msra.mxu0 0
        %2248 = vmatprep.subr.bf16.mxu0 0
        %2249 = vmatpush2.bf16.msra.mxu0 0
        %2250 = vmatprep.subr.bf16.mxu0 0
        %2251 = vmatpush2.bf16.msra.mxu0 0
        %2252 = vmatprep.subr.bf16.mxu0 0
        %2253 = vmatpush2.bf16.msra.mxu0 0
        %2254 = vmatprep.subr.bf16.mxu0 0
        %2255 = vmatpush2.bf16.msra.mxu0 0
        %2256 = vmatprep.subr.bf16.mxu0 0
        %2257 = vmatpush2.bf16.msra.mxu0 0
        %2258 = vmatprep.subr.bf16.mxu0 0
        %2259 = vmatpush2.bf16.msra.mxu0 0
        %2260 = vmatprep.subr.bf16.mxu0 0
        %2261 = vmatpush2.bf16.msra.mxu0 0
        %2262 = vmatprep.mubr.bf16.mxu0 0
        %2263 = vmatmul.mubr.bf16.gmra.mxu0 %v299
        %v2264 = vpop.f32.mrf.mxu0
        %v2265 = vadd.f32 %v2152, %v2264
        %v2266 = vpop.f32.mrf.mxu0
        %v2267 = vadd.f32 %v2154, %v2266
        %v2268 = vpop.f32.mrf.mxu0
        %v2269 = vadd.f32 %v2156, %v2268
        %v2270 = vpop.f32.mrf.mxu0
        %v2271 = vadd.f32 %v2158, %v2270
        %2272 = vmatprep.mubr.bf16.mxu0 0
        %2273 = vmatmul.mubr.bf16.gmra.mxu0 %v302
        %v2274 = vpop.f32.mrf.mxu0
        %v2275 = vadd.f32 %v2162, %v2274
        %v2276 = vpop.f32.mrf.mxu0
        %v2277 = vadd.f32 %v2164, %v2276
        %v2278 = vpop.f32.mrf.mxu0
        %v2279 = vadd.f32 %v2166, %v2278
        %v2280 = vpop.f32.mrf.mxu0
        %v2281 = vadd.f32 %v2168, %v2280
        %2282 = vmatprep.mubr.bf16.mxu0 0
        %2283 = vmatmul.mubr.bf16.gmra.mxu0 %v305
        %v2284 = vpop.f32.mrf.mxu0
        %v2285 = vadd.f32 %v2172, %v2284
        %v2286 = vpop.f32.mrf.mxu0
        %v2287 = vadd.f32 %v2174, %v2286
        %v2288 = vpop.f32.mrf.mxu0
        %v2289 = vadd.f32 %v2176, %v2288
        %v2290 = vpop.f32.mrf.mxu0
        %v2291 = vadd.f32 %v2178, %v2290
        %2292 = vmatprep.mubr.bf16.mxu0 0
        %2293 = vmatmul.mubr.bf16.gmra.mxu0 %v308
        %v2294 = vpop.f32.mrf.mxu0
        %v2295 = vadd.f32 %v2182, %v2294
        %v2296 = vpop.f32.mrf.mxu0
        %v2297 = vadd.f32 %v2184, %v2296
        %v2298 = vpop.f32.mrf.mxu0
        %v2299 = vadd.f32 %v2186, %v2298
        %v2300 = vpop.f32.mrf.mxu0
        %v2301 = vadd.f32 %v2188, %v2300
        %2302 = vmatprep.mubr.bf16.mxu0 0
        %2303 = vmatmul.mubr.bf16.gmra.mxu0 %v311
        %v2304 = vpop.f32.mrf.mxu0
        %v2305 = vadd.f32 %v2192, %v2304
        %v2306 = vpop.f32.mrf.mxu0
        %v2307 = vadd.f32 %v2194, %v2306
        %v2308 = vpop.f32.mrf.mxu0
        %v2309 = vadd.f32 %v2196, %v2308
        %v2310 = vpop.f32.mrf.mxu0
        %v2311 = vadd.f32 %v2198, %v2310
        %2312 = vmatprep.mubr.bf16.mxu0 0
        %2313 = vmatmul.mubr.bf16.gmra.mxu0 %v314
        %v2314 = vpop.f32.mrf.mxu0
        %v2315 = vadd.f32 %v2202, %v2314
        %v2316 = vpop.f32.mrf.mxu0
        %v2317 = vadd.f32 %v2204, %v2316
        %v2318 = vpop.f32.mrf.mxu0
        %v2319 = vadd.f32 %v2206, %v2318
        %v2320 = vpop.f32.mrf.mxu0
        %v2321 = vadd.f32 %v2208, %v2320
        %2322 = vmatprep.mubr.bf16.mxu0 0
        %2323 = vmatmul.mubr.bf16.gmra.mxu0 %v317
        %v2324 = vpop.f32.mrf.mxu0
        %v2325 = vadd.f32 %v2212, %v2324
        %v2326 = vpop.f32.mrf.mxu0
        %v2327 = vadd.f32 %v2214, %v2326
        %v2328 = vpop.f32.mrf.mxu0
        %v2329 = vadd.f32 %v2216, %v2328
        %v2330 = vpop.f32.mrf.mxu0
        %v2331 = vadd.f32 %v2218, %v2330
        %2332 = vmatprep.mubr.bf16.mxu0 0
        %2333 = vmatmul.mubr.bf16.gmra.mxu0 %v320
        %v2334 = vpop.f32.mrf.mxu0
        %v2335 = vadd.f32 %v2222, %v2334
        %v2336 = vpop.f32.mrf.mxu0
        %v2337 = vadd.f32 %v2224, %v2336
        %v2338 = vpop.f32.mrf.mxu0
        %v2339 = vadd.f32 %v2226, %v2338
        %v2340 = vpop.f32.mrf.mxu0
        %v2341 = vadd.f32 %v2228, %v2340
        %2342 = vdwg.mxu0
        %2343 = vmatprep.subr.bf16.mxu0 %v1303
        %2344 = vmatpush1.bf16.msra.mxu0 %v1302
        %2345 = vmatprep.subr.bf16.mxu0 %v1294
        %2346 = vmatpush1.bf16.msra.mxu0 %v1293
        %2347 = vmatprep.subr.bf16.mxu0 %v1285
        %2348 = vmatpush1.bf16.msra.mxu0 %v1284
        %2349 = vmatprep.subr.bf16.mxu0 %v1276
        %2350 = vmatpush1.bf16.msra.mxu0 %v1275
        %2351 = vmatprep.subr.bf16.mxu0 %v1267
        %2352 = vmatpush1.bf16.msra.mxu0 %v1266
        %2353 = vmatprep.subr.bf16.mxu0 %v1258
        %2354 = vmatpush1.bf16.msra.mxu0 %v1257
        %2355 = vmatprep.subr.bf16.mxu0 %v1249
        %2356 = vmatpush1.bf16.msra.mxu0 %v1248
        %2357 = vmatprep.subr.bf16.mxu0 %v1240
        %2358 = vmatpush1.bf16.msra.mxu0 %v1239
        %2359 = vmatprep.subr.bf16.mxu0 %v1375
        %2360 = vmatpush2.bf16.msra.mxu0 %v1374
        %2361 = vmatprep.subr.bf16.mxu0 %v1366
        %2362 = vmatpush2.bf16.msra.mxu0 %v1365
        %2363 = vmatprep.subr.bf16.mxu0 %v1357
        %2364 = vmatpush2.bf16.msra.mxu0 %v1356
        %2365 = vmatprep.subr.bf16.mxu0 %v1348
        %2366 = vmatpush2.bf16.msra.mxu0 %v1347
        %2367 = vmatprep.subr.bf16.mxu0 %v1339
        %2368 = vmatpush2.bf16.msra.mxu0 %v1338
        %2369 = vmatprep.subr.bf16.mxu0 %v1330
        %2370 = vmatpush2.bf16.msra.mxu0 %v1329
        %2371 = vmatprep.subr.bf16.mxu0 %v1321
        %2372 = vmatpush2.bf16.msra.mxu0 %v1320
        %2373 = vmatprep.subr.bf16.mxu0 %v1312
        %2374 = vmatpush2.bf16.msra.mxu0 %v1311
        %2375 = vmatprep.mubr.bf16.mxu0 %v298
        %2376 = vmatmul.mubr.bf16.gmra.mxu0 %v297
        %v2377 = vpop.f32.mrf.mxu0
        %v2378 = vadd.f32 0.0, %v2377
        %v2379 = vpop.f32.mrf.mxu0
        %v2380 = vadd.f32 0.0, %v2379
        %v2381 = vpop.f32.mrf.mxu0
        %v2382 = vadd.f32 0.0, %v2381
        %v2383 = vpop.f32.mrf.mxu0
        %v2384 = vadd.f32 0.0, %v2383
        %2385 = vmatprep.mubr.bf16.mxu0 %v301
        %2386 = vmatmul.mubr.bf16.gmra.mxu0 %v300
        %v2387 = vpop.f32.mrf.mxu0
        %v2388 = vadd.f32 0.0, %v2387
        %v2389 = vpop.f32.mrf.mxu0
        %v2390 = vadd.f32 0.0, %v2389
        %v2391 = vpop.f32.mrf.mxu0
        %v2392 = vadd.f32 0.0, %v2391
        %v2393 = vpop.f32.mrf.mxu0
        %v2394 = vadd.f32 0.0, %v2393
        %2395 = vmatprep.mubr.bf16.mxu0 %v304
        %2396 = vmatmul.mubr.bf16.gmra.mxu0 %v303
        %v2397 = vpop.f32.mrf.mxu0
        %v2398 = vadd.f32 0.0, %v2397
        %v2399 = vpop.f32.mrf.mxu0
        %v2400 = vadd.f32 0.0, %v2399
        %v2401 = vpop.f32.mrf.mxu0
        %v2402 = vadd.f32 0.0, %v2401
        %v2403 = vpop.f32.mrf.mxu0
        %v2404 = vadd.f32 0.0, %v2403
        %2405 = vmatprep.mubr.bf16.mxu0 %v307
        %2406 = vmatmul.mubr.bf16.gmra.mxu0 %v306
        %v2407 = vpop.f32.mrf.mxu0
        %v2408 = vadd.f32 0.0, %v2407
        %v2409 = vpop.f32.mrf.mxu0
        %v2410 = vadd.f32 0.0, %v2409
        %v2411 = vpop.f32.mrf.mxu0
        %v2412 = vadd.f32 0.0, %v2411
        %v2413 = vpop.f32.mrf.mxu0
        %v2414 = vadd.f32 0.0, %v2413
        %2415 = vmatprep.mubr.bf16.mxu0 %v310
        %2416 = vmatmul.mubr.bf16.gmra.mxu0 %v309
        %v2417 = vpop.f32.mrf.mxu0
        %v2418 = vadd.f32 0.0, %v2417
        %v2419 = vpop.f32.mrf.mxu0
        %v2420 = vadd.f32 0.0, %v2419
        %v2421 = vpop.f32.mrf.mxu0
        %v2422 = vadd.f32 0.0, %v2421
        %v2423 = vpop.f32.mrf.mxu0
        %v2424 = vadd.f32 0.0, %v2423
        %2425 = vmatprep.mubr.bf16.mxu0 %v313
        %2426 = vmatmul.mubr.bf16.gmra.mxu0 %v312
        %v2427 = vpop.f32.mrf.mxu0
        %v2428 = vadd.f32 0.0, %v2427
        %v2429 = vpop.f32.mrf.mxu0
        %v2430 = vadd.f32 0.0, %v2429
        %v2431 = vpop.f32.mrf.mxu0
        %v2432 = vadd.f32 0.0, %v2431
        %v2433 = vpop.f32.mrf.mxu0
        %v2434 = vadd.f32 0.0, %v2433
        %2435 = vmatprep.mubr.bf16.mxu0 %v316
        %2436 = vmatmul.mubr.bf16.gmra.mxu0 %v315
        %v2437 = vpop.f32.mrf.mxu0
        %v2438 = vadd.f32 0.0, %v2437
        %v2439 = vpop.f32.mrf.mxu0
        %v2440 = vadd.f32 0.0, %v2439
        %v2441 = vpop.f32.mrf.mxu0
        %v2442 = vadd.f32 0.0, %v2441
        %v2443 = vpop.f32.mrf.mxu0
        %v2444 = vadd.f32 0.0, %v2443
        %2445 = vmatprep.mubr.bf16.mxu0 %v319
        %2446 = vmatmul.mubr.bf16.gmra.mxu0 %v318
        %v2447 = vpop.f32.mrf.mxu0
        %v2448 = vadd.f32 0.0, %v2447
        %v2449 = vpop.f32.mrf.mxu0
        %v2450 = vadd.f32 0.0, %v2449
        %v2451 = vpop.f32.mrf.mxu0
        %v2452 = vadd.f32 0.0, %v2451
        %v2453 = vpop.f32.mrf.mxu0
        %v2454 = vadd.f32 0.0, %v2453
        %2455 = vdwg.mxu0
        %2456 = vmatprep.subr.bf16.mxu0 %v1447
        %2457 = vmatpush1.bf16.msra.mxu0 %v1446
        %2458 = vmatprep.subr.bf16.mxu0 %v1438
        %2459 = vmatpush1.bf16.msra.mxu0 %v1437
        %2460 = vmatprep.subr.bf16.mxu0 %v1429
        %2461 = vmatpush1.bf16.msra.mxu0 %v1428
        %2462 = vmatprep.subr.bf16.mxu0 %v1420
        %2463 = vmatpush1.bf16.msra.mxu0 %v1419
        %2464 = vmatprep.subr.bf16.mxu0 %v1411
        %2465 = vmatpush1.bf16.msra.mxu0 %v1410
        %2466 = vmatprep.subr.bf16.mxu0 %v1402
        %2467 = vmatpush1.bf16.msra.mxu0 %v1401
        %2468 = vmatprep.subr.bf16.mxu0 %v1393
        %2469 = vmatpush1.bf16.msra.mxu0 %v1392
        %2470 = vmatprep.subr.bf16.mxu0 %v1384
        %2471 = vmatpush1.bf16.msra.mxu0 %v1383
        %2472 = vmatprep.subr.bf16.mxu0 0
        %2473 = vmatpush2.bf16.msra.mxu0 0
        %2474 = vmatprep.subr.bf16.mxu0 0
        %2475 = vmatpush2.bf16.msra.mxu0 0
        %2476 = vmatprep.subr.bf16.mxu0 0
        %2477 = vmatpush2.bf16.msra.mxu0 0
        %2478 = vmatprep.subr.bf16.mxu0 0
        %2479 = vmatpush2.bf16.msra.mxu0 0
        %2480 = vmatprep.subr.bf16.mxu0 0
        %2481 = vmatpush2.bf16.msra.mxu0 0
        %2482 = vmatprep.subr.bf16.mxu0 0
        %2483 = vmatpush2.bf16.msra.mxu0 0
        %2484 = vmatprep.subr.bf16.mxu0 0
        %2485 = vmatpush2.bf16.msra.mxu0 0
        %2486 = vmatprep.subr.bf16.mxu0 0
        %2487 = vmatpush2.bf16.msra.mxu0 0
        %2488 = vmatprep.mubr.bf16.mxu0 0
        %2489 = vmatmul.mubr.bf16.gmra.mxu0 %v299
        %v2490 = vpop.f32.mrf.mxu0
        %v2491 = vadd.f32 %v2378, %v2490
        %v2492 = vpop.f32.mrf.mxu0
        %v2493 = vadd.f32 %v2380, %v2492
        %v2494 = vpop.f32.mrf.mxu0
        %v2495 = vadd.f32 %v2382, %v2494
        %v2496 = vpop.f32.mrf.mxu0
        %v2497 = vadd.f32 %v2384, %v2496
        %2498 = vmatprep.mubr.bf16.mxu0 0
        %2499 = vmatmul.mubr.bf16.gmra.mxu0 %v302
        %v2500 = vpop.f32.mrf.mxu0
        %v2501 = vadd.f32 %v2388, %v2500
        %v2502 = vpop.f32.mrf.mxu0
        %v2503 = vadd.f32 %v2390, %v2502
        %v2504 = vpop.f32.mrf.mxu0
        %v2505 = vadd.f32 %v2392, %v2504
        %v2506 = vpop.f32.mrf.mxu0
        %v2507 = vadd.f32 %v2394, %v2506
        %2508 = vmatprep.mubr.bf16.mxu0 0
        %2509 = vmatmul.mubr.bf16.gmra.mxu0 %v305
        %v2510 = vpop.f32.mrf.mxu0
        %v2511 = vadd.f32 %v2398, %v2510
        %v2512 = vpop.f32.mrf.mxu0
        %v2513 = vadd.f32 %v2400, %v2512
        %v2514 = vpop.f32.mrf.mxu0
        %v2515 = vadd.f32 %v2402, %v2514
        %v2516 = vpop.f32.mrf.mxu0
        %v2517 = vadd.f32 %v2404, %v2516
        %2518 = vmatprep.mubr.bf16.mxu0 0
        %2519 = vmatmul.mubr.bf16.gmra.mxu0 %v308
        %v2520 = vpop.f32.mrf.mxu0
        %v2521 = vadd.f32 %v2408, %v2520
        %v2522 = vpop.f32.mrf.mxu0
        %v2523 = vadd.f32 %v2410, %v2522
        %v2524 = vpop.f32.mrf.mxu0
        %v2525 = vadd.f32 %v2412, %v2524
        %v2526 = vpop.f32.mrf.mxu0
        %v2527 = vadd.f32 %v2414, %v2526
        %2528 = vmatprep.mubr.bf16.mxu0 0
        %2529 = vmatmul.mubr.bf16.gmra.mxu0 %v311
        %v2530 = vpop.f32.mrf.mxu0
        %v2531 = vadd.f32 %v2418, %v2530
        %v2532 = vpop.f32.mrf.mxu0
        %v2533 = vadd.f32 %v2420, %v2532
        %v2534 = vpop.f32.mrf.mxu0
        %v2535 = vadd.f32 %v2422, %v2534
        %v2536 = vpop.f32.mrf.mxu0
        %v2537 = vadd.f32 %v2424, %v2536
        %2538 = vmatprep.mubr.bf16.mxu0 0
        %2539 = vmatmul.mubr.bf16.gmra.mxu0 %v314
        %v2540 = vpop.f32.mrf.mxu0
        %v2541 = vadd.f32 %v2428, %v2540
        %v2542 = vpop.f32.mrf.mxu0
        %v2543 = vadd.f32 %v2430, %v2542
        %v2544 = vpop.f32.mrf.mxu0
        %v2545 = vadd.f32 %v2432, %v2544
        %v2546 = vpop.f32.mrf.mxu0
        %v2547 = vadd.f32 %v2434, %v2546
        %2548 = vmatprep.mubr.bf16.mxu0 0
        %2549 = vmatmul.mubr.bf16.gmra.mxu0 %v317
        %v2550 = vpop.f32.mrf.mxu0
        %v2551 = vadd.f32 %v2438, %v2550
        %v2552 = vpop.f32.mrf.mxu0
        %v2553 = vadd.f32 %v2440, %v2552
        %v2554 = vpop.f32.mrf.mxu0
        %v2555 = vadd.f32 %v2442, %v2554
        %v2556 = vpop.f32.mrf.mxu0
        %v2557 = vadd.f32 %v2444, %v2556
        %2558 = vmatprep.mubr.bf16.mxu0 0
        %2559 = vmatmul.mubr.bf16.gmra.mxu0 %v320
        %v2560 = vpop.f32.mrf.mxu0
        %v2561 = vadd.f32 %v2448, %v2560
        %v2562 = vpop.f32.mrf.mxu0
        %v2563 = vadd.f32 %v2450, %v2562
        %v2564 = vpop.f32.mrf.mxu0
        %v2565 = vadd.f32 %v2452, %v2564
        %v2566 = vpop.f32.mrf.mxu0
        %v2567 = vadd.f32 %v2454, %v2566
        %2568 = vdwg.mxu0
        %2569 = vmatprep.subr.bf16.mxu0 0
        %2570 = vmatpush1.bf16.msra.mxu0 %v1304
        %2571 = vmatprep.subr.bf16.mxu0 0
        %2572 = vmatpush1.bf16.msra.mxu0 %v1295
        %2573 = vmatprep.subr.bf16.mxu0 0
        %2574 = vmatpush1.bf16.msra.mxu0 %v1286
        %2575 = vmatprep.subr.bf16.mxu0 0
        %2576 = vmatpush1.bf16.msra.mxu0 %v1277
        %2577 = vmatprep.subr.bf16.mxu0 0
        %2578 = vmatpush1.bf16.msra.mxu0 %v1268
        %2579 = vmatprep.subr.bf16.mxu0 0
        %2580 = vmatpush1.bf16.msra.mxu0 %v1259
        %2581 = vmatprep.subr.bf16.mxu0 0
        %2582 = vmatpush1.bf16.msra.mxu0 %v1250
        %2583 = vmatprep.subr.bf16.mxu0 0
        %2584 = vmatpush1.bf16.msra.mxu0 %v1241
        %2585 = vmatprep.subr.bf16.mxu0 0
        %2586 = vmatpush2.bf16.msra.mxu0 %v1376
        %2587 = vmatprep.subr.bf16.mxu0 0
        %2588 = vmatpush2.bf16.msra.mxu0 %v1367
        %2589 = vmatprep.subr.bf16.mxu0 0
        %2590 = vmatpush2.bf16.msra.mxu0 %v1358
        %2591 = vmatprep.subr.bf16.mxu0 0
        %2592 = vmatpush2.bf16.msra.mxu0 %v1349
        %2593 = vmatprep.subr.bf16.mxu0 0
        %2594 = vmatpush2.bf16.msra.mxu0 %v1340
        %2595 = vmatprep.subr.bf16.mxu0 0
        %2596 = vmatpush2.bf16.msra.mxu0 %v1331
        %2597 = vmatprep.subr.bf16.mxu0 0
        %2598 = vmatpush2.bf16.msra.mxu0 %v1322
        %2599 = vmatprep.subr.bf16.mxu0 0
        %2600 = vmatpush2.bf16.msra.mxu0 %v1313
        %2601 = vmatprep.mubr.bf16.mxu0 %v298
        %2602 = vmatmul.mubr.bf16.gmra.mxu0 %v297
        %v2603 = vpop.f32.mrf.mxu0
        %v2604 = vadd.f32 0.0, %v2603
        %v2605 = vpop.f32.mrf.mxu0
        %v2606 = vpop.f32.mrf.mxu0
        %v2607 = vadd.f32 0.0, %v2606
        %v2608 = vpop.f32.mrf.mxu0
        %2609 = vmatprep.mubr.bf16.mxu0 %v301
        %2610 = vmatmul.mubr.bf16.gmra.mxu0 %v300
        %v2611 = vpop.f32.mrf.mxu0
        %v2612 = vadd.f32 0.0, %v2611
        %v2613 = vpop.f32.mrf.mxu0
        %v2614 = vpop.f32.mrf.mxu0
        %v2615 = vadd.f32 0.0, %v2614
        %v2616 = vpop.f32.mrf.mxu0
        %2617 = vmatprep.mubr.bf16.mxu0 %v304
        %2618 = vmatmul.mubr.bf16.gmra.mxu0 %v303
        %v2619 = vpop.f32.mrf.mxu0
        %v2620 = vadd.f32 0.0, %v2619
        %v2621 = vpop.f32.mrf.mxu0
        %v2622 = vpop.f32.mrf.mxu0
        %v2623 = vadd.f32 0.0, %v2622
        %v2624 = vpop.f32.mrf.mxu0
        %2625 = vmatprep.mubr.bf16.mxu0 %v307
        %2626 = vmatmul.mubr.bf16.gmra.mxu0 %v306
        %v2627 = vpop.f32.mrf.mxu0
        %v2628 = vadd.f32 0.0, %v2627
        %v2629 = vpop.f32.mrf.mxu0
        %v2630 = vpop.f32.mrf.mxu0
        %v2631 = vadd.f32 0.0, %v2630
        %v2632 = vpop.f32.mrf.mxu0
        %2633 = vmatprep.mubr.bf16.mxu0 %v310
        %2634 = vmatmul.mubr.bf16.gmra.mxu0 %v309
        %v2635 = vpop.f32.mrf.mxu0
        %v2636 = vadd.f32 0.0, %v2635
        %v2637 = vpop.f32.mrf.mxu0
        %v2638 = vpop.f32.mrf.mxu0
        %v2639 = vadd.f32 0.0, %v2638
        %v2640 = vpop.f32.mrf.mxu0
        %2641 = vmatprep.mubr.bf16.mxu0 %v313
        %2642 = vmatmul.mubr.bf16.gmra.mxu0 %v312
        %v2643 = vpop.f32.mrf.mxu0
        %v2644 = vadd.f32 0.0, %v2643
        %v2645 = vpop.f32.mrf.mxu0
        %v2646 = vpop.f32.mrf.mxu0
        %v2647 = vadd.f32 0.0, %v2646
        %v2648 = vpop.f32.mrf.mxu0
        %2649 = vmatprep.mubr.bf16.mxu0 %v316
        %2650 = vmatmul.mubr.bf16.gmra.mxu0 %v315
        %v2651 = vpop.f32.mrf.mxu0
        %v2652 = vadd.f32 0.0, %v2651
        %v2653 = vpop.f32.mrf.mxu0
        %v2654 = vpop.f32.mrf.mxu0
        %v2655 = vadd.f32 0.0, %v2654
        %v2656 = vpop.f32.mrf.mxu0
        %2657 = vmatprep.mubr.bf16.mxu0 %v319
        %2658 = vmatmul.mubr.bf16.gmra.mxu0 %v318
        %v2659 = vpop.f32.mrf.mxu0
        %v2660 = vadd.f32 0.0, %v2659
        %v2661 = vpop.f32.mrf.mxu0
        %v2662 = vpop.f32.mrf.mxu0
        %v2663 = vadd.f32 0.0, %v2662
        %v2664 = vpop.f32.mrf.mxu0
        %2665 = vdwg.mxu0
        %2666 = vmatprep.subr.bf16.mxu0 0
        %2667 = vmatpush1.bf16.msra.mxu0 %v1448
        %2668 = vmatprep.subr.bf16.mxu0 0
        %2669 = vmatpush1.bf16.msra.mxu0 %v1439
        %2670 = vmatprep.subr.bf16.mxu0 0
        %2671 = vmatpush1.bf16.msra.mxu0 %v1430
        %2672 = vmatprep.subr.bf16.mxu0 0
        %2673 = vmatpush1.bf16.msra.mxu0 %v1421
        %2674 = vmatprep.subr.bf16.mxu0 0
        %2675 = vmatpush1.bf16.msra.mxu0 %v1412
        %2676 = vmatprep.subr.bf16.mxu0 0
        %2677 = vmatpush1.bf16.msra.mxu0 %v1403
        %2678 = vmatprep.subr.bf16.mxu0 0
        %2679 = vmatpush1.bf16.msra.mxu0 %v1394
        %2680 = vmatprep.subr.bf16.mxu0 0
        %2681 = vmatpush1.bf16.msra.mxu0 %v1385
        %2682 = vmatprep.subr.bf16.mxu0 0
        %2683 = vmatpush2.bf16.msra.mxu0 0
        %2684 = vmatprep.subr.bf16.mxu0 0
        %2685 = vmatpush2.bf16.msra.mxu0 0
        %2686 = vmatprep.subr.bf16.mxu0 0
        %2687 = vmatpush2.bf16.msra.mxu0 0
        %2688 = vmatprep.subr.bf16.mxu0 0
        %2689 = vmatpush2.bf16.msra.mxu0 0
        %2690 = vmatprep.subr.bf16.mxu0 0
        %2691 = vmatpush2.bf16.msra.mxu0 0
        %2692 = vmatprep.subr.bf16.mxu0 0
        %2693 = vmatpush2.bf16.msra.mxu0 0
        %2694 = vmatprep.subr.bf16.mxu0 0
        %2695 = vmatpush2.bf16.msra.mxu0 0
        %2696 = vmatprep.subr.bf16.mxu0 0
        %2697 = vmatpush2.bf16.msra.mxu0 0
        %2698 = vmatprep.mubr.bf16.mxu0 0
        %2699 = vmatmul.mubr.bf16.gmra.mxu0 %v299
        %v2700 = vpop.f32.mrf.mxu0
        %v2701 = vadd.f32 %v2604, %v2700
        %v2702 = vpop.f32.mrf.mxu0
        %v2703 = vpop.f32.mrf.mxu0
        %v2704 = vadd.f32 %v2607, %v2703
        %v2705 = vpop.f32.mrf.mxu0
        %2706 = vmatprep.mubr.bf16.mxu0 0
        %2707 = vmatmul.mubr.bf16.gmra.mxu0 %v302
        %v2708 = vpop.f32.mrf.mxu0
        %v2709 = vadd.f32 %v2612, %v2708
        %v2710 = vpop.f32.mrf.mxu0
        %v2711 = vpop.f32.mrf.mxu0
        %v2712 = vadd.f32 %v2615, %v2711
        %v2713 = vpop.f32.mrf.mxu0
        %2714 = vmatprep.mubr.bf16.mxu0 0
        %2715 = vmatmul.mubr.bf16.gmra.mxu0 %v305
        %v2716 = vpop.f32.mrf.mxu0
        %v2717 = vadd.f32 %v2620, %v2716
        %v2718 = vpop.f32.mrf.mxu0
        %v2719 = vpop.f32.mrf.mxu0
        %v2720 = vadd.f32 %v2623, %v2719
        %v2721 = vpop.f32.mrf.mxu0
        %2722 = vmatprep.mubr.bf16.mxu0 0
        %2723 = vmatmul.mubr.bf16.gmra.mxu0 %v308
        %v2724 = vpop.f32.mrf.mxu0
        %v2725 = vadd.f32 %v2628, %v2724
        %v2726 = vpop.f32.mrf.mxu0
        %v2727 = vpop.f32.mrf.mxu0
        %v2728 = vadd.f32 %v2631, %v2727
        %v2729 = vpop.f32.mrf.mxu0
        %2730 = vmatprep.mubr.bf16.mxu0 0
        %2731 = vmatmul.mubr.bf16.gmra.mxu0 %v311
        %v2732 = vpop.f32.mrf.mxu0
        %v2733 = vadd.f32 %v2636, %v2732
        %v2734 = vpop.f32.mrf.mxu0
        %v2735 = vpop.f32.mrf.mxu0
        %v2736 = vadd.f32 %v2639, %v2735
        %v2737 = vpop.f32.mrf.mxu0
        %2738 = vmatprep.mubr.bf16.mxu0 0
        %2739 = vmatmul.mubr.bf16.gmra.mxu0 %v314
        %v2740 = vpop.f32.mrf.mxu0
        %v2741 = vadd.f32 %v2644, %v2740
        %v2742 = vpop.f32.mrf.mxu0
        %v2743 = vpop.f32.mrf.mxu0
        %v2744 = vadd.f32 %v2647, %v2743
        %v2745 = vpop.f32.mrf.mxu0
        %2746 = vmatprep.mubr.bf16.mxu0 0
        %2747 = vmatmul.mubr.bf16.gmra.mxu0 %v317
        %v2748 = vpop.f32.mrf.mxu0
        %v2749 = vadd.f32 %v2652, %v2748
        %v2750 = vpop.f32.mrf.mxu0
        %v2751 = vpop.f32.mrf.mxu0
        %v2752 = vadd.f32 %v2655, %v2751
        %v2753 = vpop.f32.mrf.mxu0
        %2754 = vmatprep.mubr.bf16.mxu0 0
        %2755 = vmatmul.mubr.bf16.gmra.mxu0 %v320
        %v2756 = vpop.f32.mrf.mxu0
        %v2757 = vadd.f32 %v2660, %v2756
        %v2758 = vpop.f32.mrf.mxu0
        %v2759 = vpop.f32.mrf.mxu0
        %v2760 = vadd.f32 %v2663, %v2759
        %v2761 = vpop.f32.mrf.mxu0
        %2762 = vdwg.mxu0
        %v2763 = vpack.c.bf16 %v1817, %v1813
        %v2764 = vpack.c.bf16 %v1819, %v1815
        %v2765 = vpack.c.bf16 %v2043, %v2039
        %v2766 = vpack.c.bf16 %v2045, %v2041
        %v2767 = vpack.c.bf16 %v2269, %v2265
        %v2768 = vpack.c.bf16 %v2271, %v2267
        %v2769 = vpack.c.bf16 %v2495, %v2491
        %v2770 = vpack.c.bf16 %v2497, %v2493
        %v2771 = vpack.c.bf16 %v2704, %v2701
        %v2772 = vpack.c.bf16 %v1827, %v1823
        %v2773 = vpack.c.bf16 %v1829, %v1825
        %v2774 = vpack.c.bf16 %v2053, %v2049
        %v2775 = vpack.c.bf16 %v2055, %v2051
        %v2776 = vpack.c.bf16 %v2279, %v2275
        %v2777 = vpack.c.bf16 %v2281, %v2277
        %v2778 = vpack.c.bf16 %v2505, %v2501
        %v2779 = vpack.c.bf16 %v2507, %v2503
        %v2780 = vpack.c.bf16 %v2712, %v2709
        %v2781 = vpack.c.bf16 %v1837, %v1833
        %v2782 = vpack.c.bf16 %v1839, %v1835
        %v2783 = vpack.c.bf16 %v2063, %v2059
        %v2784 = vpack.c.bf16 %v2065, %v2061
        %v2785 = vpack.c.bf16 %v2289, %v2285
        %v2786 = vpack.c.bf16 %v2291, %v2287
        %v2787 = vpack.c.bf16 %v2515, %v2511
        %v2788 = vpack.c.bf16 %v2517, %v2513
        %v2789 = vpack.c.bf16 %v2720, %v2717
        %v2790 = vpack.c.bf16 %v1847, %v1843
        %v2791 = vpack.c.bf16 %v1849, %v1845
        %v2792 = vpack.c.bf16 %v2073, %v2069
        %v2793 = vpack.c.bf16 %v2075, %v2071
        %v2794 = vpack.c.bf16 %v2299, %v2295
        %v2795 = vpack.c.bf16 %v2301, %v2297
        %v2796 = vpack.c.bf16 %v2525, %v2521
        %v2797 = vpack.c.bf16 %v2527, %v2523
        %v2798 = vpack.c.bf16 %v2728, %v2725
        %v2799 = vpack.c.bf16 %v1857, %v1853
        %v2800 = vpack.c.bf16 %v1859, %v1855
        %v2801 = vpack.c.bf16 %v2083, %v2079
        %v2802 = vpack.c.bf16 %v2085, %v2081
        %v2803 = vpack.c.bf16 %v2309, %v2305
        %v2804 = vpack.c.bf16 %v2311, %v2307
        %v2805 = vpack.c.bf16 %v2535, %v2531
        %v2806 = vpack.c.bf16 %v2537, %v2533
        %v2807 = vpack.c.bf16 %v2736, %v2733
        %v2808 = vpack.c.bf16 %v1867, %v1863
        %v2809 = vpack.c.bf16 %v1869, %v1865
        %v2810 = vpack.c.bf16 %v2093, %v2089
        %v2811 = vpack.c.bf16 %v2095, %v2091
        %v2812 = vpack.c.bf16 %v2319, %v2315
        %v2813 = vpack.c.bf16 %v2321, %v2317
        %v2814 = vpack.c.bf16 %v2545, %v2541
        %v2815 = vpack.c.bf16 %v2547, %v2543
        %v2816 = vpack.c.bf16 %v2744, %v2741
        %v2817 = vpack.c.bf16 %v1877, %v1873
        %v2818 = vpack.c.bf16 %v1879, %v1875
        %v2819 = vpack.c.bf16 %v2103, %v2099
        %v2820 = vpack.c.bf16 %v2105, %v2101
        %v2821 = vpack.c.bf16 %v2329, %v2325
        %v2822 = vpack.c.bf16 %v2331, %v2327
        %v2823 = vpack.c.bf16 %v2555, %v2551
        %v2824 = vpack.c.bf16 %v2557, %v2553
        %v2825 = vpack.c.bf16 %v2752, %v2749
        %v2826 = vpack.c.bf16 %v1887, %v1883
        %v2827 = vpack.c.bf16 %v1889, %v1885
        %v2828 = vpack.c.bf16 %v2113, %v2109
        %v2829 = vpack.c.bf16 %v2115, %v2111
        %v2830 = vpack.c.bf16 %v2339, %v2335
        %v2831 = vpack.c.bf16 %v2341, %v2337
        %v2832 = vpack.c.bf16 %v2565, %v2561
        %v2833 = vpack.c.bf16 %v2567, %v2563
        %v2834 = vpack.c.bf16 %v2760, %v2757
        %v2907 = vunpack.c.l.b16 %v2763
        %v2908 = vunpack.c.l.b16 %v2764
        %v2909 = vunpack.c.l.b16 %v2765
        %v2910 = vunpack.c.l.b16 %v2766
        %v2911 = vunpack.c.l.b16 %v2767
        %v2912 = vunpack.c.l.b16 %v2768
        %v2913 = vunpack.c.l.b16 %v2769
        %v2914 = vunpack.c.l.b16 %v2770
        %v2915 = vunpack.c.l.b16 %v2771
        %v2916 = vunpack.c.h.b16 %v2763
        %v2917 = vunpack.c.h.b16 %v2764
        %v2918 = vunpack.c.h.b16 %v2765
        %v2919 = vunpack.c.h.b16 %v2766
        %v2920 = vunpack.c.h.b16 %v2767
        %v2921 = vunpack.c.h.b16 %v2768
        %v2922 = vunpack.c.h.b16 %v2769
        %v2923 = vunpack.c.h.b16 %v2770
        %v2924 = vunpack.c.h.b16 %v2771
        %v2925 = vunpack.c.l.b16 %v2772
        %v2926 = vunpack.c.l.b16 %v2773
        %v2927 = vunpack.c.l.b16 %v2774
        %v2928 = vunpack.c.l.b16 %v2775
        %v2929 = vunpack.c.l.b16 %v2776
        %v2930 = vunpack.c.l.b16 %v2777
        %v2931 = vunpack.c.l.b16 %v2778
        %v2932 = vunpack.c.l.b16 %v2779
        %v2933 = vunpack.c.l.b16 %v2780
        %v2934 = vunpack.c.h.b16 %v2772
        %v2935 = vunpack.c.h.b16 %v2773
        %v2936 = vunpack.c.h.b16 %v2774
        %v2937 = vunpack.c.h.b16 %v2775
        %v2938 = vunpack.c.h.b16 %v2776
        %v2939 = vunpack.c.h.b16 %v2777
        %v2940 = vunpack.c.h.b16 %v2778
        %v2941 = vunpack.c.h.b16 %v2779
        %v2942 = vunpack.c.h.b16 %v2780
        %v2943 = vunpack.c.l.b16 %v2781
        %v2944 = vunpack.c.l.b16 %v2782
        %v2945 = vunpack.c.l.b16 %v2783
        %v2946 = vunpack.c.l.b16 %v2784
        %v2947 = vunpack.c.l.b16 %v2785
        %v2948 = vunpack.c.l.b16 %v2786
        %v2949 = vunpack.c.l.b16 %v2787
        %v2950 = vunpack.c.l.b16 %v2788
        %v2951 = vunpack.c.l.b16 %v2789
        %v2952 = vunpack.c.h.b16 %v2781
        %v2953 = vunpack.c.h.b16 %v2782
        %v2954 = vunpack.c.h.b16 %v2783
        %v2955 = vunpack.c.h.b16 %v2784
        %v2956 = vunpack.c.h.b16 %v2785
        %v2957 = vunpack.c.h.b16 %v2786
        %v2958 = vunpack.c.h.b16 %v2787
        %v2959 = vunpack.c.h.b16 %v2788
        %v2960 = vunpack.c.h.b16 %v2789
        %v2961 = vunpack.c.l.b16 %v2790
        %v2962 = vunpack.c.l.b16 %v2791
        %v2963 = vunpack.c.l.b16 %v2792
        %v2964 = vunpack.c.l.b16 %v2793
        %v2965 = vunpack.c.l.b16 %v2794
        %v2966 = vunpack.c.l.b16 %v2795
        %v2967 = vunpack.c.l.b16 %v2796
        %v2968 = vunpack.c.l.b16 %v2797
        %v2969 = vunpack.c.l.b16 %v2798
        %v2970 = vunpack.c.h.b16 %v2790
        %v2971 = vunpack.c.h.b16 %v2791
        %v2972 = vunpack.c.h.b16 %v2792
        %v2973 = vunpack.c.h.b16 %v2793
        %v2974 = vunpack.c.h.b16 %v2794
        %v2975 = vunpack.c.h.b16 %v2795
        %v2976 = vunpack.c.h.b16 %v2796
        %v2977 = vunpack.c.h.b16 %v2797
        %v2978 = vunpack.c.h.b16 %v2798
        %v2979 = vunpack.c.l.b16 %v2799
        %v2980 = vunpack.c.l.b16 %v2800
        %v2981 = vunpack.c.l.b16 %v2801
        %v2982 = vunpack.c.l.b16 %v2802
        %v2983 = vunpack.c.l.b16 %v2803
        %v2984 = vunpack.c.l.b16 %v2804
        %v2985 = vunpack.c.l.b16 %v2805
        %v2986 = vunpack.c.l.b16 %v2806
        %v2987 = vunpack.c.l.b16 %v2807
        %v2988 = vunpack.c.h.b16 %v2799
        %v2989 = vunpack.c.h.b16 %v2800
        %v2990 = vunpack.c.h.b16 %v2801
        %v2991 = vunpack.c.h.b16 %v2802
        %v2992 = vunpack.c.h.b16 %v2803
        %v2993 = vunpack.c.h.b16 %v2804
        %v2994 = vunpack.c.h.b16 %v2805
        %v2995 = vunpack.c.h.b16 %v2806
        %v2996 = vunpack.c.h.b16 %v2807
        %v2997 = vunpack.c.l.b16 %v2808
        %v2998 = vunpack.c.l.b16 %v2809
        %v2999 = vunpack.c.l.b16 %v2810
        %v3000 = vunpack.c.l.b16 %v2811
        %v3001 = vunpack.c.l.b16 %v2812
        %v3002 = vunpack.c.l.b16 %v2813
        %v3003 = vunpack.c.l.b16 %v2814
        %v3004 = vunpack.c.l.b16 %v2815
        %v3005 = vunpack.c.l.b16 %v2816
        %v3006 = vunpack.c.h.b16 %v2808
        %v3007 = vunpack.c.h.b16 %v2809
        %v3008 = vunpack.c.h.b16 %v2810
        %v3009 = vunpack.c.h.b16 %v2811
        %v3010 = vunpack.c.h.b16 %v2812
        %v3011 = vunpack.c.h.b16 %v2813
        %v3012 = vunpack.c.h.b16 %v2814
        %v3013 = vunpack.c.h.b16 %v2815
        %v3014 = vunpack.c.h.b16 %v2816
        %v3015 = vunpack.c.l.b16 %v2817
        %v3016 = vunpack.c.l.b16 %v2818
        %v3017 = vunpack.c.l.b16 %v2819
        %v3018 = vunpack.c.l.b16 %v2820
        %v3019 = vunpack.c.l.b16 %v2821
        %v3020 = vunpack.c.l.b16 %v2822
        %v3021 = vunpack.c.l.b16 %v2823
        %v3022 = vunpack.c.l.b16 %v2824
        %v3023 = vunpack.c.l.b16 %v2825
        %v3024 = vunpack.c.h.b16 %v2817
        %v3025 = vunpack.c.h.b16 %v2818
        %v3026 = vunpack.c.h.b16 %v2819
        %v3027 = vunpack.c.h.b16 %v2820
        %v3028 = vunpack.c.h.b16 %v2821
        %v3029 = vunpack.c.h.b16 %v2822
        %v3030 = vunpack.c.h.b16 %v2823
        %v3031 = vunpack.c.h.b16 %v2824
        %v3032 = vunpack.c.h.b16 %v2825
        %v3033 = vunpack.c.l.b16 %v2826
        %v3034 = vunpack.c.l.b16 %v2827
        %v3035 = vunpack.c.l.b16 %v2828
        %v3036 = vunpack.c.l.b16 %v2829
        %v3037 = vunpack.c.l.b16 %v2830
        %v3038 = vunpack.c.l.b16 %v2831
        %v3039 = vunpack.c.l.b16 %v2832
        %v3040 = vunpack.c.l.b16 %v2833
        %v3041 = vunpack.c.l.b16 %v2834
        %v3042 = vunpack.c.h.b16 %v2826
        %v3043 = vunpack.c.h.b16 %v2827
        %v3044 = vunpack.c.h.b16 %v2828
        %v3045 = vunpack.c.h.b16 %v2829
        %v3046 = vunpack.c.h.b16 %v2830
        %v3047 = vunpack.c.h.b16 %v2831
        %v3048 = vunpack.c.h.b16 %v2832
        %v3049 = vunpack.c.h.b16 %v2833
        %v3050 = vunpack.c.h.b16 %v2834
        %v3051 = vpack.c.b16 %v2908, %v2907
        %v3052 = vpack.c.b16 %v2910, %v2909
        %v3053 = vpack.c.b16 %v2912, %v2911
        %v3054 = vpack.c.b16 %v2914, %v2913
        %v3055 = vpack.c.b16 %v2915, %v2915
        %v3056 = vpack.c.b16 %v2917, %v2916
        %v3057 = vpack.c.b16 %v2919, %v2918
        %v3058 = vpack.c.b16 %v2921, %v2920
        %v3059 = vpack.c.b16 %v2923, %v2922
        %v3060 = vpack.c.b16 %v2924, %v2924
        %v3061 = vpack.c.b16 %v2926, %v2925
        %v3062 = vpack.c.b16 %v2928, %v2927
        %v3063 = vpack.c.b16 %v2930, %v2929
        %v3064 = vpack.c.b16 %v2932, %v2931
        %v3065 = vpack.c.b16 %v2933, %v2933
        %v3066 = vpack.c.b16 %v2935, %v2934
        %v3067 = vpack.c.b16 %v2937, %v2936
        %v3068 = vpack.c.b16 %v2939, %v2938
        %v3069 = vpack.c.b16 %v2941, %v2940
        %v3070 = vpack.c.b16 %v2942, %v2942
        %v3071 = vpack.c.b16 %v2944, %v2943
        %v3072 = vpack.c.b16 %v2946, %v2945
        %v3073 = vpack.c.b16 %v2948, %v2947
        %v3074 = vpack.c.b16 %v2950, %v2949
        %v3075 = vpack.c.b16 %v2951, %v2951
        %v3076 = vpack.c.b16 %v2953, %v2952
        %v3077 = vpack.c.b16 %v2955, %v2954
        %v3078 = vpack.c.b16 %v2957, %v2956
        %v3079 = vpack.c.b16 %v2959, %v2958
        %v3080 = vpack.c.b16 %v2960, %v2960
        %v3081 = vpack.c.b16 %v2962, %v2961
        %v3082 = vpack.c.b16 %v2964, %v2963
        %v3083 = vpack.c.b16 %v2966, %v2965
        %v3084 = vpack.c.b16 %v2968, %v2967
        %v3085 = vpack.c.b16 %v2969, %v2969
        %v3086 = vpack.c.b16 %v2971, %v2970
        %v3087 = vpack.c.b16 %v2973, %v2972
        %v3088 = vpack.c.b16 %v2975, %v2974
        %v3089 = vpack.c.b16 %v2977, %v2976
        %v3090 = vpack.c.b16 %v2978, %v2978
        %v3091 = vpack.c.b16 %v2980, %v2979
        %v3092 = vpack.c.b16 %v2982, %v2981
        %v3093 = vpack.c.b16 %v2984, %v2983
        %v3094 = vpack.c.b16 %v2986, %v2985
        %v3095 = vpack.c.b16 %v2987, %v2987
        %v3096 = vpack.c.b16 %v2989, %v2988
        %v3097 = vpack.c.b16 %v2991, %v2990
        %v3098 = vpack.c.b16 %v2993, %v2992
        %v3099 = vpack.c.b16 %v2995, %v2994
        %v3100 = vpack.c.b16 %v2996, %v2996
        %v3101 = vpack.c.b16 %v2998, %v2997
        %v3102 = vpack.c.b16 %v3000, %v2999
        %v3103 = vpack.c.b16 %v3002, %v3001
        %v3104 = vpack.c.b16 %v3004, %v3003
        %v3105 = vpack.c.b16 %v3005, %v3005
        %v3106 = vpack.c.b16 %v3007, %v3006
        %v3107 = vpack.c.b16 %v3009, %v3008
        %v3108 = vpack.c.b16 %v3011, %v3010
        %v3109 = vpack.c.b16 %v3013, %v3012
        %v3110 = vpack.c.b16 %v3014, %v3014
        %v3111 = vpack.c.b16 %v3016, %v3015
        %v3112 = vpack.c.b16 %v3018, %v3017
        %v3113 = vpack.c.b16 %v3020, %v3019
        %v3114 = vpack.c.b16 %v3022, %v3021
        %v3115 = vpack.c.b16 %v3023, %v3023
        %v3116 = vpack.c.b16 %v3025, %v3024
        %v3117 = vpack.c.b16 %v3027, %v3026
        %v3118 = vpack.c.b16 %v3029, %v3028
        %v3119 = vpack.c.b16 %v3031, %v3030
        %v3120 = vpack.c.b16 %v3032, %v3032
        %v3121 = vpack.c.b16 %v3034, %v3033
        %v3122 = vpack.c.b16 %v3036, %v3035
        %v3123 = vpack.c.b16 %v3038, %v3037
        %v3124 = vpack.c.b16 %v3040, %v3039
        %v3125 = vpack.c.b16 %v3041, %v3041
        %v3126 = vpack.c.b16 %v3043, %v3042
        %v3127 = vpack.c.b16 %v3045, %v3044
        %v3128 = vpack.c.b16 %v3047, %v3046
        %v3129 = vpack.c.b16 %v3049, %v3048
        %v3130 = vpack.c.b16 %v3050, %v3050
        %3211 = vst [vmem:[#allocation2] sm:$0xff] %v3051
        %3212 = vst [vmem:[#allocation2 + $0x8] sm:$0xff] %v3052
        %3213 = vst [vmem:[#allocation2 + $0x10] sm:$0xff] %v3053
        %3214 = vst [vmem:[#allocation2 + $0x18] sm:$0xff] %v3054
        %3215 = vst [vmem:[#allocation2 + $0x20] sm:$0xf] %v3055
        %3216 = vst [vmem:[#allocation2 + $0x24] sm:$0xff] %v3056
        %3217 = vst [vmem:[#allocation2 + $0x2c] sm:$0xff] %v3057
        %3218 = vst [vmem:[#allocation2 + $0x34] sm:$0xff] %v3058
        %3219 = vst [vmem:[#allocation2 + $0x3c] sm:$0xff] %v3059
        %3220 = vst [vmem:[#allocation2 + $0x44] sm:$0xf] %v3060
        %3221 = vst [vmem:[#allocation2 + $0x48] sm:$0xff] %v3061
        %3222 = vst [vmem:[#allocation2 + $0x50] sm:$0xff] %v3062
        %3223 = vst [vmem:[#allocation2 + $0x58] sm:$0xff] %v3063
        %3224 = vst [vmem:[#allocation2 + $0x60] sm:$0xff] %v3064
        %3225 = vst [vmem:[#allocation2 + $0x68] sm:$0xf] %v3065
        %3226 = vst [vmem:[#allocation2 + $0x6c] sm:$0xff] %v3066
        %3227 = vst [vmem:[#allocation2 + $0x74] sm:$0xff] %v3067
        %3228 = vst [vmem:[#allocation2 + $0x7c] sm:$0xff] %v3068
        %3229 = vst [vmem:[#allocation2 + $0x84] sm:$0xff] %v3069
        %3230 = vst [vmem:[#allocation2 + $0x8c] sm:$0xf] %v3070
        %3231 = vst [vmem:[#allocation2 + $0x90] sm:$0xff] %v3071
        %3232 = vst [vmem:[#allocation2 + $0x98] sm:$0xff] %v3072
        %3233 = vst [vmem:[#allocation2 + $0xa0] sm:$0xff] %v3073
        %3234 = vst [vmem:[#allocation2 + $0xa8] sm:$0xff] %v3074
        %3235 = vst [vmem:[#allocation2 + $0xb0] sm:$0xf] %v3075
        %3236 = vst [vmem:[#allocation2 + $0xb4] sm:$0xff] %v3076
        %3237 = vst [vmem:[#allocation2 + $0xbc] sm:$0xff] %v3077
        %3238 = vst [vmem:[#allocation2 + $0xc4] sm:$0xff] %v3078
        %3239 = vst [vmem:[#allocation2 + $0xcc] sm:$0xff] %v3079
        %3240 = vst [vmem:[#allocation2 + $0xd4] sm:$0xf] %v3080
        %3241 = vst [vmem:[#allocation2 + $0xd8] sm:$0xff] %v3081
        %3242 = vst [vmem:[#allocation2 + $0xe0] sm:$0xff] %v3082
        %3243 = vst [vmem:[#allocation2 + $0xe8] sm:$0xff] %v3083
        %3244 = vst [vmem:[#allocation2 + $0xf0] sm:$0xff] %v3084
        %3245 = vst [vmem:[#allocation2 + $0xf8] sm:$0xf] %v3085
        %3246 = vst [vmem:[#allocation2 + $0xfc] sm:$0xff] %v3086
        %3247 = vst [vmem:[#allocation2 + $0x104] sm:$0xff] %v3087
        %3248 = vst [vmem:[#allocation2 + $0x10c] sm:$0xff] %v3088
        %3249 = vst [vmem:[#allocation2 + $0x114] sm:$0xff] %v3089
        %3250 = vst [vmem:[#allocation2 + $0x11c] sm:$0xf] %v3090
        %3251 = vst [vmem:[#allocation2 + $0x120] sm:$0xff] %v3091
        %3252 = vst [vmem:[#allocation2 + $0x128] sm:$0xff] %v3092
        %3253 = vst [vmem:[#allocation2 + $0x130] sm:$0xff] %v3093
        %3254 = vst [vmem:[#allocation2 + $0x138] sm:$0xff] %v3094
        %3255 = vst [vmem:[#allocation2 + $0x140] sm:$0xf] %v3095
        %3256 = vst [vmem:[#allocation2 + $0x144] sm:$0xff] %v3096
        %3257 = vst [vmem:[#allocation2 + $0x14c] sm:$0xff] %v3097
        %3258 = vst [vmem:[#allocation2 + $0x154] sm:$0xff] %v3098
        %3259 = vst [vmem:[#allocation2 + $0x15c] sm:$0xff] %v3099
        %3260 = vst [vmem:[#allocation2 + $0x164] sm:$0xf] %v3100
        %3261 = vst [vmem:[#allocation2 + $0x168] sm:$0xff] %v3101
        %3262 = vst [vmem:[#allocation2 + $0x170] sm:$0xff] %v3102
        %3263 = vst [vmem:[#allocation2 + $0x178] sm:$0xff] %v3103
        %3264 = vst [vmem:[#allocation2 + $0x180] sm:$0xff] %v3104
        %3265 = vst [vmem:[#allocation2 + $0x188] sm:$0xf] %v3105
        %3266 = vst [vmem:[#allocation2 + $0x18c] sm:$0xff] %v3106
        %3267 = vst [vmem:[#allocation2 + $0x194] sm:$0xff] %v3107
        %3268 = vst [vmem:[#allocation2 + $0x19c] sm:$0xff] %v3108
        %3269 = vst [vmem:[#allocation2 + $0x1a4] sm:$0xff] %v3109
        %3270 = vst [vmem:[#allocation2 + $0x1ac] sm:$0xf] %v3110
        %3271 = vst [vmem:[#allocation2 + $0x1b0] sm:$0xff] %v3111
        %3272 = vst [vmem:[#allocation2 + $0x1b8] sm:$0xff] %v3112
        %3273 = vst [vmem:[#allocation2 + $0x1c0] sm:$0xff] %v3113
        %3274 = vst [vmem:[#allocation2 + $0x1c8] sm:$0xff] %v3114
        %3275 = vst [vmem:[#allocation2 + $0x1d0] sm:$0xf] %v3115
        %3276 = vst [vmem:[#allocation2 + $0x1d4] sm:$0xff] %v3116
        %3277 = vst [vmem:[#allocation2 + $0x1dc] sm:$0xff] %v3117
        %3278 = vst [vmem:[#allocation2 + $0x1e4] sm:$0xff] %v3118
        %3279 = vst [vmem:[#allocation2 + $0x1ec] sm:$0xff] %v3119
        %3280 = vst [vmem:[#allocation2 + $0x1f4] sm:$0xf] %v3120
        %3281 = vst [vmem:[#allocation2 + $0x1f8] sm:$0xff] %v3121
        %3282 = vst [vmem:[#allocation2 + $0x200] sm:$0xff] %v3122
        %3283 = vst [vmem:[#allocation2 + $0x208] sm:$0xff] %v3123
        %3284 = vst [vmem:[#allocation2 + $0x210] sm:$0xff] %v3124
        %3285 = vst [vmem:[#allocation2 + $0x218] sm:$0xf] %v3125
        %3286 = vst [vmem:[#allocation2 + $0x21c] sm:$0xff] %v3126
        %3287 = vst [vmem:[#allocation2 + $0x224] sm:$0xff] %v3127
        %3288 = vst [vmem:[#allocation2 + $0x22c] sm:$0xff] %v3128
        %3289 = vst [vmem:[#allocation2 + $0x234] sm:$0xff] %v3129
        %3290 = vst [vmem:[#allocation2 + $0x23c] sm:$0xf] %v3130
        %v3291 = vlaneseq
        %v3292 = vshrl.u32 %v3291, 7
        %v3293 = vadd.s32 %v3292, 8
        %v3294 = vadd.s32 %v3292, 16
        %v3295 = vadd.s32 %v3292, 24
        %v3296 = vadd.s32 %v3292, 32
        %v3297 = vadd.s32 %v3292, 40
        %v3298 = vadd.s32 %v3292, 48
        %v3299 = vadd.s32 %v3292, 56
        %v3300 = vlaneseq
        %v3301 = vand.u32 %v3300, 127
        %vm3302 = vcmp.ge.s32.totalorder %v3292, %v3301
        %vm3303 = vcmp.ge.s32.totalorder %v3293, %v3301
        %vm3304 = vcmp.ge.s32.totalorder %v3294, %v3301
        %vm3305 = vcmp.ge.s32.totalorder %v3295, %v3301
        %vm3306 = vcmp.ge.s32.totalorder %v3296, %v3301
        %vm3307 = vcmp.ge.s32.totalorder %v3297, %v3301
        %vm3308 = vcmp.ge.s32.totalorder %v3298, %v3301
        %vm3309 = vcmp.ge.s32.totalorder %v3299, %v3301
        %v3310 = vsel %vm3302, 0.0, -1e+30
        %v3311 = vsel %vm3303, 0.0, -1e+30
        %v3312 = vsel %vm3304, 0.0, -1e+30
        %v3313 = vsel %vm3305, 0.0, -1e+30
        %v3314 = vsel %vm3306, 0.0, -1e+30
        %v3315 = vsel %vm3307, 0.0, -1e+30
        %v3316 = vsel %vm3308, 0.0, -1e+30
        %v3317 = vsel %vm3309, 0.0, -1e+30
        %v3318 = vld [vmem:[#allocation2] sm:$0xf]
        %v3319 = vld [vmem:[#allocation2 + $0x24] sm:$0xf]
        %v3320 = vld [vmem:[#allocation2 + $0x48] sm:$0xf]
        %v3321 = vld [vmem:[#allocation2 + $0x6c] sm:$0xf]
        %v3322 = vld [vmem:[#allocation2 + $0x90] sm:$0xf]
        %v3323 = vld [vmem:[#allocation2 + $0xb4] sm:$0xf]
        %v3324 = vld [vmem:[#allocation2 + $0xd8] sm:$0xf]
        %v3325 = vld [vmem:[#allocation2 + $0xfc] sm:$0xf]
        %v3326 = vld [vmem:[#allocation2 + $0xc] sm:$0xf]
        %v3327 = vld [vmem:[#allocation2 + $0x30] sm:$0xf]
        %v3328 = vld [vmem:[#allocation2 + $0x54] sm:$0xf]
        %v3329 = vld [vmem:[#allocation2 + $0x78] sm:$0xf]
        %v3330 = vld [vmem:[#allocation2 + $0x9c] sm:$0xf]
        %v3331 = vld [vmem:[#allocation2 + $0xc0] sm:$0xf]
        %v3332 = vld [vmem:[#allocation2 + $0xe4] sm:$0xf]
        %v3333 = vld [vmem:[#allocation2 + $0x108] sm:$0xf]
        %v3334 = vld [vmem:[#allocation2 + $0x18] sm:$0xf]
        %v3335 = vld [vmem:[#allocation2 + $0x3c] sm:$0xf]
        %v3336 = vld [vmem:[#allocation2 + $0x60] sm:$0xf]
        %v3337 = vld [vmem:[#allocation2 + $0x84] sm:$0xf]
        %v3338 = vld [vmem:[#allocation2 + $0xa8] sm:$0xf]
        %v3339 = vld [vmem:[#allocation2 + $0xcc] sm:$0xf]
        %v3340 = vld [vmem:[#allocation2 + $0xf0] sm:$0xf]
        %v3341 = vld [vmem:[#allocation2 + $0x114] sm:$0xf]
        %v3350 = vunpack.c.l.b16 %v3318
        %v3351 = vunpack.c.l.b16 %v3319
        %v3352 = vunpack.c.l.b16 %v3320
        %v3353 = vunpack.c.l.b16 %v3321
        %v3354 = vunpack.c.l.b16 %v3322
        %v3355 = vunpack.c.l.b16 %v3323
        %v3356 = vunpack.c.l.b16 %v3324
        %v3357 = vunpack.c.l.b16 %v3325
        %v3358 = vpack.c.b16 %v3351, %v3350
        %v3359 = vpack.c.b16 %v3353, %v3352
        %v3360 = vpack.c.b16 %v3355, %v3354
        %v3361 = vpack.c.b16 %v3357, %v3356
        %v3370 = vunpack.c.l.b16 %v3326
        %v3371 = vunpack.c.l.b16 %v3327
        %v3372 = vunpack.c.l.b16 %v3328
        %v3373 = vunpack.c.l.b16 %v3329
        %v3374 = vunpack.c.l.b16 %v3330
        %v3375 = vunpack.c.l.b16 %v3331
        %v3376 = vunpack.c.l.b16 %v3332
        %v3377 = vunpack.c.l.b16 %v3333
        %v3378 = vpack.c.b16 %v3371, %v3370
        %v3379 = vpack.c.b16 %v3373, %v3372
        %v3380 = vpack.c.b16 %v3375, %v3374
        %v3381 = vpack.c.b16 %v3377, %v3376
        %vm3382 = vcmask 523264
        %v3384 = vsel %vm3382, %v3358, 0
        %v3387 = vsel %vm3382, %v3359, 0
        %v3390 = vsel %vm3382, %v3360, 0
        %v3393 = vsel %vm3382, %v3361, 0
        %v3396 = vsel %vm3382, %v3378, 0
        %v3399 = vsel %vm3382, %v3379, 0
        %v3402 = vsel %vm3382, %v3380, 0
        %v3405 = vsel %vm3382, %v3381, 0
        %3407 = vmatprep.subr.bf16.mxu0 0
        %3408 = vmatpush1.bf16.xpose.msra.mxu0 0
        %3409 = vmatprep.subr.bf16.mxu0 0
        %3410 = vmatpush1.bf16.xpose.msra.mxu0 0
        %3411 = vmatprep.subr.bf16.mxu0 0
        %3412 = vmatpush1.bf16.xpose.msra.mxu0 0
        %3413 = vmatprep.subr.bf16.mxu0 0
        %3414 = vmatpush1.bf16.xpose.msra.mxu0 0
        %3415 = vmatprep.subr.bf16.mxu0 0
        %3416 = vmatpush1.bf16.xpose.msra.mxu0 %v3405
        %3417 = vmatprep.subr.bf16.mxu0 0
        %3418 = vmatpush1.bf16.xpose.msra.mxu0 %v3402
        %3419 = vmatprep.subr.bf16.mxu0 0
        %3420 = vmatpush1.bf16.xpose.msra.mxu0 %v3399
        %3421 = vmatprep.subr.bf16.mxu0 0
        %3422 = vmatpush1.bf16.xpose.msra.mxu0 %v3396
        %3423 = vmatprep.subr.bf16.mxu0 0
        %3424 = vmatpush2.bf16.xpose.msra.mxu0 0
        %3425 = vmatprep.subr.bf16.mxu0 0
        %3426 = vmatpush2.bf16.xpose.msra.mxu0 0
        %3427 = vmatprep.subr.bf16.mxu0 0
        %3428 = vmatpush2.bf16.xpose.msra.mxu0 0
        %3429 = vmatprep.subr.bf16.mxu0 0
        %3430 = vmatpush2.bf16.xpose.msra.mxu0 0
        %3431 = vmatprep.subr.bf16.mxu0 0
        %3432 = vmatpush2.bf16.xpose.msra.mxu0 0
        %3433 = vmatprep.subr.bf16.mxu0 0
        %3434 = vmatpush2.bf16.xpose.msra.mxu0 0
        %3435 = vmatprep.subr.bf16.mxu0 0
        %3436 = vmatpush2.bf16.xpose.msra.mxu0 0
        %3437 = vmatprep.subr.bf16.mxu0 0
        %3438 = vmatpush2.bf16.xpose.msra.mxu0 0
        %3439 = vmatprep.mubr.bf16.mxu0 0
        %3440 = vmatmul.mubr.bf16.gmra.mxu0 %v3384
        %v3441 = vpop.f32.mrf.mxu0
        %v3442 = vadd.f32 0.0, %v3441
        %v3443 = vpop.f32.mrf.mxu0
        %v3444 = vpop.f32.mrf.mxu0
        %v3445 = vadd.f32 0.0, %v3444
        %v3446 = vpop.f32.mrf.mxu0
        %3447 = vmatprep.mubr.bf16.mxu0 0
        %3448 = vmatmul.mubr.bf16.gmra.mxu0 %v3387
        %v3449 = vpop.f32.mrf.mxu0
        %v3450 = vadd.f32 0.0, %v3449
        %v3451 = vpop.f32.mrf.mxu0
        %v3452 = vpop.f32.mrf.mxu0
        %v3453 = vadd.f32 0.0, %v3452
        %v3454 = vpop.f32.mrf.mxu0
        %3455 = vmatprep.mubr.bf16.mxu0 0
        %3456 = vmatmul.mubr.bf16.gmra.mxu0 %v3390
        %v3457 = vpop.f32.mrf.mxu0
        %v3458 = vadd.f32 0.0, %v3457
        %v3459 = vpop.f32.mrf.mxu0
        %v3460 = vpop.f32.mrf.mxu0
        %v3461 = vadd.f32 0.0, %v3460
        %v3462 = vpop.f32.mrf.mxu0
        %3463 = vmatprep.mubr.bf16.mxu0 0
        %3464 = vmatmul.mubr.bf16.gmra.mxu0 %v3393
        %v3465 = vpop.f32.mrf.mxu0
        %v3466 = vadd.f32 0.0, %v3465
        %v3467 = vpop.f32.mrf.mxu0
        %v3468 = vpop.f32.mrf.mxu0
        %v3469 = vadd.f32 0.0, %v3468
        %v3470 = vpop.f32.mrf.mxu0
        %3471 = vdwg.mxu0
        %v3472 = vmul.f32 %v3442, 0.125
        %v3473 = vmul.f32 %v3445, 0.125
        %v3474 = vmul.f32 %v3450, 0.125
        %v3475 = vmul.f32 %v3453, 0.125
        %v3476 = vmul.f32 %v3458, 0.125
        %v3477 = vmul.f32 %v3461, 0.125
        %v3478 = vmul.f32 %v3466, 0.125
        %v3479 = vmul.f32 %v3469, 0.125
        %v3480 = vadd.f32 %v3472, %v3310
        %v3481 = vadd.f32 %v3473, %v3311
        %v3482 = vadd.f32 %v3474, %v3312
        %v3483 = vadd.f32 %v3475, %v3313
        %v3484 = vadd.f32 %v3476, %v3314
        %v3485 = vadd.f32 %v3477, %v3315
        %v3486 = vadd.f32 %v3478, %v3316
        %v3487 = vadd.f32 %v3479, %v3317
        %v3488 = vsel %vm3382, %v3480, -inf
        %3489 = vmax.xlane.f32.xlu0 %v3488
        %v3490 = vpop.xlane.xlu0 %3489
        %v3491 = vsel %vm3382, %v3481, -inf
        %3492 = vmax.xlane.f32.xlu0 %v3491
        %v3493 = vpop.xlane.xlu0 %3492
        %v3494 = vsel %vm3382, %v3482, -inf
        %3495 = vmax.xlane.f32.xlu0 %v3494
        %v3496 = vpop.xlane.xlu0 %3495
        %v3497 = vsel %vm3382, %v3483, -inf
        %3498 = vmax.xlane.f32.xlu0 %v3497
        %v3499 = vpop.xlane.xlu0 %3498
        %v3500 = vsel %vm3382, %v3484, -inf
        %3501 = vmax.xlane.f32.xlu0 %v3500
        %v3502 = vpop.xlane.xlu0 %3501
        %v3503 = vsel %vm3382, %v3485, -inf
        %3504 = vmax.xlane.f32.xlu0 %v3503
        %v3505 = vpop.xlane.xlu0 %3504
        %v3506 = vsel %vm3382, %v3486, -inf
        %3507 = vmax.xlane.f32.xlu0 %v3506
        %v3508 = vpop.xlane.xlu0 %3507
        %v3509 = vsel %vm3382, %v3487, -inf
        %3510 = vmax.xlane.f32.xlu0 %v3509
        %v3511 = vpop.xlane.xlu0 %3510
        %v3512 = vsub.f32 %v3480, %v3490
        %v3513 = vsub.f32 %v3481, %v3493
        %v3514 = vsub.f32 %v3482, %v3496
        %v3515 = vsub.f32 %v3483, %v3499
        %v3516 = vsub.f32 %v3484, %v3502
        %v3517 = vsub.f32 %v3485, %v3505
        %v3518 = vsub.f32 %v3486, %v3508
        %v3519 = vsub.f32 %v3487, %v3511
        %v3520 = vmul.f32 %v3512, 1.442695
        %v3521 = vpow.pop %v3520
        %v3522 = vmul.f32 %v3513, 1.442695
        %v3523 = vpow.pop %v3522
        %v3524 = vmul.f32 %v3514, 1.442695
        %v3525 = vpow.pop %v3524
        %v3526 = vmul.f32 %v3515, 1.442695
        %v3527 = vpow.pop %v3526
        %v3528 = vmul.f32 %v3516, 1.442695
        %v3529 = vpow.pop %v3528
        %v3530 = vmul.f32 %v3517, 1.442695
        %v3531 = vpow.pop %v3530
        %v3532 = vmul.f32 %v3518, 1.442695
        %v3533 = vpow.pop %v3532
        %v3534 = vmul.f32 %v3519, 1.442695
        %v3535 = vpow.pop %v3534
        %v3536 = vsel %vm3382, %v3521, 0.0
        %3537 = vadd.xlane.f32.xlu0 %v3536
        %v3538 = vpop.xlane.xlu0 %3537
        %v3539 = vsel %vm3382, %v3523, 0.0
        %3540 = vadd.xlane.f32.xlu0 %v3539
        %v3541 = vpop.xlane.xlu0 %3540
        %v3542 = vsel %vm3382, %v3525, 0.0
        %3543 = vadd.xlane.f32.xlu0 %v3542
        %v3544 = vpop.xlane.xlu0 %3543
        %v3545 = vsel %vm3382, %v3527, 0.0
        %3546 = vadd.xlane.f32.xlu0 %v3545
        %v3547 = vpop.xlane.xlu0 %3546
        %v3548 = vsel %vm3382, %v3529, 0.0
        %3549 = vadd.xlane.f32.xlu0 %v3548
        %v3550 = vpop.xlane.xlu0 %3549
        %v3551 = vsel %vm3382, %v3531, 0.0
        %3552 = vadd.xlane.f32.xlu0 %v3551
        %v3553 = vpop.xlane.xlu0 %3552
        %v3554 = vsel %vm3382, %v3533, 0.0
        %3555 = vadd.xlane.f32.xlu0 %v3554
        %v3556 = vpop.xlane.xlu0 %3555
        %v3557 = vsel %vm3382, %v3535, 0.0
        %3558 = vadd.xlane.f32.xlu0 %v3557
        %v3559 = vpop.xlane.xlu0 %3558
        %v3560 = vrcp.pop %v3538
        %v3561 = vrcp.pop %v3541
        %v3562 = vrcp.pop %v3544
        %v3563 = vrcp.pop %v3547
        %v3564 = vrcp.pop %v3550
        %v3565 = vrcp.pop %v3553
        %v3566 = vrcp.pop %v3556
        %v3567 = vrcp.pop %v3559
        %v3568 = vmul.f32 %v3521, %v3560
        %v3569 = vmul.f32 %v3523, %v3561
        %v3570 = vmul.f32 %v3525, %v3562
        %v3571 = vmul.f32 %v3527, %v3563
        %v3572 = vmul.f32 %v3529, %v3564
        %v3573 = vmul.f32 %v3531, %v3565
        %v3574 = vmul.f32 %v3533, %v3566
        %v3575 = vmul.f32 %v3535, %v3567
        %v3576 = vpack.c.bf16 %v3569, %v3568
        %v3577 = vpack.c.bf16 %v3571, %v3570
        %v3578 = vpack.c.bf16 %v3573, %v3572
        %v3579 = vpack.c.bf16 %v3575, %v3574
        %v3588 = vunpack.c.l.b16 %v3334
        %v3589 = vunpack.c.l.b16 %v3335
        %v3590 = vunpack.c.l.b16 %v3336
        %v3591 = vunpack.c.l.b16 %v3337
        %v3592 = vunpack.c.l.b16 %v3338
        %v3593 = vunpack.c.l.b16 %v3339
        %v3594 = vunpack.c.l.b16 %v3340
        %v3595 = vunpack.c.l.b16 %v3341
        %v3596 = vpack.c.b16 %v3589, %v3588
        %v3597 = vpack.c.b16 %v3591, %v3590
        %v3598 = vpack.c.b16 %v3593, %v3592
        %v3599 = vpack.c.b16 %v3595, %v3594
        %v3605 = vsel %vm3382, %v3576, 0
        %v3608 = vsel %vm3382, %v3577, 0
        %v3611 = vsel %vm3382, %v3578, 0
        %v3614 = vsel %vm3382, %v3579, 0
        %3616 = vmatprep.subr.bf16.mxu0 0
        %3617 = vmatpush1.bf16.msra.mxu0 0
        %3618 = vmatprep.subr.bf16.mxu0 0
        %3619 = vmatpush1.bf16.msra.mxu0 0
        %3620 = vmatprep.subr.bf16.mxu0 0
        %3621 = vmatpush1.bf16.msra.mxu0 0
        %3622 = vmatprep.subr.bf16.mxu0 0
        %3623 = vmatpush1.bf16.msra.mxu0 0
        %3624 = vmatprep.subr.bf16.mxu0 0
        %3625 = vmatpush1.bf16.msra.mxu0 %v3599
        %3626 = vmatprep.subr.bf16.mxu0 0
        %3627 = vmatpush1.bf16.msra.mxu0 %v3598
        %3628 = vmatprep.subr.bf16.mxu0 0
        %3629 = vmatpush1.bf16.msra.mxu0 %v3597
        %3630 = vmatprep.subr.bf16.mxu0 0
        %3631 = vmatpush1.bf16.msra.mxu0 %v3596
        %3632 = vmatprep.subr.bf16.mxu0 0
        %3633 = vmatpush2.bf16.msra.mxu0 0
        %3634 = vmatprep.subr.bf16.mxu0 0
        %3635 = vmatpush2.bf16.msra.mxu0 0
        %3636 = vmatprep.subr.bf16.mxu0 0
        %3637 = vmatpush2.bf16.msra.mxu0 0
        %3638 = vmatprep.subr.bf16.mxu0 0
        %3639 = vmatpush2.bf16.msra.mxu0 0
        %3640 = vmatprep.subr.bf16.mxu0 0
        %3641 = vmatpush2.bf16.msra.mxu0 0
        %3642 = vmatprep.subr.bf16.mxu0 0
        %3643 = vmatpush2.bf16.msra.mxu0 0
        %3644 = vmatprep.subr.bf16.mxu0 0
        %3645 = vmatpush2.bf16.msra.mxu0 0
        %3646 = vmatprep.subr.bf16.mxu0 0
        %3647 = vmatpush2.bf16.msra.mxu0 0
        %3648 = vmatprep.mubr.bf16.mxu0 0
        %3649 = vmatmul.mubr.bf16.gmra.mxu0 %v3605
        %v3650 = vpop.f32.mrf.mxu0
        %v3651 = vadd.f32 0.0, %v3650
        %v3652 = vpop.f32.mrf.mxu0
        %v3653 = vpop.f32.mrf.mxu0
        %v3654 = vadd.f32 0.0, %v3653
        %v3655 = vpop.f32.mrf.mxu0
        %3656 = vmatprep.mubr.bf16.mxu0 0
        %3657 = vmatmul.mubr.bf16.gmra.mxu0 %v3608
        %v3658 = vpop.f32.mrf.mxu0
        %v3659 = vadd.f32 0.0, %v3658
        %v3660 = vpop.f32.mrf.mxu0
        %v3661 = vpop.f32.mrf.mxu0
        %v3662 = vadd.f32 0.0, %v3661
        %v3663 = vpop.f32.mrf.mxu0
        %3664 = vmatprep.mubr.bf16.mxu0 0
        %3665 = vmatmul.mubr.bf16.gmra.mxu0 %v3611
        %v3666 = vpop.f32.mrf.mxu0
        %v3667 = vadd.f32 0.0, %v3666
        %v3668 = vpop.f32.mrf.mxu0
        %v3669 = vpop.f32.mrf.mxu0
        %v3670 = vadd.f32 0.0, %v3669
        %v3671 = vpop.f32.mrf.mxu0
        %3672 = vmatprep.mubr.bf16.mxu0 0
        %3673 = vmatmul.mubr.bf16.gmra.mxu0 %v3614
        %v3674 = vpop.f32.mrf.mxu0
        %v3675 = vadd.f32 0.0, %v3674
        %v3676 = vpop.f32.mrf.mxu0
        %v3677 = vpop.f32.mrf.mxu0
        %v3678 = vadd.f32 0.0, %v3677
        %v3679 = vpop.f32.mrf.mxu0
        %3680 = vdwg.mxu0
        %v3681 = vpack.c.bf16 %v3654, %v3651
        %v3682 = vpack.c.bf16 %v3662, %v3659
        %v3683 = vpack.c.bf16 %v3670, %v3667
        %v3684 = vpack.c.bf16 %v3678, %v3675
        %v3689 = vunpack.c.l.b16 %v3681
        %v3690 = vunpack.c.h.b16 %v3681
        %v3691 = vunpack.c.l.b16 %v3682
        %v3692 = vunpack.c.h.b16 %v3682
        %v3693 = vunpack.c.l.b16 %v3683
        %v3694 = vunpack.c.h.b16 %v3683
        %v3695 = vunpack.c.l.b16 %v3684
        %v3696 = vunpack.c.h.b16 %v3684
        %v3697 = vpack.c.b16 %v3689, %v3689
        %v3698 = vpack.c.b16 %v3690, %v3690
        %v3699 = vpack.c.b16 %v3691, %v3691
        %v3700 = vpack.c.b16 %v3692, %v3692
        %v3701 = vpack.c.b16 %v3693, %v3693
        %v3702 = vpack.c.b16 %v3694, %v3694
        %v3703 = vpack.c.b16 %v3695, %v3695
        %v3704 = vpack.c.b16 %v3696, %v3696
        %vm3713 = vcmask 519168
        %3714 = vst.msk [vmem:[#allocation3] sm:$0xf] %vm3713, %v3697
        %3715 = vst.msk [vmem:[#allocation3 + $0xc] sm:$0xf] %vm3713, %v3698
        %3716 = vst.msk [vmem:[#allocation3 + $0x18] sm:$0xf] %vm3713, %v3699
        %3717 = vst.msk [vmem:[#allocation3 + $0x24] sm:$0xf] %vm3713, %v3700
        %3718 = vst.msk [vmem:[#allocation3 + $0x30] sm:$0xf] %vm3713, %v3701
        %3719 = vst.msk [vmem:[#allocation3 + $0x3c] sm:$0xf] %vm3713, %v3702
        %3720 = vst.msk [vmem:[#allocation3 + $0x48] sm:$0xf] %vm3713, %v3703
        %3721 = vst.msk [vmem:[#allocation3 + $0x54] sm:$0xf] %vm3713, %v3704
        %v3722 = vld [vmem:[#allocation2] sm:$0xf]
        %v3723 = vld [vmem:[#allocation2 + $0x24] sm:$0xf]
        %v3724 = vld [vmem:[#allocation2 + $0x48] sm:$0xf]
        %v3725 = vld [vmem:[#allocation2 + $0x6c] sm:$0xf]
        %v3726 = vld [vmem:[#allocation2 + $0x90] sm:$0xf]
        %v3727 = vld [vmem:[#allocation2 + $0xb4] sm:$0xf]
        %v3728 = vld [vmem:[#allocation2 + $0xd8] sm:$0xf]
        %v3729 = vld [vmem:[#allocation2 + $0xfc] sm:$0xf]
        %v3730 = vld [vmem:[#allocation2 + $0xc] sm:$0xf]
        %v3731 = vld [vmem:[#allocation2 + $0x30] sm:$0xf]
        %v3732 = vld [vmem:[#allocation2 + $0x54] sm:$0xf]
        %v3733 = vld [vmem:[#allocation2 + $0x78] sm:$0xf]
        %v3734 = vld [vmem:[#allocation2 + $0x9c] sm:$0xf]
        %v3735 = vld [vmem:[#allocation2 + $0xc0] sm:$0xf]
        %v3736 = vld [vmem:[#allocation2 + $0xe4] sm:$0xf]
        %v3737 = vld [vmem:[#allocation2 + $0x108] sm:$0xf]
        %v3738 = vld [vmem:[#allocation2 + $0x18] sm:$0xf]
        %v3739 = vld [vmem:[#allocation2 + $0x3c] sm:$0xf]
        %v3740 = vld [vmem:[#allocation2 + $0x60] sm:$0xf]
        %v3741 = vld [vmem:[#allocation2 + $0x84] sm:$0xf]
        %v3742 = vld [vmem:[#allocation2 + $0xa8] sm:$0xf]
        %v3743 = vld [vmem:[#allocation2 + $0xcc] sm:$0xf]
        %v3744 = vld [vmem:[#allocation2 + $0xf0] sm:$0xf]
        %v3745 = vld [vmem:[#allocation2 + $0x114] sm:$0xf]
        %v3754 = vunpack.c.l.b16 %v3722
        %v3755 = vunpack.c.l.b16 %v3723
        %v3756 = vunpack.c.l.b16 %v3724
        %v3757 = vunpack.c.l.b16 %v3725
        %v3758 = vunpack.c.l.b16 %v3726
        %v3759 = vunpack.c.l.b16 %v3727
        %v3760 = vunpack.c.l.b16 %v3728
        %v3761 = vunpack.c.l.b16 %v3729
        %v3762 = vpack.c.b16 %v3755, %v3754
        %v3763 = vpack.c.b16 %v3757, %v3756
        %v3764 = vpack.c.b16 %v3759, %v3758
        %v3765 = vpack.c.b16 %v3761, %v3760
        %3766 = vrot.lane.b32.xlu0 %v3762, 64
        %v3767 = vpop.permute.xlu0 %3766
        %3768 = vrot.lane.b32.xlu0 %v3763, 64
        %v3769 = vpop.permute.xlu0 %3768
        %3770 = vrot.lane.b32.xlu0 %v3764, 64
        %v3771 = vpop.permute.xlu0 %3770
        %3772 = vrot.lane.b32.xlu0 %v3765, 64
        %v3773 = vpop.permute.xlu0 %3772
        %v3782 = vunpack.c.l.b16 %v3730
        %v3783 = vunpack.c.l.b16 %v3731
        %v3784 = vunpack.c.l.b16 %v3732
        %v3785 = vunpack.c.l.b16 %v3733
        %v3786 = vunpack.c.l.b16 %v3734
        %v3787 = vunpack.c.l.b16 %v3735
        %v3788 = vunpack.c.l.b16 %v3736
        %v3789 = vunpack.c.l.b16 %v3737
        %v3790 = vpack.c.b16 %v3783, %v3782
        %v3791 = vpack.c.b16 %v3785, %v3784
        %v3792 = vpack.c.b16 %v3787, %v3786
        %v3793 = vpack.c.b16 %v3789, %v3788
        %3794 = vrot.lane.b32.xlu0 %v3790, 64
        %v3795 = vpop.permute.xlu0 %3794
        %3796 = vrot.lane.b32.xlu0 %v3791, 64
        %v3797 = vpop.permute.xlu0 %3796
        %3798 = vrot.lane.b32.xlu0 %v3792, 64
        %v3799 = vpop.permute.xlu0 %3798
        %3800 = vrot.lane.b32.xlu0 %v3793, 64
        %v3801 = vpop.permute.xlu0 %3800
        %v3803 = vsel %vm3382, %v3767, 0
        %v3806 = vsel %vm3382, %v3769, 0
        %v3809 = vsel %vm3382, %v3771, 0
        %v3812 = vsel %vm3382, %v3773, 0
        %v3815 = vsel %vm3382, %v3795, 0
        %v3818 = vsel %vm3382, %v3797, 0
        %v3821 = vsel %vm3382, %v3799, 0
        %v3824 = vsel %vm3382, %v3801, 0
        %3826 = vmatprep.subr.bf16.mxu0 0
        %3827 = vmatpush1.bf16.xpose.msra.mxu0 0
        %3828 = vmatprep.subr.bf16.mxu0 0
        %3829 = vmatpush1.bf16.xpose.msra.mxu0 0
        %3830 = vmatprep.subr.bf16.mxu0 0
        %3831 = vmatpush1.bf16.xpose.msra.mxu0 0
        %3832 = vmatprep.subr.bf16.mxu0 0
        %3833 = vmatpush1.bf16.xpose.msra.mxu0 0
        %3834 = vmatprep.subr.bf16.mxu0 0
        %3835 = vmatpush1.bf16.xpose.msra.mxu0 %v3824
        %3836 = vmatprep.subr.bf16.mxu0 0
        %3837 = vmatpush1.bf16.xpose.msra.mxu0 %v3821
        %3838 = vmatprep.subr.bf16.mxu0 0
        %3839 = vmatpush1.bf16.xpose.msra.mxu0 %v3818
        %3840 = vmatprep.subr.bf16.mxu0 0
        %3841 = vmatpush1.bf16.xpose.msra.mxu0 %v3815
        %3842 = vmatprep.subr.bf16.mxu0 0
        %3843 = vmatpush2.bf16.xpose.msra.mxu0 0
        %3844 = vmatprep.subr.bf16.mxu0 0
        %3845 = vmatpush2.bf16.xpose.msra.mxu0 0
        %3846 = vmatprep.subr.bf16.mxu0 0
        %3847 = vmatpush2.bf16.xpose.msra.mxu0 0
        %3848 = vmatprep.subr.bf16.mxu0 0
        %3849 = vmatpush2.bf16.xpose.msra.mxu0 0
        %3850 = vmatprep.subr.bf16.mxu0 0
        %3851 = vmatpush2.bf16.xpose.msra.mxu0 0
        %3852 = vmatprep.subr.bf16.mxu0 0
        %3853 = vmatpush2.bf16.xpose.msra.mxu0 0
        %3854 = vmatprep.subr.bf16.mxu0 0
        %3855 = vmatpush2.bf16.xpose.msra.mxu0 0
        %3856 = vmatprep.subr.bf16.mxu0 0
        %3857 = vmatpush2.bf16.xpose.msra.mxu0 0
        %3858 = vmatprep.mubr.bf16.mxu0 0
        %3859 = vmatmul.mubr.bf16.gmra.mxu0 %v3803
        %v3860 = vpop.f32.mrf.mxu0
        %v3861 = vadd.f32 0.0, %v3860
        %v3862 = vpop.f32.mrf.mxu0
        %v3863 = vpop.f32.mrf.mxu0
        %v3864 = vadd.f32 0.0, %v3863
        %v3865 = vpop.f32.mrf.mxu0
        %3866 = vmatprep.mubr.bf16.mxu0 0
        %3867 = vmatmul.mubr.bf16.gmra.mxu0 %v3806
        %v3868 = vpop.f32.mrf.mxu0
        %v3869 = vadd.f32 0.0, %v3868
        %v3870 = vpop.f32.mrf.mxu0
        %v3871 = vpop.f32.mrf.mxu0
        %v3872 = vadd.f32 0.0, %v3871
        %v3873 = vpop.f32.mrf.mxu0
        %3874 = vmatprep.mubr.bf16.mxu0 0
        %3875 = vmatmul.mubr.bf16.gmra.mxu0 %v3809
        %v3876 = vpop.f32.mrf.mxu0
        %v3877 = vadd.f32 0.0, %v3876
        %v3878 = vpop.f32.mrf.mxu0
        %v3879 = vpop.f32.mrf.mxu0
        %v3880 = vadd.f32 0.0, %v3879
        %v3881 = vpop.f32.mrf.mxu0
        %3882 = vmatprep.mubr.bf16.mxu0 0
        %3883 = vmatmul.mubr.bf16.gmra.mxu0 %v3812
        %v3884 = vpop.f32.mrf.mxu0
        %v3885 = vadd.f32 0.0, %v3884
        %v3886 = vpop.f32.mrf.mxu0
        %v3887 = vpop.f32.mrf.mxu0
        %v3888 = vadd.f32 0.0, %v3887
        %v3889 = vpop.f32.mrf.mxu0
        %3890 = vdwg.mxu0
        %v3891 = vmul.f32 %v3861, 0.125
        %v3892 = vmul.f32 %v3864, 0.125
        %v3893 = vmul.f32 %v3869, 0.125
        %v3894 = vmul.f32 %v3872, 0.125
        %v3895 = vmul.f32 %v3877, 0.125
        %v3896 = vmul.f32 %v3880, 0.125
        %v3897 = vmul.f32 %v3885, 0.125
        %v3898 = vmul.f32 %v3888, 0.125
        %v3899 = vadd.f32 %v3891, %v3310
        %v3900 = vadd.f32 %v3892, %v3311
        %v3901 = vadd.f32 %v3893, %v3312
        %v3902 = vadd.f32 %v3894, %v3313
        %v3903 = vadd.f32 %v3895, %v3314
        %v3904 = vadd.f32 %v3896, %v3315
        %v3905 = vadd.f32 %v3897, %v3316
        %v3906 = vadd.f32 %v3898, %v3317
        %v3907 = vsel %vm3382, %v3899, -inf
        %3908 = vmax.xlane.f32.xlu0 %v3907
        %v3909 = vpop.xlane.xlu0 %3908
        %v3910 = vsel %vm3382, %v3900, -inf
        %3911 = vmax.xlane.f32.xlu0 %v3910
        %v3912 = vpop.xlane.xlu0 %3911
        %v3913 = vsel %vm3382, %v3901, -inf
        %3914 = vmax.xlane.f32.xlu0 %v3913
        %v3915 = vpop.xlane.xlu0 %3914
        %v3916 = vsel %vm3382, %v3902, -inf
        %3917 = vmax.xlane.f32.xlu0 %v3916
        %v3918 = vpop.xlane.xlu0 %3917
        %v3919 = vsel %vm3382, %v3903, -inf
        %3920 = vmax.xlane.f32.xlu0 %v3919
        %v3921 = vpop.xlane.xlu0 %3920
        %v3922 = vsel %vm3382, %v3904, -inf
        %3923 = vmax.xlane.f32.xlu0 %v3922
        %v3924 = vpop.xlane.xlu0 %3923
        %v3925 = vsel %vm3382, %v3905, -inf
        %3926 = vmax.xlane.f32.xlu0 %v3925
        %v3927 = vpop.xlane.xlu0 %3926
        %v3928 = vsel %vm3382, %v3906, -inf
        %3929 = vmax.xlane.f32.xlu0 %v3928
        %v3930 = vpop.xlane.xlu0 %3929
        %v3931 = vsub.f32 %v3899, %v3909
        %v3932 = vsub.f32 %v3900, %v3912
        %v3933 = vsub.f32 %v3901, %v3915
        %v3934 = vsub.f32 %v3902, %v3918
        %v3935 = vsub.f32 %v3903, %v3921
        %v3936 = vsub.f32 %v3904, %v3924
        %v3937 = vsub.f32 %v3905, %v3927
        %v3938 = vsub.f32 %v3906, %v3930
        %v3939 = vmul.f32 %v3931, 1.442695
        %v3940 = vpow.pop %v3939
        %v3941 = vmul.f32 %v3932, 1.442695
        %v3942 = vpow.pop %v3941
        %v3943 = vmul.f32 %v3933, 1.442695
        %v3944 = vpow.pop %v3943
        %v3945 = vmul.f32 %v3934, 1.442695
        %v3946 = vpow.pop %v3945
        %v3947 = vmul.f32 %v3935, 1.442695
        %v3948 = vpow.pop %v3947
        %v3949 = vmul.f32 %v3936, 1.442695
        %v3950 = vpow.pop %v3949
        %v3951 = vmul.f32 %v3937, 1.442695
        %v3952 = vpow.pop %v3951
        %v3953 = vmul.f32 %v3938, 1.442695
        %v3954 = vpow.pop %v3953
        %v3955 = vsel %vm3382, %v3940, 0.0
        %3956 = vadd.xlane.f32.xlu0 %v3955
        %v3957 = vpop.xlane.xlu0 %3956
        %v3958 = vsel %vm3382, %v3942, 0.0
        %3959 = vadd.xlane.f32.xlu0 %v3958
        %v3960 = vpop.xlane.xlu0 %3959
        %v3961 = vsel %vm3382, %v3944, 0.0
        %3962 = vadd.xlane.f32.xlu0 %v3961
        %v3963 = vpop.xlane.xlu0 %3962
        %v3964 = vsel %vm3382, %v3946, 0.0
        %3965 = vadd.xlane.f32.xlu0 %v3964
        %v3966 = vpop.xlane.xlu0 %3965
        %v3967 = vsel %vm3382, %v3948, 0.0
        %3968 = vadd.xlane.f32.xlu0 %v3967
        %v3969 = vpop.xlane.xlu0 %3968
        %v3970 = vsel %vm3382, %v3950, 0.0
        %3971 = vadd.xlane.f32.xlu0 %v3970
        %v3972 = vpop.xlane.xlu0 %3971
        %v3973 = vsel %vm3382, %v3952, 0.0
        %3974 = vadd.xlane.f32.xlu0 %v3973
        %v3975 = vpop.xlane.xlu0 %3974
        %v3976 = vsel %vm3382, %v3954, 0.0
        %3977 = vadd.xlane.f32.xlu0 %v3976
        %v3978 = vpop.xlane.xlu0 %3977
        %v3979 = vrcp.pop %v3957
        %v3980 = vrcp.pop %v3960
        %v3981 = vrcp.pop %v3963
        %v3982 = vrcp.pop %v3966
        %v3983 = vrcp.pop %v3969
        %v3984 = vrcp.pop %v3972
        %v3985 = vrcp.pop %v3975
        %v3986 = vrcp.pop %v3978
        %v3987 = vmul.f32 %v3940, %v3979
        %v3988 = vmul.f32 %v3942, %v3980
        %v3989 = vmul.f32 %v3944, %v3981
        %v3990 = vmul.f32 %v3946, %v3982
        %v3991 = vmul.f32 %v3948, %v3983
        %v3992 = vmul.f32 %v3950, %v3984
        %v3993 = vmul.f32 %v3952, %v3985
        %v3994 = vmul.f32 %v3954, %v3986
        %v3995 = vpack.c.bf16 %v3988, %v3987
        %v3996 = vpack.c.bf16 %v3990, %v3989
        %v3997 = vpack.c.bf16 %v3992, %v3991
        %v3998 = vpack.c.bf16 %v3994, %v3993
        %v4007 = vunpack.c.l.b16 %v3738
        %v4008 = vunpack.c.l.b16 %v3739
        %v4009 = vunpack.c.l.b16 %v3740
        %v4010 = vunpack.c.l.b16 %v3741
        %v4011 = vunpack.c.l.b16 %v3742
        %v4012 = vunpack.c.l.b16 %v3743
        %v4013 = vunpack.c.l.b16 %v3744
        %v4014 = vunpack.c.l.b16 %v3745
        %v4015 = vpack.c.b16 %v4008, %v4007
        %v4016 = vpack.c.b16 %v4010, %v4009
        %v4017 = vpack.c.b16 %v4012, %v4011
        %v4018 = vpack.c.b16 %v4014, %v4013
        %4019 = vrot.lane.b32.xlu0 %v4015, 64
        %v4020 = vpop.permute.xlu0 %4019
        %4021 = vrot.lane.b32.xlu0 %v4016, 64
        %v4022 = vpop.permute.xlu0 %4021
        %4023 = vrot.lane.b32.xlu0 %v4017, 64
        %v4024 = vpop.permute.xlu0 %4023
        %4025 = vrot.lane.b32.xlu0 %v4018, 64
        %v4026 = vpop.permute.xlu0 %4025
        %v4032 = vsel %vm3382, %v3995, 0
        %v4035 = vsel %vm3382, %v3996, 0
        %v4038 = vsel %vm3382, %v3997, 0
        %v4041 = vsel %vm3382, %v3998, 0
        %4043 = vmatprep.subr.bf16.mxu0 0
        %4044 = vmatpush1.bf16.msra.mxu0 0
        %4045 = vmatprep.subr.bf16.mxu0 0
        %4046 = vmatpush1.bf16.msra.mxu0 0
        %4047 = vmatprep.subr.bf16.mxu0 0
        %4048 = vmatpush1.bf16.msra.mxu0 0
        %4049 = vmatprep.subr.bf16.mxu0 0
        %4050 = vmatpush1.bf16.msra.mxu0 0
        %4051 = vmatprep.subr.bf16.mxu0 0
        %4052 = vmatpush1.bf16.msra.mxu0 %v4026
        %4053 = vmatprep.subr.bf16.mxu0 0
        %4054 = vmatpush1.bf16.msra.mxu0 %v4024
        %4055 = vmatprep.subr.bf16.mxu0 0
        %4056 = vmatpush1.bf16.msra.mxu0 %v4022
        %4057 = vmatprep.subr.bf16.mxu0 0
        %4058 = vmatpush1.bf16.msra.mxu0 %v4020
        %4059 = vmatprep.subr.bf16.mxu0 0
        %4060 = vmatpush2.bf16.msra.mxu0 0
        %4061 = vmatprep.subr.bf16.mxu0 0
        %4062 = vmatpush2.bf16.msra.mxu0 0
        %4063 = vmatprep.subr.bf16.mxu0 0
        %4064 = vmatpush2.bf16.msra.mxu0 0
        %4065 = vmatprep.subr.bf16.mxu0 0
        %4066 = vmatpush2.bf16.msra.mxu0 0
        %4067 = vmatprep.subr.bf16.mxu0 0
        %4068 = vmatpush2.bf16.msra.mxu0 0
        %4069 = vmatprep.subr.bf16.mxu0 0
        %4070 = vmatpush2.bf16.msra.mxu0 0
        %4071 = vmatprep.subr.bf16.mxu0 0
        %4072 = vmatpush2.bf16.msra.mxu0 0
        %4073 = vmatprep.subr.bf16.mxu0 0
        %4074 = vmatpush2.bf16.msra.mxu0 0
        %4075 = vmatprep.mubr.bf16.mxu0 0
        %4076 = vmatmul.mubr.bf16.gmra.mxu0 %v4032
        %v4077 = vpop.f32.mrf.mxu0
        %v4078 = vadd.f32 0.0, %v4077
        %v4079 = vpop.f32.mrf.mxu0
        %v4080 = vpop.f32.mrf.mxu0
        %v4081 = vadd.f32 0.0, %v4080
        %v4082 = vpop.f32.mrf.mxu0
        %4083 = vmatprep.mubr.bf16.mxu0 0
        %4084 = vmatmul.mubr.bf16.gmra.mxu0 %v4035
        %v4085 = vpop.f32.mrf.mxu0
        %v4086 = vadd.f32 0.0, %v4085
        %v4087 = vpop.f32.mrf.mxu0
        %v4088 = vpop.f32.mrf.mxu0
        %v4089 = vadd.f32 0.0, %v4088
        %v4090 = vpop.f32.mrf.mxu0
        %4091 = vmatprep.mubr.bf16.mxu0 0
        %4092 = vmatmul.mubr.bf16.gmra.mxu0 %v4038
        %v4093 = vpop.f32.mrf.mxu0
        %v4094 = vadd.f32 0.0, %v4093
        %v4095 = vpop.f32.mrf.mxu0
        %v4096 = vpop.f32.mrf.mxu0
        %v4097 = vadd.f32 0.0, %v4096
        %v4098 = vpop.f32.mrf.mxu0
        %4099 = vmatprep.mubr.bf16.mxu0 0
        %4100 = vmatmul.mubr.bf16.gmra.mxu0 %v4041
        %v4101 = vpop.f32.mrf.mxu0
        %v4102 = vadd.f32 0.0, %v4101
        %v4103 = vpop.f32.mrf.mxu0
        %v4104 = vpop.f32.mrf.mxu0
        %v4105 = vadd.f32 0.0, %v4104
        %v4106 = vpop.f32.mrf.mxu0
        %4107 = vdwg.mxu0
        %v4108 = vpack.c.bf16 %v4081, %v4078
        %v4109 = vpack.c.bf16 %v4089, %v4086
        %v4110 = vpack.c.bf16 %v4097, %v4094
        %v4111 = vpack.c.bf16 %v4105, %v4102
        %v4116 = vunpack.c.l.b16 %v4108
        %v4117 = vunpack.c.h.b16 %v4108
        %v4118 = vunpack.c.l.b16 %v4109
        %v4119 = vunpack.c.h.b16 %v4109
        %v4120 = vunpack.c.l.b16 %v4110
        %v4121 = vunpack.c.h.b16 %v4110
        %v4122 = vunpack.c.l.b16 %v4111
        %v4123 = vunpack.c.h.b16 %v4111
        %v4124 = vpack.c.b16 %v4116, %v4116
        %v4125 = vpack.c.b16 %v4117, %v4117
        %v4126 = vpack.c.b16 %v4118, %v4118
        %v4127 = vpack.c.b16 %v4119, %v4119
        %v4128 = vpack.c.b16 %v4120, %v4120
        %v4129 = vpack.c.b16 %v4121, %v4121
        %v4130 = vpack.c.b16 %v4122, %v4122
        %v4131 = vpack.c.b16 %v4123, %v4123
        %4132 = vrot.lane.b32.xlu0 %v4124, 64
        %v4133 = vpop.permute.xlu0 %4132
        %4134 = vrot.lane.b32.xlu0 %v4125, 64
        %v4135 = vpop.permute.xlu0 %4134
        %4136 = vrot.lane.b32.xlu0 %v4126, 64
        %v4137 = vpop.permute.xlu0 %4136
        %4138 = vrot.lane.b32.xlu0 %v4127, 64
        %v4139 = vpop.permute.xlu0 %4138
        %4140 = vrot.lane.b32.xlu0 %v4128, 64
        %v4141 = vpop.permute.xlu0 %4140
        %4142 = vrot.lane.b32.xlu0 %v4129, 64
        %v4143 = vpop.permute.xlu0 %4142
        %4144 = vrot.lane.b32.xlu0 %v4130, 64
        %v4145 = vpop.permute.xlu0 %4144
        %4146 = vrot.lane.b32.xlu0 %v4131, 64
        %v4147 = vpop.permute.xlu0 %4146
        %vm4156 = vcmask 1043968
        %4157 = vst.msk [vmem:[#allocation3] sm:$0xf] %vm4156, %v4133
        %4158 = vst.msk [vmem:[#allocation3 + $0xc] sm:$0xf] %vm4156, %v4135
        %4159 = vst.msk [vmem:[#allocation3 + $0x18] sm:$0xf] %vm4156, %v4137
        %4160 = vst.msk [vmem:[#allocation3 + $0x24] sm:$0xf] %vm4156, %v4139
        %4161 = vst.msk [vmem:[#allocation3 + $0x30] sm:$0xf] %vm4156, %v4141
        %4162 = vst.msk [vmem:[#allocation3 + $0x3c] sm:$0xf] %vm4156, %v4143
        %4163 = vst.msk [vmem:[#allocation3 + $0x48] sm:$0xf] %vm4156, %v4145
        %4164 = vst.msk [vmem:[#allocation3 + $0x54] sm:$0xf] %vm4156, %v4147
        %v4165 = vld [vmem:[#allocation2 + $0x4] sm:$0xf]
        %v4166 = vld [vmem:[#allocation2 + $0x28] sm:$0xf]
        %v4167 = vld [vmem:[#allocation2 + $0x4c] sm:$0xf]
        %v4168 = vld [vmem:[#allocation2 + $0x70] sm:$0xf]
        %v4169 = vld [vmem:[#allocation2 + $0x94] sm:$0xf]
        %v4170 = vld [vmem:[#allocation2 + $0xb8] sm:$0xf]
        %v4171 = vld [vmem:[#allocation2 + $0xdc] sm:$0xf]
        %v4172 = vld [vmem:[#allocation2 + $0x100] sm:$0xf]
        %v4173 = vld [vmem:[#allocation2 + $0x10] sm:$0xf]
        %v4174 = vld [vmem:[#allocation2 + $0x34] sm:$0xf]
        %v4175 = vld [vmem:[#allocation2 + $0x58] sm:$0xf]
        %v4176 = vld [vmem:[#allocation2 + $0x7c] sm:$0xf]
        %v4177 = vld [vmem:[#allocation2 + $0xa0] sm:$0xf]
        %v4178 = vld [vmem:[#allocation2 + $0xc4] sm:$0xf]
        %v4179 = vld [vmem:[#allocation2 + $0xe8] sm:$0xf]
        %v4180 = vld [vmem:[#allocation2 + $0x10c] sm:$0xf]
        %v4181 = vld [vmem:[#allocation2 + $0x1c] sm:$0xf]
        %v4182 = vld [vmem:[#allocation2 + $0x40] sm:$0xf]
        %v4183 = vld [vmem:[#allocation2 + $0x64] sm:$0xf]
        %v4184 = vld [vmem:[#allocation2 + $0x88] sm:$0xf]
        %v4185 = vld [vmem:[#allocation2 + $0xac] sm:$0xf]
        %v4186 = vld [vmem:[#allocation2 + $0xd0] sm:$0xf]
        %v4187 = vld [vmem:[#allocation2 + $0xf4] sm:$0xf]
        %v4188 = vld [vmem:[#allocation2 + $0x118] sm:$0xf]
        %v4197 = vunpack.c.l.b16 %v4165
        %v4198 = vunpack.c.l.b16 %v4166
        %v4199 = vunpack.c.l.b16 %v4167
        %v4200 = vunpack.c.l.b16 %v4168
        %v4201 = vunpack.c.l.b16 %v4169
        %v4202 = vunpack.c.l.b16 %v4170
        %v4203 = vunpack.c.l.b16 %v4171
        %v4204 = vunpack.c.l.b16 %v4172
        %v4205 = vpack.c.b16 %v4198, %v4197
        %v4206 = vpack.c.b16 %v4200, %v4199
        %v4207 = vpack.c.b16 %v4202, %v4201
        %v4208 = vpack.c.b16 %v4204, %v4203
        %v4217 = vunpack.c.l.b16 %v4173
        %v4218 = vunpack.c.l.b16 %v4174
        %v4219 = vunpack.c.l.b16 %v4175
        %v4220 = vunpack.c.l.b16 %v4176
        %v4221 = vunpack.c.l.b16 %v4177
        %v4222 = vunpack.c.l.b16 %v4178
        %v4223 = vunpack.c.l.b16 %v4179
        %v4224 = vunpack.c.l.b16 %v4180
        %v4225 = vpack.c.b16 %v4218, %v4217
        %v4226 = vpack.c.b16 %v4220, %v4219
        %v4227 = vpack.c.b16 %v4222, %v4221
        %v4228 = vpack.c.b16 %v4224, %v4223
        %v4230 = vsel %vm3382, %v4205, 0
        %v4233 = vsel %vm3382, %v4206, 0
        %v4236 = vsel %vm3382, %v4207, 0
        %v4239 = vsel %vm3382, %v4208, 0
        %v4242 = vsel %vm3382, %v4225, 0
        %v4245 = vsel %vm3382, %v4226, 0
        %v4248 = vsel %vm3382, %v4227, 0
        %v4251 = vsel %vm3382, %v4228, 0
        %4253 = vmatprep.subr.bf16.mxu0 0
        %4254 = vmatpush1.bf16.xpose.msra.mxu0 0
        %4255 = vmatprep.subr.bf16.mxu0 0
        %4256 = vmatpush1.bf16.xpose.msra.mxu0 0
        %4257 = vmatprep.subr.bf16.mxu0 0
        %4258 = vmatpush1.bf16.xpose.msra.mxu0 0
        %4259 = vmatprep.subr.bf16.mxu0 0
        %4260 = vmatpush1.bf16.xpose.msra.mxu0 0
        %4261 = vmatprep.subr.bf16.mxu0 0
        %4262 = vmatpush1.bf16.xpose.msra.mxu0 %v4251
        %4263 = vmatprep.subr.bf16.mxu0 0
        %4264 = vmatpush1.bf16.xpose.msra.mxu0 %v4248
        %4265 = vmatprep.subr.bf16.mxu0 0
        %4266 = vmatpush1.bf16.xpose.msra.mxu0 %v4245
        %4267 = vmatprep.subr.bf16.mxu0 0
        %4268 = vmatpush1.bf16.xpose.msra.mxu0 %v4242
        %4269 = vmatprep.subr.bf16.mxu0 0
        %4270 = vmatpush2.bf16.xpose.msra.mxu0 0
        %4271 = vmatprep.subr.bf16.mxu0 0
        %4272 = vmatpush2.bf16.xpose.msra.mxu0 0
        %4273 = vmatprep.subr.bf16.mxu0 0
        %4274 = vmatpush2.bf16.xpose.msra.mxu0 0
        %4275 = vmatprep.subr.bf16.mxu0 0
        %4276 = vmatpush2.bf16.xpose.msra.mxu0 0
        %4277 = vmatprep.subr.bf16.mxu0 0
        %4278 = vmatpush2.bf16.xpose.msra.mxu0 0
        %4279 = vmatprep.subr.bf16.mxu0 0
        %4280 = vmatpush2.bf16.xpose.msra.mxu0 0
        %4281 = vmatprep.subr.bf16.mxu0 0
        %4282 = vmatpush2.bf16.xpose.msra.mxu0 0
        %4283 = vmatprep.subr.bf16.mxu0 0
        %4284 = vmatpush2.bf16.xpose.msra.mxu0 0
        %4285 = vmatprep.mubr.bf16.mxu0 0
        %4286 = vmatmul.mubr.bf16.gmra.mxu0 %v4230
        %v4287 = vpop.f32.mrf.mxu0
        %v4288 = vadd.f32 0.0, %v4287
        %v4289 = vpop.f32.mrf.mxu0
        %v4290 = vpop.f32.mrf.mxu0
        %v4291 = vadd.f32 0.0, %v4290
        %v4292 = vpop.f32.mrf.mxu0
        %4293 = vmatprep.mubr.bf16.mxu0 0
        %4294 = vmatmul.mubr.bf16.gmra.mxu0 %v4233
        %v4295 = vpop.f32.mrf.mxu0
        %v4296 = vadd.f32 0.0, %v4295
        %v4297 = vpop.f32.mrf.mxu0
        %v4298 = vpop.f32.mrf.mxu0
        %v4299 = vadd.f32 0.0, %v4298
        %v4300 = vpop.f32.mrf.mxu0
        %4301 = vmatprep.mubr.bf16.mxu0 0
        %4302 = vmatmul.mubr.bf16.gmra.mxu0 %v4236
        %v4303 = vpop.f32.mrf.mxu0
        %v4304 = vadd.f32 0.0, %v4303
        %v4305 = vpop.f32.mrf.mxu0
        %v4306 = vpop.f32.mrf.mxu0
        %v4307 = vadd.f32 0.0, %v4306
        %v4308 = vpop.f32.mrf.mxu0
        %4309 = vmatprep.mubr.bf16.mxu0 0
        %4310 = vmatmul.mubr.bf16.gmra.mxu0 %v4239
        %v4311 = vpop.f32.mrf.mxu0
        %v4312 = vadd.f32 0.0, %v4311
        %v4313 = vpop.f32.mrf.mxu0
        %v4314 = vpop.f32.mrf.mxu0
        %v4315 = vadd.f32 0.0, %v4314
        %v4316 = vpop.f32.mrf.mxu0
        %4317 = vdwg.mxu0
        %v4318 = vmul.f32 %v4288, 0.125
        %v4319 = vmul.f32 %v4291, 0.125
        %v4320 = vmul.f32 %v4296, 0.125
        %v4321 = vmul.f32 %v4299, 0.125
        %v4322 = vmul.f32 %v4304, 0.125
        %v4323 = vmul.f32 %v4307, 0.125
        %v4324 = vmul.f32 %v4312, 0.125
        %v4325 = vmul.f32 %v4315, 0.125
        %v4326 = vadd.f32 %v4318, %v3310
        %v4327 = vadd.f32 %v4319, %v3311
        %v4328 = vadd.f32 %v4320, %v3312
        %v4329 = vadd.f32 %v4321, %v3313
        %v4330 = vadd.f32 %v4322, %v3314
        %v4331 = vadd.f32 %v4323, %v3315
        %v4332 = vadd.f32 %v4324, %v3316
        %v4333 = vadd.f32 %v4325, %v3317
        %v4334 = vsel %vm3382, %v4326, -inf
        %4335 = vmax.xlane.f32.xlu0 %v4334
        %v4336 = vpop.xlane.xlu0 %4335
        %v4337 = vsel %vm3382, %v4327, -inf
        %4338 = vmax.xlane.f32.xlu0 %v4337
        %v4339 = vpop.xlane.xlu0 %4338
        %v4340 = vsel %vm3382, %v4328, -inf
        %4341 = vmax.xlane.f32.xlu0 %v4340
        %v4342 = vpop.xlane.xlu0 %4341
        %v4343 = vsel %vm3382, %v4329, -inf
        %4344 = vmax.xlane.f32.xlu0 %v4343
        %v4345 = vpop.xlane.xlu0 %4344
        %v4346 = vsel %vm3382, %v4330, -inf
        %4347 = vmax.xlane.f32.xlu0 %v4346
        %v4348 = vpop.xlane.xlu0 %4347
        %v4349 = vsel %vm3382, %v4331, -inf
        %4350 = vmax.xlane.f32.xlu0 %v4349
        %v4351 = vpop.xlane.xlu0 %4350
        %v4352 = vsel %vm3382, %v4332, -inf
        %4353 = vmax.xlane.f32.xlu0 %v4352
        %v4354 = vpop.xlane.xlu0 %4353
        %v4355 = vsel %vm3382, %v4333, -inf
        %4356 = vmax.xlane.f32.xlu0 %v4355
        %v4357 = vpop.xlane.xlu0 %4356
        %v4358 = vsub.f32 %v4326, %v4336
        %v4359 = vsub.f32 %v4327, %v4339
        %v4360 = vsub.f32 %v4328, %v4342
        %v4361 = vsub.f32 %v4329, %v4345
        %v4362 = vsub.f32 %v4330, %v4348
        %v4363 = vsub.f32 %v4331, %v4351
        %v4364 = vsub.f32 %v4332, %v4354
        %v4365 = vsub.f32 %v4333, %v4357
        %v4366 = vmul.f32 %v4358, 1.442695
        %v4367 = vpow.pop %v4366
        %v4368 = vmul.f32 %v4359, 1.442695
        %v4369 = vpow.pop %v4368
        %v4370 = vmul.f32 %v4360, 1.442695
        %v4371 = vpow.pop %v4370
        %v4372 = vmul.f32 %v4361, 1.442695
        %v4373 = vpow.pop %v4372
        %v4374 = vmul.f32 %v4362, 1.442695
        %v4375 = vpow.pop %v4374
        %v4376 = vmul.f32 %v4363, 1.442695
        %v4377 = vpow.pop %v4376
        %v4378 = vmul.f32 %v4364, 1.442695
        %v4379 = vpow.pop %v4378
        %v4380 = vmul.f32 %v4365, 1.442695
        %v4381 = vpow.pop %v4380
        %v4382 = vsel %vm3382, %v4367, 0.0
        %4383 = vadd.xlane.f32.xlu0 %v4382
        %v4384 = vpop.xlane.xlu0 %4383
        %v4385 = vsel %vm3382, %v4369, 0.0
        %4386 = vadd.xlane.f32.xlu0 %v4385
        %v4387 = vpop.xlane.xlu0 %4386
        %v4388 = vsel %vm3382, %v4371, 0.0
        %4389 = vadd.xlane.f32.xlu0 %v4388
        %v4390 = vpop.xlane.xlu0 %4389
        %v4391 = vsel %vm3382, %v4373, 0.0
        %4392 = vadd.xlane.f32.xlu0 %v4391
        %v4393 = vpop.xlane.xlu0 %4392
        %v4394 = vsel %vm3382, %v4375, 0.0
        %4395 = vadd.xlane.f32.xlu0 %v4394
        %v4396 = vpop.xlane.xlu0 %4395
        %v4397 = vsel %vm3382, %v4377, 0.0
        %4398 = vadd.xlane.f32.xlu0 %v4397
        %v4399 = vpop.xlane.xlu0 %4398
        %v4400 = vsel %vm3382, %v4379, 0.0
        %4401 = vadd.xlane.f32.xlu0 %v4400
        %v4402 = vpop.xlane.xlu0 %4401
        %v4403 = vsel %vm3382, %v4381, 0.0
        %4404 = vadd.xlane.f32.xlu0 %v4403
        %v4405 = vpop.xlane.xlu0 %4404
        %v4406 = vrcp.pop %v4384
        %v4407 = vrcp.pop %v4387
        %v4408 = vrcp.pop %v4390
        %v4409 = vrcp.pop %v4393
        %v4410 = vrcp.pop %v4396
        %v4411 = vrcp.pop %v4399
        %v4412 = vrcp.pop %v4402
        %v4413 = vrcp.pop %v4405
        %v4414 = vmul.f32 %v4367, %v4406
        %v4415 = vmul.f32 %v4369, %v4407
        %v4416 = vmul.f32 %v4371, %v4408
        %v4417 = vmul.f32 %v4373, %v4409
        %v4418 = vmul.f32 %v4375, %v4410
        %v4419 = vmul.f32 %v4377, %v4411
        %v4420 = vmul.f32 %v4379, %v4412
        %v4421 = vmul.f32 %v4381, %v4413
        %v4422 = vpack.c.bf16 %v4415, %v4414
        %v4423 = vpack.c.bf16 %v4417, %v4416
        %v4424 = vpack.c.bf16 %v4419, %v4418
        %v4425 = vpack.c.bf16 %v4421, %v4420
        %v4434 = vunpack.c.l.b16 %v4181
        %v4435 = vunpack.c.l.b16 %v4182
        %v4436 = vunpack.c.l.b16 %v4183
        %v4437 = vunpack.c.l.b16 %v4184
        %v4438 = vunpack.c.l.b16 %v4185
        %v4439 = vunpack.c.l.b16 %v4186
        %v4440 = vunpack.c.l.b16 %v4187
        %v4441 = vunpack.c.l.b16 %v4188
        %v4442 = vpack.c.b16 %v4435, %v4434
        %v4443 = vpack.c.b16 %v4437, %v4436
        %v4444 = vpack.c.b16 %v4439, %v4438
        %v4445 = vpack.c.b16 %v4441, %v4440
        %v4451 = vsel %vm3382, %v4422, 0
        %v4454 = vsel %vm3382, %v4423, 0
        %v4457 = vsel %vm3382, %v4424, 0
        %v4460 = vsel %vm3382, %v4425, 0
        %4462 = vmatprep.subr.bf16.mxu0 0
        %4463 = vmatpush1.bf16.msra.mxu0 0
        %4464 = vmatprep.subr.bf16.mxu0 0
        %4465 = vmatpush1.bf16.msra.mxu0 0
        %4466 = vmatprep.subr.bf16.mxu0 0
        %4467 = vmatpush1.bf16.msra.mxu0 0
        %4468 = vmatprep.subr.bf16.mxu0 0
        %4469 = vmatpush1.bf16.msra.mxu0 0
        %4470 = vmatprep.subr.bf16.mxu0 0
        %4471 = vmatpush1.bf16.msra.mxu0 %v4445
        %4472 = vmatprep.subr.bf16.mxu0 0
        %4473 = vmatpush1.bf16.msra.mxu0 %v4444
        %4474 = vmatprep.subr.bf16.mxu0 0
        %4475 = vmatpush1.bf16.msra.mxu0 %v4443
        %4476 = vmatprep.subr.bf16.mxu0 0
        %4477 = vmatpush1.bf16.msra.mxu0 %v4442
        %4478 = vmatprep.subr.bf16.mxu0 0
        %4479 = vmatpush2.bf16.msra.mxu0 0
        %4480 = vmatprep.subr.bf16.mxu0 0
        %4481 = vmatpush2.bf16.msra.mxu0 0
        %4482 = vmatprep.subr.bf16.mxu0 0
        %4483 = vmatpush2.bf16.msra.mxu0 0
        %4484 = vmatprep.subr.bf16.mxu0 0
        %4485 = vmatpush2.bf16.msra.mxu0 0
        %4486 = vmatprep.subr.bf16.mxu0 0
        %4487 = vmatpush2.bf16.msra.mxu0 0
        %4488 = vmatprep.subr.bf16.mxu0 0
        %4489 = vmatpush2.bf16.msra.mxu0 0
        %4490 = vmatprep.subr.bf16.mxu0 0
        %4491 = vmatpush2.bf16.msra.mxu0 0
        %4492 = vmatprep.subr.bf16.mxu0 0
        %4493 = vmatpush2.bf16.msra.mxu0 0
        %4494 = vmatprep.mubr.bf16.mxu0 0
        %4495 = vmatmul.mubr.bf16.gmra.mxu0 %v4451
        %v4496 = vpop.f32.mrf.mxu0
        %v4497 = vadd.f32 0.0, %v4496
        %v4498 = vpop.f32.mrf.mxu0
        %v4499 = vpop.f32.mrf.mxu0
        %v4500 = vadd.f32 0.0, %v4499
        %v4501 = vpop.f32.mrf.mxu0
        %4502 = vmatprep.mubr.bf16.mxu0 0
        %4503 = vmatmul.mubr.bf16.gmra.mxu0 %v4454
        %v4504 = vpop.f32.mrf.mxu0
        %v4505 = vadd.f32 0.0, %v4504
        %v4506 = vpop.f32.mrf.mxu0
        %v4507 = vpop.f32.mrf.mxu0
        %v4508 = vadd.f32 0.0, %v4507
        %v4509 = vpop.f32.mrf.mxu0
        %4510 = vmatprep.mubr.bf16.mxu0 0
        %4511 = vmatmul.mubr.bf16.gmra.mxu0 %v4457
        %v4512 = vpop.f32.mrf.mxu0
        %v4513 = vadd.f32 0.0, %v4512
        %v4514 = vpop.f32.mrf.mxu0
        %v4515 = vpop.f32.mrf.mxu0
        %v4516 = vadd.f32 0.0, %v4515
        %v4517 = vpop.f32.mrf.mxu0
        %4518 = vmatprep.mubr.bf16.mxu0 0
        %4519 = vmatmul.mubr.bf16.gmra.mxu0 %v4460
        %v4520 = vpop.f32.mrf.mxu0
        %v4521 = vadd.f32 0.0, %v4520
        %v4522 = vpop.f32.mrf.mxu0
        %v4523 = vpop.f32.mrf.mxu0
        %v4524 = vadd.f32 0.0, %v4523
        %v4525 = vpop.f32.mrf.mxu0
        %4526 = vdwg.mxu0
        %v4527 = vpack.c.bf16 %v4500, %v4497
        %v4528 = vpack.c.bf16 %v4508, %v4505
        %v4529 = vpack.c.bf16 %v4516, %v4513
        %v4530 = vpack.c.bf16 %v4524, %v4521
        %v4535 = vunpack.c.l.b16 %v4527
        %v4536 = vunpack.c.h.b16 %v4527
        %v4537 = vunpack.c.l.b16 %v4528
        %v4538 = vunpack.c.h.b16 %v4528
        %v4539 = vunpack.c.l.b16 %v4529
        %v4540 = vunpack.c.h.b16 %v4529
        %v4541 = vunpack.c.l.b16 %v4530
        %v4542 = vunpack.c.h.b16 %v4530
        %v4543 = vpack.c.b16 %v4535, %v4535
        %v4544 = vpack.c.b16 %v4536, %v4536
        %v4545 = vpack.c.b16 %v4537, %v4537
        %v4546 = vpack.c.b16 %v4538, %v4538
        %v4547 = vpack.c.b16 %v4539, %v4539
        %v4548 = vpack.c.b16 %v4540, %v4540
        %v4549 = vpack.c.b16 %v4541, %v4541
        %v4550 = vpack.c.b16 %v4542, %v4542
        %4559 = vst.msk [vmem:[#allocation3 + $0x4] sm:$0xf] %vm3713, %v4543
        %4560 = vst.msk [vmem:[#allocation3 + $0x10] sm:$0xf] %vm3713, %v4544
        %4561 = vst.msk [vmem:[#allocation3 + $0x1c] sm:$0xf] %vm3713, %v4545
        %4562 = vst.msk [vmem:[#allocation3 + $0x28] sm:$0xf] %vm3713, %v4546
        %4563 = vst.msk [vmem:[#allocation3 + $0x34] sm:$0xf] %vm3713, %v4547
        %4564 = vst.msk [vmem:[#allocation3 + $0x40] sm:$0xf] %vm3713, %v4548
        %4565 = vst.msk [vmem:[#allocation3 + $0x4c] sm:$0xf] %vm3713, %v4549
        %4566 = vst.msk [vmem:[#allocation3 + $0x58] sm:$0xf] %vm3713, %v4550
        %v4567 = vld [vmem:[#allocation2 + $0x4] sm:$0xf]
        %v4568 = vld [vmem:[#allocation2 + $0x28] sm:$0xf]
        %v4569 = vld [vmem:[#allocation2 + $0x4c] sm:$0xf]
        %v4570 = vld [vmem:[#allocation2 + $0x70] sm:$0xf]
        %v4571 = vld [vmem:[#allocation2 + $0x94] sm:$0xf]
        %v4572 = vld [vmem:[#allocation2 + $0xb8] sm:$0xf]
        %v4573 = vld [vmem:[#allocation2 + $0xdc] sm:$0xf]
        %v4574 = vld [vmem:[#allocation2 + $0x100] sm:$0xf]
        %v4575 = vld [vmem:[#allocation2 + $0x10] sm:$0xf]
        %v4576 = vld [vmem:[#allocation2 + $0x34] sm:$0xf]
        %v4577 = vld [vmem:[#allocation2 + $0x58] sm:$0xf]
        %v4578 = vld [vmem:[#allocation2 + $0x7c] sm:$0xf]
        %v4579 = vld [vmem:[#allocation2 + $0xa0] sm:$0xf]
        %v4580 = vld [vmem:[#allocation2 + $0xc4] sm:$0xf]
        %v4581 = vld [vmem:[#allocation2 + $0xe8] sm:$0xf]
        %v4582 = vld [vmem:[#allocation2 + $0x10c] sm:$0xf]
        %v4583 = vld [vmem:[#allocation2 + $0x1c] sm:$0xf]
        %v4584 = vld [vmem:[#allocation2 + $0x40] sm:$0xf]
        %v4585 = vld [vmem:[#allocation2 + $0x64] sm:$0xf]
        %v4586 = vld [vmem:[#allocation2 + $0x88] sm:$0xf]
        %v4587 = vld [vmem:[#allocation2 + $0xac] sm:$0xf]
        %v4588 = vld [vmem:[#allocation2 + $0xd0] sm:$0xf]
        %v4589 = vld [vmem:[#allocation2 + $0xf4] sm:$0xf]
        %v4590 = vld [vmem:[#allocation2 + $0x118] sm:$0xf]
        %v4599 = vunpack.c.l.b16 %v4567
        %v4600 = vunpack.c.l.b16 %v4568
        %v4601 = vunpack.c.l.b16 %v4569
        %v4602 = vunpack.c.l.b16 %v4570
        %v4603 = vunpack.c.l.b16 %v4571
        %v4604 = vunpack.c.l.b16 %v4572
        %v4605 = vunpack.c.l.b16 %v4573
        %v4606 = vunpack.c.l.b16 %v4574
        %v4607 = vpack.c.b16 %v4600, %v4599
        %v4608 = vpack.c.b16 %v4602, %v4601
        %v4609 = vpack.c.b16 %v4604, %v4603
        %v4610 = vpack.c.b16 %v4606, %v4605
        %4611 = vrot.lane.b32.xlu0 %v4607, 64
        %v4612 = vpop.permute.xlu0 %4611
        %4613 = vrot.lane.b32.xlu0 %v4608, 64
        %v4614 = vpop.permute.xlu0 %4613
        %4615 = vrot.lane.b32.xlu0 %v4609, 64
        %v4616 = vpop.permute.xlu0 %4615
        %4617 = vrot.lane.b32.xlu0 %v4610, 64
        %v4618 = vpop.permute.xlu0 %4617
        %v4627 = vunpack.c.l.b16 %v4575
        %v4628 = vunpack.c.l.b16 %v4576
        %v4629 = vunpack.c.l.b16 %v4577
        %v4630 = vunpack.c.l.b16 %v4578
        %v4631 = vunpack.c.l.b16 %v4579
        %v4632 = vunpack.c.l.b16 %v4580
        %v4633 = vunpack.c.l.b16 %v4581
        %v4634 = vunpack.c.l.b16 %v4582
        %v4635 = vpack.c.b16 %v4628, %v4627
        %v4636 = vpack.c.b16 %v4630, %v4629
        %v4637 = vpack.c.b16 %v4632, %v4631
        %v4638 = vpack.c.b16 %v4634, %v4633
        %4639 = vrot.lane.b32.xlu0 %v4635, 64
        %v4640 = vpop.permute.xlu0 %4639
        %4641 = vrot.lane.b32.xlu0 %v4636, 64
        %v4642 = vpop.permute.xlu0 %4641
        %4643 = vrot.lane.b32.xlu0 %v4637, 64
        %v4644 = vpop.permute.xlu0 %4643
        %4645 = vrot.lane.b32.xlu0 %v4638, 64
        %v4646 = vpop.permute.xlu0 %4645
        %v4648 = vsel %vm3382, %v4612, 0
        %v4651 = vsel %vm3382, %v4614, 0
        %v4654 = vsel %vm3382, %v4616, 0
        %v4657 = vsel %vm3382, %v4618, 0
        %v4660 = vsel %vm3382, %v4640, 0
        %v4663 = vsel %vm3382, %v4642, 0
        %v4666 = vsel %vm3382, %v4644, 0
        %v4669 = vsel %vm3382, %v4646, 0
        %4671 = vmatprep.subr.bf16.mxu0 0
        %4672 = vmatpush1.bf16.xpose.msra.mxu0 0
        %4673 = vmatprep.subr.bf16.mxu0 0
        %4674 = vmatpush1.bf16.xpose.msra.mxu0 0
        %4675 = vmatprep.subr.bf16.mxu0 0
        %4676 = vmatpush1.bf16.xpose.msra.mxu0 0
        %4677 = vmatprep.subr.bf16.mxu0 0
        %4678 = vmatpush1.bf16.xpose.msra.mxu0 0
        %4679 = vmatprep.subr.bf16.mxu0 0
        %4680 = vmatpush1.bf16.xpose.msra.mxu0 %v4669
        %4681 = vmatprep.subr.bf16.mxu0 0
        %4682 = vmatpush1.bf16.xpose.msra.mxu0 %v4666
        %4683 = vmatprep.subr.bf16.mxu0 0
        %4684 = vmatpush1.bf16.xpose.msra.mxu0 %v4663
        %4685 = vmatprep.subr.bf16.mxu0 0
        %4686 = vmatpush1.bf16.xpose.msra.mxu0 %v4660
        %4687 = vmatprep.subr.bf16.mxu0 0
        %4688 = vmatpush2.bf16.xpose.msra.mxu0 0
        %4689 = vmatprep.subr.bf16.mxu0 0
        %4690 = vmatpush2.bf16.xpose.msra.mxu0 0
        %4691 = vmatprep.subr.bf16.mxu0 0
        %4692 = vmatpush2.bf16.xpose.msra.mxu0 0
        %4693 = vmatprep.subr.bf16.mxu0 0
        %4694 = vmatpush2.bf16.xpose.msra.mxu0 0
        %4695 = vmatprep.subr.bf16.mxu0 0
        %4696 = vmatpush2.bf16.xpose.msra.mxu0 0
        %4697 = vmatprep.subr.bf16.mxu0 0
        %4698 = vmatpush2.bf16.xpose.msra.mxu0 0
        %4699 = vmatprep.subr.bf16.mxu0 0
        %4700 = vmatpush2.bf16.xpose.msra.mxu0 0
        %4701 = vmatprep.subr.bf16.mxu0 0
        %4702 = vmatpush2.bf16.xpose.msra.mxu0 0
        %4703 = vmatprep.mubr.bf16.mxu0 0
        %4704 = vmatmul.mubr.bf16.gmra.mxu0 %v4648
        %v4705 = vpop.f32.mrf.mxu0
        %v4706 = vadd.f32 0.0, %v4705
        %v4707 = vpop.f32.mrf.mxu0
        %v4708 = vpop.f32.mrf.mxu0
        %v4709 = vadd.f32 0.0, %v4708
        %v4710 = vpop.f32.mrf.mxu0
        %4711 = vmatprep.mubr.bf16.mxu0 0
        %4712 = vmatmul.mubr.bf16.gmra.mxu0 %v4651
        %v4713 = vpop.f32.mrf.mxu0
        %v4714 = vadd.f32 0.0, %v4713
        %v4715 = vpop.f32.mrf.mxu0
        %v4716 = vpop.f32.mrf.mxu0
        %v4717 = vadd.f32 0.0, %v4716
        %v4718 = vpop.f32.mrf.mxu0
        %4719 = vmatprep.mubr.bf16.mxu0 0
        %4720 = vmatmul.mubr.bf16.gmra.mxu0 %v4654
        %v4721 = vpop.f32.mrf.mxu0
        %v4722 = vadd.f32 0.0, %v4721
        %v4723 = vpop.f32.mrf.mxu0
        %v4724 = vpop.f32.mrf.mxu0
        %v4725 = vadd.f32 0.0, %v4724
        %v4726 = vpop.f32.mrf.mxu0
        %4727 = vmatprep.mubr.bf16.mxu0 0
        %4728 = vmatmul.mubr.bf16.gmra.mxu0 %v4657
        %v4729 = vpop.f32.mrf.mxu0
        %v4730 = vadd.f32 0.0, %v4729
        %v4731 = vpop.f32.mrf.mxu0
        %v4732 = vpop.f32.mrf.mxu0
        %v4733 = vadd.f32 0.0, %v4732
        %v4734 = vpop.f32.mrf.mxu0
        %4735 = vdwg.mxu0
        %v4736 = vmul.f32 %v4706, 0.125
        %v4737 = vmul.f32 %v4709, 0.125
        %v4738 = vmul.f32 %v4714, 0.125
        %v4739 = vmul.f32 %v4717, 0.125
        %v4740 = vmul.f32 %v4722, 0.125
        %v4741 = vmul.f32 %v4725, 0.125
        %v4742 = vmul.f32 %v4730, 0.125
        %v4743 = vmul.f32 %v4733, 0.125
        %v4744 = vadd.f32 %v4736, %v3310
        %v4745 = vadd.f32 %v4737, %v3311
        %v4746 = vadd.f32 %v4738, %v3312
        %v4747 = vadd.f32 %v4739, %v3313
        %v4748 = vadd.f32 %v4740, %v3314
        %v4749 = vadd.f32 %v4741, %v3315
        %v4750 = vadd.f32 %v4742, %v3316
        %v4751 = vadd.f32 %v4743, %v3317
        %v4752 = vsel %vm3382, %v4744, -inf
        %4753 = vmax.xlane.f32.xlu0 %v4752
        %v4754 = vpop.xlane.xlu0 %4753
        %v4755 = vsel %vm3382, %v4745, -inf
        %4756 = vmax.xlane.f32.xlu0 %v4755
        %v4757 = vpop.xlane.xlu0 %4756
        %v4758 = vsel %vm3382, %v4746, -inf
        %4759 = vmax.xlane.f32.xlu0 %v4758
        %v4760 = vpop.xlane.xlu0 %4759
        %v4761 = vsel %vm3382, %v4747, -inf
        %4762 = vmax.xlane.f32.xlu0 %v4761
        %v4763 = vpop.xlane.xlu0 %4762
        %v4764 = vsel %vm3382, %v4748, -inf
        %4765 = vmax.xlane.f32.xlu0 %v4764
        %v4766 = vpop.xlane.xlu0 %4765
        %v4767 = vsel %vm3382, %v4749, -inf
        %4768 = vmax.xlane.f32.xlu0 %v4767
        %v4769 = vpop.xlane.xlu0 %4768
        %v4770 = vsel %vm3382, %v4750, -inf
        %4771 = vmax.xlane.f32.xlu0 %v4770
        %v4772 = vpop.xlane.xlu0 %4771
        %v4773 = vsel %vm3382, %v4751, -inf
        %4774 = vmax.xlane.f32.xlu0 %v4773
        %v4775 = vpop.xlane.xlu0 %4774
        %v4776 = vsub.f32 %v4744, %v4754
        %v4777 = vsub.f32 %v4745, %v4757
        %v4778 = vsub.f32 %v4746, %v4760
        %v4779 = vsub.f32 %v4747, %v4763
        %v4780 = vsub.f32 %v4748, %v4766
        %v4781 = vsub.f32 %v4749, %v4769
        %v4782 = vsub.f32 %v4750, %v4772
        %v4783 = vsub.f32 %v4751, %v4775
        %v4784 = vmul.f32 %v4776, 1.442695
        %v4785 = vpow.pop %v4784
        %v4786 = vmul.f32 %v4777, 1.442695
        %v4787 = vpow.pop %v4786
        %v4788 = vmul.f32 %v4778, 1.442695
        %v4789 = vpow.pop %v4788
        %v4790 = vmul.f32 %v4779, 1.442695
        %v4791 = vpow.pop %v4790
        %v4792 = vmul.f32 %v4780, 1.442695
        %v4793 = vpow.pop %v4792
        %v4794 = vmul.f32 %v4781, 1.442695
        %v4795 = vpow.pop %v4794
        %v4796 = vmul.f32 %v4782, 1.442695
        %v4797 = vpow.pop %v4796
        %v4798 = vmul.f32 %v4783, 1.442695
        %v4799 = vpow.pop %v4798
        %v4800 = vsel %vm3382, %v4785, 0.0
        %4801 = vadd.xlane.f32.xlu0 %v4800
        %v4802 = vpop.xlane.xlu0 %4801
        %v4803 = vsel %vm3382, %v4787, 0.0
        %4804 = vadd.xlane.f32.xlu0 %v4803
        %v4805 = vpop.xlane.xlu0 %4804
        %v4806 = vsel %vm3382, %v4789, 0.0
        %4807 = vadd.xlane.f32.xlu0 %v4806
        %v4808 = vpop.xlane.xlu0 %4807
        %v4809 = vsel %vm3382, %v4791, 0.0
        %4810 = vadd.xlane.f32.xlu0 %v4809
        %v4811 = vpop.xlane.xlu0 %4810
        %v4812 = vsel %vm3382, %v4793, 0.0
        %4813 = vadd.xlane.f32.xlu0 %v4812
        %v4814 = vpop.xlane.xlu0 %4813
        %v4815 = vsel %vm3382, %v4795, 0.0
        %4816 = vadd.xlane.f32.xlu0 %v4815
        %v4817 = vpop.xlane.xlu0 %4816
        %v4818 = vsel %vm3382, %v4797, 0.0
        %4819 = vadd.xlane.f32.xlu0 %v4818
        %v4820 = vpop.xlane.xlu0 %4819
        %v4821 = vsel %vm3382, %v4799, 0.0
        %4822 = vadd.xlane.f32.xlu0 %v4821
        %v4823 = vpop.xlane.xlu0 %4822
        %v4824 = vrcp.pop %v4802
        %v4825 = vrcp.pop %v4805
        %v4826 = vrcp.pop %v4808
        %v4827 = vrcp.pop %v4811
        %v4828 = vrcp.pop %v4814
        %v4829 = vrcp.pop %v4817
        %v4830 = vrcp.pop %v4820
        %v4831 = vrcp.pop %v4823
        %v4832 = vmul.f32 %v4785, %v4824
        %v4833 = vmul.f32 %v4787, %v4825
        %v4834 = vmul.f32 %v4789, %v4826
        %v4835 = vmul.f32 %v4791, %v4827
        %v4836 = vmul.f32 %v4793, %v4828
        %v4837 = vmul.f32 %v4795, %v4829
        %v4838 = vmul.f32 %v4797, %v4830
        %v4839 = vmul.f32 %v4799, %v4831
        %v4840 = vpack.c.bf16 %v4833, %v4832
        %v4841 = vpack.c.bf16 %v4835, %v4834
        %v4842 = vpack.c.bf16 %v4837, %v4836
        %v4843 = vpack.c.bf16 %v4839, %v4838
        %v4852 = vunpack.c.l.b16 %v4583
        %v4853 = vunpack.c.l.b16 %v4584
        %v4854 = vunpack.c.l.b16 %v4585
        %v4855 = vunpack.c.l.b16 %v4586
        %v4856 = vunpack.c.l.b16 %v4587
        %v4857 = vunpack.c.l.b16 %v4588
        %v4858 = vunpack.c.l.b16 %v4589
        %v4859 = vunpack.c.l.b16 %v4590
        %v4860 = vpack.c.b16 %v4853, %v4852
        %v4861 = vpack.c.b16 %v4855, %v4854
        %v4862 = vpack.c.b16 %v4857, %v4856
        %v4863 = vpack.c.b16 %v4859, %v4858
        %4864 = vrot.lane.b32.xlu0 %v4860, 64
        %v4865 = vpop.permute.xlu0 %4864
        %4866 = vrot.lane.b32.xlu0 %v4861, 64
        %v4867 = vpop.permute.xlu0 %4866
        %4868 = vrot.lane.b32.xlu0 %v4862, 64
        %v4869 = vpop.permute.xlu0 %4868
        %4870 = vrot.lane.b32.xlu0 %v4863, 64
        %v4871 = vpop.permute.xlu0 %4870
        %v4877 = vsel %vm3382, %v4840, 0
        %v4880 = vsel %vm3382, %v4841, 0
        %v4883 = vsel %vm3382, %v4842, 0
        %v4886 = vsel %vm3382, %v4843, 0
        %4888 = vmatprep.subr.bf16.mxu0 0
        %4889 = vmatpush1.bf16.msra.mxu0 0
        %4890 = vmatprep.subr.bf16.mxu0 0
        %4891 = vmatpush1.bf16.msra.mxu0 0
        %4892 = vmatprep.subr.bf16.mxu0 0
        %4893 = vmatpush1.bf16.msra.mxu0 0
        %4894 = vmatprep.subr.bf16.mxu0 0
        %4895 = vmatpush1.bf16.msra.mxu0 0
        %4896 = vmatprep.subr.bf16.mxu0 0
        %4897 = vmatpush1.bf16.msra.mxu0 %v4871
        %4898 = vmatprep.subr.bf16.mxu0 0
        %4899 = vmatpush1.bf16.msra.mxu0 %v4869
        %4900 = vmatprep.subr.bf16.mxu0 0
        %4901 = vmatpush1.bf16.msra.mxu0 %v4867
        %4902 = vmatprep.subr.bf16.mxu0 0
        %4903 = vmatpush1.bf16.msra.mxu0 %v4865
        %4904 = vmatprep.subr.bf16.mxu0 0
        %4905 = vmatpush2.bf16.msra.mxu0 0
        %4906 = vmatprep.subr.bf16.mxu0 0
        %4907 = vmatpush2.bf16.msra.mxu0 0
        %4908 = vmatprep.subr.bf16.mxu0 0
        %4909 = vmatpush2.bf16.msra.mxu0 0
        %4910 = vmatprep.subr.bf16.mxu0 0
        %4911 = vmatpush2.bf16.msra.mxu0 0
        %4912 = vmatprep.subr.bf16.mxu0 0
        %4913 = vmatpush2.bf16.msra.mxu0 0
        %4914 = vmatprep.subr.bf16.mxu0 0
        %4915 = vmatpush2.bf16.msra.mxu0 0
        %4916 = vmatprep.subr.bf16.mxu0 0
        %4917 = vmatpush2.bf16.msra.mxu0 0
        %4918 = vmatprep.subr.bf16.mxu0 0
        %4919 = vmatpush2.bf16.msra.mxu0 0
        %4920 = vmatprep.mubr.bf16.mxu0 0
        %4921 = vmatmul.mubr.bf16.gmra.mxu0 %v4877
        %v4922 = vpop.f32.mrf.mxu0
        %v4923 = vadd.f32 0.0, %v4922
        %v4924 = vpop.f32.mrf.mxu0
        %v4925 = vpop.f32.mrf.mxu0
        %v4926 = vadd.f32 0.0, %v4925
        %v4927 = vpop.f32.mrf.mxu0
        %4928 = vmatprep.mubr.bf16.mxu0 0
        %4929 = vmatmul.mubr.bf16.gmra.mxu0 %v4880
        %v4930 = vpop.f32.mrf.mxu0
        %v4931 = vadd.f32 0.0, %v4930
        %v4932 = vpop.f32.mrf.mxu0
        %v4933 = vpop.f32.mrf.mxu0
        %v4934 = vadd.f32 0.0, %v4933
        %v4935 = vpop.f32.mrf.mxu0
        %4936 = vmatprep.mubr.bf16.mxu0 0
        %4937 = vmatmul.mubr.bf16.gmra.mxu0 %v4883
        %v4938 = vpop.f32.mrf.mxu0
        %v4939 = vadd.f32 0.0, %v4938
        %v4940 = vpop.f32.mrf.mxu0
        %v4941 = vpop.f32.mrf.mxu0
        %v4942 = vadd.f32 0.0, %v4941
        %v4943 = vpop.f32.mrf.mxu0
        %4944 = vmatprep.mubr.bf16.mxu0 0
        %4945 = vmatmul.mubr.bf16.gmra.mxu0 %v4886
        %v4946 = vpop.f32.mrf.mxu0
        %v4947 = vadd.f32 0.0, %v4946
        %v4948 = vpop.f32.mrf.mxu0
        %v4949 = vpop.f32.mrf.mxu0
        %v4950 = vadd.f32 0.0, %v4949
        %v4951 = vpop.f32.mrf.mxu0
        %4952 = vdwg.mxu0
        %v4953 = vpack.c.bf16 %v4926, %v4923
        %v4954 = vpack.c.bf16 %v4934, %v4931
        %v4955 = vpack.c.bf16 %v4942, %v4939
        %v4956 = vpack.c.bf16 %v4950, %v4947
        %v4961 = vunpack.c.l.b16 %v4953
        %v4962 = vunpack.c.h.b16 %v4953
        %v4963 = vunpack.c.l.b16 %v4954
        %v4964 = vunpack.c.h.b16 %v4954
        %v4965 = vunpack.c.l.b16 %v4955
        %v4966 = vunpack.c.h.b16 %v4955
        %v4967 = vunpack.c.l.b16 %v4956
        %v4968 = vunpack.c.h.b16 %v4956
        %v4969 = vpack.c.b16 %v4961, %v4961
        %v4970 = vpack.c.b16 %v4962, %v4962
        %v4971 = vpack.c.b16 %v4963, %v4963
        %v4972 = vpack.c.b16 %v4964, %v4964
        %v4973 = vpack.c.b16 %v4965, %v4965
        %v4974 = vpack.c.b16 %v4966, %v4966
        %v4975 = vpack.c.b16 %v4967, %v4967
        %v4976 = vpack.c.b16 %v4968, %v4968
        %4977 = vrot.lane.b32.xlu0 %v4969, 64
        %v4978 = vpop.permute.xlu0 %4977
        %4979 = vrot.lane.b32.xlu0 %v4970, 64
        %v4980 = vpop.permute.xlu0 %4979
        %4981 = vrot.lane.b32.xlu0 %v4971, 64
        %v4982 = vpop.permute.xlu0 %4981
        %4983 = vrot.lane.b32.xlu0 %v4972, 64
        %v4984 = vpop.permute.xlu0 %4983
        %4985 = vrot.lane.b32.xlu0 %v4973, 64
        %v4986 = vpop.permute.xlu0 %4985
        %4987 = vrot.lane.b32.xlu0 %v4974, 64
        %v4988 = vpop.permute.xlu0 %4987
        %4989 = vrot.lane.b32.xlu0 %v4975, 64
        %v4990 = vpop.permute.xlu0 %4989
        %4991 = vrot.lane.b32.xlu0 %v4976, 64
        %v4992 = vpop.permute.xlu0 %4991
        %5001 = vst.msk [vmem:[#allocation3 + $0x4] sm:$0xf] %vm4156, %v4978
        %5002 = vst.msk [vmem:[#allocation3 + $0x10] sm:$0xf] %vm4156, %v4980
        %5003 = vst.msk [vmem:[#allocation3 + $0x1c] sm:$0xf] %vm4156, %v4982
        %5004 = vst.msk [vmem:[#allocation3 + $0x28] sm:$0xf] %vm4156, %v4984
        %5005 = vst.msk [vmem:[#allocation3 + $0x34] sm:$0xf] %vm4156, %v4986
        %5006 = vst.msk [vmem:[#allocation3 + $0x40] sm:$0xf] %vm4156, %v4988
        %5007 = vst.msk [vmem:[#allocation3 + $0x4c] sm:$0xf] %vm4156, %v4990
        %5008 = vst.msk [vmem:[#allocation3 + $0x58] sm:$0xf] %vm4156, %v4992
        %v5009 = vld [vmem:[#allocation2 + $0x8] sm:$0xf]
        %v5010 = vld [vmem:[#allocation2 + $0x2c] sm:$0xf]
        %v5011 = vld [vmem:[#allocation2 + $0x50] sm:$0xf]
        %v5012 = vld [vmem:[#allocation2 + $0x74] sm:$0xf]
        %v5013 = vld [vmem:[#allocation2 + $0x98] sm:$0xf]
        %v5014 = vld [vmem:[#allocation2 + $0xbc] sm:$0xf]
        %v5015 = vld [vmem:[#allocation2 + $0xe0] sm:$0xf]
        %v5016 = vld [vmem:[#allocation2 + $0x104] sm:$0xf]
        %v5017 = vld [vmem:[#allocation2 + $0x14] sm:$0xf]
        %v5018 = vld [vmem:[#allocation2 + $0x38] sm:$0xf]
        %v5019 = vld [vmem:[#allocation2 + $0x5c] sm:$0xf]
        %v5020 = vld [vmem:[#allocation2 + $0x80] sm:$0xf]
        %v5021 = vld [vmem:[#allocation2 + $0xa4] sm:$0xf]
        %v5022 = vld [vmem:[#allocation2 + $0xc8] sm:$0xf]
        %v5023 = vld [vmem:[#allocation2 + $0xec] sm:$0xf]
        %v5024 = vld [vmem:[#allocation2 + $0x110] sm:$0xf]
        %v5025 = vld [vmem:[#allocation2 + $0x20] sm:$0xf]
        %v5026 = vld [vmem:[#allocation2 + $0x44] sm:$0xf]
        %v5027 = vld [vmem:[#allocation2 + $0x68] sm:$0xf]
        %v5028 = vld [vmem:[#allocation2 + $0x8c] sm:$0xf]
        %v5029 = vld [vmem:[#allocation2 + $0xb0] sm:$0xf]
        %v5030 = vld [vmem:[#allocation2 + $0xd4] sm:$0xf]
        %v5031 = vld [vmem:[#allocation2 + $0xf8] sm:$0xf]
        %v5032 = vld [vmem:[#allocation2 + $0x11c] sm:$0xf]
        %v5041 = vunpack.c.l.b16 %v5009
        %v5042 = vunpack.c.l.b16 %v5010
        %v5043 = vunpack.c.l.b16 %v5011
        %v5044 = vunpack.c.l.b16 %v5012
        %v5045 = vunpack.c.l.b16 %v5013
        %v5046 = vunpack.c.l.b16 %v5014
        %v5047 = vunpack.c.l.b16 %v5015
        %v5048 = vunpack.c.l.b16 %v5016
        %v5049 = vpack.c.b16 %v5042, %v5041
        %v5050 = vpack.c.b16 %v5044, %v5043
        %v5051 = vpack.c.b16 %v5046, %v5045
        %v5052 = vpack.c.b16 %v5048, %v5047
        %v5061 = vunpack.c.l.b16 %v5017
        %v5062 = vunpack.c.l.b16 %v5018
        %v5063 = vunpack.c.l.b16 %v5019
        %v5064 = vunpack.c.l.b16 %v5020
        %v5065 = vunpack.c.l.b16 %v5021
        %v5066 = vunpack.c.l.b16 %v5022
        %v5067 = vunpack.c.l.b16 %v5023
        %v5068 = vunpack.c.l.b16 %v5024
        %v5069 = vpack.c.b16 %v5062, %v5061
        %v5070 = vpack.c.b16 %v5064, %v5063
        %v5071 = vpack.c.b16 %v5066, %v5065
        %v5072 = vpack.c.b16 %v5068, %v5067
        %v5074 = vsel %vm3382, %v5049, 0
        %v5077 = vsel %vm3382, %v5050, 0
        %v5080 = vsel %vm3382, %v5051, 0
        %v5083 = vsel %vm3382, %v5052, 0
        %v5086 = vsel %vm3382, %v5069, 0
        %v5089 = vsel %vm3382, %v5070, 0
        %v5092 = vsel %vm3382, %v5071, 0
        %v5095 = vsel %vm3382, %v5072, 0
        %5097 = vmatprep.subr.bf16.mxu0 0
        %5098 = vmatpush1.bf16.xpose.msra.mxu0 0
        %5099 = vmatprep.subr.bf16.mxu0 0
        %5100 = vmatpush1.bf16.xpose.msra.mxu0 0
        %5101 = vmatprep.subr.bf16.mxu0 0
        %5102 = vmatpush1.bf16.xpose.msra.mxu0 0
        %5103 = vmatprep.subr.bf16.mxu0 0
        %5104 = vmatpush1.bf16.xpose.msra.mxu0 0
        %5105 = vmatprep.subr.bf16.mxu0 0
        %5106 = vmatpush1.bf16.xpose.msra.mxu0 %v5095
        %5107 = vmatprep.subr.bf16.mxu0 0
        %5108 = vmatpush1.bf16.xpose.msra.mxu0 %v5092
        %5109 = vmatprep.subr.bf16.mxu0 0
        %5110 = vmatpush1.bf16.xpose.msra.mxu0 %v5089
        %5111 = vmatprep.subr.bf16.mxu0 0
        %5112 = vmatpush1.bf16.xpose.msra.mxu0 %v5086
        %5113 = vmatprep.subr.bf16.mxu0 0
        %5114 = vmatpush2.bf16.xpose.msra.mxu0 0
        %5115 = vmatprep.subr.bf16.mxu0 0
        %5116 = vmatpush2.bf16.xpose.msra.mxu0 0
        %5117 = vmatprep.subr.bf16.mxu0 0
        %5118 = vmatpush2.bf16.xpose.msra.mxu0 0
        %5119 = vmatprep.subr.bf16.mxu0 0
        %5120 = vmatpush2.bf16.xpose.msra.mxu0 0
        %5121 = vmatprep.subr.bf16.mxu0 0
        %5122 = vmatpush2.bf16.xpose.msra.mxu0 0
        %5123 = vmatprep.subr.bf16.mxu0 0
        %5124 = vmatpush2.bf16.xpose.msra.mxu0 0
        %5125 = vmatprep.subr.bf16.mxu0 0
        %5126 = vmatpush2.bf16.xpose.msra.mxu0 0
        %5127 = vmatprep.subr.bf16.mxu0 0
        %5128 = vmatpush2.bf16.xpose.msra.mxu0 0
        %5129 = vmatprep.mubr.bf16.mxu0 0
        %5130 = vmatmul.mubr.bf16.gmra.mxu0 %v5074
        %v5131 = vpop.f32.mrf.mxu0
        %v5132 = vadd.f32 0.0, %v5131
        %v5133 = vpop.f32.mrf.mxu0
        %v5134 = vpop.f32.mrf.mxu0
        %v5135 = vadd.f32 0.0, %v5134
        %v5136 = vpop.f32.mrf.mxu0
        %5137 = vmatprep.mubr.bf16.mxu0 0
        %5138 = vmatmul.mubr.bf16.gmra.mxu0 %v5077
        %v5139 = vpop.f32.mrf.mxu0
        %v5140 = vadd.f32 0.0, %v5139
        %v5141 = vpop.f32.mrf.mxu0
        %v5142 = vpop.f32.mrf.mxu0
        %v5143 = vadd.f32 0.0, %v5142
        %v5144 = vpop.f32.mrf.mxu0
        %5145 = vmatprep.mubr.bf16.mxu0 0
        %5146 = vmatmul.mubr.bf16.gmra.mxu0 %v5080
        %v5147 = vpop.f32.mrf.mxu0
        %v5148 = vadd.f32 0.0, %v5147
        %v5149 = vpop.f32.mrf.mxu0
        %v5150 = vpop.f32.mrf.mxu0
        %v5151 = vadd.f32 0.0, %v5150
        %v5152 = vpop.f32.mrf.mxu0
        %5153 = vmatprep.mubr.bf16.mxu0 0
        %5154 = vmatmul.mubr.bf16.gmra.mxu0 %v5083
        %v5155 = vpop.f32.mrf.mxu0
        %v5156 = vadd.f32 0.0, %v5155
        %v5157 = vpop.f32.mrf.mxu0
        %v5158 = vpop.f32.mrf.mxu0
        %v5159 = vadd.f32 0.0, %v5158
        %v5160 = vpop.f32.mrf.mxu0
        %5161 = vdwg.mxu0
        %v5162 = vmul.f32 %v5132, 0.125
        %v5163 = vmul.f32 %v5135, 0.125
        %v5164 = vmul.f32 %v5140, 0.125
        %v5165 = vmul.f32 %v5143, 0.125
        %v5166 = vmul.f32 %v5148, 0.125
        %v5167 = vmul.f32 %v5151, 0.125
        %v5168 = vmul.f32 %v5156, 0.125
        %v5169 = vmul.f32 %v5159, 0.125
        %v5170 = vadd.f32 %v5162, %v3310
        %v5171 = vadd.f32 %v5163, %v3311
        %v5172 = vadd.f32 %v5164, %v3312
        %v5173 = vadd.f32 %v5165, %v3313
        %v5174 = vadd.f32 %v5166, %v3314
        %v5175 = vadd.f32 %v5167, %v3315
        %v5176 = vadd.f32 %v5168, %v3316
        %v5177 = vadd.f32 %v5169, %v3317
        %v5178 = vsel %vm3382, %v5170, -inf
        %5179 = vmax.xlane.f32.xlu0 %v5178
        %v5180 = vpop.xlane.xlu0 %5179
        %v5181 = vsel %vm3382, %v5171, -inf
        %5182 = vmax.xlane.f32.xlu0 %v5181
        %v5183 = vpop.xlane.xlu0 %5182
        %v5184 = vsel %vm3382, %v5172, -inf
        %5185 = vmax.xlane.f32.xlu0 %v5184
        %v5186 = vpop.xlane.xlu0 %5185
        %v5187 = vsel %vm3382, %v5173, -inf
        %5188 = vmax.xlane.f32.xlu0 %v5187
        %v5189 = vpop.xlane.xlu0 %5188
        %v5190 = vsel %vm3382, %v5174, -inf
        %5191 = vmax.xlane.f32.xlu0 %v5190
        %v5192 = vpop.xlane.xlu0 %5191
        %v5193 = vsel %vm3382, %v5175, -inf
        %5194 = vmax.xlane.f32.xlu0 %v5193
        %v5195 = vpop.xlane.xlu0 %5194
        %v5196 = vsel %vm3382, %v5176, -inf
        %5197 = vmax.xlane.f32.xlu0 %v5196
        %v5198 = vpop.xlane.xlu0 %5197
        %v5199 = vsel %vm3382, %v5177, -inf
        %5200 = vmax.xlane.f32.xlu0 %v5199
        %v5201 = vpop.xlane.xlu0 %5200
        %v5202 = vsub.f32 %v5170, %v5180
        %v5203 = vsub.f32 %v5171, %v5183
        %v5204 = vsub.f32 %v5172, %v5186
        %v5205 = vsub.f32 %v5173, %v5189
        %v5206 = vsub.f32 %v5174, %v5192
        %v5207 = vsub.f32 %v5175, %v5195
        %v5208 = vsub.f32 %v5176, %v5198
        %v5209 = vsub.f32 %v5177, %v5201
        %v5210 = vmul.f32 %v5202, 1.442695
        %v5211 = vpow.pop %v5210
        %v5212 = vmul.f32 %v5203, 1.442695
        %v5213 = vpow.pop %v5212
        %v5214 = vmul.f32 %v5204, 1.442695
        %v5215 = vpow.pop %v5214
        %v5216 = vmul.f32 %v5205, 1.442695
        %v5217 = vpow.pop %v5216
        %v5218 = vmul.f32 %v5206, 1.442695
        %v5219 = vpow.pop %v5218
        %v5220 = vmul.f32 %v5207, 1.442695
        %v5221 = vpow.pop %v5220
        %v5222 = vmul.f32 %v5208, 1.442695
        %v5223 = vpow.pop %v5222
        %v5224 = vmul.f32 %v5209, 1.442695
        %v5225 = vpow.pop %v5224
        %v5226 = vsel %vm3382, %v5211, 0.0
        %5227 = vadd.xlane.f32.xlu0 %v5226
        %v5228 = vpop.xlane.xlu0 %5227
        %v5229 = vsel %vm3382, %v5213, 0.0
        %5230 = vadd.xlane.f32.xlu0 %v5229
        %v5231 = vpop.xlane.xlu0 %5230
        %v5232 = vsel %vm3382, %v5215, 0.0
        %5233 = vadd.xlane.f32.xlu0 %v5232
        %v5234 = vpop.xlane.xlu0 %5233
        %v5235 = vsel %vm3382, %v5217, 0.0
        %5236 = vadd.xlane.f32.xlu0 %v5235
        %v5237 = vpop.xlane.xlu0 %5236
        %v5238 = vsel %vm3382, %v5219, 0.0
        %5239 = vadd.xlane.f32.xlu0 %v5238
        %v5240 = vpop.xlane.xlu0 %5239
        %v5241 = vsel %vm3382, %v5221, 0.0
        %5242 = vadd.xlane.f32.xlu0 %v5241
        %v5243 = vpop.xlane.xlu0 %5242
        %v5244 = vsel %vm3382, %v5223, 0.0
        %5245 = vadd.xlane.f32.xlu0 %v5244
        %v5246 = vpop.xlane.xlu0 %5245
        %v5247 = vsel %vm3382, %v5225, 0.0
        %5248 = vadd.xlane.f32.xlu0 %v5247
        %v5249 = vpop.xlane.xlu0 %5248
        %v5250 = vrcp.pop %v5228
        %v5251 = vrcp.pop %v5231
        %v5252 = vrcp.pop %v5234
        %v5253 = vrcp.pop %v5237
        %v5254 = vrcp.pop %v5240
        %v5255 = vrcp.pop %v5243
        %v5256 = vrcp.pop %v5246
        %v5257 = vrcp.pop %v5249
        %v5258 = vmul.f32 %v5211, %v5250
        %v5259 = vmul.f32 %v5213, %v5251
        %v5260 = vmul.f32 %v5215, %v5252
        %v5261 = vmul.f32 %v5217, %v5253
        %v5262 = vmul.f32 %v5219, %v5254
        %v5263 = vmul.f32 %v5221, %v5255
        %v5264 = vmul.f32 %v5223, %v5256
        %v5265 = vmul.f32 %v5225, %v5257
        %v5266 = vpack.c.bf16 %v5259, %v5258
        %v5267 = vpack.c.bf16 %v5261, %v5260
        %v5268 = vpack.c.bf16 %v5263, %v5262
        %v5269 = vpack.c.bf16 %v5265, %v5264
        %v5278 = vunpack.c.l.b16 %v5025
        %v5279 = vunpack.c.l.b16 %v5026
        %v5280 = vunpack.c.l.b16 %v5027
        %v5281 = vunpack.c.l.b16 %v5028
        %v5282 = vunpack.c.l.b16 %v5029
        %v5283 = vunpack.c.l.b16 %v5030
        %v5284 = vunpack.c.l.b16 %v5031
        %v5285 = vunpack.c.l.b16 %v5032
        %v5286 = vpack.c.b16 %v5279, %v5278
        %v5287 = vpack.c.b16 %v5281, %v5280
        %v5288 = vpack.c.b16 %v5283, %v5282
        %v5289 = vpack.c.b16 %v5285, %v5284
        %v5295 = vsel %vm3382, %v5266, 0
        %v5298 = vsel %vm3382, %v5267, 0
        %v5301 = vsel %vm3382, %v5268, 0
        %v5304 = vsel %vm3382, %v5269, 0
        %5306 = vmatprep.subr.bf16.mxu0 0
        %5307 = vmatpush1.bf16.msra.mxu0 0
        %5308 = vmatprep.subr.bf16.mxu0 0
        %5309 = vmatpush1.bf16.msra.mxu0 0
        %5310 = vmatprep.subr.bf16.mxu0 0
        %5311 = vmatpush1.bf16.msra.mxu0 0
        %5312 = vmatprep.subr.bf16.mxu0 0
        %5313 = vmatpush1.bf16.msra.mxu0 0
        %5314 = vmatprep.subr.bf16.mxu0 0
        %5315 = vmatpush1.bf16.msra.mxu0 %v5289
        %5316 = vmatprep.subr.bf16.mxu0 0
        %5317 = vmatpush1.bf16.msra.mxu0 %v5288
        %5318 = vmatprep.subr.bf16.mxu0 0
        %5319 = vmatpush1.bf16.msra.mxu0 %v5287
        %5320 = vmatprep.subr.bf16.mxu0 0
        %5321 = vmatpush1.bf16.msra.mxu0 %v5286
        %5322 = vmatprep.subr.bf16.mxu0 0
        %5323 = vmatpush2.bf16.msra.mxu0 0
        %5324 = vmatprep.subr.bf16.mxu0 0
        %5325 = vmatpush2.bf16.msra.mxu0 0
        %5326 = vmatprep.subr.bf16.mxu0 0
        %5327 = vmatpush2.bf16.msra.mxu0 0
        %5328 = vmatprep.subr.bf16.mxu0 0
        %5329 = vmatpush2.bf16.msra.mxu0 0
        %5330 = vmatprep.subr.bf16.mxu0 0
        %5331 = vmatpush2.bf16.msra.mxu0 0
        %5332 = vmatprep.subr.bf16.mxu0 0
        %5333 = vmatpush2.bf16.msra.mxu0 0
        %5334 = vmatprep.subr.bf16.mxu0 0
        %5335 = vmatpush2.bf16.msra.mxu0 0
        %5336 = vmatprep.subr.bf16.mxu0 0
        %5337 = vmatpush2.bf16.msra.mxu0 0
        %5338 = vmatprep.mubr.bf16.mxu0 0
        %5339 = vmatmul.mubr.bf16.gmra.mxu0 %v5295
        %v5340 = vpop.f32.mrf.mxu0
        %v5341 = vadd.f32 0.0, %v5340
        %v5342 = vpop.f32.mrf.mxu0
        %v5343 = vpop.f32.mrf.mxu0
        %v5344 = vadd.f32 0.0, %v5343
        %v5345 = vpop.f32.mrf.mxu0
        %5346 = vmatprep.mubr.bf16.mxu0 0
        %5347 = vmatmul.mubr.bf16.gmra.mxu0 %v5298
        %v5348 = vpop.f32.mrf.mxu0
        %v5349 = vadd.f32 0.0, %v5348
        %v5350 = vpop.f32.mrf.mxu0
        %v5351 = vpop.f32.mrf.mxu0
        %v5352 = vadd.f32 0.0, %v5351
        %v5353 = vpop.f32.mrf.mxu0
        %5354 = vmatprep.mubr.bf16.mxu0 0
        %5355 = vmatmul.mubr.bf16.gmra.mxu0 %v5301
        %v5356 = vpop.f32.mrf.mxu0
        %v5357 = vadd.f32 0.0, %v5356
        %v5358 = vpop.f32.mrf.mxu0
        %v5359 = vpop.f32.mrf.mxu0
        %v5360 = vadd.f32 0.0, %v5359
        %v5361 = vpop.f32.mrf.mxu0
        %5362 = vmatprep.mubr.bf16.mxu0 0
        %5363 = vmatmul.mubr.bf16.gmra.mxu0 %v5304
        %v5364 = vpop.f32.mrf.mxu0
        %v5365 = vadd.f32 0.0, %v5364
        %v5366 = vpop.f32.mrf.mxu0
        %v5367 = vpop.f32.mrf.mxu0
        %v5368 = vadd.f32 0.0, %v5367
        %v5369 = vpop.f32.mrf.mxu0
        %5370 = vdwg.mxu0
        %v5371 = vpack.c.bf16 %v5344, %v5341
        %v5372 = vpack.c.bf16 %v5352, %v5349
        %v5373 = vpack.c.bf16 %v5360, %v5357
        %v5374 = vpack.c.bf16 %v5368, %v5365
        %v5379 = vunpack.c.l.b16 %v5371
        %v5380 = vunpack.c.h.b16 %v5371
        %v5381 = vunpack.c.l.b16 %v5372
        %v5382 = vunpack.c.h.b16 %v5372
        %v5383 = vunpack.c.l.b16 %v5373
        %v5384 = vunpack.c.h.b16 %v5373
        %v5385 = vunpack.c.l.b16 %v5374
        %v5386 = vunpack.c.h.b16 %v5374
        %v5387 = vpack.c.b16 %v5379, %v5379
        %v5388 = vpack.c.b16 %v5380, %v5380
        %v5389 = vpack.c.b16 %v5381, %v5381
        %v5390 = vpack.c.b16 %v5382, %v5382
        %v5391 = vpack.c.b16 %v5383, %v5383
        %v5392 = vpack.c.b16 %v5384, %v5384
        %v5393 = vpack.c.b16 %v5385, %v5385
        %v5394 = vpack.c.b16 %v5386, %v5386
        %5403 = vst.msk [vmem:[#allocation3 + $0x8] sm:$0xf] %vm3713, %v5387
        %5404 = vst.msk [vmem:[#allocation3 + $0x14] sm:$0xf] %vm3713, %v5388
        %5405 = vst.msk [vmem:[#allocation3 + $0x20] sm:$0xf] %vm3713, %v5389
        %5406 = vst.msk [vmem:[#allocation3 + $0x2c] sm:$0xf] %vm3713, %v5390
        %5407 = vst.msk [vmem:[#allocation3 + $0x38] sm:$0xf] %vm3713, %v5391
        %5408 = vst.msk [vmem:[#allocation3 + $0x44] sm:$0xf] %vm3713, %v5392
        %5409 = vst.msk [vmem:[#allocation3 + $0x50] sm:$0xf] %vm3713, %v5393
        %5410 = vst.msk [vmem:[#allocation3 + $0x5c] sm:$0xf] %vm3713, %v5394
        %v5411 = vld [vmem:[#allocation2 + $0x8] sm:$0xf]
        %v5412 = vld [vmem:[#allocation2 + $0x2c] sm:$0xf]
        %v5413 = vld [vmem:[#allocation2 + $0x50] sm:$0xf]
        %v5414 = vld [vmem:[#allocation2 + $0x74] sm:$0xf]
        %v5415 = vld [vmem:[#allocation2 + $0x98] sm:$0xf]
        %v5416 = vld [vmem:[#allocation2 + $0xbc] sm:$0xf]
        %v5417 = vld [vmem:[#allocation2 + $0xe0] sm:$0xf]
        %v5418 = vld [vmem:[#allocation2 + $0x104] sm:$0xf]
        %v5419 = vld [vmem:[#allocation2 + $0x14] sm:$0xf]
        %v5420 = vld [vmem:[#allocation2 + $0x38] sm:$0xf]
        %v5421 = vld [vmem:[#allocation2 + $0x5c] sm:$0xf]
        %v5422 = vld [vmem:[#allocation2 + $0x80] sm:$0xf]
        %v5423 = vld [vmem:[#allocation2 + $0xa4] sm:$0xf]
        %v5424 = vld [vmem:[#allocation2 + $0xc8] sm:$0xf]
        %v5425 = vld [vmem:[#allocation2 + $0xec] sm:$0xf]
        %v5426 = vld [vmem:[#allocation2 + $0x110] sm:$0xf]
        %v5427 = vld [vmem:[#allocation2 + $0x20] sm:$0xf]
        %v5428 = vld [vmem:[#allocation2 + $0x44] sm:$0xf]
        %v5429 = vld [vmem:[#allocation2 + $0x68] sm:$0xf]
        %v5430 = vld [vmem:[#allocation2 + $0x8c] sm:$0xf]
        %v5431 = vld [vmem:[#allocation2 + $0xb0] sm:$0xf]
        %v5432 = vld [vmem:[#allocation2 + $0xd4] sm:$0xf]
        %v5433 = vld [vmem:[#allocation2 + $0xf8] sm:$0xf]
        %v5434 = vld [vmem:[#allocation2 + $0x11c] sm:$0xf]
        %v5443 = vunpack.c.l.b16 %v5411
        %v5444 = vunpack.c.l.b16 %v5412
        %v5445 = vunpack.c.l.b16 %v5413
        %v5446 = vunpack.c.l.b16 %v5414
        %v5447 = vunpack.c.l.b16 %v5415
        %v5448 = vunpack.c.l.b16 %v5416
        %v5449 = vunpack.c.l.b16 %v5417
        %v5450 = vunpack.c.l.b16 %v5418
        %v5451 = vpack.c.b16 %v5444, %v5443
        %v5452 = vpack.c.b16 %v5446, %v5445
        %v5453 = vpack.c.b16 %v5448, %v5447
        %v5454 = vpack.c.b16 %v5450, %v5449
        %5455 = vrot.lane.b32.xlu0 %v5451, 64
        %v5456 = vpop.permute.xlu0 %5455
        %5457 = vrot.lane.b32.xlu0 %v5452, 64
        %v5458 = vpop.permute.xlu0 %5457
        %5459 = vrot.lane.b32.xlu0 %v5453, 64
        %v5460 = vpop.permute.xlu0 %5459
        %5461 = vrot.lane.b32.xlu0 %v5454, 64
        %v5462 = vpop.permute.xlu0 %5461
        %v5471 = vunpack.c.l.b16 %v5419
        %v5472 = vunpack.c.l.b16 %v5420
        %v5473 = vunpack.c.l.b16 %v5421
        %v5474 = vunpack.c.l.b16 %v5422
        %v5475 = vunpack.c.l.b16 %v5423
        %v5476 = vunpack.c.l.b16 %v5424
        %v5477 = vunpack.c.l.b16 %v5425
        %v5478 = vunpack.c.l.b16 %v5426
        %v5479 = vpack.c.b16 %v5472, %v5471
        %v5480 = vpack.c.b16 %v5474, %v5473
        %v5481 = vpack.c.b16 %v5476, %v5475
        %v5482 = vpack.c.b16 %v5478, %v5477
        %5483 = vrot.lane.b32.xlu0 %v5479, 64
        %v5484 = vpop.permute.xlu0 %5483
        %5485 = vrot.lane.b32.xlu0 %v5480, 64
        %v5486 = vpop.permute.xlu0 %5485
        %5487 = vrot.lane.b32.xlu0 %v5481, 64
        %v5488 = vpop.permute.xlu0 %5487
        %5489 = vrot.lane.b32.xlu0 %v5482, 64
        %v5490 = vpop.permute.xlu0 %5489
        %v5492 = vsel %vm3382, %v5456, 0
        %v5495 = vsel %vm3382, %v5458, 0
        %v5498 = vsel %vm3382, %v5460, 0
        %v5501 = vsel %vm3382, %v5462, 0
        %v5504 = vsel %vm3382, %v5484, 0
        %v5507 = vsel %vm3382, %v5486, 0
        %v5510 = vsel %vm3382, %v5488, 0
        %v5513 = vsel %vm3382, %v5490, 0
        %5515 = vmatprep.subr.bf16.mxu0 0
        %5516 = vmatpush1.bf16.xpose.msra.mxu0 0
        %5517 = vmatprep.subr.bf16.mxu0 0
        %5518 = vmatpush1.bf16.xpose.msra.mxu0 0
        %5519 = vmatprep.subr.bf16.mxu0 0
        %5520 = vmatpush1.bf16.xpose.msra.mxu0 0
        %5521 = vmatprep.subr.bf16.mxu0 0
        %5522 = vmatpush1.bf16.xpose.msra.mxu0 0
        %5523 = vmatprep.subr.bf16.mxu0 0
        %5524 = vmatpush1.bf16.xpose.msra.mxu0 %v5513
        %5525 = vmatprep.subr.bf16.mxu0 0
        %5526 = vmatpush1.bf16.xpose.msra.mxu0 %v5510
        %5527 = vmatprep.subr.bf16.mxu0 0
        %5528 = vmatpush1.bf16.xpose.msra.mxu0 %v5507
        %5529 = vmatprep.subr.bf16.mxu0 0
        %5530 = vmatpush1.bf16.xpose.msra.mxu0 %v5504
        %5531 = vmatprep.subr.bf16.mxu0 0
        %5532 = vmatpush2.bf16.xpose.msra.mxu0 0
        %5533 = vmatprep.subr.bf16.mxu0 0
        %5534 = vmatpush2.bf16.xpose.msra.mxu0 0
        %5535 = vmatprep.subr.bf16.mxu0 0
        %5536 = vmatpush2.bf16.xpose.msra.mxu0 0
        %5537 = vmatprep.subr.bf16.mxu0 0
        %5538 = vmatpush2.bf16.xpose.msra.mxu0 0
        %5539 = vmatprep.subr.bf16.mxu0 0
        %5540 = vmatpush2.bf16.xpose.msra.mxu0 0
        %5541 = vmatprep.subr.bf16.mxu0 0
        %5542 = vmatpush2.bf16.xpose.msra.mxu0 0
        %5543 = vmatprep.subr.bf16.mxu0 0
        %5544 = vmatpush2.bf16.xpose.msra.mxu0 0
        %5545 = vmatprep.subr.bf16.mxu0 0
        %5546 = vmatpush2.bf16.xpose.msra.mxu0 0
        %5547 = vmatprep.mubr.bf16.mxu0 0
        %5548 = vmatmul.mubr.bf16.gmra.mxu0 %v5492
        %v5549 = vpop.f32.mrf.mxu0
        %v5550 = vadd.f32 0.0, %v5549
        %v5551 = vpop.f32.mrf.mxu0
        %v5552 = vpop.f32.mrf.mxu0
        %v5553 = vadd.f32 0.0, %v5552
        %v5554 = vpop.f32.mrf.mxu0
        %5555 = vmatprep.mubr.bf16.mxu0 0
        %5556 = vmatmul.mubr.bf16.gmra.mxu0 %v5495
        %v5557 = vpop.f32.mrf.mxu0
        %v5558 = vadd.f32 0.0, %v5557
        %v5559 = vpop.f32.mrf.mxu0
        %v5560 = vpop.f32.mrf.mxu0
        %v5561 = vadd.f32 0.0, %v5560
        %v5562 = vpop.f32.mrf.mxu0
        %5563 = vmatprep.mubr.bf16.mxu0 0
        %5564 = vmatmul.mubr.bf16.gmra.mxu0 %v5498
        %v5565 = vpop.f32.mrf.mxu0
        %v5566 = vadd.f32 0.0, %v5565
        %v5567 = vpop.f32.mrf.mxu0
        %v5568 = vpop.f32.mrf.mxu0
        %v5569 = vadd.f32 0.0, %v5568
        %v5570 = vpop.f32.mrf.mxu0
        %5571 = vmatprep.mubr.bf16.mxu0 0
        %5572 = vmatmul.mubr.bf16.gmra.mxu0 %v5501
        %v5573 = vpop.f32.mrf.mxu0
        %v5574 = vadd.f32 0.0, %v5573
        %v5575 = vpop.f32.mrf.mxu0
        %v5576 = vpop.f32.mrf.mxu0
        %v5577 = vadd.f32 0.0, %v5576
        %v5578 = vpop.f32.mrf.mxu0
        %5579 = vdwg.mxu0
        %v5580 = vmul.f32 %v5550, 0.125
        %v5581 = vmul.f32 %v5553, 0.125
        %v5582 = vmul.f32 %v5558, 0.125
        %v5583 = vmul.f32 %v5561, 0.125
        %v5584 = vmul.f32 %v5566, 0.125
        %v5585 = vmul.f32 %v5569, 0.125
        %v5586 = vmul.f32 %v5574, 0.125
        %v5587 = vmul.f32 %v5577, 0.125
        %v5588 = vadd.f32 %v5580, %v3310
        %v5589 = vadd.f32 %v5581, %v3311
        %v5590 = vadd.f32 %v5582, %v3312
        %v5591 = vadd.f32 %v5583, %v3313
        %v5592 = vadd.f32 %v5584, %v3314
        %v5593 = vadd.f32 %v5585, %v3315
        %v5594 = vadd.f32 %v5586, %v3316
        %v5595 = vadd.f32 %v5587, %v3317
        %v5596 = vsel %vm3382, %v5588, -inf
        %5597 = vmax.xlane.f32.xlu0 %v5596
        %v5598 = vpop.xlane.xlu0 %5597
        %v5599 = vsel %vm3382, %v5589, -inf
        %5600 = vmax.xlane.f32.xlu0 %v5599
        %v5601 = vpop.xlane.xlu0 %5600
        %v5602 = vsel %vm3382, %v5590, -inf
        %5603 = vmax.xlane.f32.xlu0 %v5602
        %v5604 = vpop.xlane.xlu0 %5603
        %v5605 = vsel %vm3382, %v5591, -inf
        %5606 = vmax.xlane.f32.xlu0 %v5605
        %v5607 = vpop.xlane.xlu0 %5606
        %v5608 = vsel %vm3382, %v5592, -inf
        %5609 = vmax.xlane.f32.xlu0 %v5608
        %v5610 = vpop.xlane.xlu0 %5609
        %v5611 = vsel %vm3382, %v5593, -inf
        %5612 = vmax.xlane.f32.xlu0 %v5611
        %v5613 = vpop.xlane.xlu0 %5612
        %v5614 = vsel %vm3382, %v5594, -inf
        %5615 = vmax.xlane.f32.xlu0 %v5614
        %v5616 = vpop.xlane.xlu0 %5615
        %v5617 = vsel %vm3382, %v5595, -inf
        %5618 = vmax.xlane.f32.xlu0 %v5617
        %v5619 = vpop.xlane.xlu0 %5618
        %v5620 = vsub.f32 %v5588, %v5598
        %v5621 = vsub.f32 %v5589, %v5601
        %v5622 = vsub.f32 %v5590, %v5604
        %v5623 = vsub.f32 %v5591, %v5607
        %v5624 = vsub.f32 %v5592, %v5610
        %v5625 = vsub.f32 %v5593, %v5613
        %v5626 = vsub.f32 %v5594, %v5616
        %v5627 = vsub.f32 %v5595, %v5619
        %v5628 = vmul.f32 %v5620, 1.442695
        %v5629 = vpow.pop %v5628
        %v5630 = vmul.f32 %v5621, 1.442695
        %v5631 = vpow.pop %v5630
        %v5632 = vmul.f32 %v5622, 1.442695
        %v5633 = vpow.pop %v5632
        %v5634 = vmul.f32 %v5623, 1.442695
        %v5635 = vpow.pop %v5634
        %v5636 = vmul.f32 %v5624, 1.442695
        %v5637 = vpow.pop %v5636
        %v5638 = vmul.f32 %v5625, 1.442695
        %v5639 = vpow.pop %v5638
        %v5640 = vmul.f32 %v5626, 1.442695
        %v5641 = vpow.pop %v5640
        %v5642 = vmul.f32 %v5627, 1.442695
        %v5643 = vpow.pop %v5642
        %v5644 = vsel %vm3382, %v5629, 0.0
        %5645 = vadd.xlane.f32.xlu0 %v5644
        %v5646 = vpop.xlane.xlu0 %5645
        %v5647 = vsel %vm3382, %v5631, 0.0
        %5648 = vadd.xlane.f32.xlu0 %v5647
        %v5649 = vpop.xlane.xlu0 %5648
        %v5650 = vsel %vm3382, %v5633, 0.0
        %5651 = vadd.xlane.f32.xlu0 %v5650
        %v5652 = vpop.xlane.xlu0 %5651
        %v5653 = vsel %vm3382, %v5635, 0.0
        %5654 = vadd.xlane.f32.xlu0 %v5653
        %v5655 = vpop.xlane.xlu0 %5654
        %v5656 = vsel %vm3382, %v5637, 0.0
        %5657 = vadd.xlane.f32.xlu0 %v5656
        %v5658 = vpop.xlane.xlu0 %5657
        %v5659 = vsel %vm3382, %v5639, 0.0
        %5660 = vadd.xlane.f32.xlu0 %v5659
        %v5661 = vpop.xlane.xlu0 %5660
        %v5662 = vsel %vm3382, %v5641, 0.0
        %5663 = vadd.xlane.f32.xlu0 %v5662
        %v5664 = vpop.xlane.xlu0 %5663
        %v5665 = vsel %vm3382, %v5643, 0.0
        %5666 = vadd.xlane.f32.xlu0 %v5665
        %v5667 = vpop.xlane.xlu0 %5666
        %v5668 = vrcp.pop %v5646
        %v5669 = vrcp.pop %v5649
        %v5670 = vrcp.pop %v5652
        %v5671 = vrcp.pop %v5655
        %v5672 = vrcp.pop %v5658
        %v5673 = vrcp.pop %v5661
        %v5674 = vrcp.pop %v5664
        %v5675 = vrcp.pop %v5667
        %v5676 = vmul.f32 %v5629, %v5668
        %v5677 = vmul.f32 %v5631, %v5669
        %v5678 = vmul.f32 %v5633, %v5670
        %v5679 = vmul.f32 %v5635, %v5671
        %v5680 = vmul.f32 %v5637, %v5672
        %v5681 = vmul.f32 %v5639, %v5673
        %v5682 = vmul.f32 %v5641, %v5674
        %v5683 = vmul.f32 %v5643, %v5675
        %v5684 = vpack.c.bf16 %v5677, %v5676
        %v5685 = vpack.c.bf16 %v5679, %v5678
        %v5686 = vpack.c.bf16 %v5681, %v5680
        %v5687 = vpack.c.bf16 %v5683, %v5682
        %v5696 = vunpack.c.l.b16 %v5427
        %v5697 = vunpack.c.l.b16 %v5428
        %v5698 = vunpack.c.l.b16 %v5429
        %v5699 = vunpack.c.l.b16 %v5430
        %v5700 = vunpack.c.l.b16 %v5431
        %v5701 = vunpack.c.l.b16 %v5432
        %v5702 = vunpack.c.l.b16 %v5433
        %v5703 = vunpack.c.l.b16 %v5434
        %v5704 = vpack.c.b16 %v5697, %v5696
        %v5705 = vpack.c.b16 %v5699, %v5698
        %v5706 = vpack.c.b16 %v5701, %v5700
        %v5707 = vpack.c.b16 %v5703, %v5702
        %5708 = vrot.lane.b32.xlu0 %v5704, 64
        %v5709 = vpop.permute.xlu0 %5708
        %5710 = vrot.lane.b32.xlu0 %v5705, 64
        %v5711 = vpop.permute.xlu0 %5710
        %5712 = vrot.lane.b32.xlu0 %v5706, 64
        %v5713 = vpop.permute.xlu0 %5712
        %5714 = vrot.lane.b32.xlu0 %v5707, 64
        %v5715 = vpop.permute.xlu0 %5714
        %v5721 = vsel %vm3382, %v5684, 0
        %v5724 = vsel %vm3382, %v5685, 0
        %v5727 = vsel %vm3382, %v5686, 0
        %v5730 = vsel %vm3382, %v5687, 0
        %5732 = vmatprep.subr.bf16.mxu0 0
        %5733 = vmatpush1.bf16.msra.mxu0 0
        %5734 = vmatprep.subr.bf16.mxu0 0
        %5735 = vmatpush1.bf16.msra.mxu0 0
        %5736 = vmatprep.subr.bf16.mxu0 0
        %5737 = vmatpush1.bf16.msra.mxu0 0
        %5738 = vmatprep.subr.bf16.mxu0 0
        %5739 = vmatpush1.bf16.msra.mxu0 0
        %5740 = vmatprep.subr.bf16.mxu0 0
        %5741 = vmatpush1.bf16.msra.mxu0 %v5715
        %5742 = vmatprep.subr.bf16.mxu0 0
        %5743 = vmatpush1.bf16.msra.mxu0 %v5713
        %5744 = vmatprep.subr.bf16.mxu0 0
        %5745 = vmatpush1.bf16.msra.mxu0 %v5711
        %5746 = vmatprep.subr.bf16.mxu0 0
        %5747 = vmatpush1.bf16.msra.mxu0 %v5709
        %5748 = vmatprep.subr.bf16.mxu0 0
        %5749 = vmatpush2.bf16.msra.mxu0 0
        %5750 = vmatprep.subr.bf16.mxu0 0
        %5751 = vmatpush2.bf16.msra.mxu0 0
        %5752 = vmatprep.subr.bf16.mxu0 0
        %5753 = vmatpush2.bf16.msra.mxu0 0
        %5754 = vmatprep.subr.bf16.mxu0 0
        %5755 = vmatpush2.bf16.msra.mxu0 0
        %5756 = vmatprep.subr.bf16.mxu0 0
        %5757 = vmatpush2.bf16.msra.mxu0 0
        %5758 = vmatprep.subr.bf16.mxu0 0
        %5759 = vmatpush2.bf16.msra.mxu0 0
        %5760 = vmatprep.subr.bf16.mxu0 0
        %5761 = vmatpush2.bf16.msra.mxu0 0
        %5762 = vmatprep.subr.bf16.mxu0 0
        %5763 = vmatpush2.bf16.msra.mxu0 0
        %5764 = vmatprep.mubr.bf16.mxu0 0
        %5765 = vmatmul.mubr.bf16.gmra.mxu0 %v5721
        %v5766 = vpop.f32.mrf.mxu0
        %v5767 = vadd.f32 0.0, %v5766
        %v5768 = vpop.f32.mrf.mxu0
        %v5769 = vpop.f32.mrf.mxu0
        %v5770 = vadd.f32 0.0, %v5769
        %v5771 = vpop.f32.mrf.mxu0
        %5772 = vmatprep.mubr.bf16.mxu0 0
        %5773 = vmatmul.mubr.bf16.gmra.mxu0 %v5724
        %v5774 = vpop.f32.mrf.mxu0
        %v5775 = vadd.f32 0.0, %v5774
        %v5776 = vpop.f32.mrf.mxu0
        %v5777 = vpop.f32.mrf.mxu0
        %v5778 = vadd.f32 0.0, %v5777
        %v5779 = vpop.f32.mrf.mxu0
        %5780 = vmatprep.mubr.bf16.mxu0 0
        %5781 = vmatmul.mubr.bf16.gmra.mxu0 %v5727
        %v5782 = vpop.f32.mrf.mxu0
        %v5783 = vadd.f32 0.0, %v5782
        %v5784 = vpop.f32.mrf.mxu0
        %v5785 = vpop.f32.mrf.mxu0
        %v5786 = vadd.f32 0.0, %v5785
        %v5787 = vpop.f32.mrf.mxu0
        %5788 = vmatprep.mubr.bf16.mxu0 0
        %5789 = vmatmul.mubr.bf16.gmra.mxu0 %v5730
        %v5790 = vpop.f32.mrf.mxu0
        %v5791 = vadd.f32 0.0, %v5790
        %v5792 = vpop.f32.mrf.mxu0
        %v5793 = vpop.f32.mrf.mxu0
        %v5794 = vadd.f32 0.0, %v5793
        %v5795 = vpop.f32.mrf.mxu0
        %5796 = vdwg.mxu0
        %v5797 = vpack.c.bf16 %v5770, %v5767
        %v5798 = vpack.c.bf16 %v5778, %v5775
        %v5799 = vpack.c.bf16 %v5786, %v5783
        %v5800 = vpack.c.bf16 %v5794, %v5791
        %v5805 = vunpack.c.l.b16 %v5797
        %v5806 = vunpack.c.h.b16 %v5797
        %v5807 = vunpack.c.l.b16 %v5798
        %v5808 = vunpack.c.h.b16 %v5798
        %v5809 = vunpack.c.l.b16 %v5799
        %v5810 = vunpack.c.h.b16 %v5799
        %v5811 = vunpack.c.l.b16 %v5800
        %v5812 = vunpack.c.h.b16 %v5800
        %v5813 = vpack.c.b16 %v5805, %v5805
        %v5814 = vpack.c.b16 %v5806, %v5806
        %v5815 = vpack.c.b16 %v5807, %v5807
        %v5816 = vpack.c.b16 %v5808, %v5808
        %v5817 = vpack.c.b16 %v5809, %v5809
        %v5818 = vpack.c.b16 %v5810, %v5810
        %v5819 = vpack.c.b16 %v5811, %v5811
        %v5820 = vpack.c.b16 %v5812, %v5812
        %5821 = vrot.lane.b32.xlu0 %v5813, 64
        %v5822 = vpop.permute.xlu0 %5821
        %5823 = vrot.lane.b32.xlu0 %v5814, 64
        %v5824 = vpop.permute.xlu0 %5823
        %5825 = vrot.lane.b32.xlu0 %v5815, 64
        %v5826 = vpop.permute.xlu0 %5825
        %5827 = vrot.lane.b32.xlu0 %v5816, 64
        %v5828 = vpop.permute.xlu0 %5827
        %5829 = vrot.lane.b32.xlu0 %v5817, 64
        %v5830 = vpop.permute.xlu0 %5829
        %5831 = vrot.lane.b32.xlu0 %v5818, 64
        %v5832 = vpop.permute.xlu0 %5831
        %5833 = vrot.lane.b32.xlu0 %v5819, 64
        %v5834 = vpop.permute.xlu0 %5833
        %5835 = vrot.lane.b32.xlu0 %v5820, 64
        %v5836 = vpop.permute.xlu0 %5835
        %5845 = vst.msk [vmem:[#allocation3 + $0x8] sm:$0xf] %vm4156, %v5822
        %5846 = vst.msk [vmem:[#allocation3 + $0x14] sm:$0xf] %vm4156, %v5824
        %5847 = vst.msk [vmem:[#allocation3 + $0x20] sm:$0xf] %vm4156, %v5826
        %5848 = vst.msk [vmem:[#allocation3 + $0x2c] sm:$0xf] %vm4156, %v5828
        %5849 = vst.msk [vmem:[#allocation3 + $0x38] sm:$0xf] %vm4156, %v5830
        %5850 = vst.msk [vmem:[#allocation3 + $0x44] sm:$0xf] %vm4156, %v5832
        %5851 = vst.msk [vmem:[#allocation3 + $0x50] sm:$0xf] %vm4156, %v5834
        %5852 = vst.msk [vmem:[#allocation3 + $0x5c] sm:$0xf] %vm4156, %v5836
        %v5853 = vld [vmem:[#allocation2 + $0x120] sm:$0xf]
        %v5854 = vld [vmem:[#allocation2 + $0x144] sm:$0xf]
        %v5855 = vld [vmem:[#allocation2 + $0x168] sm:$0xf]
        %v5856 = vld [vmem:[#allocation2 + $0x18c] sm:$0xf]
        %v5857 = vld [vmem:[#allocation2 + $0x1b0] sm:$0xf]
        %v5858 = vld [vmem:[#allocation2 + $0x1d4] sm:$0xf]
        %v5859 = vld [vmem:[#allocation2 + $0x1f8] sm:$0xf]
        %v5860 = vld [vmem:[#allocation2 + $0x21c] sm:$0xf]
        %v5861 = vld [vmem:[#allocation2 + $0x12c] sm:$0xf]
        %v5862 = vld [vmem:[#allocation2 + $0x150] sm:$0xf]
        %v5863 = vld [vmem:[#allocation2 + $0x174] sm:$0xf]
        %v5864 = vld [vmem:[#allocation2 + $0x198] sm:$0xf]
        %v5865 = vld [vmem:[#allocation2 + $0x1bc] sm:$0xf]
        %v5866 = vld [vmem:[#allocation2 + $0x1e0] sm:$0xf]
        %v5867 = vld [vmem:[#allocation2 + $0x204] sm:$0xf]
        %v5868 = vld [vmem:[#allocation2 + $0x228] sm:$0xf]
        %v5869 = vld [vmem:[#allocation2 + $0x138] sm:$0xf]
        %v5870 = vld [vmem:[#allocation2 + $0x15c] sm:$0xf]
        %v5871 = vld [vmem:[#allocation2 + $0x180] sm:$0xf]
        %v5872 = vld [vmem:[#allocation2 + $0x1a4] sm:$0xf]
        %v5873 = vld [vmem:[#allocation2 + $0x1c8] sm:$0xf]
        %v5874 = vld [vmem:[#allocation2 + $0x1ec] sm:$0xf]
        %v5875 = vld [vmem:[#allocation2 + $0x210] sm:$0xf]
        %v5876 = vld [vmem:[#allocation2 + $0x234] sm:$0xf]
        %v5885 = vunpack.c.l.b16 %v5853
        %v5886 = vunpack.c.l.b16 %v5854
        %v5887 = vunpack.c.l.b16 %v5855
        %v5888 = vunpack.c.l.b16 %v5856
        %v5889 = vunpack.c.l.b16 %v5857
        %v5890 = vunpack.c.l.b16 %v5858
        %v5891 = vunpack.c.l.b16 %v5859
        %v5892 = vunpack.c.l.b16 %v5860
        %v5893 = vpack.c.b16 %v5886, %v5885
        %v5894 = vpack.c.b16 %v5888, %v5887
        %v5895 = vpack.c.b16 %v5890, %v5889
        %v5896 = vpack.c.b16 %v5892, %v5891
        %v5905 = vunpack.c.l.b16 %v5861
        %v5906 = vunpack.c.l.b16 %v5862
        %v5907 = vunpack.c.l.b16 %v5863
        %v5908 = vunpack.c.l.b16 %v5864
        %v5909 = vunpack.c.l.b16 %v5865
        %v5910 = vunpack.c.l.b16 %v5866
        %v5911 = vunpack.c.l.b16 %v5867
        %v5912 = vunpack.c.l.b16 %v5868
        %v5913 = vpack.c.b16 %v5906, %v5905
        %v5914 = vpack.c.b16 %v5908, %v5907
        %v5915 = vpack.c.b16 %v5910, %v5909
        %v5916 = vpack.c.b16 %v5912, %v5911
        %v5918 = vsel %vm3382, %v5893, 0
        %v5921 = vsel %vm3382, %v5894, 0
        %v5924 = vsel %vm3382, %v5895, 0
        %v5927 = vsel %vm3382, %v5896, 0
        %v5930 = vsel %vm3382, %v5913, 0
        %v5933 = vsel %vm3382, %v5914, 0
        %v5936 = vsel %vm3382, %v5915, 0
        %v5939 = vsel %vm3382, %v5916, 0
        %5941 = vmatprep.subr.bf16.mxu0 0
        %5942 = vmatpush1.bf16.xpose.msra.mxu0 0
        %5943 = vmatprep.subr.bf16.mxu0 0
        %5944 = vmatpush1.bf16.xpose.msra.mxu0 0
        %5945 = vmatprep.subr.bf16.mxu0 0
        %5946 = vmatpush1.bf16.xpose.msra.mxu0 0
        %5947 = vmatprep.subr.bf16.mxu0 0
        %5948 = vmatpush1.bf16.xpose.msra.mxu0 0
        %5949 = vmatprep.subr.bf16.mxu0 0
        %5950 = vmatpush1.bf16.xpose.msra.mxu0 %v5939
        %5951 = vmatprep.subr.bf16.mxu0 0
        %5952 = vmatpush1.bf16.xpose.msra.mxu0 %v5936
        %5953 = vmatprep.subr.bf16.mxu0 0
        %5954 = vmatpush1.bf16.xpose.msra.mxu0 %v5933
        %5955 = vmatprep.subr.bf16.mxu0 0
        %5956 = vmatpush1.bf16.xpose.msra.mxu0 %v5930
        %5957 = vmatprep.subr.bf16.mxu0 0
        %5958 = vmatpush2.bf16.xpose.msra.mxu0 0
        %5959 = vmatprep.subr.bf16.mxu0 0
        %5960 = vmatpush2.bf16.xpose.msra.mxu0 0
        %5961 = vmatprep.subr.bf16.mxu0 0
        %5962 = vmatpush2.bf16.xpose.msra.mxu0 0
        %5963 = vmatprep.subr.bf16.mxu0 0
        %5964 = vmatpush2.bf16.xpose.msra.mxu0 0
        %5965 = vmatprep.subr.bf16.mxu0 0
        %5966 = vmatpush2.bf16.xpose.msra.mxu0 0
        %5967 = vmatprep.subr.bf16.mxu0 0
        %5968 = vmatpush2.bf16.xpose.msra.mxu0 0
        %5969 = vmatprep.subr.bf16.mxu0 0
        %5970 = vmatpush2.bf16.xpose.msra.mxu0 0
        %5971 = vmatprep.subr.bf16.mxu0 0
        %5972 = vmatpush2.bf16.xpose.msra.mxu0 0
        %5973 = vmatprep.mubr.bf16.mxu0 0
        %5974 = vmatmul.mubr.bf16.gmra.mxu0 %v5918
        %v5975 = vpop.f32.mrf.mxu0
        %v5976 = vadd.f32 0.0, %v5975
        %v5977 = vpop.f32.mrf.mxu0
        %v5978 = vpop.f32.mrf.mxu0
        %v5979 = vadd.f32 0.0, %v5978
        %v5980 = vpop.f32.mrf.mxu0
        %5981 = vmatprep.mubr.bf16.mxu0 0
        %5982 = vmatmul.mubr.bf16.gmra.mxu0 %v5921
        %v5983 = vpop.f32.mrf.mxu0
        %v5984 = vadd.f32 0.0, %v5983
        %v5985 = vpop.f32.mrf.mxu0
        %v5986 = vpop.f32.mrf.mxu0
        %v5987 = vadd.f32 0.0, %v5986
        %v5988 = vpop.f32.mrf.mxu0
        %5989 = vmatprep.mubr.bf16.mxu0 0
        %5990 = vmatmul.mubr.bf16.gmra.mxu0 %v5924
        %v5991 = vpop.f32.mrf.mxu0
        %v5992 = vadd.f32 0.0, %v5991
        %v5993 = vpop.f32.mrf.mxu0
        %v5994 = vpop.f32.mrf.mxu0
        %v5995 = vadd.f32 0.0, %v5994
        %v5996 = vpop.f32.mrf.mxu0
        %5997 = vmatprep.mubr.bf16.mxu0 0
        %5998 = vmatmul.mubr.bf16.gmra.mxu0 %v5927
        %v5999 = vpop.f32.mrf.mxu0
        %v6000 = vadd.f32 0.0, %v5999
        %v6001 = vpop.f32.mrf.mxu0
        %v6002 = vpop.f32.mrf.mxu0
        %v6003 = vadd.f32 0.0, %v6002
        %v6004 = vpop.f32.mrf.mxu0
        %6005 = vdwg.mxu0
        %v6006 = vmul.f32 %v5976, 0.125
        %v6007 = vmul.f32 %v5979, 0.125
        %v6008 = vmul.f32 %v5984, 0.125
        %v6009 = vmul.f32 %v5987, 0.125
        %v6010 = vmul.f32 %v5992, 0.125
        %v6011 = vmul.f32 %v5995, 0.125
        %v6012 = vmul.f32 %v6000, 0.125
        %v6013 = vmul.f32 %v6003, 0.125
        %v6014 = vadd.f32 %v6006, %v3310
        %v6015 = vadd.f32 %v6007, %v3311
        %v6016 = vadd.f32 %v6008, %v3312
        %v6017 = vadd.f32 %v6009, %v3313
        %v6018 = vadd.f32 %v6010, %v3314
        %v6019 = vadd.f32 %v6011, %v3315
        %v6020 = vadd.f32 %v6012, %v3316
        %v6021 = vadd.f32 %v6013, %v3317
        %v6022 = vsel %vm3382, %v6014, -inf
        %6023 = vmax.xlane.f32.xlu0 %v6022
        %v6024 = vpop.xlane.xlu0 %6023
        %v6025 = vsel %vm3382, %v6015, -inf
        %6026 = vmax.xlane.f32.xlu0 %v6025
        %v6027 = vpop.xlane.xlu0 %6026
        %v6028 = vsel %vm3382, %v6016, -inf
        %6029 = vmax.xlane.f32.xlu0 %v6028
        %v6030 = vpop.xlane.xlu0 %6029
        %v6031 = vsel %vm3382, %v6017, -inf
        %6032 = vmax.xlane.f32.xlu0 %v6031
        %v6033 = vpop.xlane.xlu0 %6032
        %v6034 = vsel %vm3382, %v6018, -inf
        %6035 = vmax.xlane.f32.xlu0 %v6034
        %v6036 = vpop.xlane.xlu0 %6035
        %v6037 = vsel %vm3382, %v6019, -inf
        %6038 = vmax.xlane.f32.xlu0 %v6037
        %v6039 = vpop.xlane.xlu0 %6038
        %v6040 = vsel %vm3382, %v6020, -inf
        %6041 = vmax.xlane.f32.xlu0 %v6040
        %v6042 = vpop.xlane.xlu0 %6041
        %v6043 = vsel %vm3382, %v6021, -inf
        %6044 = vmax.xlane.f32.xlu0 %v6043
        %v6045 = vpop.xlane.xlu0 %6044
        %v6046 = vsub.f32 %v6014, %v6024
        %v6047 = vsub.f32 %v6015, %v6027
        %v6048 = vsub.f32 %v6016, %v6030
        %v6049 = vsub.f32 %v6017, %v6033
        %v6050 = vsub.f32 %v6018, %v6036
        %v6051 = vsub.f32 %v6019, %v6039
        %v6052 = vsub.f32 %v6020, %v6042
        %v6053 = vsub.f32 %v6021, %v6045
        %v6054 = vmul.f32 %v6046, 1.442695
        %v6055 = vpow.pop %v6054
        %v6056 = vmul.f32 %v6047, 1.442695
        %v6057 = vpow.pop %v6056
        %v6058 = vmul.f32 %v6048, 1.442695
        %v6059 = vpow.pop %v6058
        %v6060 = vmul.f32 %v6049, 1.442695
        %v6061 = vpow.pop %v6060
        %v6062 = vmul.f32 %v6050, 1.442695
        %v6063 = vpow.pop %v6062
        %v6064 = vmul.f32 %v6051, 1.442695
        %v6065 = vpow.pop %v6064
        %v6066 = vmul.f32 %v6052, 1.442695
        %v6067 = vpow.pop %v6066
        %v6068 = vmul.f32 %v6053, 1.442695
        %v6069 = vpow.pop %v6068
        %v6070 = vsel %vm3382, %v6055, 0.0
        %6071 = vadd.xlane.f32.xlu0 %v6070
        %v6072 = vpop.xlane.xlu0 %6071
        %v6073 = vsel %vm3382, %v6057, 0.0
        %6074 = vadd.xlane.f32.xlu0 %v6073
        %v6075 = vpop.xlane.xlu0 %6074
        %v6076 = vsel %vm3382, %v6059, 0.0
        %6077 = vadd.xlane.f32.xlu0 %v6076
        %v6078 = vpop.xlane.xlu0 %6077
        %v6079 = vsel %vm3382, %v6061, 0.0
        %6080 = vadd.xlane.f32.xlu0 %v6079
        %v6081 = vpop.xlane.xlu0 %6080
        %v6082 = vsel %vm3382, %v6063, 0.0
        %6083 = vadd.xlane.f32.xlu0 %v6082
        %v6084 = vpop.xlane.xlu0 %6083
        %v6085 = vsel %vm3382, %v6065, 0.0
        %6086 = vadd.xlane.f32.xlu0 %v6085
        %v6087 = vpop.xlane.xlu0 %6086
        %v6088 = vsel %vm3382, %v6067, 0.0
        %6089 = vadd.xlane.f32.xlu0 %v6088
        %v6090 = vpop.xlane.xlu0 %6089
        %v6091 = vsel %vm3382, %v6069, 0.0
        %6092 = vadd.xlane.f32.xlu0 %v6091
        %v6093 = vpop.xlane.xlu0 %6092
        %v6094 = vrcp.pop %v6072
        %v6095 = vrcp.pop %v6075
        %v6096 = vrcp.pop %v6078
        %v6097 = vrcp.pop %v6081
        %v6098 = vrcp.pop %v6084
        %v6099 = vrcp.pop %v6087
        %v6100 = vrcp.pop %v6090
        %v6101 = vrcp.pop %v6093
        %v6102 = vmul.f32 %v6055, %v6094
        %v6103 = vmul.f32 %v6057, %v6095
        %v6104 = vmul.f32 %v6059, %v6096
        %v6105 = vmul.f32 %v6061, %v6097
        %v6106 = vmul.f32 %v6063, %v6098
        %v6107 = vmul.f32 %v6065, %v6099
        %v6108 = vmul.f32 %v6067, %v6100
        %v6109 = vmul.f32 %v6069, %v6101
        %v6110 = vpack.c.bf16 %v6103, %v6102
        %v6111 = vpack.c.bf16 %v6105, %v6104
        %v6112 = vpack.c.bf16 %v6107, %v6106
        %v6113 = vpack.c.bf16 %v6109, %v6108
        %v6122 = vunpack.c.l.b16 %v5869
        %v6123 = vunpack.c.l.b16 %v5870
        %v6124 = vunpack.c.l.b16 %v5871
        %v6125 = vunpack.c.l.b16 %v5872
        %v6126 = vunpack.c.l.b16 %v5873
        %v6127 = vunpack.c.l.b16 %v5874
        %v6128 = vunpack.c.l.b16 %v5875
        %v6129 = vunpack.c.l.b16 %v5876
        %v6130 = vpack.c.b16 %v6123, %v6122
        %v6131 = vpack.c.b16 %v6125, %v6124
        %v6132 = vpack.c.b16 %v6127, %v6126
        %v6133 = vpack.c.b16 %v6129, %v6128
        %v6139 = vsel %vm3382, %v6110, 0
        %v6142 = vsel %vm3382, %v6111, 0
        %v6145 = vsel %vm3382, %v6112, 0
        %v6148 = vsel %vm3382, %v6113, 0
        %6150 = vmatprep.subr.bf16.mxu0 0
        %6151 = vmatpush1.bf16.msra.mxu0 0
        %6152 = vmatprep.subr.bf16.mxu0 0
        %6153 = vmatpush1.bf16.msra.mxu0 0
        %6154 = vmatprep.subr.bf16.mxu0 0
        %6155 = vmatpush1.bf16.msra.mxu0 0
        %6156 = vmatprep.subr.bf16.mxu0 0
        %6157 = vmatpush1.bf16.msra.mxu0 0
        %6158 = vmatprep.subr.bf16.mxu0 0
        %6159 = vmatpush1.bf16.msra.mxu0 %v6133
        %6160 = vmatprep.subr.bf16.mxu0 0
        %6161 = vmatpush1.bf16.msra.mxu0 %v6132
        %6162 = vmatprep.subr.bf16.mxu0 0
        %6163 = vmatpush1.bf16.msra.mxu0 %v6131
        %6164 = vmatprep.subr.bf16.mxu0 0
        %6165 = vmatpush1.bf16.msra.mxu0 %v6130
        %6166 = vmatprep.subr.bf16.mxu0 0
        %6167 = vmatpush2.bf16.msra.mxu0 0
        %6168 = vmatprep.subr.bf16.mxu0 0
        %6169 = vmatpush2.bf16.msra.mxu0 0
        %6170 = vmatprep.subr.bf16.mxu0 0
        %6171 = vmatpush2.bf16.msra.mxu0 0
        %6172 = vmatprep.subr.bf16.mxu0 0
        %6173 = vmatpush2.bf16.msra.mxu0 0
        %6174 = vmatprep.subr.bf16.mxu0 0
        %6175 = vmatpush2.bf16.msra.mxu0 0
        %6176 = vmatprep.subr.bf16.mxu0 0
        %6177 = vmatpush2.bf16.msra.mxu0 0
        %6178 = vmatprep.subr.bf16.mxu0 0
        %6179 = vmatpush2.bf16.msra.mxu0 0
        %6180 = vmatprep.subr.bf16.mxu0 0
        %6181 = vmatpush2.bf16.msra.mxu0 0
        %6182 = vmatprep.mubr.bf16.mxu0 0
        %6183 = vmatmul.mubr.bf16.gmra.mxu0 %v6139
        %v6184 = vpop.f32.mrf.mxu0
        %v6185 = vadd.f32 0.0, %v6184
        %v6186 = vpop.f32.mrf.mxu0
        %v6187 = vpop.f32.mrf.mxu0
        %v6188 = vadd.f32 0.0, %v6187
        %v6189 = vpop.f32.mrf.mxu0
        %6190 = vmatprep.mubr.bf16.mxu0 0
        %6191 = vmatmul.mubr.bf16.gmra.mxu0 %v6142
        %v6192 = vpop.f32.mrf.mxu0
        %v6193 = vadd.f32 0.0, %v6192
        %v6194 = vpop.f32.mrf.mxu0
        %v6195 = vpop.f32.mrf.mxu0
        %v6196 = vadd.f32 0.0, %v6195
        %v6197 = vpop.f32.mrf.mxu0
        %6198 = vmatprep.mubr.bf16.mxu0 0
        %6199 = vmatmul.mubr.bf16.gmra.mxu0 %v6145
        %v6200 = vpop.f32.mrf.mxu0
        %v6201 = vadd.f32 0.0, %v6200
        %v6202 = vpop.f32.mrf.mxu0
        %v6203 = vpop.f32.mrf.mxu0
        %v6204 = vadd.f32 0.0, %v6203
        %v6205 = vpop.f32.mrf.mxu0
        %6206 = vmatprep.mubr.bf16.mxu0 0
        %6207 = vmatmul.mubr.bf16.gmra.mxu0 %v6148
        %v6208 = vpop.f32.mrf.mxu0
        %v6209 = vadd.f32 0.0, %v6208
        %v6210 = vpop.f32.mrf.mxu0
        %v6211 = vpop.f32.mrf.mxu0
        %v6212 = vadd.f32 0.0, %v6211
        %v6213 = vpop.f32.mrf.mxu0
        %6214 = vdwg.mxu0
        %v6215 = vpack.c.bf16 %v6188, %v6185
        %v6216 = vpack.c.bf16 %v6196, %v6193
        %v6217 = vpack.c.bf16 %v6204, %v6201
        %v6218 = vpack.c.bf16 %v6212, %v6209
        %v6223 = vunpack.c.l.b16 %v6215
        %v6224 = vunpack.c.h.b16 %v6215
        %v6225 = vunpack.c.l.b16 %v6216
        %v6226 = vunpack.c.h.b16 %v6216
        %v6227 = vunpack.c.l.b16 %v6217
        %v6228 = vunpack.c.h.b16 %v6217
        %v6229 = vunpack.c.l.b16 %v6218
        %v6230 = vunpack.c.h.b16 %v6218
        %v6231 = vpack.c.b16 %v6223, %v6223
        %v6232 = vpack.c.b16 %v6224, %v6224
        %v6233 = vpack.c.b16 %v6225, %v6225
        %v6234 = vpack.c.b16 %v6226, %v6226
        %v6235 = vpack.c.b16 %v6227, %v6227
        %v6236 = vpack.c.b16 %v6228, %v6228
        %v6237 = vpack.c.b16 %v6229, %v6229
        %v6238 = vpack.c.b16 %v6230, %v6230
        %6247 = vst.msk [vmem:[#allocation3 + $0x60] sm:$0xf] %vm3713, %v6231
        %6248 = vst.msk [vmem:[#allocation3 + $0x6c] sm:$0xf] %vm3713, %v6232
        %6249 = vst.msk [vmem:[#allocation3 + $0x78] sm:$0xf] %vm3713, %v6233
        %6250 = vst.msk [vmem:[#allocation3 + $0x84] sm:$0xf] %vm3713, %v6234
        %6251 = vst.msk [vmem:[#allocation3 + $0x90] sm:$0xf] %vm3713, %v6235
        %6252 = vst.msk [vmem:[#allocation3 + $0x9c] sm:$0xf] %vm3713, %v6236
        %6253 = vst.msk [vmem:[#allocation3 + $0xa8] sm:$0xf] %vm3713, %v6237
        %6254 = vst.msk [vmem:[#allocation3 + $0xb4] sm:$0xf] %vm3713, %v6238
        %v6255 = vld [vmem:[#allocation2 + $0x120] sm:$0xf]
        %v6256 = vld [vmem:[#allocation2 + $0x144] sm:$0xf]
        %v6257 = vld [vmem:[#allocation2 + $0x168] sm:$0xf]
        %v6258 = vld [vmem:[#allocation2 + $0x18c] sm:$0xf]
        %v6259 = vld [vmem:[#allocation2 + $0x1b0] sm:$0xf]
        %v6260 = vld [vmem:[#allocation2 + $0x1d4] sm:$0xf]
        %v6261 = vld [vmem:[#allocation2 + $0x1f8] sm:$0xf]
        %v6262 = vld [vmem:[#allocation2 + $0x21c] sm:$0xf]
        %v6263 = vld [vmem:[#allocation2 + $0x12c] sm:$0xf]
        %v6264 = vld [vmem:[#allocation2 + $0x150] sm:$0xf]
        %v6265 = vld [vmem:[#allocation2 + $0x174] sm:$0xf]
        %v6266 = vld [vmem:[#allocation2 + $0x198] sm:$0xf]
        %v6267 = vld [vmem:[#allocation2 + $0x1bc] sm:$0xf]
        %v6268 = vld [vmem:[#allocation2 + $0x1e0] sm:$0xf]
        %v6269 = vld [vmem:[#allocation2 + $0x204] sm:$0xf]
        %v6270 = vld [vmem:[#allocation2 + $0x228] sm:$0xf]
        %v6271 = vld [vmem:[#allocation2 + $0x138] sm:$0xf]
        %v6272 = vld [vmem:[#allocation2 + $0x15c] sm:$0xf]
        %v6273 = vld [vmem:[#allocation2 + $0x180] sm:$0xf]
        %v6274 = vld [vmem:[#allocation2 + $0x1a4] sm:$0xf]
        %v6275 = vld [vmem:[#allocation2 + $0x1c8] sm:$0xf]
        %v6276 = vld [vmem:[#allocation2 + $0x1ec] sm:$0xf]
        %v6277 = vld [vmem:[#allocation2 + $0x210] sm:$0xf]
        %v6278 = vld [vmem:[#allocation2 + $0x234] sm:$0xf]
        %v6287 = vunpack.c.l.b16 %v6255
        %v6288 = vunpack.c.l.b16 %v6256
        %v6289 = vunpack.c.l.b16 %v6257
        %v6290 = vunpack.c.l.b16 %v6258
        %v6291 = vunpack.c.l.b16 %v6259
        %v6292 = vunpack.c.l.b16 %v6260
        %v6293 = vunpack.c.l.b16 %v6261
        %v6294 = vunpack.c.l.b16 %v6262
        %v6295 = vpack.c.b16 %v6288, %v6287
        %v6296 = vpack.c.b16 %v6290, %v6289
        %v6297 = vpack.c.b16 %v6292, %v6291
        %v6298 = vpack.c.b16 %v6294, %v6293
        %6299 = vrot.lane.b32.xlu0 %v6295, 64
        %v6300 = vpop.permute.xlu0 %6299
        %6301 = vrot.lane.b32.xlu0 %v6296, 64
        %v6302 = vpop.permute.xlu0 %6301
        %6303 = vrot.lane.b32.xlu0 %v6297, 64
        %v6304 = vpop.permute.xlu0 %6303
        %6305 = vrot.lane.b32.xlu0 %v6298, 64
        %v6306 = vpop.permute.xlu0 %6305
        %v6315 = vunpack.c.l.b16 %v6263
        %v6316 = vunpack.c.l.b16 %v6264
        %v6317 = vunpack.c.l.b16 %v6265
        %v6318 = vunpack.c.l.b16 %v6266
        %v6319 = vunpack.c.l.b16 %v6267
        %v6320 = vunpack.c.l.b16 %v6268
        %v6321 = vunpack.c.l.b16 %v6269
        %v6322 = vunpack.c.l.b16 %v6270
        %v6323 = vpack.c.b16 %v6316, %v6315
        %v6324 = vpack.c.b16 %v6318, %v6317
        %v6325 = vpack.c.b16 %v6320, %v6319
        %v6326 = vpack.c.b16 %v6322, %v6321
        %6327 = vrot.lane.b32.xlu0 %v6323, 64
        %v6328 = vpop.permute.xlu0 %6327
        %6329 = vrot.lane.b32.xlu0 %v6324, 64
        %v6330 = vpop.permute.xlu0 %6329
        %6331 = vrot.lane.b32.xlu0 %v6325, 64
        %v6332 = vpop.permute.xlu0 %6331
        %6333 = vrot.lane.b32.xlu0 %v6326, 64
        %v6334 = vpop.permute.xlu0 %6333
        %v6336 = vsel %vm3382, %v6300, 0
        %v6339 = vsel %vm3382, %v6302, 0
        %v6342 = vsel %vm3382, %v6304, 0
        %v6345 = vsel %vm3382, %v6306, 0
        %v6348 = vsel %vm3382, %v6328, 0
        %v6351 = vsel %vm3382, %v6330, 0
        %v6354 = vsel %vm3382, %v6332, 0
        %v6357 = vsel %vm3382, %v6334, 0
        %6359 = vmatprep.subr.bf16.mxu0 0
        %6360 = vmatpush1.bf16.xpose.msra.mxu0 0
        %6361 = vmatprep.subr.bf16.mxu0 0
        %6362 = vmatpush1.bf16.xpose.msra.mxu0 0
        %6363 = vmatprep.subr.bf16.mxu0 0
        %6364 = vmatpush1.bf16.xpose.msra.mxu0 0
        %6365 = vmatprep.subr.bf16.mxu0 0
        %6366 = vmatpush1.bf16.xpose.msra.mxu0 0
        %6367 = vmatprep.subr.bf16.mxu0 0
        %6368 = vmatpush1.bf16.xpose.msra.mxu0 %v6357
        %6369 = vmatprep.subr.bf16.mxu0 0
        %6370 = vmatpush1.bf16.xpose.msra.mxu0 %v6354
        %6371 = vmatprep.subr.bf16.mxu0 0
        %6372 = vmatpush1.bf16.xpose.msra.mxu0 %v6351
        %6373 = vmatprep.subr.bf16.mxu0 0
        %6374 = vmatpush1.bf16.xpose.msra.mxu0 %v6348
        %6375 = vmatprep.subr.bf16.mxu0 0
        %6376 = vmatpush2.bf16.xpose.msra.mxu0 0
        %6377 = vmatprep.subr.bf16.mxu0 0
        %6378 = vmatpush2.bf16.xpose.msra.mxu0 0
        %6379 = vmatprep.subr.bf16.mxu0 0
        %6380 = vmatpush2.bf16.xpose.msra.mxu0 0
        %6381 = vmatprep.subr.bf16.mxu0 0
        %6382 = vmatpush2.bf16.xpose.msra.mxu0 0
        %6383 = vmatprep.subr.bf16.mxu0 0
        %6384 = vmatpush2.bf16.xpose.msra.mxu0 0
        %6385 = vmatprep.subr.bf16.mxu0 0
        %6386 = vmatpush2.bf16.xpose.msra.mxu0 0
        %6387 = vmatprep.subr.bf16.mxu0 0
        %6388 = vmatpush2.bf16.xpose.msra.mxu0 0
        %6389 = vmatprep.subr.bf16.mxu0 0
        %6390 = vmatpush2.bf16.xpose.msra.mxu0 0
        %6391 = vmatprep.mubr.bf16.mxu0 0
        %6392 = vmatmul.mubr.bf16.gmra.mxu0 %v6336
        %v6393 = vpop.f32.mrf.mxu0
        %v6394 = vadd.f32 0.0, %v6393
        %v6395 = vpop.f32.mrf.mxu0
        %v6396 = vpop.f32.mrf.mxu0
        %v6397 = vadd.f32 0.0, %v6396
        %v6398 = vpop.f32.mrf.mxu0
        %6399 = vmatprep.mubr.bf16.mxu0 0
        %6400 = vmatmul.mubr.bf16.gmra.mxu0 %v6339
        %v6401 = vpop.f32.mrf.mxu0
        %v6402 = vadd.f32 0.0, %v6401
        %v6403 = vpop.f32.mrf.mxu0
        %v6404 = vpop.f32.mrf.mxu0
        %v6405 = vadd.f32 0.0, %v6404
        %v6406 = vpop.f32.mrf.mxu0
        %6407 = vmatprep.mubr.bf16.mxu0 0
        %6408 = vmatmul.mubr.bf16.gmra.mxu0 %v6342
        %v6409 = vpop.f32.mrf.mxu0
        %v6410 = vadd.f32 0.0, %v6409
        %v6411 = vpop.f32.mrf.mxu0
        %v6412 = vpop.f32.mrf.mxu0
        %v6413 = vadd.f32 0.0, %v6412
        %v6414 = vpop.f32.mrf.mxu0
        %6415 = vmatprep.mubr.bf16.mxu0 0
        %6416 = vmatmul.mubr.bf16.gmra.mxu0 %v6345
        %v6417 = vpop.f32.mrf.mxu0
        %v6418 = vadd.f32 0.0, %v6417
        %v6419 = vpop.f32.mrf.mxu0
        %v6420 = vpop.f32.mrf.mxu0
        %v6421 = vadd.f32 0.0, %v6420
        %v6422 = vpop.f32.mrf.mxu0
        %6423 = vdwg.mxu0
        %v6424 = vmul.f32 %v6394, 0.125
        %v6425 = vmul.f32 %v6397, 0.125
        %v6426 = vmul.f32 %v6402, 0.125
        %v6427 = vmul.f32 %v6405, 0.125
        %v6428 = vmul.f32 %v6410, 0.125
        %v6429 = vmul.f32 %v6413, 0.125
        %v6430 = vmul.f32 %v6418, 0.125
        %v6431 = vmul.f32 %v6421, 0.125
        %v6432 = vadd.f32 %v6424, %v3310
        %v6433 = vadd.f32 %v6425, %v3311
        %v6434 = vadd.f32 %v6426, %v3312
        %v6435 = vadd.f32 %v6427, %v3313
        %v6436 = vadd.f32 %v6428, %v3314
        %v6437 = vadd.f32 %v6429, %v3315
        %v6438 = vadd.f32 %v6430, %v3316
        %v6439 = vadd.f32 %v6431, %v3317
        %v6440 = vsel %vm3382, %v6432, -inf
        %6441 = vmax.xlane.f32.xlu0 %v6440
        %v6442 = vpop.xlane.xlu0 %6441
        %v6443 = vsel %vm3382, %v6433, -inf
        %6444 = vmax.xlane.f32.xlu0 %v6443
        %v6445 = vpop.xlane.xlu0 %6444
        %v6446 = vsel %vm3382, %v6434, -inf
        %6447 = vmax.xlane.f32.xlu0 %v6446
        %v6448 = vpop.xlane.xlu0 %6447
        %v6449 = vsel %vm3382, %v6435, -inf
        %6450 = vmax.xlane.f32.xlu0 %v6449
        %v6451 = vpop.xlane.xlu0 %6450
        %v6452 = vsel %vm3382, %v6436, -inf
        %6453 = vmax.xlane.f32.xlu0 %v6452
        %v6454 = vpop.xlane.xlu0 %6453
        %v6455 = vsel %vm3382, %v6437, -inf
        %6456 = vmax.xlane.f32.xlu0 %v6455
        %v6457 = vpop.xlane.xlu0 %6456
        %v6458 = vsel %vm3382, %v6438, -inf
        %6459 = vmax.xlane.f32.xlu0 %v6458
        %v6460 = vpop.xlane.xlu0 %6459
        %v6461 = vsel %vm3382, %v6439, -inf
        %6462 = vmax.xlane.f32.xlu0 %v6461
        %v6463 = vpop.xlane.xlu0 %6462
        %v6464 = vsub.f32 %v6432, %v6442
        %v6465 = vsub.f32 %v6433, %v6445
        %v6466 = vsub.f32 %v6434, %v6448
        %v6467 = vsub.f32 %v6435, %v6451
        %v6468 = vsub.f32 %v6436, %v6454
        %v6469 = vsub.f32 %v6437, %v6457
        %v6470 = vsub.f32 %v6438, %v6460
        %v6471 = vsub.f32 %v6439, %v6463
        %v6472 = vmul.f32 %v6464, 1.442695
        %v6473 = vpow.pop %v6472
        %v6474 = vmul.f32 %v6465, 1.442695
        %v6475 = vpow.pop %v6474
        %v6476 = vmul.f32 %v6466, 1.442695
        %v6477 = vpow.pop %v6476
        %v6478 = vmul.f32 %v6467, 1.442695
        %v6479 = vpow.pop %v6478
        %v6480 = vmul.f32 %v6468, 1.442695
        %v6481 = vpow.pop %v6480
        %v6482 = vmul.f32 %v6469, 1.442695
        %v6483 = vpow.pop %v6482
        %v6484 = vmul.f32 %v6470, 1.442695
        %v6485 = vpow.pop %v6484
        %v6486 = vmul.f32 %v6471, 1.442695
        %v6487 = vpow.pop %v6486
        %v6488 = vsel %vm3382, %v6473, 0.0
        %6489 = vadd.xlane.f32.xlu0 %v6488
        %v6490 = vpop.xlane.xlu0 %6489
        %v6491 = vsel %vm3382, %v6475, 0.0
        %6492 = vadd.xlane.f32.xlu0 %v6491
        %v6493 = vpop.xlane.xlu0 %6492
        %v6494 = vsel %vm3382, %v6477, 0.0
        %6495 = vadd.xlane.f32.xlu0 %v6494
        %v6496 = vpop.xlane.xlu0 %6495
        %v6497 = vsel %vm3382, %v6479, 0.0
        %6498 = vadd.xlane.f32.xlu0 %v6497
        %v6499 = vpop.xlane.xlu0 %6498
        %v6500 = vsel %vm3382, %v6481, 0.0
        %6501 = vadd.xlane.f32.xlu0 %v6500
        %v6502 = vpop.xlane.xlu0 %6501
        %v6503 = vsel %vm3382, %v6483, 0.0
        %6504 = vadd.xlane.f32.xlu0 %v6503
        %v6505 = vpop.xlane.xlu0 %6504
        %v6506 = vsel %vm3382, %v6485, 0.0
        %6507 = vadd.xlane.f32.xlu0 %v6506
        %v6508 = vpop.xlane.xlu0 %6507
        %v6509 = vsel %vm3382, %v6487, 0.0
        %6510 = vadd.xlane.f32.xlu0 %v6509
        %v6511 = vpop.xlane.xlu0 %6510
        %v6512 = vrcp.pop %v6490
        %v6513 = vrcp.pop %v6493
        %v6514 = vrcp.pop %v6496
        %v6515 = vrcp.pop %v6499
        %v6516 = vrcp.pop %v6502
        %v6517 = vrcp.pop %v6505
        %v6518 = vrcp.pop %v6508
        %v6519 = vrcp.pop %v6511
        %v6520 = vmul.f32 %v6473, %v6512
        %v6521 = vmul.f32 %v6475, %v6513
        %v6522 = vmul.f32 %v6477, %v6514
        %v6523 = vmul.f32 %v6479, %v6515
        %v6524 = vmul.f32 %v6481, %v6516
        %v6525 = vmul.f32 %v6483, %v6517
        %v6526 = vmul.f32 %v6485, %v6518
        %v6527 = vmul.f32 %v6487, %v6519
        %v6528 = vpack.c.bf16 %v6521, %v6520
        %v6529 = vpack.c.bf16 %v6523, %v6522
        %v6530 = vpack.c.bf16 %v6525, %v6524
        %v6531 = vpack.c.bf16 %v6527, %v6526
        %v6540 = vunpack.c.l.b16 %v6271
        %v6541 = vunpack.c.l.b16 %v6272
        %v6542 = vunpack.c.l.b16 %v6273
        %v6543 = vunpack.c.l.b16 %v6274
        %v6544 = vunpack.c.l.b16 %v6275
        %v6545 = vunpack.c.l.b16 %v6276
        %v6546 = vunpack.c.l.b16 %v6277
        %v6547 = vunpack.c.l.b16 %v6278
        %v6548 = vpack.c.b16 %v6541, %v6540
        %v6549 = vpack.c.b16 %v6543, %v6542
        %v6550 = vpack.c.b16 %v6545, %v6544
        %v6551 = vpack.c.b16 %v6547, %v6546
        %6552 = vrot.lane.b32.xlu0 %v6548, 64
        %v6553 = vpop.permute.xlu0 %6552
        %6554 = vrot.lane.b32.xlu0 %v6549, 64
        %v6555 = vpop.permute.xlu0 %6554
        %6556 = vrot.lane.b32.xlu0 %v6550, 64
        %v6557 = vpop.permute.xlu0 %6556
        %6558 = vrot.lane.b32.xlu0 %v6551, 64
        %v6559 = vpop.permute.xlu0 %6558
        %v6565 = vsel %vm3382, %v6528, 0
        %v6568 = vsel %vm3382, %v6529, 0
        %v6571 = vsel %vm3382, %v6530, 0
        %v6574 = vsel %vm3382, %v6531, 0
        %6576 = vmatprep.subr.bf16.mxu0 0
        %6577 = vmatpush1.bf16.msra.mxu0 0
        %6578 = vmatprep.subr.bf16.mxu0 0
        %6579 = vmatpush1.bf16.msra.mxu0 0
        %6580 = vmatprep.subr.bf16.mxu0 0
        %6581 = vmatpush1.bf16.msra.mxu0 0
        %6582 = vmatprep.subr.bf16.mxu0 0
        %6583 = vmatpush1.bf16.msra.mxu0 0
        %6584 = vmatprep.subr.bf16.mxu0 0
        %6585 = vmatpush1.bf16.msra.mxu0 %v6559
        %6586 = vmatprep.subr.bf16.mxu0 0
        %6587 = vmatpush1.bf16.msra.mxu0 %v6557
        %6588 = vmatprep.subr.bf16.mxu0 0
        %6589 = vmatpush1.bf16.msra.mxu0 %v6555
        %6590 = vmatprep.subr.bf16.mxu0 0
        %6591 = vmatpush1.bf16.msra.mxu0 %v6553
        %6592 = vmatprep.subr.bf16.mxu0 0
        %6593 = vmatpush2.bf16.msra.mxu0 0
        %6594 = vmatprep.subr.bf16.mxu0 0
        %6595 = vmatpush2.bf16.msra.mxu0 0
        %6596 = vmatprep.subr.bf16.mxu0 0
        %6597 = vmatpush2.bf16.msra.mxu0 0
        %6598 = vmatprep.subr.bf16.mxu0 0
        %6599 = vmatpush2.bf16.msra.mxu0 0
        %6600 = vmatprep.subr.bf16.mxu0 0
        %6601 = vmatpush2.bf16.msra.mxu0 0
        %6602 = vmatprep.subr.bf16.mxu0 0
        %6603 = vmatpush2.bf16.msra.mxu0 0
        %6604 = vmatprep.subr.bf16.mxu0 0
        %6605 = vmatpush2.bf16.msra.mxu0 0
        %6606 = vmatprep.subr.bf16.mxu0 0
        %6607 = vmatpush2.bf16.msra.mxu0 0
        %6608 = vmatprep.mubr.bf16.mxu0 0
        %6609 = vmatmul.mubr.bf16.gmra.mxu0 %v6565
        %v6610 = vpop.f32.mrf.mxu0
        %v6611 = vadd.f32 0.0, %v6610
        %v6612 = vpop.f32.mrf.mxu0
        %v6613 = vpop.f32.mrf.mxu0
        %v6614 = vadd.f32 0.0, %v6613
        %v6615 = vpop.f32.mrf.mxu0
        %6616 = vmatprep.mubr.bf16.mxu0 0
        %6617 = vmatmul.mubr.bf16.gmra.mxu0 %v6568
        %v6618 = vpop.f32.mrf.mxu0
        %v6619 = vadd.f32 0.0, %v6618
        %v6620 = vpop.f32.mrf.mxu0
        %v6621 = vpop.f32.mrf.mxu0
        %v6622 = vadd.f32 0.0, %v6621
        %v6623 = vpop.f32.mrf.mxu0
        %6624 = vmatprep.mubr.bf16.mxu0 0
        %6625 = vmatmul.mubr.bf16.gmra.mxu0 %v6571
        %v6626 = vpop.f32.mrf.mxu0
        %v6627 = vadd.f32 0.0, %v6626
        %v6628 = vpop.f32.mrf.mxu0
        %v6629 = vpop.f32.mrf.mxu0
        %v6630 = vadd.f32 0.0, %v6629
        %v6631 = vpop.f32.mrf.mxu0
        %6632 = vmatprep.mubr.bf16.mxu0 0
        %6633 = vmatmul.mubr.bf16.gmra.mxu0 %v6574
        %v6634 = vpop.f32.mrf.mxu0
        %v6635 = vadd.f32 0.0, %v6634
        %v6636 = vpop.f32.mrf.mxu0
        %v6637 = vpop.f32.mrf.mxu0
        %v6638 = vadd.f32 0.0, %v6637
        %v6639 = vpop.f32.mrf.mxu0
        %6640 = vdwg.mxu0
        %v6641 = vpack.c.bf16 %v6614, %v6611
        %v6642 = vpack.c.bf16 %v6622, %v6619
        %v6643 = vpack.c.bf16 %v6630, %v6627
        %v6644 = vpack.c.bf16 %v6638, %v6635
        %v6649 = vunpack.c.l.b16 %v6641
        %v6650 = vunpack.c.h.b16 %v6641
        %v6651 = vunpack.c.l.b16 %v6642
        %v6652 = vunpack.c.h.b16 %v6642
        %v6653 = vunpack.c.l.b16 %v6643
        %v6654 = vunpack.c.h.b16 %v6643
        %v6655 = vunpack.c.l.b16 %v6644
        %v6656 = vunpack.c.h.b16 %v6644
        %v6657 = vpack.c.b16 %v6649, %v6649
        %v6658 = vpack.c.b16 %v6650, %v6650
        %v6659 = vpack.c.b16 %v6651, %v6651
        %v6660 = vpack.c.b16 %v6652, %v6652
        %v6661 = vpack.c.b16 %v6653, %v6653
        %v6662 = vpack.c.b16 %v6654, %v6654
        %v6663 = vpack.c.b16 %v6655, %v6655
        %v6664 = vpack.c.b16 %v6656, %v6656
        %6665 = vrot.lane.b32.xlu0 %v6657, 64
        %v6666 = vpop.permute.xlu0 %6665
        %6667 = vrot.lane.b32.xlu0 %v6658, 64
        %v6668 = vpop.permute.xlu0 %6667
        %6669 = vrot.lane.b32.xlu0 %v6659, 64
        %v6670 = vpop.permute.xlu0 %6669
        %6671 = vrot.lane.b32.xlu0 %v6660, 64
        %v6672 = vpop.permute.xlu0 %6671
        %6673 = vrot.lane.b32.xlu0 %v6661, 64
        %v6674 = vpop.permute.xlu0 %6673
        %6675 = vrot.lane.b32.xlu0 %v6662, 64
        %v6676 = vpop.permute.xlu0 %6675
        %6677 = vrot.lane.b32.xlu0 %v6663, 64
        %v6678 = vpop.permute.xlu0 %6677
        %6679 = vrot.lane.b32.xlu0 %v6664, 64
        %v6680 = vpop.permute.xlu0 %6679
        %6689 = vst.msk [vmem:[#allocation3 + $0x60] sm:$0xf] %vm4156, %v6666
        %6690 = vst.msk [vmem:[#allocation3 + $0x6c] sm:$0xf] %vm4156, %v6668
        %6691 = vst.msk [vmem:[#allocation3 + $0x78] sm:$0xf] %vm4156, %v6670
        %6692 = vst.msk [vmem:[#allocation3 + $0x84] sm:$0xf] %vm4156, %v6672
        %6693 = vst.msk [vmem:[#allocation3 + $0x90] sm:$0xf] %vm4156, %v6674
        %6694 = vst.msk [vmem:[#allocation3 + $0x9c] sm:$0xf] %vm4156, %v6676
        %6695 = vst.msk [vmem:[#allocation3 + $0xa8] sm:$0xf] %vm4156, %v6678
        %6696 = vst.msk [vmem:[#allocation3 + $0xb4] sm:$0xf] %vm4156, %v6680
        %v6697 = vld [vmem:[#allocation2 + $0x124] sm:$0xf]
        %v6698 = vld [vmem:[#allocation2 + $0x148] sm:$0xf]
        %v6699 = vld [vmem:[#allocation2 + $0x16c] sm:$0xf]
        %v6700 = vld [vmem:[#allocation2 + $0x190] sm:$0xf]
        %v6701 = vld [vmem:[#allocation2 + $0x1b4] sm:$0xf]
        %v6702 = vld [vmem:[#allocation2 + $0x1d8] sm:$0xf]
        %v6703 = vld [vmem:[#allocation2 + $0x1fc] sm:$0xf]
        %v6704 = vld [vmem:[#allocation2 + $0x220] sm:$0xf]
        %v6705 = vld [vmem:[#allocation2 + $0x130] sm:$0xf]
        %v6706 = vld [vmem:[#allocation2 + $0x154] sm:$0xf]
        %v6707 = vld [vmem:[#allocation2 + $0x178] sm:$0xf]
        %v6708 = vld [vmem:[#allocation2 + $0x19c] sm:$0xf]
        %v6709 = vld [vmem:[#allocation2 + $0x1c0] sm:$0xf]
        %v6710 = vld [vmem:[#allocation2 + $0x1e4] sm:$0xf]
        %v6711 = vld [vmem:[#allocation2 + $0x208] sm:$0xf]
        %v6712 = vld [vmem:[#allocation2 + $0x22c] sm:$0xf]
        %v6713 = vld [vmem:[#allocation2 + $0x13c] sm:$0xf]
        %v6714 = vld [vmem:[#allocation2 + $0x160] sm:$0xf]
        %v6715 = vld [vmem:[#allocation2 + $0x184] sm:$0xf]
        %v6716 = vld [vmem:[#allocation2 + $0x1a8] sm:$0xf]
        %v6717 = vld [vmem:[#allocation2 + $0x1cc] sm:$0xf]
        %v6718 = vld [vmem:[#allocation2 + $0x1f0] sm:$0xf]
        %v6719 = vld [vmem:[#allocation2 + $0x214] sm:$0xf]
        %v6720 = vld [vmem:[#allocation2 + $0x238] sm:$0xf]
        %v6729 = vunpack.c.l.b16 %v6697
        %v6730 = vunpack.c.l.b16 %v6698
        %v6731 = vunpack.c.l.b16 %v6699
        %v6732 = vunpack.c.l.b16 %v6700
        %v6733 = vunpack.c.l.b16 %v6701
        %v6734 = vunpack.c.l.b16 %v6702
        %v6735 = vunpack.c.l.b16 %v6703
        %v6736 = vunpack.c.l.b16 %v6704
        %v6737 = vpack.c.b16 %v6730, %v6729
        %v6738 = vpack.c.b16 %v6732, %v6731
        %v6739 = vpack.c.b16 %v6734, %v6733
        %v6740 = vpack.c.b16 %v6736, %v6735
        %v6749 = vunpack.c.l.b16 %v6705
        %v6750 = vunpack.c.l.b16 %v6706
        %v6751 = vunpack.c.l.b16 %v6707
        %v6752 = vunpack.c.l.b16 %v6708
        %v6753 = vunpack.c.l.b16 %v6709
        %v6754 = vunpack.c.l.b16 %v6710
        %v6755 = vunpack.c.l.b16 %v6711
        %v6756 = vunpack.c.l.b16 %v6712
        %v6757 = vpack.c.b16 %v6750, %v6749
        %v6758 = vpack.c.b16 %v6752, %v6751
        %v6759 = vpack.c.b16 %v6754, %v6753
        %v6760 = vpack.c.b16 %v6756, %v6755
        %v6762 = vsel %vm3382, %v6737, 0
        %v6765 = vsel %vm3382, %v6738, 0
        %v6768 = vsel %vm3382, %v6739, 0
        %v6771 = vsel %vm3382, %v6740, 0
        %v6774 = vsel %vm3382, %v6757, 0
        %v6777 = vsel %vm3382, %v6758, 0
        %v6780 = vsel %vm3382, %v6759, 0
        %v6783 = vsel %vm3382, %v6760, 0
        %6785 = vmatprep.subr.bf16.mxu0 0
        %6786 = vmatpush1.bf16.xpose.msra.mxu0 0
        %6787 = vmatprep.subr.bf16.mxu0 0
        %6788 = vmatpush1.bf16.xpose.msra.mxu0 0
        %6789 = vmatprep.subr.bf16.mxu0 0
        %6790 = vmatpush1.bf16.xpose.msra.mxu0 0
        %6791 = vmatprep.subr.bf16.mxu0 0
        %6792 = vmatpush1.bf16.xpose.msra.mxu0 0
        %6793 = vmatprep.subr.bf16.mxu0 0
        %6794 = vmatpush1.bf16.xpose.msra.mxu0 %v6783
        %6795 = vmatprep.subr.bf16.mxu0 0
        %6796 = vmatpush1.bf16.xpose.msra.mxu0 %v6780
        %6797 = vmatprep.subr.bf16.mxu0 0
        %6798 = vmatpush1.bf16.xpose.msra.mxu0 %v6777
        %6799 = vmatprep.subr.bf16.mxu0 0
        %6800 = vmatpush1.bf16.xpose.msra.mxu0 %v6774
        %6801 = vmatprep.subr.bf16.mxu0 0
        %6802 = vmatpush2.bf16.xpose.msra.mxu0 0
        %6803 = vmatprep.subr.bf16.mxu0 0
        %6804 = vmatpush2.bf16.xpose.msra.mxu0 0
        %6805 = vmatprep.subr.bf16.mxu0 0
        %6806 = vmatpush2.bf16.xpose.msra.mxu0 0
        %6807 = vmatprep.subr.bf16.mxu0 0
        %6808 = vmatpush2.bf16.xpose.msra.mxu0 0
        %6809 = vmatprep.subr.bf16.mxu0 0
        %6810 = vmatpush2.bf16.xpose.msra.mxu0 0
        %6811 = vmatprep.subr.bf16.mxu0 0
        %6812 = vmatpush2.bf16.xpose.msra.mxu0 0
        %6813 = vmatprep.subr.bf16.mxu0 0
        %6814 = vmatpush2.bf16.xpose.msra.mxu0 0
        %6815 = vmatprep.subr.bf16.mxu0 0
        %6816 = vmatpush2.bf16.xpose.msra.mxu0 0
        %6817 = vmatprep.mubr.bf16.mxu0 0
        %6818 = vmatmul.mubr.bf16.gmra.mxu0 %v6762
        %v6819 = vpop.f32.mrf.mxu0
        %v6820 = vadd.f32 0.0, %v6819
        %v6821 = vpop.f32.mrf.mxu0
        %v6822 = vpop.f32.mrf.mxu0
        %v6823 = vadd.f32 0.0, %v6822
        %v6824 = vpop.f32.mrf.mxu0
        %6825 = vmatprep.mubr.bf16.mxu0 0
        %6826 = vmatmul.mubr.bf16.gmra.mxu0 %v6765
        %v6827 = vpop.f32.mrf.mxu0
        %v6828 = vadd.f32 0.0, %v6827
        %v6829 = vpop.f32.mrf.mxu0
        %v6830 = vpop.f32.mrf.mxu0
        %v6831 = vadd.f32 0.0, %v6830
        %v6832 = vpop.f32.mrf.mxu0
        %6833 = vmatprep.mubr.bf16.mxu0 0
        %6834 = vmatmul.mubr.bf16.gmra.mxu0 %v6768
        %v6835 = vpop.f32.mrf.mxu0
        %v6836 = vadd.f32 0.0, %v6835
        %v6837 = vpop.f32.mrf.mxu0
        %v6838 = vpop.f32.mrf.mxu0
        %v6839 = vadd.f32 0.0, %v6838
        %v6840 = vpop.f32.mrf.mxu0
        %6841 = vmatprep.mubr.bf16.mxu0 0
        %6842 = vmatmul.mubr.bf16.gmra.mxu0 %v6771
        %v6843 = vpop.f32.mrf.mxu0
        %v6844 = vadd.f32 0.0, %v6843
        %v6845 = vpop.f32.mrf.mxu0
        %v6846 = vpop.f32.mrf.mxu0
        %v6847 = vadd.f32 0.0, %v6846
        %v6848 = vpop.f32.mrf.mxu0
        %6849 = vdwg.mxu0
        %v6850 = vmul.f32 %v6820, 0.125
        %v6851 = vmul.f32 %v6823, 0.125
        %v6852 = vmul.f32 %v6828, 0.125
        %v6853 = vmul.f32 %v6831, 0.125
        %v6854 = vmul.f32 %v6836, 0.125
        %v6855 = vmul.f32 %v6839, 0.125
        %v6856 = vmul.f32 %v6844, 0.125
        %v6857 = vmul.f32 %v6847, 0.125
        %v6858 = vadd.f32 %v6850, %v3310
        %v6859 = vadd.f32 %v6851, %v3311
        %v6860 = vadd.f32 %v6852, %v3312
        %v6861 = vadd.f32 %v6853, %v3313
        %v6862 = vadd.f32 %v6854, %v3314
        %v6863 = vadd.f32 %v6855, %v3315
        %v6864 = vadd.f32 %v6856, %v3316
        %v6865 = vadd.f32 %v6857, %v3317
        %v6866 = vsel %vm3382, %v6858, -inf
        %6867 = vmax.xlane.f32.xlu0 %v6866
        %v6868 = vpop.xlane.xlu0 %6867
        %v6869 = vsel %vm3382, %v6859, -inf
        %6870 = vmax.xlane.f32.xlu0 %v6869
        %v6871 = vpop.xlane.xlu0 %6870
        %v6872 = vsel %vm3382, %v6860, -inf
        %6873 = vmax.xlane.f32.xlu0 %v6872
        %v6874 = vpop.xlane.xlu0 %6873
        %v6875 = vsel %vm3382, %v6861, -inf
        %6876 = vmax.xlane.f32.xlu0 %v6875
        %v6877 = vpop.xlane.xlu0 %6876
        %v6878 = vsel %vm3382, %v6862, -inf
        %6879 = vmax.xlane.f32.xlu0 %v6878
        %v6880 = vpop.xlane.xlu0 %6879
        %v6881 = vsel %vm3382, %v6863, -inf
        %6882 = vmax.xlane.f32.xlu0 %v6881
        %v6883 = vpop.xlane.xlu0 %6882
        %v6884 = vsel %vm3382, %v6864, -inf
        %6885 = vmax.xlane.f32.xlu0 %v6884
        %v6886 = vpop.xlane.xlu0 %6885
        %v6887 = vsel %vm3382, %v6865, -inf
        %6888 = vmax.xlane.f32.xlu0 %v6887
        %v6889 = vpop.xlane.xlu0 %6888
        %v6890 = vsub.f32 %v6858, %v6868
        %v6891 = vsub.f32 %v6859, %v6871
        %v6892 = vsub.f32 %v6860, %v6874
        %v6893 = vsub.f32 %v6861, %v6877
        %v6894 = vsub.f32 %v6862, %v6880
        %v6895 = vsub.f32 %v6863, %v6883
        %v6896 = vsub.f32 %v6864, %v6886
        %v6897 = vsub.f32 %v6865, %v6889
        %v6898 = vmul.f32 %v6890, 1.442695
        %v6899 = vpow.pop %v6898
        %v6900 = vmul.f32 %v6891, 1.442695
        %v6901 = vpow.pop %v6900
        %v6902 = vmul.f32 %v6892, 1.442695
        %v6903 = vpow.pop %v6902
        %v6904 = vmul.f32 %v6893, 1.442695
        %v6905 = vpow.pop %v6904
        %v6906 = vmul.f32 %v6894, 1.442695
        %v6907 = vpow.pop %v6906
        %v6908 = vmul.f32 %v6895, 1.442695
        %v6909 = vpow.pop %v6908
        %v6910 = vmul.f32 %v6896, 1.442695
        %v6911 = vpow.pop %v6910
        %v6912 = vmul.f32 %v6897, 1.442695
        %v6913 = vpow.pop %v6912
        %v6914 = vsel %vm3382, %v6899, 0.0
        %6915 = vadd.xlane.f32.xlu0 %v6914
        %v6916 = vpop.xlane.xlu0 %6915
        %v6917 = vsel %vm3382, %v6901, 0.0
        %6918 = vadd.xlane.f32.xlu0 %v6917
        %v6919 = vpop.xlane.xlu0 %6918
        %v6920 = vsel %vm3382, %v6903, 0.0
        %6921 = vadd.xlane.f32.xlu0 %v6920
        %v6922 = vpop.xlane.xlu0 %6921
        %v6923 = vsel %vm3382, %v6905, 0.0
        %6924 = vadd.xlane.f32.xlu0 %v6923
        %v6925 = vpop.xlane.xlu0 %6924
        %v6926 = vsel %vm3382, %v6907, 0.0
        %6927 = vadd.xlane.f32.xlu0 %v6926
        %v6928 = vpop.xlane.xlu0 %6927
        %v6929 = vsel %vm3382, %v6909, 0.0
        %6930 = vadd.xlane.f32.xlu0 %v6929
        %v6931 = vpop.xlane.xlu0 %6930
        %v6932 = vsel %vm3382, %v6911, 0.0
        %6933 = vadd.xlane.f32.xlu0 %v6932
        %v6934 = vpop.xlane.xlu0 %6933
        %v6935 = vsel %vm3382, %v6913, 0.0
        %6936 = vadd.xlane.f32.xlu0 %v6935
        %v6937 = vpop.xlane.xlu0 %6936
        %v6938 = vrcp.pop %v6916
        %v6939 = vrcp.pop %v6919
        %v6940 = vrcp.pop %v6922
        %v6941 = vrcp.pop %v6925
        %v6942 = vrcp.pop %v6928
        %v6943 = vrcp.pop %v6931
        %v6944 = vrcp.pop %v6934
        %v6945 = vrcp.pop %v6937
        %v6946 = vmul.f32 %v6899, %v6938
        %v6947 = vmul.f32 %v6901, %v6939
        %v6948 = vmul.f32 %v6903, %v6940
        %v6949 = vmul.f32 %v6905, %v6941
        %v6950 = vmul.f32 %v6907, %v6942
        %v6951 = vmul.f32 %v6909, %v6943
        %v6952 = vmul.f32 %v6911, %v6944
        %v6953 = vmul.f32 %v6913, %v6945
        %v6954 = vpack.c.bf16 %v6947, %v6946
        %v6955 = vpack.c.bf16 %v6949, %v6948
        %v6956 = vpack.c.bf16 %v6951, %v6950
        %v6957 = vpack.c.bf16 %v6953, %v6952
        %v6966 = vunpack.c.l.b16 %v6713
        %v6967 = vunpack.c.l.b16 %v6714
        %v6968 = vunpack.c.l.b16 %v6715
        %v6969 = vunpack.c.l.b16 %v6716
        %v6970 = vunpack.c.l.b16 %v6717
        %v6971 = vunpack.c.l.b16 %v6718
        %v6972 = vunpack.c.l.b16 %v6719
        %v6973 = vunpack.c.l.b16 %v6720
        %v6974 = vpack.c.b16 %v6967, %v6966
        %v6975 = vpack.c.b16 %v6969, %v6968
        %v6976 = vpack.c.b16 %v6971, %v6970
        %v6977 = vpack.c.b16 %v6973, %v6972
        %v6983 = vsel %vm3382, %v6954, 0
        %v6986 = vsel %vm3382, %v6955, 0
        %v6989 = vsel %vm3382, %v6956, 0
        %v6992 = vsel %vm3382, %v6957, 0
        %6994 = vmatprep.subr.bf16.mxu0 0
        %6995 = vmatpush1.bf16.msra.mxu0 0
        %6996 = vmatprep.subr.bf16.mxu0 0
        %6997 = vmatpush1.bf16.msra.mxu0 0
        %6998 = vmatprep.subr.bf16.mxu0 0
        %6999 = vmatpush1.bf16.msra.mxu0 0
        %7000 = vmatprep.subr.bf16.mxu0 0
        %7001 = vmatpush1.bf16.msra.mxu0 0
        %7002 = vmatprep.subr.bf16.mxu0 0
        %7003 = vmatpush1.bf16.msra.mxu0 %v6977
        %7004 = vmatprep.subr.bf16.mxu0 0
        %7005 = vmatpush1.bf16.msra.mxu0 %v6976
        %7006 = vmatprep.subr.bf16.mxu0 0
        %7007 = vmatpush1.bf16.msra.mxu0 %v6975
        %7008 = vmatprep.subr.bf16.mxu0 0
        %7009 = vmatpush1.bf16.msra.mxu0 %v6974
        %7010 = vmatprep.subr.bf16.mxu0 0
        %7011 = vmatpush2.bf16.msra.mxu0 0
        %7012 = vmatprep.subr.bf16.mxu0 0
        %7013 = vmatpush2.bf16.msra.mxu0 0
        %7014 = vmatprep.subr.bf16.mxu0 0
        %7015 = vmatpush2.bf16.msra.mxu0 0
        %7016 = vmatprep.subr.bf16.mxu0 0
        %7017 = vmatpush2.bf16.msra.mxu0 0
        %7018 = vmatprep.subr.bf16.mxu0 0
        %7019 = vmatpush2.bf16.msra.mxu0 0
        %7020 = vmatprep.subr.bf16.mxu0 0
        %7021 = vmatpush2.bf16.msra.mxu0 0
        %7022 = vmatprep.subr.bf16.mxu0 0
        %7023 = vmatpush2.bf16.msra.mxu0 0
        %7024 = vmatprep.subr.bf16.mxu0 0
        %7025 = vmatpush2.bf16.msra.mxu0 0
        %7026 = vmatprep.mubr.bf16.mxu0 0
        %7027 = vmatmul.mubr.bf16.gmra.mxu0 %v6983
        %v7028 = vpop.f32.mrf.mxu0
        %v7029 = vadd.f32 0.0, %v7028
        %v7030 = vpop.f32.mrf.mxu0
        %v7031 = vpop.f32.mrf.mxu0
        %v7032 = vadd.f32 0.0, %v7031
        %v7033 = vpop.f32.mrf.mxu0
        %7034 = vmatprep.mubr.bf16.mxu0 0
        %7035 = vmatmul.mubr.bf16.gmra.mxu0 %v6986
        %v7036 = vpop.f32.mrf.mxu0
        %v7037 = vadd.f32 0.0, %v7036
        %v7038 = vpop.f32.mrf.mxu0
        %v7039 = vpop.f32.mrf.mxu0
        %v7040 = vadd.f32 0.0, %v7039
        %v7041 = vpop.f32.mrf.mxu0
        %7042 = vmatprep.mubr.bf16.mxu0 0
        %7043 = vmatmul.mubr.bf16.gmra.mxu0 %v6989
        %v7044 = vpop.f32.mrf.mxu0
        %v7045 = vadd.f32 0.0, %v7044
        %v7046 = vpop.f32.mrf.mxu0
        %v7047 = vpop.f32.mrf.mxu0
        %v7048 = vadd.f32 0.0, %v7047
        %v7049 = vpop.f32.mrf.mxu0
        %7050 = vmatprep.mubr.bf16.mxu0 0
        %7051 = vmatmul.mubr.bf16.gmra.mxu0 %v6992
        %v7052 = vpop.f32.mrf.mxu0
        %v7053 = vadd.f32 0.0, %v7052
        %v7054 = vpop.f32.mrf.mxu0
        %v7055 = vpop.f32.mrf.mxu0
        %v7056 = vadd.f32 0.0, %v7055
        %v7057 = vpop.f32.mrf.mxu0
        %7058 = vdwg.mxu0
        %v7059 = vpack.c.bf16 %v7032, %v7029
        %v7060 = vpack.c.bf16 %v7040, %v7037
        %v7061 = vpack.c.bf16 %v7048, %v7045
        %v7062 = vpack.c.bf16 %v7056, %v7053
        %v7067 = vunpack.c.l.b16 %v7059
        %v7068 = vunpack.c.h.b16 %v7059
        %v7069 = vunpack.c.l.b16 %v7060
        %v7070 = vunpack.c.h.b16 %v7060
        %v7071 = vunpack.c.l.b16 %v7061
        %v7072 = vunpack.c.h.b16 %v7061
        %v7073 = vunpack.c.l.b16 %v7062
        %v7074 = vunpack.c.h.b16 %v7062
        %v7075 = vpack.c.b16 %v7067, %v7067
        %v7076 = vpack.c.b16 %v7068, %v7068
        %v7077 = vpack.c.b16 %v7069, %v7069
        %v7078 = vpack.c.b16 %v7070, %v7070
        %v7079 = vpack.c.b16 %v7071, %v7071
        %v7080 = vpack.c.b16 %v7072, %v7072
        %v7081 = vpack.c.b16 %v7073, %v7073
        %v7082 = vpack.c.b16 %v7074, %v7074
        %7091 = vst.msk [vmem:[#allocation3 + $0x64] sm:$0xf] %vm3713, %v7075
        %7092 = vst.msk [vmem:[#allocation3 + $0x70] sm:$0xf] %vm3713, %v7076
        %7093 = vst.msk [vmem:[#allocation3 + $0x7c] sm:$0xf] %vm3713, %v7077
        %7094 = vst.msk [vmem:[#allocation3 + $0x88] sm:$0xf] %vm3713, %v7078
        %7095 = vst.msk [vmem:[#allocation3 + $0x94] sm:$0xf] %vm3713, %v7079
        %7096 = vst.msk [vmem:[#allocation3 + $0xa0] sm:$0xf] %vm3713, %v7080
        %7097 = vst.msk [vmem:[#allocation3 + $0xac] sm:$0xf] %vm3713, %v7081
        %7098 = vst.msk [vmem:[#allocation3 + $0xb8] sm:$0xf] %vm3713, %v7082
        %v7099 = vld [vmem:[#allocation2 + $0x124] sm:$0xf]
        %v7100 = vld [vmem:[#allocation2 + $0x148] sm:$0xf]
        %v7101 = vld [vmem:[#allocation2 + $0x16c] sm:$0xf]
        %v7102 = vld [vmem:[#allocation2 + $0x190] sm:$0xf]
        %v7103 = vld [vmem:[#allocation2 + $0x1b4] sm:$0xf]
        %v7104 = vld [vmem:[#allocation2 + $0x1d8] sm:$0xf]
        %v7105 = vld [vmem:[#allocation2 + $0x1fc] sm:$0xf]
        %v7106 = vld [vmem:[#allocation2 + $0x220] sm:$0xf]
        %v7107 = vld [vmem:[#allocation2 + $0x130] sm:$0xf]
        %v7108 = vld [vmem:[#allocation2 + $0x154] sm:$0xf]
        %v7109 = vld [vmem:[#allocation2 + $0x178] sm:$0xf]
        %v7110 = vld [vmem:[#allocation2 + $0x19c] sm:$0xf]
        %v7111 = vld [vmem:[#allocation2 + $0x1c0] sm:$0xf]
        %v7112 = vld [vmem:[#allocation2 + $0x1e4] sm:$0xf]
        %v7113 = vld [vmem:[#allocation2 + $0x208] sm:$0xf]
        %v7114 = vld [vmem:[#allocation2 + $0x22c] sm:$0xf]
        %v7115 = vld [vmem:[#allocation2 + $0x13c] sm:$0xf]
        %v7116 = vld [vmem:[#allocation2 + $0x160] sm:$0xf]
        %v7117 = vld [vmem:[#allocation2 + $0x184] sm:$0xf]
        %v7118 = vld [vmem:[#allocation2 + $0x1a8] sm:$0xf]
        %v7119 = vld [vmem:[#allocation2 + $0x1cc] sm:$0xf]
        %v7120 = vld [vmem:[#allocation2 + $0x1f0] sm:$0xf]
        %v7121 = vld [vmem:[#allocation2 + $0x214] sm:$0xf]
        %v7122 = vld [vmem:[#allocation2 + $0x238] sm:$0xf]
        %v7131 = vunpack.c.l.b16 %v7099
        %v7132 = vunpack.c.l.b16 %v7100
        %v7133 = vunpack.c.l.b16 %v7101
        %v7134 = vunpack.c.l.b16 %v7102
        %v7135 = vunpack.c.l.b16 %v7103
        %v7136 = vunpack.c.l.b16 %v7104
        %v7137 = vunpack.c.l.b16 %v7105
        %v7138 = vunpack.c.l.b16 %v7106
        %v7139 = vpack.c.b16 %v7132, %v7131
        %v7140 = vpack.c.b16 %v7134, %v7133
        %v7141 = vpack.c.b16 %v7136, %v7135
        %v7142 = vpack.c.b16 %v7138, %v7137
        %7143 = vrot.lane.b32.xlu0 %v7139, 64
        %v7144 = vpop.permute.xlu0 %7143
        %7145 = vrot.lane.b32.xlu0 %v7140, 64
        %v7146 = vpop.permute.xlu0 %7145
        %7147 = vrot.lane.b32.xlu0 %v7141, 64
        %v7148 = vpop.permute.xlu0 %7147
        %7149 = vrot.lane.b32.xlu0 %v7142, 64
        %v7150 = vpop.permute.xlu0 %7149
        %v7159 = vunpack.c.l.b16 %v7107
        %v7160 = vunpack.c.l.b16 %v7108
        %v7161 = vunpack.c.l.b16 %v7109
        %v7162 = vunpack.c.l.b16 %v7110
        %v7163 = vunpack.c.l.b16 %v7111
        %v7164 = vunpack.c.l.b16 %v7112
        %v7165 = vunpack.c.l.b16 %v7113
        %v7166 = vunpack.c.l.b16 %v7114
        %v7167 = vpack.c.b16 %v7160, %v7159
        %v7168 = vpack.c.b16 %v7162, %v7161
        %v7169 = vpack.c.b16 %v7164, %v7163
        %v7170 = vpack.c.b16 %v7166, %v7165
        %7171 = vrot.lane.b32.xlu0 %v7167, 64
        %v7172 = vpop.permute.xlu0 %7171
        %7173 = vrot.lane.b32.xlu0 %v7168, 64
        %v7174 = vpop.permute.xlu0 %7173
        %7175 = vrot.lane.b32.xlu0 %v7169, 64
        %v7176 = vpop.permute.xlu0 %7175
        %7177 = vrot.lane.b32.xlu0 %v7170, 64
        %v7178 = vpop.permute.xlu0 %7177
        %v7180 = vsel %vm3382, %v7144, 0
        %v7183 = vsel %vm3382, %v7146, 0
        %v7186 = vsel %vm3382, %v7148, 0
        %v7189 = vsel %vm3382, %v7150, 0
        %v7192 = vsel %vm3382, %v7172, 0
        %v7195 = vsel %vm3382, %v7174, 0
        %v7198 = vsel %vm3382, %v7176, 0
        %v7201 = vsel %vm3382, %v7178, 0
        %7203 = vmatprep.subr.bf16.mxu0 0
        %7204 = vmatpush1.bf16.xpose.msra.mxu0 0
        %7205 = vmatprep.subr.bf16.mxu0 0
        %7206 = vmatpush1.bf16.xpose.msra.mxu0 0
        %7207 = vmatprep.subr.bf16.mxu0 0
        %7208 = vmatpush1.bf16.xpose.msra.mxu0 0
        %7209 = vmatprep.subr.bf16.mxu0 0
        %7210 = vmatpush1.bf16.xpose.msra.mxu0 0
        %7211 = vmatprep.subr.bf16.mxu0 0
        %7212 = vmatpush1.bf16.xpose.msra.mxu0 %v7201
        %7213 = vmatprep.subr.bf16.mxu0 0
        %7214 = vmatpush1.bf16.xpose.msra.mxu0 %v7198
        %7215 = vmatprep.subr.bf16.mxu0 0
        %7216 = vmatpush1.bf16.xpose.msra.mxu0 %v7195
        %7217 = vmatprep.subr.bf16.mxu0 0
        %7218 = vmatpush1.bf16.xpose.msra.mxu0 %v7192
        %7219 = vmatprep.subr.bf16.mxu0 0
        %7220 = vmatpush2.bf16.xpose.msra.mxu0 0
        %7221 = vmatprep.subr.bf16.mxu0 0
        %7222 = vmatpush2.bf16.xpose.msra.mxu0 0
        %7223 = vmatprep.subr.bf16.mxu0 0
        %7224 = vmatpush2.bf16.xpose.msra.mxu0 0
        %7225 = vmatprep.subr.bf16.mxu0 0
        %7226 = vmatpush2.bf16.xpose.msra.mxu0 0
        %7227 = vmatprep.subr.bf16.mxu0 0
        %7228 = vmatpush2.bf16.xpose.msra.mxu0 0
        %7229 = vmatprep.subr.bf16.mxu0 0
        %7230 = vmatpush2.bf16.xpose.msra.mxu0 0
        %7231 = vmatprep.subr.bf16.mxu0 0
        %7232 = vmatpush2.bf16.xpose.msra.mxu0 0
        %7233 = vmatprep.subr.bf16.mxu0 0
        %7234 = vmatpush2.bf16.xpose.msra.mxu0 0
        %7235 = vmatprep.mubr.bf16.mxu0 0
        %7236 = vmatmul.mubr.bf16.gmra.mxu0 %v7180
        %v7237 = vpop.f32.mrf.mxu0
        %v7238 = vadd.f32 0.0, %v7237
        %v7239 = vpop.f32.mrf.mxu0
        %v7240 = vpop.f32.mrf.mxu0
        %v7241 = vadd.f32 0.0, %v7240
        %v7242 = vpop.f32.mrf.mxu0
        %7243 = vmatprep.mubr.bf16.mxu0 0
        %7244 = vmatmul.mubr.bf16.gmra.mxu0 %v7183
        %v7245 = vpop.f32.mrf.mxu0
        %v7246 = vadd.f32 0.0, %v7245
        %v7247 = vpop.f32.mrf.mxu0
        %v7248 = vpop.f32.mrf.mxu0
        %v7249 = vadd.f32 0.0, %v7248
        %v7250 = vpop.f32.mrf.mxu0
        %7251 = vmatprep.mubr.bf16.mxu0 0
        %7252 = vmatmul.mubr.bf16.gmra.mxu0 %v7186
        %v7253 = vpop.f32.mrf.mxu0
        %v7254 = vadd.f32 0.0, %v7253
        %v7255 = vpop.f32.mrf.mxu0
        %v7256 = vpop.f32.mrf.mxu0
        %v7257 = vadd.f32 0.0, %v7256
        %v7258 = vpop.f32.mrf.mxu0
        %7259 = vmatprep.mubr.bf16.mxu0 0
        %7260 = vmatmul.mubr.bf16.gmra.mxu0 %v7189
        %v7261 = vpop.f32.mrf.mxu0
        %v7262 = vadd.f32 0.0, %v7261
        %v7263 = vpop.f32.mrf.mxu0
        %v7264 = vpop.f32.mrf.mxu0
        %v7265 = vadd.f32 0.0, %v7264
        %v7266 = vpop.f32.mrf.mxu0
        %7267 = vdwg.mxu0
        %v7268 = vmul.f32 %v7238, 0.125
        %v7269 = vmul.f32 %v7241, 0.125
        %v7270 = vmul.f32 %v7246, 0.125
        %v7271 = vmul.f32 %v7249, 0.125
        %v7272 = vmul.f32 %v7254, 0.125
        %v7273 = vmul.f32 %v7257, 0.125
        %v7274 = vmul.f32 %v7262, 0.125
        %v7275 = vmul.f32 %v7265, 0.125
        %v7276 = vadd.f32 %v7268, %v3310
        %v7277 = vadd.f32 %v7269, %v3311
        %v7278 = vadd.f32 %v7270, %v3312
        %v7279 = vadd.f32 %v7271, %v3313
        %v7280 = vadd.f32 %v7272, %v3314
        %v7281 = vadd.f32 %v7273, %v3315
        %v7282 = vadd.f32 %v7274, %v3316
        %v7283 = vadd.f32 %v7275, %v3317
        %v7284 = vsel %vm3382, %v7276, -inf
        %7285 = vmax.xlane.f32.xlu0 %v7284
        %v7286 = vpop.xlane.xlu0 %7285
        %v7287 = vsel %vm3382, %v7277, -inf
        %7288 = vmax.xlane.f32.xlu0 %v7287
        %v7289 = vpop.xlane.xlu0 %7288
        %v7290 = vsel %vm3382, %v7278, -inf
        %7291 = vmax.xlane.f32.xlu0 %v7290
        %v7292 = vpop.xlane.xlu0 %7291
        %v7293 = vsel %vm3382, %v7279, -inf
        %7294 = vmax.xlane.f32.xlu0 %v7293
        %v7295 = vpop.xlane.xlu0 %7294
        %v7296 = vsel %vm3382, %v7280, -inf
        %7297 = vmax.xlane.f32.xlu0 %v7296
        %v7298 = vpop.xlane.xlu0 %7297
        %v7299 = vsel %vm3382, %v7281, -inf
        %7300 = vmax.xlane.f32.xlu0 %v7299
        %v7301 = vpop.xlane.xlu0 %7300
        %v7302 = vsel %vm3382, %v7282, -inf
        %7303 = vmax.xlane.f32.xlu0 %v7302
        %v7304 = vpop.xlane.xlu0 %7303
        %v7305 = vsel %vm3382, %v7283, -inf
        %7306 = vmax.xlane.f32.xlu0 %v7305
        %v7307 = vpop.xlane.xlu0 %7306
        %v7308 = vsub.f32 %v7276, %v7286
        %v7309 = vsub.f32 %v7277, %v7289
        %v7310 = vsub.f32 %v7278, %v7292
        %v7311 = vsub.f32 %v7279, %v7295
        %v7312 = vsub.f32 %v7280, %v7298
        %v7313 = vsub.f32 %v7281, %v7301
        %v7314 = vsub.f32 %v7282, %v7304
        %v7315 = vsub.f32 %v7283, %v7307
        %v7316 = vmul.f32 %v7308, 1.442695
        %v7317 = vpow.pop %v7316
        %v7318 = vmul.f32 %v7309, 1.442695
        %v7319 = vpow.pop %v7318
        %v7320 = vmul.f32 %v7310, 1.442695
        %v7321 = vpow.pop %v7320
        %v7322 = vmul.f32 %v7311, 1.442695
        %v7323 = vpow.pop %v7322
        %v7324 = vmul.f32 %v7312, 1.442695
        %v7325 = vpow.pop %v7324
        %v7326 = vmul.f32 %v7313, 1.442695
        %v7327 = vpow.pop %v7326
        %v7328 = vmul.f32 %v7314, 1.442695
        %v7329 = vpow.pop %v7328
        %v7330 = vmul.f32 %v7315, 1.442695
        %v7331 = vpow.pop %v7330
        %v7332 = vsel %vm3382, %v7317, 0.0
        %7333 = vadd.xlane.f32.xlu0 %v7332
        %v7334 = vpop.xlane.xlu0 %7333
        %v7335 = vsel %vm3382, %v7319, 0.0
        %7336 = vadd.xlane.f32.xlu0 %v7335
        %v7337 = vpop.xlane.xlu0 %7336
        %v7338 = vsel %vm3382, %v7321, 0.0
        %7339 = vadd.xlane.f32.xlu0 %v7338
        %v7340 = vpop.xlane.xlu0 %7339
        %v7341 = vsel %vm3382, %v7323, 0.0
        %7342 = vadd.xlane.f32.xlu0 %v7341
        %v7343 = vpop.xlane.xlu0 %7342
        %v7344 = vsel %vm3382, %v7325, 0.0
        %7345 = vadd.xlane.f32.xlu0 %v7344
        %v7346 = vpop.xlane.xlu0 %7345
        %v7347 = vsel %vm3382, %v7327, 0.0
        %7348 = vadd.xlane.f32.xlu0 %v7347
        %v7349 = vpop.xlane.xlu0 %7348
        %v7350 = vsel %vm3382, %v7329, 0.0
        %7351 = vadd.xlane.f32.xlu0 %v7350
        %v7352 = vpop.xlane.xlu0 %7351
        %v7353 = vsel %vm3382, %v7331, 0.0
        %7354 = vadd.xlane.f32.xlu0 %v7353
        %v7355 = vpop.xlane.xlu0 %7354
        %v7356 = vrcp.pop %v7334
        %v7357 = vrcp.pop %v7337
        %v7358 = vrcp.pop %v7340
        %v7359 = vrcp.pop %v7343
        %v7360 = vrcp.pop %v7346
        %v7361 = vrcp.pop %v7349
        %v7362 = vrcp.pop %v7352
        %v7363 = vrcp.pop %v7355
        %v7364 = vmul.f32 %v7317, %v7356
        %v7365 = vmul.f32 %v7319, %v7357
        %v7366 = vmul.f32 %v7321, %v7358
        %v7367 = vmul.f32 %v7323, %v7359
        %v7368 = vmul.f32 %v7325, %v7360
        %v7369 = vmul.f32 %v7327, %v7361
        %v7370 = vmul.f32 %v7329, %v7362
        %v7371 = vmul.f32 %v7331, %v7363
        %v7372 = vpack.c.bf16 %v7365, %v7364
        %v7373 = vpack.c.bf16 %v7367, %v7366
        %v7374 = vpack.c.bf16 %v7369, %v7368
        %v7375 = vpack.c.bf16 %v7371, %v7370
        %v7384 = vunpack.c.l.b16 %v7115
        %v7385 = vunpack.c.l.b16 %v7116
        %v7386 = vunpack.c.l.b16 %v7117
        %v7387 = vunpack.c.l.b16 %v7118
        %v7388 = vunpack.c.l.b16 %v7119
        %v7389 = vunpack.c.l.b16 %v7120
        %v7390 = vunpack.c.l.b16 %v7121
        %v7391 = vunpack.c.l.b16 %v7122
        %v7392 = vpack.c.b16 %v7385, %v7384
        %v7393 = vpack.c.b16 %v7387, %v7386
        %v7394 = vpack.c.b16 %v7389, %v7388
        %v7395 = vpack.c.b16 %v7391, %v7390
        %7396 = vrot.lane.b32.xlu0 %v7392, 64
        %v7397 = vpop.permute.xlu0 %7396
        %7398 = vrot.lane.b32.xlu0 %v7393, 64
        %v7399 = vpop.permute.xlu0 %7398
        %7400 = vrot.lane.b32.xlu0 %v7394, 64
        %v7401 = vpop.permute.xlu0 %7400
        %7402 = vrot.lane.b32.xlu0 %v7395, 64
        %v7403 = vpop.permute.xlu0 %7402
        %v7409 = vsel %vm3382, %v7372, 0
        %v7412 = vsel %vm3382, %v7373, 0
        %v7415 = vsel %vm3382, %v7374, 0
        %v7418 = vsel %vm3382, %v7375, 0
        %7420 = vmatprep.subr.bf16.mxu0 0
        %7421 = vmatpush1.bf16.msra.mxu0 0
        %7422 = vmatprep.subr.bf16.mxu0 0
        %7423 = vmatpush1.bf16.msra.mxu0 0
        %7424 = vmatprep.subr.bf16.mxu0 0
        %7425 = vmatpush1.bf16.msra.mxu0 0
        %7426 = vmatprep.subr.bf16.mxu0 0
        %7427 = vmatpush1.bf16.msra.mxu0 0
        %7428 = vmatprep.subr.bf16.mxu0 0
        %7429 = vmatpush1.bf16.msra.mxu0 %v7403
        %7430 = vmatprep.subr.bf16.mxu0 0
        %7431 = vmatpush1.bf16.msra.mxu0 %v7401
        %7432 = vmatprep.subr.bf16.mxu0 0
        %7433 = vmatpush1.bf16.msra.mxu0 %v7399
        %7434 = vmatprep.subr.bf16.mxu0 0
        %7435 = vmatpush1.bf16.msra.mxu0 %v7397
        %7436 = vmatprep.subr.bf16.mxu0 0
        %7437 = vmatpush2.bf16.msra.mxu0 0
        %7438 = vmatprep.subr.bf16.mxu0 0
        %7439 = vmatpush2.bf16.msra.mxu0 0
        %7440 = vmatprep.subr.bf16.mxu0 0
        %7441 = vmatpush2.bf16.msra.mxu0 0
        %7442 = vmatprep.subr.bf16.mxu0 0
        %7443 = vmatpush2.bf16.msra.mxu0 0
        %7444 = vmatprep.subr.bf16.mxu0 0
        %7445 = vmatpush2.bf16.msra.mxu0 0
        %7446 = vmatprep.subr.bf16.mxu0 0
        %7447 = vmatpush2.bf16.msra.mxu0 0
        %7448 = vmatprep.subr.bf16.mxu0 0
        %7449 = vmatpush2.bf16.msra.mxu0 0
        %7450 = vmatprep.subr.bf16.mxu0 0
        %7451 = vmatpush2.bf16.msra.mxu0 0
        %7452 = vmatprep.mubr.bf16.mxu0 0
        %7453 = vmatmul.mubr.bf16.gmra.mxu0 %v7409
        %v7454 = vpop.f32.mrf.mxu0
        %v7455 = vadd.f32 0.0, %v7454
        %v7456 = vpop.f32.mrf.mxu0
        %v7457 = vpop.f32.mrf.mxu0
        %v7458 = vadd.f32 0.0, %v7457
        %v7459 = vpop.f32.mrf.mxu0
        %7460 = vmatprep.mubr.bf16.mxu0 0
        %7461 = vmatmul.mubr.bf16.gmra.mxu0 %v7412
        %v7462 = vpop.f32.mrf.mxu0
        %v7463 = vadd.f32 0.0, %v7462
        %v7464 = vpop.f32.mrf.mxu0
        %v7465 = vpop.f32.mrf.mxu0
        %v7466 = vadd.f32 0.0, %v7465
        %v7467 = vpop.f32.mrf.mxu0
        %7468 = vmatprep.mubr.bf16.mxu0 0
        %7469 = vmatmul.mubr.bf16.gmra.mxu0 %v7415
        %v7470 = vpop.f32.mrf.mxu0
        %v7471 = vadd.f32 0.0, %v7470
        %v7472 = vpop.f32.mrf.mxu0
        %v7473 = vpop.f32.mrf.mxu0
        %v7474 = vadd.f32 0.0, %v7473
        %v7475 = vpop.f32.mrf.mxu0
        %7476 = vmatprep.mubr.bf16.mxu0 0
        %7477 = vmatmul.mubr.bf16.gmra.mxu0 %v7418
        %v7478 = vpop.f32.mrf.mxu0
        %v7479 = vadd.f32 0.0, %v7478
        %v7480 = vpop.f32.mrf.mxu0
        %v7481 = vpop.f32.mrf.mxu0
        %v7482 = vadd.f32 0.0, %v7481
        %v7483 = vpop.f32.mrf.mxu0
        %7484 = vdwg.mxu0
        %v7485 = vpack.c.bf16 %v7458, %v7455
        %v7486 = vpack.c.bf16 %v7466, %v7463
        %v7487 = vpack.c.bf16 %v7474, %v7471
        %v7488 = vpack.c.bf16 %v7482, %v7479
        %v7493 = vunpack.c.l.b16 %v7485
        %v7494 = vunpack.c.h.b16 %v7485
        %v7495 = vunpack.c.l.b16 %v7486
        %v7496 = vunpack.c.h.b16 %v7486
        %v7497 = vunpack.c.l.b16 %v7487
        %v7498 = vunpack.c.h.b16 %v7487
        %v7499 = vunpack.c.l.b16 %v7488
        %v7500 = vunpack.c.h.b16 %v7488
        %v7501 = vpack.c.b16 %v7493, %v7493
        %v7502 = vpack.c.b16 %v7494, %v7494
        %v7503 = vpack.c.b16 %v7495, %v7495
        %v7504 = vpack.c.b16 %v7496, %v7496
        %v7505 = vpack.c.b16 %v7497, %v7497
        %v7506 = vpack.c.b16 %v7498, %v7498
        %v7507 = vpack.c.b16 %v7499, %v7499
        %v7508 = vpack.c.b16 %v7500, %v7500
        %7509 = vrot.lane.b32.xlu0 %v7501, 64
        %v7510 = vpop.permute.xlu0 %7509
        %7511 = vrot.lane.b32.xlu0 %v7502, 64
        %v7512 = vpop.permute.xlu0 %7511
        %7513 = vrot.lane.b32.xlu0 %v7503, 64
        %v7514 = vpop.permute.xlu0 %7513
        %7515 = vrot.lane.b32.xlu0 %v7504, 64
        %v7516 = vpop.permute.xlu0 %7515
        %7517 = vrot.lane.b32.xlu0 %v7505, 64
        %v7518 = vpop.permute.xlu0 %7517
        %7519 = vrot.lane.b32.xlu0 %v7506, 64
        %v7520 = vpop.permute.xlu0 %7519
        %7521 = vrot.lane.b32.xlu0 %v7507, 64
        %v7522 = vpop.permute.xlu0 %7521
        %7523 = vrot.lane.b32.xlu0 %v7508, 64
        %v7524 = vpop.permute.xlu0 %7523
        %7533 = vst.msk [vmem:[#allocation3 + $0x64] sm:$0xf] %vm4156, %v7510
        %7534 = vst.msk [vmem:[#allocation3 + $0x70] sm:$0xf] %vm4156, %v7512
        %7535 = vst.msk [vmem:[#allocation3 + $0x7c] sm:$0xf] %vm4156, %v7514
        %7536 = vst.msk [vmem:[#allocation3 + $0x88] sm:$0xf] %vm4156, %v7516
        %7537 = vst.msk [vmem:[#allocation3 + $0x94] sm:$0xf] %vm4156, %v7518
        %7538 = vst.msk [vmem:[#allocation3 + $0xa0] sm:$0xf] %vm4156, %v7520
        %7539 = vst.msk [vmem:[#allocation3 + $0xac] sm:$0xf] %vm4156, %v7522
        %7540 = vst.msk [vmem:[#allocation3 + $0xb8] sm:$0xf] %vm4156, %v7524
        %v7541 = vld [vmem:[#allocation2 + $0x128] sm:$0xf]
        %v7542 = vld [vmem:[#allocation2 + $0x14c] sm:$0xf]
        %v7543 = vld [vmem:[#allocation2 + $0x170] sm:$0xf]
        %v7544 = vld [vmem:[#allocation2 + $0x194] sm:$0xf]
        %v7545 = vld [vmem:[#allocation2 + $0x1b8] sm:$0xf]
        %v7546 = vld [vmem:[#allocation2 + $0x1dc] sm:$0xf]
        %v7547 = vld [vmem:[#allocation2 + $0x200] sm:$0xf]
        %v7548 = vld [vmem:[#allocation2 + $0x224] sm:$0xf]
        %v7549 = vld [vmem:[#allocation2 + $0x134] sm:$0xf]
        %v7550 = vld [vmem:[#allocation2 + $0x158] sm:$0xf]
        %v7551 = vld [vmem:[#allocation2 + $0x17c] sm:$0xf]
        %v7552 = vld [vmem:[#allocation2 + $0x1a0] sm:$0xf]
        %v7553 = vld [vmem:[#allocation2 + $0x1c4] sm:$0xf]
        %v7554 = vld [vmem:[#allocation2 + $0x1e8] sm:$0xf]
        %v7555 = vld [vmem:[#allocation2 + $0x20c] sm:$0xf]
        %v7556 = vld [vmem:[#allocation2 + $0x230] sm:$0xf]
        %v7557 = vld [vmem:[#allocation2 + $0x140] sm:$0xf]
        %v7558 = vld [vmem:[#allocation2 + $0x164] sm:$0xf]
        %v7559 = vld [vmem:[#allocation2 + $0x188] sm:$0xf]
        %v7560 = vld [vmem:[#allocation2 + $0x1ac] sm:$0xf]
        %v7561 = vld [vmem:[#allocation2 + $0x1d0] sm:$0xf]
        %v7562 = vld [vmem:[#allocation2 + $0x1f4] sm:$0xf]
        %v7563 = vld [vmem:[#allocation2 + $0x218] sm:$0xf]
        %v7564 = vld [vmem:[#allocation2 + $0x23c] sm:$0xf]
        %v7573 = vunpack.c.l.b16 %v7541
        %v7574 = vunpack.c.l.b16 %v7542
        %v7575 = vunpack.c.l.b16 %v7543
        %v7576 = vunpack.c.l.b16 %v7544
        %v7577 = vunpack.c.l.b16 %v7545
        %v7578 = vunpack.c.l.b16 %v7546
        %v7579 = vunpack.c.l.b16 %v7547
        %v7580 = vunpack.c.l.b16 %v7548
        %v7581 = vpack.c.b16 %v7574, %v7573
        %v7582 = vpack.c.b16 %v7576, %v7575
        %v7583 = vpack.c.b16 %v7578, %v7577
        %v7584 = vpack.c.b16 %v7580, %v7579
        %v7593 = vunpack.c.l.b16 %v7549
        %v7594 = vunpack.c.l.b16 %v7550
        %v7595 = vunpack.c.l.b16 %v7551
        %v7596 = vunpack.c.l.b16 %v7552
        %v7597 = vunpack.c.l.b16 %v7553
        %v7598 = vunpack.c.l.b16 %v7554
        %v7599 = vunpack.c.l.b16 %v7555
        %v7600 = vunpack.c.l.b16 %v7556
        %v7601 = vpack.c.b16 %v7594, %v7593
        %v7602 = vpack.c.b16 %v7596, %v7595
        %v7603 = vpack.c.b16 %v7598, %v7597
        %v7604 = vpack.c.b16 %v7600, %v7599
        %v7606 = vsel %vm3382, %v7581, 0
        %v7609 = vsel %vm3382, %v7582, 0
        %v7612 = vsel %vm3382, %v7583, 0
        %v7615 = vsel %vm3382, %v7584, 0
        %v7618 = vsel %vm3382, %v7601, 0
        %v7621 = vsel %vm3382, %v7602, 0
        %v7624 = vsel %vm3382, %v7603, 0
        %v7627 = vsel %vm3382, %v7604, 0
        %7629 = vmatprep.subr.bf16.mxu0 0
        %7630 = vmatpush1.bf16.xpose.msra.mxu0 0
        %7631 = vmatprep.subr.bf16.mxu0 0
        %7632 = vmatpush1.bf16.xpose.msra.mxu0 0
        %7633 = vmatprep.subr.bf16.mxu0 0
        %7634 = vmatpush1.bf16.xpose.msra.mxu0 0
        %7635 = vmatprep.subr.bf16.mxu0 0
        %7636 = vmatpush1.bf16.xpose.msra.mxu0 0
        %7637 = vmatprep.subr.bf16.mxu0 0
        %7638 = vmatpush1.bf16.xpose.msra.mxu0 %v7627
        %7639 = vmatprep.subr.bf16.mxu0 0
        %7640 = vmatpush1.bf16.xpose.msra.mxu0 %v7624
        %7641 = vmatprep.subr.bf16.mxu0 0
        %7642 = vmatpush1.bf16.xpose.msra.mxu0 %v7621
        %7643 = vmatprep.subr.bf16.mxu0 0
        %7644 = vmatpush1.bf16.xpose.msra.mxu0 %v7618
        %7645 = vmatprep.subr.bf16.mxu0 0
        %7646 = vmatpush2.bf16.xpose.msra.mxu0 0
        %7647 = vmatprep.subr.bf16.mxu0 0
        %7648 = vmatpush2.bf16.xpose.msra.mxu0 0
        %7649 = vmatprep.subr.bf16.mxu0 0
        %7650 = vmatpush2.bf16.xpose.msra.mxu0 0
        %7651 = vmatprep.subr.bf16.mxu0 0
        %7652 = vmatpush2.bf16.xpose.msra.mxu0 0
        %7653 = vmatprep.subr.bf16.mxu0 0
        %7654 = vmatpush2.bf16.xpose.msra.mxu0 0
        %7655 = vmatprep.subr.bf16.mxu0 0
        %7656 = vmatpush2.bf16.xpose.msra.mxu0 0
        %7657 = vmatprep.subr.bf16.mxu0 0
        %7658 = vmatpush2.bf16.xpose.msra.mxu0 0
        %7659 = vmatprep.subr.bf16.mxu0 0
        %7660 = vmatpush2.bf16.xpose.msra.mxu0 0
        %7661 = vmatprep.mubr.bf16.mxu0 0
        %7662 = vmatmul.mubr.bf16.gmra.mxu0 %v7606
        %v7663 = vpop.f32.mrf.mxu0
        %v7664 = vadd.f32 0.0, %v7663
        %v7665 = vpop.f32.mrf.mxu0
        %v7666 = vpop.f32.mrf.mxu0
        %v7667 = vadd.f32 0.0, %v7666
        %v7668 = vpop.f32.mrf.mxu0
        %7669 = vmatprep.mubr.bf16.mxu0 0
        %7670 = vmatmul.mubr.bf16.gmra.mxu0 %v7609
        %v7671 = vpop.f32.mrf.mxu0
        %v7672 = vadd.f32 0.0, %v7671
        %v7673 = vpop.f32.mrf.mxu0
        %v7674 = vpop.f32.mrf.mxu0
        %v7675 = vadd.f32 0.0, %v7674
        %v7676 = vpop.f32.mrf.mxu0
        %7677 = vmatprep.mubr.bf16.mxu0 0
        %7678 = vmatmul.mubr.bf16.gmra.mxu0 %v7612
        %v7679 = vpop.f32.mrf.mxu0
        %v7680 = vadd.f32 0.0, %v7679
        %v7681 = vpop.f32.mrf.mxu0
        %v7682 = vpop.f32.mrf.mxu0
        %v7683 = vadd.f32 0.0, %v7682
        %v7684 = vpop.f32.mrf.mxu0
        %7685 = vmatprep.mubr.bf16.mxu0 0
        %7686 = vmatmul.mubr.bf16.gmra.mxu0 %v7615
        %v7687 = vpop.f32.mrf.mxu0
        %v7688 = vadd.f32 0.0, %v7687
        %v7689 = vpop.f32.mrf.mxu0
        %v7690 = vpop.f32.mrf.mxu0
        %v7691 = vadd.f32 0.0, %v7690
        %v7692 = vpop.f32.mrf.mxu0
        %7693 = vdwg.mxu0
        %v7694 = vmul.f32 %v7664, 0.125
        %v7695 = vmul.f32 %v7667, 0.125
        %v7696 = vmul.f32 %v7672, 0.125
        %v7697 = vmul.f32 %v7675, 0.125
        %v7698 = vmul.f32 %v7680, 0.125
        %v7699 = vmul.f32 %v7683, 0.125
        %v7700 = vmul.f32 %v7688, 0.125
        %v7701 = vmul.f32 %v7691, 0.125
        %v7702 = vadd.f32 %v7694, %v3310
        %v7703 = vadd.f32 %v7695, %v3311
        %v7704 = vadd.f32 %v7696, %v3312
        %v7705 = vadd.f32 %v7697, %v3313
        %v7706 = vadd.f32 %v7698, %v3314
        %v7707 = vadd.f32 %v7699, %v3315
        %v7708 = vadd.f32 %v7700, %v3316
        %v7709 = vadd.f32 %v7701, %v3317
        %v7710 = vsel %vm3382, %v7702, -inf
        %7711 = vmax.xlane.f32.xlu0 %v7710
        %v7712 = vpop.xlane.xlu0 %7711
        %v7713 = vsel %vm3382, %v7703, -inf
        %7714 = vmax.xlane.f32.xlu0 %v7713
        %v7715 = vpop.xlane.xlu0 %7714
        %v7716 = vsel %vm3382, %v7704, -inf
        %7717 = vmax.xlane.f32.xlu0 %v7716
        %v7718 = vpop.xlane.xlu0 %7717
        %v7719 = vsel %vm3382, %v7705, -inf
        %7720 = vmax.xlane.f32.xlu0 %v7719
        %v7721 = vpop.xlane.xlu0 %7720
        %v7722 = vsel %vm3382, %v7706, -inf
        %7723 = vmax.xlane.f32.xlu0 %v7722
        %v7724 = vpop.xlane.xlu0 %7723
        %v7725 = vsel %vm3382, %v7707, -inf
        %7726 = vmax.xlane.f32.xlu0 %v7725
        %v7727 = vpop.xlane.xlu0 %7726
        %v7728 = vsel %vm3382, %v7708, -inf
        %7729 = vmax.xlane.f32.xlu0 %v7728
        %v7730 = vpop.xlane.xlu0 %7729
        %v7731 = vsel %vm3382, %v7709, -inf
        %7732 = vmax.xlane.f32.xlu0 %v7731
        %v7733 = vpop.xlane.xlu0 %7732
        %v7734 = vsub.f32 %v7702, %v7712
        %v7735 = vsub.f32 %v7703, %v7715
        %v7736 = vsub.f32 %v7704, %v7718
        %v7737 = vsub.f32 %v7705, %v7721
        %v7738 = vsub.f32 %v7706, %v7724
        %v7739 = vsub.f32 %v7707, %v7727
        %v7740 = vsub.f32 %v7708, %v7730
        %v7741 = vsub.f32 %v7709, %v7733
        %v7742 = vmul.f32 %v7734, 1.442695
        %v7743 = vpow.pop %v7742
        %v7744 = vmul.f32 %v7735, 1.442695
        %v7745 = vpow.pop %v7744
        %v7746 = vmul.f32 %v7736, 1.442695
        %v7747 = vpow.pop %v7746
        %v7748 = vmul.f32 %v7737, 1.442695
        %v7749 = vpow.pop %v7748
        %v7750 = vmul.f32 %v7738, 1.442695
        %v7751 = vpow.pop %v7750
        %v7752 = vmul.f32 %v7739, 1.442695
        %v7753 = vpow.pop %v7752
        %v7754 = vmul.f32 %v7740, 1.442695
        %v7755 = vpow.pop %v7754
        %v7756 = vmul.f32 %v7741, 1.442695
        %v7757 = vpow.pop %v7756
        %v7758 = vsel %vm3382, %v7743, 0.0
        %7759 = vadd.xlane.f32.xlu0 %v7758
        %v7760 = vpop.xlane.xlu0 %7759
        %v7761 = vsel %vm3382, %v7745, 0.0
        %7762 = vadd.xlane.f32.xlu0 %v7761
        %v7763 = vpop.xlane.xlu0 %7762
        %v7764 = vsel %vm3382, %v7747, 0.0
        %7765 = vadd.xlane.f32.xlu0 %v7764
        %v7766 = vpop.xlane.xlu0 %7765
        %v7767 = vsel %vm3382, %v7749, 0.0
        %7768 = vadd.xlane.f32.xlu0 %v7767
        %v7769 = vpop.xlane.xlu0 %7768
        %v7770 = vsel %vm3382, %v7751, 0.0
        %7771 = vadd.xlane.f32.xlu0 %v7770
        %v7772 = vpop.xlane.xlu0 %7771
        %v7773 = vsel %vm3382, %v7753, 0.0
        %7774 = vadd.xlane.f32.xlu0 %v7773
        %v7775 = vpop.xlane.xlu0 %7774
        %v7776 = vsel %vm3382, %v7755, 0.0
        %7777 = vadd.xlane.f32.xlu0 %v7776
        %v7778 = vpop.xlane.xlu0 %7777
        %v7779 = vsel %vm3382, %v7757, 0.0
        %7780 = vadd.xlane.f32.xlu0 %v7779
        %v7781 = vpop.xlane.xlu0 %7780
        %v7782 = vrcp.pop %v7760
        %v7783 = vrcp.pop %v7763
        %v7784 = vrcp.pop %v7766
        %v7785 = vrcp.pop %v7769
        %v7786 = vrcp.pop %v7772
        %v7787 = vrcp.pop %v7775
        %v7788 = vrcp.pop %v7778
        %v7789 = vrcp.pop %v7781
        %v7790 = vmul.f32 %v7743, %v7782
        %v7791 = vmul.f32 %v7745, %v7783
        %v7792 = vmul.f32 %v7747, %v7784
        %v7793 = vmul.f32 %v7749, %v7785
        %v7794 = vmul.f32 %v7751, %v7786
        %v7795 = vmul.f32 %v7753, %v7787
        %v7796 = vmul.f32 %v7755, %v7788
        %v7797 = vmul.f32 %v7757, %v7789
        %v7798 = vpack.c.bf16 %v7791, %v7790
        %v7799 = vpack.c.bf16 %v7793, %v7792
        %v7800 = vpack.c.bf16 %v7795, %v7794
        %v7801 = vpack.c.bf16 %v7797, %v7796
        %v7810 = vunpack.c.l.b16 %v7557
        %v7811 = vunpack.c.l.b16 %v7558
        %v7812 = vunpack.c.l.b16 %v7559
        %v7813 = vunpack.c.l.b16 %v7560
        %v7814 = vunpack.c.l.b16 %v7561
        %v7815 = vunpack.c.l.b16 %v7562
        %v7816 = vunpack.c.l.b16 %v7563
        %v7817 = vunpack.c.l.b16 %v7564
        %v7818 = vpack.c.b16 %v7811, %v7810
        %v7819 = vpack.c.b16 %v7813, %v7812
        %v7820 = vpack.c.b16 %v7815, %v7814
        %v7821 = vpack.c.b16 %v7817, %v7816
        %v7827 = vsel %vm3382, %v7798, 0
        %v7830 = vsel %vm3382, %v7799, 0
        %v7833 = vsel %vm3382, %v7800, 0
        %v7836 = vsel %vm3382, %v7801, 0
        %7838 = vmatprep.subr.bf16.mxu0 0
        %7839 = vmatpush1.bf16.msra.mxu0 0
        %7840 = vmatprep.subr.bf16.mxu0 0
        %7841 = vmatpush1.bf16.msra.mxu0 0
        %7842 = vmatprep.subr.bf16.mxu0 0
        %7843 = vmatpush1.bf16.msra.mxu0 0
        %7844 = vmatprep.subr.bf16.mxu0 0
        %7845 = vmatpush1.bf16.msra.mxu0 0
        %7846 = vmatprep.subr.bf16.mxu0 0
        %7847 = vmatpush1.bf16.msra.mxu0 %v7821
        %7848 = vmatprep.subr.bf16.mxu0 0
        %7849 = vmatpush1.bf16.msra.mxu0 %v7820
        %7850 = vmatprep.subr.bf16.mxu0 0
        %7851 = vmatpush1.bf16.msra.mxu0 %v7819
        %7852 = vmatprep.subr.bf16.mxu0 0
        %7853 = vmatpush1.bf16.msra.mxu0 %v7818
        %7854 = vmatprep.subr.bf16.mxu0 0
        %7855 = vmatpush2.bf16.msra.mxu0 0
        %7856 = vmatprep.subr.bf16.mxu0 0
        %7857 = vmatpush2.bf16.msra.mxu0 0
        %7858 = vmatprep.subr.bf16.mxu0 0
        %7859 = vmatpush2.bf16.msra.mxu0 0
        %7860 = vmatprep.subr.bf16.mxu0 0
        %7861 = vmatpush2.bf16.msra.mxu0 0
        %7862 = vmatprep.subr.bf16.mxu0 0
        %7863 = vmatpush2.bf16.msra.mxu0 0
        %7864 = vmatprep.subr.bf16.mxu0 0
        %7865 = vmatpush2.bf16.msra.mxu0 0
        %7866 = vmatprep.subr.bf16.mxu0 0
        %7867 = vmatpush2.bf16.msra.mxu0 0
        %7868 = vmatprep.subr.bf16.mxu0 0
        %7869 = vmatpush2.bf16.msra.mxu0 0
        %7870 = vmatprep.mubr.bf16.mxu0 0
        %7871 = vmatmul.mubr.bf16.gmra.mxu0 %v7827
        %v7872 = vpop.f32.mrf.mxu0
        %v7873 = vadd.f32 0.0, %v7872
        %v7874 = vpop.f32.mrf.mxu0
        %v7875 = vpop.f32.mrf.mxu0
        %v7876 = vadd.f32 0.0, %v7875
        %v7877 = vpop.f32.mrf.mxu0
        %7878 = vmatprep.mubr.bf16.mxu0 0
        %7879 = vmatmul.mubr.bf16.gmra.mxu0 %v7830
        %v7880 = vpop.f32.mrf.mxu0
        %v7881 = vadd.f32 0.0, %v7880
        %v7882 = vpop.f32.mrf.mxu0
        %v7883 = vpop.f32.mrf.mxu0
        %v7884 = vadd.f32 0.0, %v7883
        %v7885 = vpop.f32.mrf.mxu0
        %7886 = vmatprep.mubr.bf16.mxu0 0
        %7887 = vmatmul.mubr.bf16.gmra.mxu0 %v7833
        %v7888 = vpop.f32.mrf.mxu0
        %v7889 = vadd.f32 0.0, %v7888
        %v7890 = vpop.f32.mrf.mxu0
        %v7891 = vpop.f32.mrf.mxu0
        %v7892 = vadd.f32 0.0, %v7891
        %v7893 = vpop.f32.mrf.mxu0
        %7894 = vmatprep.mubr.bf16.mxu0 0
        %7895 = vmatmul.mubr.bf16.gmra.mxu0 %v7836
        %v7896 = vpop.f32.mrf.mxu0
        %v7897 = vadd.f32 0.0, %v7896
        %v7898 = vpop.f32.mrf.mxu0
        %v7899 = vpop.f32.mrf.mxu0
        %v7900 = vadd.f32 0.0, %v7899
        %v7901 = vpop.f32.mrf.mxu0
        %7902 = vdwg.mxu0
        %v7903 = vpack.c.bf16 %v7876, %v7873
        %v7904 = vpack.c.bf16 %v7884, %v7881
        %v7905 = vpack.c.bf16 %v7892, %v7889
        %v7906 = vpack.c.bf16 %v7900, %v7897
        %v7911 = vunpack.c.l.b16 %v7903
        %v7912 = vunpack.c.h.b16 %v7903
        %v7913 = vunpack.c.l.b16 %v7904
        %v7914 = vunpack.c.h.b16 %v7904
        %v7915 = vunpack.c.l.b16 %v7905
        %v7916 = vunpack.c.h.b16 %v7905
        %v7917 = vunpack.c.l.b16 %v7906
        %v7918 = vunpack.c.h.b16 %v7906
        %v7919 = vpack.c.b16 %v7911, %v7911
        %v7920 = vpack.c.b16 %v7912, %v7912
        %v7921 = vpack.c.b16 %v7913, %v7913
        %v7922 = vpack.c.b16 %v7914, %v7914
        %v7923 = vpack.c.b16 %v7915, %v7915
        %v7924 = vpack.c.b16 %v7916, %v7916
        %v7925 = vpack.c.b16 %v7917, %v7917
        %v7926 = vpack.c.b16 %v7918, %v7918
        %7935 = vst.msk [vmem:[#allocation3 + $0x68] sm:$0xf] %vm3713, %v7919
        %7936 = vst.msk [vmem:[#allocation3 + $0x74] sm:$0xf] %vm3713, %v7920
        %7937 = vst.msk [vmem:[#allocation3 + $0x80] sm:$0xf] %vm3713, %v7921
        %7938 = vst.msk [vmem:[#allocation3 + $0x8c] sm:$0xf] %vm3713, %v7922
        %7939 = vst.msk [vmem:[#allocation3 + $0x98] sm:$0xf] %vm3713, %v7923
        %7940 = vst.msk [vmem:[#allocation3 + $0xa4] sm:$0xf] %vm3713, %v7924
        %7941 = vst.msk [vmem:[#allocation3 + $0xb0] sm:$0xf] %vm3713, %v7925
        %7942 = vst.msk [vmem:[#allocation3 + $0xbc] sm:$0xf] %vm3713, %v7926
        %v7943 = vld [vmem:[#allocation2 + $0x128] sm:$0xf]
        %v7944 = vld [vmem:[#allocation2 + $0x14c] sm:$0xf]
        %v7945 = vld [vmem:[#allocation2 + $0x170] sm:$0xf]
        %v7946 = vld [vmem:[#allocation2 + $0x194] sm:$0xf]
        %v7947 = vld [vmem:[#allocation2 + $0x1b8] sm:$0xf]
        %v7948 = vld [vmem:[#allocation2 + $0x1dc] sm:$0xf]
        %v7949 = vld [vmem:[#allocation2 + $0x200] sm:$0xf]
        %v7950 = vld [vmem:[#allocation2 + $0x224] sm:$0xf]
        %v7951 = vld [vmem:[#allocation2 + $0x134] sm:$0xf]
        %v7952 = vld [vmem:[#allocation2 + $0x158] sm:$0xf]
        %v7953 = vld [vmem:[#allocation2 + $0x17c] sm:$0xf]
        %v7954 = vld [vmem:[#allocation2 + $0x1a0] sm:$0xf]
        %v7955 = vld [vmem:[#allocation2 + $0x1c4] sm:$0xf]
        %v7956 = vld [vmem:[#allocation2 + $0x1e8] sm:$0xf]
        %v7957 = vld [vmem:[#allocation2 + $0x20c] sm:$0xf]
        %v7958 = vld [vmem:[#allocation2 + $0x230] sm:$0xf]
        %v7959 = vld [vmem:[#allocation2 + $0x140] sm:$0xf]
        %v7960 = vld [vmem:[#allocation2 + $0x164] sm:$0xf]
        %v7961 = vld [vmem:[#allocation2 + $0x188] sm:$0xf]
        %v7962 = vld [vmem:[#allocation2 + $0x1ac] sm:$0xf]
        %v7963 = vld [vmem:[#allocation2 + $0x1d0] sm:$0xf]
        %v7964 = vld [vmem:[#allocation2 + $0x1f4] sm:$0xf]
        %v7965 = vld [vmem:[#allocation2 + $0x218] sm:$0xf]
        %v7966 = vld [vmem:[#allocation2 + $0x23c] sm:$0xf]
        %v7975 = vunpack.c.l.b16 %v7943
        %v7976 = vunpack.c.l.b16 %v7944
        %v7977 = vunpack.c.l.b16 %v7945
        %v7978 = vunpack.c.l.b16 %v7946
        %v7979 = vunpack.c.l.b16 %v7947
        %v7980 = vunpack.c.l.b16 %v7948
        %v7981 = vunpack.c.l.b16 %v7949
        %v7982 = vunpack.c.l.b16 %v7950
        %v7983 = vpack.c.b16 %v7976, %v7975
        %v7984 = vpack.c.b16 %v7978, %v7977
        %v7985 = vpack.c.b16 %v7980, %v7979
        %v7986 = vpack.c.b16 %v7982, %v7981
        %7987 = vrot.lane.b32.xlu0 %v7983, 64
        %v7988 = vpop.permute.xlu0 %7987
        %7989 = vrot.lane.b32.xlu0 %v7984, 64
        %v7990 = vpop.permute.xlu0 %7989
        %7991 = vrot.lane.b32.xlu0 %v7985, 64
        %v7992 = vpop.permute.xlu0 %7991
        %7993 = vrot.lane.b32.xlu0 %v7986, 64
        %v7994 = vpop.permute.xlu0 %7993
        %v8003 = vunpack.c.l.b16 %v7951
        %v8004 = vunpack.c.l.b16 %v7952
        %v8005 = vunpack.c.l.b16 %v7953
        %v8006 = vunpack.c.l.b16 %v7954
        %v8007 = vunpack.c.l.b16 %v7955
        %v8008 = vunpack.c.l.b16 %v7956
        %v8009 = vunpack.c.l.b16 %v7957
        %v8010 = vunpack.c.l.b16 %v7958
        %v8011 = vpack.c.b16 %v8004, %v8003
        %v8012 = vpack.c.b16 %v8006, %v8005
        %v8013 = vpack.c.b16 %v8008, %v8007
        %v8014 = vpack.c.b16 %v8010, %v8009
        %8015 = vrot.lane.b32.xlu0 %v8011, 64
        %v8016 = vpop.permute.xlu0 %8015
        %8017 = vrot.lane.b32.xlu0 %v8012, 64
        %v8018 = vpop.permute.xlu0 %8017
        %8019 = vrot.lane.b32.xlu0 %v8013, 64
        %v8020 = vpop.permute.xlu0 %8019
        %8021 = vrot.lane.b32.xlu0 %v8014, 64
        %v8022 = vpop.permute.xlu0 %8021
        %v8024 = vsel %vm3382, %v7988, 0
        %v8027 = vsel %vm3382, %v7990, 0
        %v8030 = vsel %vm3382, %v7992, 0
        %v8033 = vsel %vm3382, %v7994, 0
        %v8036 = vsel %vm3382, %v8016, 0
        %v8039 = vsel %vm3382, %v8018, 0
        %v8042 = vsel %vm3382, %v8020, 0
        %v8045 = vsel %vm3382, %v8022, 0
        %8047 = vmatprep.subr.bf16.mxu0 0
        %8048 = vmatpush1.bf16.xpose.msra.mxu0 0
        %8049 = vmatprep.subr.bf16.mxu0 0
        %8050 = vmatpush1.bf16.xpose.msra.mxu0 0
        %8051 = vmatprep.subr.bf16.mxu0 0
        %8052 = vmatpush1.bf16.xpose.msra.mxu0 0
        %8053 = vmatprep.subr.bf16.mxu0 0
        %8054 = vmatpush1.bf16.xpose.msra.mxu0 0
        %8055 = vmatprep.subr.bf16.mxu0 0
        %8056 = vmatpush1.bf16.xpose.msra.mxu0 %v8045
        %8057 = vmatprep.subr.bf16.mxu0 0
        %8058 = vmatpush1.bf16.xpose.msra.mxu0 %v8042
        %8059 = vmatprep.subr.bf16.mxu0 0
        %8060 = vmatpush1.bf16.xpose.msra.mxu0 %v8039
        %8061 = vmatprep.subr.bf16.mxu0 0
        %8062 = vmatpush1.bf16.xpose.msra.mxu0 %v8036
        %8063 = vmatprep.subr.bf16.mxu0 0
        %8064 = vmatpush2.bf16.xpose.msra.mxu0 0
        %8065 = vmatprep.subr.bf16.mxu0 0
        %8066 = vmatpush2.bf16.xpose.msra.mxu0 0
        %8067 = vmatprep.subr.bf16.mxu0 0
        %8068 = vmatpush2.bf16.xpose.msra.mxu0 0
        %8069 = vmatprep.subr.bf16.mxu0 0
        %8070 = vmatpush2.bf16.xpose.msra.mxu0 0
        %8071 = vmatprep.subr.bf16.mxu0 0
        %8072 = vmatpush2.bf16.xpose.msra.mxu0 0
        %8073 = vmatprep.subr.bf16.mxu0 0
        %8074 = vmatpush2.bf16.xpose.msra.mxu0 0
        %8075 = vmatprep.subr.bf16.mxu0 0
        %8076 = vmatpush2.bf16.xpose.msra.mxu0 0
        %8077 = vmatprep.subr.bf16.mxu0 0
        %8078 = vmatpush2.bf16.xpose.msra.mxu0 0
        %8079 = vmatprep.mubr.bf16.mxu0 0
        %8080 = vmatmul.mubr.bf16.gmra.mxu0 %v8024
        %v8081 = vpop.f32.mrf.mxu0
        %v8082 = vadd.f32 0.0, %v8081
        %v8083 = vpop.f32.mrf.mxu0
        %v8084 = vpop.f32.mrf.mxu0
        %v8085 = vadd.f32 0.0, %v8084
        %v8086 = vpop.f32.mrf.mxu0
        %8087 = vmatprep.mubr.bf16.mxu0 0
        %8088 = vmatmul.mubr.bf16.gmra.mxu0 %v8027
        %v8089 = vpop.f32.mrf.mxu0
        %v8090 = vadd.f32 0.0, %v8089
        %v8091 = vpop.f32.mrf.mxu0
        %v8092 = vpop.f32.mrf.mxu0
        %v8093 = vadd.f32 0.0, %v8092
        %v8094 = vpop.f32.mrf.mxu0
        %8095 = vmatprep.mubr.bf16.mxu0 0
        %8096 = vmatmul.mubr.bf16.gmra.mxu0 %v8030
        %v8097 = vpop.f32.mrf.mxu0
        %v8098 = vadd.f32 0.0, %v8097
        %v8099 = vpop.f32.mrf.mxu0
        %v8100 = vpop.f32.mrf.mxu0
        %v8101 = vadd.f32 0.0, %v8100
        %v8102 = vpop.f32.mrf.mxu0
        %8103 = vmatprep.mubr.bf16.mxu0 0
        %8104 = vmatmul.mubr.bf16.gmra.mxu0 %v8033
        %v8105 = vpop.f32.mrf.mxu0
        %v8106 = vadd.f32 0.0, %v8105
        %v8107 = vpop.f32.mrf.mxu0
        %v8108 = vpop.f32.mrf.mxu0
        %v8109 = vadd.f32 0.0, %v8108
        %v8110 = vpop.f32.mrf.mxu0
        %8111 = vdwg.mxu0
        %v8112 = vmul.f32 %v8082, 0.125
        %v8113 = vmul.f32 %v8085, 0.125
        %v8114 = vmul.f32 %v8090, 0.125
        %v8115 = vmul.f32 %v8093, 0.125
        %v8116 = vmul.f32 %v8098, 0.125
        %v8117 = vmul.f32 %v8101, 0.125
        %v8118 = vmul.f32 %v8106, 0.125
        %v8119 = vmul.f32 %v8109, 0.125
        %v8120 = vadd.f32 %v8112, %v3310
        %v8121 = vadd.f32 %v8113, %v3311
        %v8122 = vadd.f32 %v8114, %v3312
        %v8123 = vadd.f32 %v8115, %v3313
        %v8124 = vadd.f32 %v8116, %v3314
        %v8125 = vadd.f32 %v8117, %v3315
        %v8126 = vadd.f32 %v8118, %v3316
        %v8127 = vadd.f32 %v8119, %v3317
        %v8128 = vsel %vm3382, %v8120, -inf
        %8129 = vmax.xlane.f32.xlu0 %v8128
        %v8130 = vpop.xlane.xlu0 %8129
        %v8131 = vsel %vm3382, %v8121, -inf
        %8132 = vmax.xlane.f32.xlu0 %v8131
        %v8133 = vpop.xlane.xlu0 %8132
        %v8134 = vsel %vm3382, %v8122, -inf
        %8135 = vmax.xlane.f32.xlu0 %v8134
        %v8136 = vpop.xlane.xlu0 %8135
        %v8137 = vsel %vm3382, %v8123, -inf
        %8138 = vmax.xlane.f32.xlu0 %v8137
        %v8139 = vpop.xlane.xlu0 %8138
        %v8140 = vsel %vm3382, %v8124, -inf
        %8141 = vmax.xlane.f32.xlu0 %v8140
        %v8142 = vpop.xlane.xlu0 %8141
        %v8143 = vsel %vm3382, %v8125, -inf
        %8144 = vmax.xlane.f32.xlu0 %v8143
        %v8145 = vpop.xlane.xlu0 %8144
        %v8146 = vsel %vm3382, %v8126, -inf
        %8147 = vmax.xlane.f32.xlu0 %v8146
        %v8148 = vpop.xlane.xlu0 %8147
        %v8149 = vsel %vm3382, %v8127, -inf
        %8150 = vmax.xlane.f32.xlu0 %v8149
        %v8151 = vpop.xlane.xlu0 %8150
        %v8152 = vsub.f32 %v8120, %v8130
        %v8153 = vsub.f32 %v8121, %v8133
        %v8154 = vsub.f32 %v8122, %v8136
        %v8155 = vsub.f32 %v8123, %v8139
        %v8156 = vsub.f32 %v8124, %v8142
        %v8157 = vsub.f32 %v8125, %v8145
        %v8158 = vsub.f32 %v8126, %v8148
        %v8159 = vsub.f32 %v8127, %v8151
        %v8160 = vmul.f32 %v8152, 1.442695
        %v8161 = vpow.pop %v8160
        %v8162 = vmul.f32 %v8153, 1.442695
        %v8163 = vpow.pop %v8162
        %v8164 = vmul.f32 %v8154, 1.442695
        %v8165 = vpow.pop %v8164
        %v8166 = vmul.f32 %v8155, 1.442695
        %v8167 = vpow.pop %v8166
        %v8168 = vmul.f32 %v8156, 1.442695
        %v8169 = vpow.pop %v8168
        %v8170 = vmul.f32 %v8157, 1.442695
        %v8171 = vpow.pop %v8170
        %v8172 = vmul.f32 %v8158, 1.442695
        %v8173 = vpow.pop %v8172
        %v8174 = vmul.f32 %v8159, 1.442695
        %v8175 = vpow.pop %v8174
        %v8176 = vsel %vm3382, %v8161, 0.0
        %8177 = vadd.xlane.f32.xlu0 %v8176
        %v8178 = vpop.xlane.xlu0 %8177
        %v8179 = vsel %vm3382, %v8163, 0.0
        %8180 = vadd.xlane.f32.xlu0 %v8179
        %v8181 = vpop.xlane.xlu0 %8180
        %v8182 = vsel %vm3382, %v8165, 0.0
        %8183 = vadd.xlane.f32.xlu0 %v8182
        %v8184 = vpop.xlane.xlu0 %8183
        %v8185 = vsel %vm3382, %v8167, 0.0
        %8186 = vadd.xlane.f32.xlu0 %v8185
        %v8187 = vpop.xlane.xlu0 %8186
        %v8188 = vsel %vm3382, %v8169, 0.0
        %8189 = vadd.xlane.f32.xlu0 %v8188
        %v8190 = vpop.xlane.xlu0 %8189
        %v8191 = vsel %vm3382, %v8171, 0.0
        %8192 = vadd.xlane.f32.xlu0 %v8191
        %v8193 = vpop.xlane.xlu0 %8192
        %v8194 = vsel %vm3382, %v8173, 0.0
        %8195 = vadd.xlane.f32.xlu0 %v8194
        %v8196 = vpop.xlane.xlu0 %8195
        %v8197 = vsel %vm3382, %v8175, 0.0
        %8198 = vadd.xlane.f32.xlu0 %v8197
        %v8199 = vpop.xlane.xlu0 %8198
        %v8200 = vrcp.pop %v8178
        %v8201 = vrcp.pop %v8181
        %v8202 = vrcp.pop %v8184
        %v8203 = vrcp.pop %v8187
        %v8204 = vrcp.pop %v8190
        %v8205 = vrcp.pop %v8193
        %v8206 = vrcp.pop %v8196
        %v8207 = vrcp.pop %v8199
        %v8208 = vmul.f32 %v8161, %v8200
        %v8209 = vmul.f32 %v8163, %v8201
        %v8210 = vmul.f32 %v8165, %v8202
        %v8211 = vmul.f32 %v8167, %v8203
        %v8212 = vmul.f32 %v8169, %v8204
        %v8213 = vmul.f32 %v8171, %v8205
        %v8214 = vmul.f32 %v8173, %v8206
        %v8215 = vmul.f32 %v8175, %v8207
        %v8216 = vpack.c.bf16 %v8209, %v8208
        %v8217 = vpack.c.bf16 %v8211, %v8210
        %v8218 = vpack.c.bf16 %v8213, %v8212
        %v8219 = vpack.c.bf16 %v8215, %v8214
        %v8228 = vunpack.c.l.b16 %v7959
        %v8229 = vunpack.c.l.b16 %v7960
        %v8230 = vunpack.c.l.b16 %v7961
        %v8231 = vunpack.c.l.b16 %v7962
        %v8232 = vunpack.c.l.b16 %v7963
        %v8233 = vunpack.c.l.b16 %v7964
        %v8234 = vunpack.c.l.b16 %v7965
        %v8235 = vunpack.c.l.b16 %v7966
        %v8236 = vpack.c.b16 %v8229, %v8228
        %v8237 = vpack.c.b16 %v8231, %v8230
        %v8238 = vpack.c.b16 %v8233, %v8232
        %v8239 = vpack.c.b16 %v8235, %v8234
        %8240 = vrot.lane.b32.xlu0 %v8236, 64
        %v8241 = vpop.permute.xlu0 %8240
        %8242 = vrot.lane.b32.xlu0 %v8237, 64
        %v8243 = vpop.permute.xlu0 %8242
        %8244 = vrot.lane.b32.xlu0 %v8238, 64
        %v8245 = vpop.permute.xlu0 %8244
        %8246 = vrot.lane.b32.xlu0 %v8239, 64
        %v8247 = vpop.permute.xlu0 %8246
        %v8253 = vsel %vm3382, %v8216, 0
        %v8256 = vsel %vm3382, %v8217, 0
        %v8259 = vsel %vm3382, %v8218, 0
        %v8262 = vsel %vm3382, %v8219, 0
        %8264 = vmatprep.subr.bf16.mxu0 0
        %8265 = vmatpush1.bf16.msra.mxu0 0
        %8266 = vmatprep.subr.bf16.mxu0 0
        %8267 = vmatpush1.bf16.msra.mxu0 0
        %8268 = vmatprep.subr.bf16.mxu0 0
        %8269 = vmatpush1.bf16.msra.mxu0 0
        %8270 = vmatprep.subr.bf16.mxu0 0
        %8271 = vmatpush1.bf16.msra.mxu0 0
        %8272 = vmatprep.subr.bf16.mxu0 0
        %8273 = vmatpush1.bf16.msra.mxu0 %v8247
        %8274 = vmatprep.subr.bf16.mxu0 0
        %8275 = vmatpush1.bf16.msra.mxu0 %v8245
        %8276 = vmatprep.subr.bf16.mxu0 0
        %8277 = vmatpush1.bf16.msra.mxu0 %v8243
        %8278 = vmatprep.subr.bf16.mxu0 0
        %8279 = vmatpush1.bf16.msra.mxu0 %v8241
        %8280 = vmatprep.subr.bf16.mxu0 0
        %8281 = vmatpush2.bf16.msra.mxu0 0
        %8282 = vmatprep.subr.bf16.mxu0 0
        %8283 = vmatpush2.bf16.msra.mxu0 0
        %8284 = vmatprep.subr.bf16.mxu0 0
        %8285 = vmatpush2.bf16.msra.mxu0 0
        %8286 = vmatprep.subr.bf16.mxu0 0
        %8287 = vmatpush2.bf16.msra.mxu0 0
        %8288 = vmatprep.subr.bf16.mxu0 0
        %8289 = vmatpush2.bf16.msra.mxu0 0
        %8290 = vmatprep.subr.bf16.mxu0 0
        %8291 = vmatpush2.bf16.msra.mxu0 0
        %8292 = vmatprep.subr.bf16.mxu0 0
        %8293 = vmatpush2.bf16.msra.mxu0 0
        %8294 = vmatprep.subr.bf16.mxu0 0
        %8295 = vmatpush2.bf16.msra.mxu0 0
        %8296 = vmatprep.mubr.bf16.mxu0 0
        %8297 = vmatmul.mubr.bf16.gmra.mxu0 %v8253
        %v8298 = vpop.f32.mrf.mxu0
        %v8299 = vadd.f32 0.0, %v8298
        %v8300 = vpop.f32.mrf.mxu0
        %v8301 = vpop.f32.mrf.mxu0
        %v8302 = vadd.f32 0.0, %v8301
        %v8303 = vpop.f32.mrf.mxu0
        %8304 = vmatprep.mubr.bf16.mxu0 0
        %8305 = vmatmul.mubr.bf16.gmra.mxu0 %v8256
        %v8306 = vpop.f32.mrf.mxu0
        %v8307 = vadd.f32 0.0, %v8306
        %v8308 = vpop.f32.mrf.mxu0
        %v8309 = vpop.f32.mrf.mxu0
        %v8310 = vadd.f32 0.0, %v8309
        %v8311 = vpop.f32.mrf.mxu0
        %8312 = vmatprep.mubr.bf16.mxu0 0
        %8313 = vmatmul.mubr.bf16.gmra.mxu0 %v8259
        %v8314 = vpop.f32.mrf.mxu0
        %v8315 = vadd.f32 0.0, %v8314
        %v8316 = vpop.f32.mrf.mxu0
        %v8317 = vpop.f32.mrf.mxu0
        %v8318 = vadd.f32 0.0, %v8317
        %v8319 = vpop.f32.mrf.mxu0
        %8320 = vmatprep.mubr.bf16.mxu0 0
        %8321 = vmatmul.mubr.bf16.gmra.mxu0 %v8262
        %v8322 = vpop.f32.mrf.mxu0
        %v8323 = vadd.f32 0.0, %v8322
        %v8324 = vpop.f32.mrf.mxu0
        %v8325 = vpop.f32.mrf.mxu0
        %v8326 = vadd.f32 0.0, %v8325
        %v8327 = vpop.f32.mrf.mxu0
        %8328 = vdwg.mxu0
        %v8329 = vpack.c.bf16 %v8302, %v8299
        %v8330 = vpack.c.bf16 %v8310, %v8307
        %v8331 = vpack.c.bf16 %v8318, %v8315
        %v8332 = vpack.c.bf16 %v8326, %v8323
        %v8337 = vunpack.c.l.b16 %v8329
        %v8338 = vunpack.c.h.b16 %v8329
        %v8339 = vunpack.c.l.b16 %v8330
        %v8340 = vunpack.c.h.b16 %v8330
        %v8341 = vunpack.c.l.b16 %v8331
        %v8342 = vunpack.c.h.b16 %v8331
        %v8343 = vunpack.c.l.b16 %v8332
        %v8344 = vunpack.c.h.b16 %v8332
        %v8345 = vpack.c.b16 %v8337, %v8337
        %v8346 = vpack.c.b16 %v8338, %v8338
        %v8347 = vpack.c.b16 %v8339, %v8339
        %v8348 = vpack.c.b16 %v8340, %v8340
        %v8349 = vpack.c.b16 %v8341, %v8341
        %v8350 = vpack.c.b16 %v8342, %v8342
        %v8351 = vpack.c.b16 %v8343, %v8343
        %v8352 = vpack.c.b16 %v8344, %v8344
        %8353 = vrot.lane.b32.xlu0 %v8345, 64
        %v8354 = vpop.permute.xlu0 %8353
        %8355 = vrot.lane.b32.xlu0 %v8346, 64
        %v8356 = vpop.permute.xlu0 %8355
        %8357 = vrot.lane.b32.xlu0 %v8347, 64
        %v8358 = vpop.permute.xlu0 %8357
        %8359 = vrot.lane.b32.xlu0 %v8348, 64
        %v8360 = vpop.permute.xlu0 %8359
        %8361 = vrot.lane.b32.xlu0 %v8349, 64
        %v8362 = vpop.permute.xlu0 %8361
        %8363 = vrot.lane.b32.xlu0 %v8350, 64
        %v8364 = vpop.permute.xlu0 %8363
        %8365 = vrot.lane.b32.xlu0 %v8351, 64
        %v8366 = vpop.permute.xlu0 %8365
        %8367 = vrot.lane.b32.xlu0 %v8352, 64
        %v8368 = vpop.permute.xlu0 %8367
        %8377 = vst.msk [vmem:[#allocation3 + $0x68] sm:$0xf] %vm4156, %v8354
        %8378 = vst.msk [vmem:[#allocation3 + $0x74] sm:$0xf] %vm4156, %v8356
        %8379 = vst.msk [vmem:[#allocation3 + $0x80] sm:$0xf] %vm4156, %v8358
        %8380 = vst.msk [vmem:[#allocation3 + $0x8c] sm:$0xf] %vm4156, %v8360
        %8381 = vst.msk [vmem:[#allocation3 + $0x98] sm:$0xf] %vm4156, %v8362
        %8382 = vst.msk [vmem:[#allocation3 + $0xa4] sm:$0xf] %vm4156, %v8364
        %8383 = vst.msk [vmem:[#allocation3 + $0xb0] sm:$0xf] %vm4156, %v8366
        %8384 = vst.msk [vmem:[#allocation3 + $0xbc] sm:$0xf] %vm4156, %v8368
        %v8385 = vld [vmem:[#allocation3] sm:$0xff]
        %v8386 = vld [vmem:[#allocation3 + $0x8] sm:$0xf]
        %v8387 = vld [vmem:[#allocation3 + $0xc] sm:$0xff]
        %v8388 = vld [vmem:[#allocation3 + $0x14] sm:$0xf]
        %v8389 = vld [vmem:[#allocation3 + $0x18] sm:$0xff]
        %v8390 = vld [vmem:[#allocation3 + $0x20] sm:$0xf]
        %v8391 = vld [vmem:[#allocation3 + $0x24] sm:$0xff]
        %v8392 = vld [vmem:[#allocation3 + $0x2c] sm:$0xf]
        %v8393 = vld [vmem:[#allocation3 + $0x30] sm:$0xff]
        %v8394 = vld [vmem:[#allocation3 + $0x38] sm:$0xf]
        %v8395 = vld [vmem:[#allocation3 + $0x3c] sm:$0xff]
        %v8396 = vld [vmem:[#allocation3 + $0x44] sm:$0xf]
        %v8397 = vld [vmem:[#allocation3 + $0x48] sm:$0xff]
        %v8398 = vld [vmem:[#allocation3 + $0x50] sm:$0xf]
        %v8399 = vld [vmem:[#allocation3 + $0x54] sm:$0xff]
        %v8400 = vld [vmem:[#allocation3 + $0x5c] sm:$0xf]
        %v8401 = vld [vmem:[#allocation3 + $0x60] sm:$0xff]
        %v8402 = vld [vmem:[#allocation3 + $0x68] sm:$0xf]
        %v8403 = vld [vmem:[#allocation3 + $0x6c] sm:$0xff]
        %v8404 = vld [vmem:[#allocation3 + $0x74] sm:$0xf]
        %v8405 = vld [vmem:[#allocation3 + $0x78] sm:$0xff]
        %v8406 = vld [vmem:[#allocation3 + $0x80] sm:$0xf]
        %v8407 = vld [vmem:[#allocation3 + $0x84] sm:$0xff]
        %v8408 = vld [vmem:[#allocation3 + $0x8c] sm:$0xf]
        %v8409 = vld [vmem:[#allocation3 + $0x90] sm:$0xff]
        %v8410 = vld [vmem:[#allocation3 + $0x98] sm:$0xf]
        %v8411 = vld [vmem:[#allocation3 + $0x9c] sm:$0xff]
        %v8412 = vld [vmem:[#allocation3 + $0xa4] sm:$0xf]
        %v8413 = vld [vmem:[#allocation3 + $0xa8] sm:$0xff]
        %v8414 = vld [vmem:[#allocation3 + $0xb0] sm:$0xf]
        %v8415 = vld [vmem:[#allocation3 + $0xb4] sm:$0xff]
        %v8416 = vld [vmem:[#allocation3 + $0xbc] sm:$0xf]
        %v8417 = vld [vmem:[#allocation9] sm:$0xff]
        %v8418 = vld [vmem:[#allocation9 + $0x8] sm:$0xf]
        %v8419 = vld [vmem:[#allocation9 + $0xc] sm:$0xff]
        %v8420 = vld [vmem:[#allocation9 + $0x14] sm:$0xf]
        %v8421 = vld [vmem:[#allocation9 + $0x18] sm:$0xff]
        %v8422 = vld [vmem:[#allocation9 + $0x20] sm:$0xf]
        %v8423 = vld [vmem:[#allocation9 + $0x24] sm:$0xff]
        %v8424 = vld [vmem:[#allocation9 + $0x2c] sm:$0xf]
        %v8425 = vld [vmem:[#allocation9 + $0x30] sm:$0xff]
        %v8426 = vld [vmem:[#allocation9 + $0x38] sm:$0xf]
        %v8427 = vld [vmem:[#allocation9 + $0x3c] sm:$0xff]
        %v8428 = vld [vmem:[#allocation9 + $0x44] sm:$0xf]
        %v8429 = vld [vmem:[#allocation9 + $0x48] sm:$0xff]
        %v8430 = vld [vmem:[#allocation9 + $0x50] sm:$0xf]
        %v8431 = vld [vmem:[#allocation9 + $0x54] sm:$0xff]
        %v8432 = vld [vmem:[#allocation9 + $0x5c] sm:$0xf]
        %v8433 = vld [vmem:[#allocation9 + $0x60] sm:$0xff]
        %v8434 = vld [vmem:[#allocation9 + $0x68] sm:$0xf]
        %v8435 = vld [vmem:[#allocation9 + $0x6c] sm:$0xff]
        %v8436 = vld [vmem:[#allocation9 + $0x74] sm:$0xf]
        %v8437 = vld [vmem:[#allocation9 + $0x78] sm:$0xff]
        %v8438 = vld [vmem:[#allocation9 + $0x80] sm:$0xf]
        %v8439 = vld [vmem:[#allocation9 + $0x84] sm:$0xff]
        %v8440 = vld [vmem:[#allocation9 + $0x8c] sm:$0xf]
        %v8441 = vld [vmem:[#allocation9 + $0x90] sm:$0xff]
        %v8442 = vld [vmem:[#allocation9 + $0x98] sm:$0xf]
        %v8443 = vld [vmem:[#allocation9 + $0x9c] sm:$0xff]
        %v8444 = vld [vmem:[#allocation9 + $0xa4] sm:$0xf]
        %v8445 = vld [vmem:[#allocation9 + $0xa8] sm:$0xff]
        %v8446 = vld [vmem:[#allocation9 + $0xb0] sm:$0xf]
        %v8447 = vld [vmem:[#allocation9 + $0xb4] sm:$0xff]
        %v8448 = vld [vmem:[#allocation9 + $0xbc] sm:$0xf]
        %v8449 = vld [vmem:[#allocation9 + $0xc0] sm:$0xff]
        %v8450 = vld [vmem:[#allocation9 + $0xc8] sm:$0xf]
        %v8451 = vld [vmem:[#allocation9 + $0xcc] sm:$0xff]
        %v8452 = vld [vmem:[#allocation9 + $0xd4] sm:$0xf]
        %v8453 = vld [vmem:[#allocation9 + $0xd8] sm:$0xff]
        %v8454 = vld [vmem:[#allocation9 + $0xe0] sm:$0xf]
        %v8455 = vld [vmem:[#allocation9 + $0xe4] sm:$0xff]
        %v8456 = vld [vmem:[#allocation9 + $0xec] sm:$0xf]
        %v8457 = vld [vmem:[#allocation9 + $0xf0] sm:$0xff]
        %v8458 = vld [vmem:[#allocation9 + $0xf8] sm:$0xf]
        %v8459 = vld [vmem:[#allocation9 + $0xfc] sm:$0xff]
        %v8460 = vld [vmem:[#allocation9 + $0x104] sm:$0xf]
        %v8461 = vld [vmem:[#allocation9 + $0x108] sm:$0xff]
        %v8462 = vld [vmem:[#allocation9 + $0x110] sm:$0xf]
        %v8463 = vld [vmem:[#allocation9 + $0x114] sm:$0xff]
        %v8464 = vld [vmem:[#allocation9 + $0x11c] sm:$0xf]
        %v8465 = vld [vmem:[#allocation9 + $0x120] sm:$0xff]
        %v8466 = vld [vmem:[#allocation9 + $0x128] sm:$0xf]
        %v8467 = vld [vmem:[#allocation9 + $0x12c] sm:$0xff]
        %v8468 = vld [vmem:[#allocation9 + $0x134] sm:$0xf]
        %v8469 = vld [vmem:[#allocation9 + $0x138] sm:$0xff]
        %v8470 = vld [vmem:[#allocation9 + $0x140] sm:$0xf]
        %v8471 = vld [vmem:[#allocation9 + $0x144] sm:$0xff]
        %v8472 = vld [vmem:[#allocation9 + $0x14c] sm:$0xf]
        %v8473 = vld [vmem:[#allocation9 + $0x150] sm:$0xff]
        %v8474 = vld [vmem:[#allocation9 + $0x158] sm:$0xf]
        %v8475 = vld [vmem:[#allocation9 + $0x15c] sm:$0xff]
        %v8476 = vld [vmem:[#allocation9 + $0x164] sm:$0xf]
        %v8477 = vld [vmem:[#allocation9 + $0x168] sm:$0xff]
        %v8478 = vld [vmem:[#allocation9 + $0x170] sm:$0xf]
        %v8479 = vld [vmem:[#allocation9 + $0x174] sm:$0xff]
        %v8480 = vld [vmem:[#allocation9 + $0x17c] sm:$0xf]
        %v8481 = vld [vmem:[#allocation9 + $0x180] sm:$0xff]
        %v8482 = vld [vmem:[#allocation9 + $0x188] sm:$0xf]
        %v8483 = vld [vmem:[#allocation9 + $0x18c] sm:$0xff]
        %v8484 = vld [vmem:[#allocation9 + $0x194] sm:$0xf]
        %v8485 = vld [vmem:[#allocation9 + $0x198] sm:$0xff]
        %v8486 = vld [vmem:[#allocation9 + $0x1a0] sm:$0xf]
        %v8487 = vld [vmem:[#allocation9 + $0x1a4] sm:$0xff]
        %v8488 = vld [vmem:[#allocation9 + $0x1ac] sm:$0xf]
        %v8489 = vld [vmem:[#allocation9 + $0x1b0] sm:$0xff]
        %v8490 = vld [vmem:[#allocation9 + $0x1b8] sm:$0xf]
        %v8491 = vld [vmem:[#allocation9 + $0x1bc] sm:$0xff]
        %v8492 = vld [vmem:[#allocation9 + $0x1c4] sm:$0xf]
        %v8493 = vld [vmem:[#allocation9 + $0x1c8] sm:$0xff]
        %v8494 = vld [vmem:[#allocation9 + $0x1d0] sm:$0xf]
        %v8495 = vld [vmem:[#allocation9 + $0x1d4] sm:$0xff]
        %v8496 = vld [vmem:[#allocation9 + $0x1dc] sm:$0xf]
        %v8497 = vld [vmem:[#allocation9 + $0x1e0] sm:$0xff]
        %v8498 = vld [vmem:[#allocation9 + $0x1e8] sm:$0xf]
        %v8499 = vld [vmem:[#allocation9 + $0x1ec] sm:$0xff]
        %v8500 = vld [vmem:[#allocation9 + $0x1f4] sm:$0xf]
        %v8501 = vld [vmem:[#allocation9 + $0x1f8] sm:$0xff]
        %v8502 = vld [vmem:[#allocation9 + $0x200] sm:$0xf]
        %v8503 = vld [vmem:[#allocation9 + $0x204] sm:$0xff]
        %v8504 = vld [vmem:[#allocation9 + $0x20c] sm:$0xf]
        %v8505 = vld [vmem:[#allocation9 + $0x210] sm:$0xff]
        %v8506 = vld [vmem:[#allocation9 + $0x218] sm:$0xf]
        %v8507 = vld [vmem:[#allocation9 + $0x21c] sm:$0xff]
        %v8508 = vld [vmem:[#allocation9 + $0x224] sm:$0xf]
        %v8509 = vld [vmem:[#allocation9 + $0x228] sm:$0xff]
        %v8510 = vld [vmem:[#allocation9 + $0x230] sm:$0xf]
        %v8511 = vld [vmem:[#allocation9 + $0x234] sm:$0xff]
        %v8512 = vld [vmem:[#allocation9 + $0x23c] sm:$0xf]
        %v8513 = vld [vmem:[%s3] sm:$0x7]
        %v8515 = vlaneseq
        %v8516 = vshrl.u32 %v8515, 7
        %v8517 = vsub.s32 0, %v8516
        %v8518 = vrot.slane %v8513, %v8517
        %v8519 = vlaneseq
        %v8520 = vshrl.u32 %v8519, 7
        %v8521 = vsub.s32 1, %v8520
        %v8522 = vrot.slane %v8513, %v8521
        %v8523 = vlaneseq
        %v8524 = vshrl.u32 %v8523, 7
        %v8525 = vsub.s32 2, %v8524
        %v8526 = vrot.slane %v8513, %v8525
        %v8562 = vunpack.c.l.b16 %v8385
        %v8563 = vunpack.c.h.b16 %v8385
        %v8564 = vunpack.c.l.b16 %v8386
        %v8565 = vunpack.c.l.b16 %v8387
        %v8566 = vunpack.c.h.b16 %v8387
        %v8567 = vunpack.c.l.b16 %v8388
        %v8568 = vunpack.c.l.b16 %v8389
        %v8569 = vunpack.c.h.b16 %v8389
        %v8570 = vunpack.c.l.b16 %v8390
        %v8571 = vunpack.c.l.b16 %v8391
        %v8572 = vunpack.c.h.b16 %v8391
        %v8573 = vunpack.c.l.b16 %v8392
        %v8574 = vunpack.c.l.b16 %v8393
        %v8575 = vunpack.c.h.b16 %v8393
        %v8576 = vunpack.c.l.b16 %v8394
        %v8577 = vunpack.c.l.b16 %v8395
        %v8578 = vunpack.c.h.b16 %v8395
        %v8579 = vunpack.c.l.b16 %v8396
        %v8580 = vunpack.c.l.b16 %v8397
        %v8581 = vunpack.c.h.b16 %v8397
        %v8582 = vunpack.c.l.b16 %v8398
        %v8583 = vunpack.c.l.b16 %v8399
        %v8584 = vunpack.c.h.b16 %v8399
        %v8585 = vunpack.c.l.b16 %v8400
        %v8586 = vunpack.c.l.b16 %v8401
        %v8587 = vunpack.c.h.b16 %v8401
        %v8588 = vunpack.c.l.b16 %v8402
        %v8589 = vunpack.c.l.b16 %v8403
        %v8590 = vunpack.c.h.b16 %v8403
        %v8591 = vunpack.c.l.b16 %v8404
        %v8592 = vunpack.c.l.b16 %v8405
        %v8593 = vunpack.c.h.b16 %v8405
        %v8594 = vunpack.c.l.b16 %v8406
        %v8595 = vunpack.c.l.b16 %v8407
        %v8596 = vunpack.c.h.b16 %v8407
        %v8597 = vunpack.c.l.b16 %v8408
        %v8598 = vunpack.c.l.b16 %v8409
        %v8599 = vunpack.c.h.b16 %v8409
        %v8600 = vunpack.c.l.b16 %v8410
        %v8601 = vunpack.c.l.b16 %v8411
        %v8602 = vunpack.c.h.b16 %v8411
        %v8603 = vunpack.c.l.b16 %v8412
        %v8604 = vunpack.c.l.b16 %v8413
        %v8605 = vunpack.c.h.b16 %v8413
        %v8606 = vunpack.c.l.b16 %v8414
        %v8607 = vunpack.c.l.b16 %v8415
        %v8608 = vunpack.c.h.b16 %v8415
        %v8609 = vunpack.c.l.b16 %v8416
        %v8610 = vpack.c.b16 %v8565, %v8562
        %v8611 = vpack.c.b16 %v8566, %v8563
        %v8612 = vpack.c.b16 %v8567, %v8564
        %v8613 = vpack.c.b16 %v8571, %v8568
        %v8614 = vpack.c.b16 %v8572, %v8569
        %v8615 = vpack.c.b16 %v8573, %v8570
        %v8616 = vpack.c.b16 %v8577, %v8574
        %v8617 = vpack.c.b16 %v8578, %v8575
        %v8618 = vpack.c.b16 %v8579, %v8576
        %v8619 = vpack.c.b16 %v8583, %v8580
        %v8620 = vpack.c.b16 %v8584, %v8581
        %v8621 = vpack.c.b16 %v8585, %v8582
        %v8622 = vpack.c.b16 %v8589, %v8586
        %v8623 = vpack.c.b16 %v8590, %v8587
        %v8624 = vpack.c.b16 %v8591, %v8588
        %v8625 = vpack.c.b16 %v8595, %v8592
        %v8626 = vpack.c.b16 %v8596, %v8593
        %v8627 = vpack.c.b16 %v8597, %v8594
        %v8628 = vpack.c.b16 %v8601, %v8598
        %v8629 = vpack.c.b16 %v8602, %v8599
        %v8630 = vpack.c.b16 %v8603, %v8600
        %v8631 = vpack.c.b16 %v8607, %v8604
        %v8632 = vpack.c.b16 %v8608, %v8605
        %v8633 = vpack.c.b16 %v8609, %v8606
        %v8754 = vunpack.c.l.b16 %v8417
        %v8755 = vunpack.c.h.b16 %v8417
        %v8756 = vunpack.c.l.b16 %v8418
        %v8757 = vunpack.c.l.b16 %v8419
        %v8758 = vunpack.c.h.b16 %v8419
        %v8759 = vunpack.c.l.b16 %v8420
        %v8760 = vunpack.c.l.b16 %v8421
        %v8761 = vunpack.c.h.b16 %v8421
        %v8762 = vunpack.c.l.b16 %v8422
        %v8763 = vunpack.c.l.b16 %v8423
        %v8764 = vunpack.c.h.b16 %v8423
        %v8765 = vunpack.c.l.b16 %v8424
        %v8766 = vunpack.c.l.b16 %v8425
        %v8767 = vunpack.c.h.b16 %v8425
        %v8768 = vunpack.c.l.b16 %v8426
        %v8769 = vunpack.c.l.b16 %v8427
        %v8770 = vunpack.c.h.b16 %v8427
        %v8771 = vunpack.c.l.b16 %v8428
        %v8772 = vunpack.c.l.b16 %v8429
        %v8773 = vunpack.c.h.b16 %v8429
        %v8774 = vunpack.c.l.b16 %v8430
        %v8775 = vunpack.c.l.b16 %v8431
        %v8776 = vunpack.c.h.b16 %v8431
        %v8777 = vunpack.c.l.b16 %v8432
        %v8778 = vunpack.c.l.b16 %v8433
        %v8779 = vunpack.c.h.b16 %v8433
        %v8780 = vunpack.c.l.b16 %v8434
        %v8781 = vunpack.c.l.b16 %v8435
        %v8782 = vunpack.c.h.b16 %v8435
        %v8783 = vunpack.c.l.b16 %v8436
        %v8784 = vunpack.c.l.b16 %v8437
        %v8785 = vunpack.c.h.b16 %v8437
        %v8786 = vunpack.c.l.b16 %v8438
        %v8787 = vunpack.c.l.b16 %v8439
        %v8788 = vunpack.c.h.b16 %v8439
        %v8789 = vunpack.c.l.b16 %v8440
        %v8790 = vunpack.c.l.b16 %v8441
        %v8791 = vunpack.c.h.b16 %v8441
        %v8792 = vunpack.c.l.b16 %v8442
        %v8793 = vunpack.c.l.b16 %v8443
        %v8794 = vunpack.c.h.b16 %v8443
        %v8795 = vunpack.c.l.b16 %v8444
        %v8796 = vunpack.c.l.b16 %v8445
        %v8797 = vunpack.c.h.b16 %v8445
        %v8798 = vunpack.c.l.b16 %v8446
        %v8799 = vunpack.c.l.b16 %v8447
        %v8800 = vunpack.c.h.b16 %v8447
        %v8801 = vunpack.c.l.b16 %v8448
        %v8802 = vunpack.c.l.b16 %v8449
        %v8803 = vunpack.c.h.b16 %v8449
        %v8804 = vunpack.c.l.b16 %v8450
        %v8805 = vunpack.c.l.b16 %v8451
        %v8806 = vunpack.c.h.b16 %v8451
        %v8807 = vunpack.c.l.b16 %v8452
        %v8808 = vunpack.c.l.b16 %v8453
        %v8809 = vunpack.c.h.b16 %v8453
        %v8810 = vunpack.c.l.b16 %v8454
        %v8811 = vunpack.c.l.b16 %v8455
        %v8812 = vunpack.c.h.b16 %v8455
        %v8813 = vunpack.c.l.b16 %v8456
        %v8814 = vunpack.c.l.b16 %v8457
        %v8815 = vunpack.c.h.b16 %v8457
        %v8816 = vunpack.c.l.b16 %v8458
        %v8817 = vunpack.c.l.b16 %v8459
        %v8818 = vunpack.c.h.b16 %v8459
        %v8819 = vunpack.c.l.b16 %v8460
        %v8820 = vunpack.c.l.b16 %v8461
        %v8821 = vunpack.c.h.b16 %v8461
        %v8822 = vunpack.c.l.b16 %v8462
        %v8823 = vunpack.c.l.b16 %v8463
        %v8824 = vunpack.c.h.b16 %v8463
        %v8825 = vunpack.c.l.b16 %v8464
        %v8826 = vunpack.c.l.b16 %v8465
        %v8827 = vunpack.c.h.b16 %v8465
        %v8828 = vunpack.c.l.b16 %v8466
        %v8829 = vunpack.c.l.b16 %v8467
        %v8830 = vunpack.c.h.b16 %v8467
        %v8831 = vunpack.c.l.b16 %v8468
        %v8832 = vunpack.c.l.b16 %v8469
        %v8833 = vunpack.c.h.b16 %v8469
        %v8834 = vunpack.c.l.b16 %v8470
        %v8835 = vunpack.c.l.b16 %v8471
        %v8836 = vunpack.c.h.b16 %v8471
        %v8837 = vunpack.c.l.b16 %v8472
        %v8838 = vunpack.c.l.b16 %v8473
        %v8839 = vunpack.c.h.b16 %v8473
        %v8840 = vunpack.c.l.b16 %v8474
        %v8841 = vunpack.c.l.b16 %v8475
        %v8842 = vunpack.c.h.b16 %v8475
        %v8843 = vunpack.c.l.b16 %v8476
        %v8844 = vunpack.c.l.b16 %v8477
        %v8845 = vunpack.c.h.b16 %v8477
        %v8846 = vunpack.c.l.b16 %v8478
        %v8847 = vunpack.c.l.b16 %v8479
        %v8848 = vunpack.c.h.b16 %v8479
        %v8849 = vunpack.c.l.b16 %v8480
        %v8850 = vunpack.c.l.b16 %v8481
        %v8851 = vunpack.c.h.b16 %v8481
        %v8852 = vunpack.c.l.b16 %v8482
        %v8853 = vunpack.c.l.b16 %v8483
        %v8854 = vunpack.c.h.b16 %v8483
        %v8855 = vunpack.c.l.b16 %v8484
        %v8856 = vunpack.c.l.b16 %v8485
        %v8857 = vunpack.c.h.b16 %v8485
        %v8858 = vunpack.c.l.b16 %v8486
        %v8859 = vunpack.c.l.b16 %v8487
        %v8860 = vunpack.c.h.b16 %v8487
        %v8861 = vunpack.c.l.b16 %v8488
        %v8862 = vunpack.c.l.b16 %v8489
        %v8863 = vunpack.c.h.b16 %v8489
        %v8864 = vunpack.c.l.b16 %v8490
        %v8865 = vunpack.c.l.b16 %v8491
        %v8866 = vunpack.c.h.b16 %v8491
        %v8867 = vunpack.c.l.b16 %v8492
        %v8868 = vunpack.c.l.b16 %v8493
        %v8869 = vunpack.c.h.b16 %v8493
        %v8870 = vunpack.c.l.b16 %v8494
        %v8871 = vunpack.c.l.b16 %v8495
        %v8872 = vunpack.c.h.b16 %v8495
        %v8873 = vunpack.c.l.b16 %v8496
        %v8874 = vunpack.c.l.b16 %v8497
        %v8875 = vunpack.c.h.b16 %v8497
        %v8876 = vunpack.c.l.b16 %v8498
        %v8877 = vunpack.c.l.b16 %v8499
        %v8878 = vunpack.c.h.b16 %v8499
        %v8879 = vunpack.c.l.b16 %v8500
        %v8880 = vunpack.c.l.b16 %v8501
        %v8881 = vunpack.c.h.b16 %v8501
        %v8882 = vunpack.c.l.b16 %v8502
        %v8883 = vunpack.c.l.b16 %v8503
        %v8884 = vunpack.c.h.b16 %v8503
        %v8885 = vunpack.c.l.b16 %v8504
        %v8886 = vunpack.c.l.b16 %v8505
        %v8887 = vunpack.c.h.b16 %v8505
        %v8888 = vunpack.c.l.b16 %v8506
        %v8889 = vunpack.c.l.b16 %v8507
        %v8890 = vunpack.c.h.b16 %v8507
        %v8891 = vunpack.c.l.b16 %v8508
        %v8892 = vunpack.c.l.b16 %v8509
        %v8893 = vunpack.c.h.b16 %v8509
        %v8894 = vunpack.c.l.b16 %v8510
        %v8895 = vunpack.c.l.b16 %v8511
        %v8896 = vunpack.c.h.b16 %v8511
        %v8897 = vunpack.c.l.b16 %v8512
        %v8898 = vpack.c.b16 %v8757, %v8754
        %v8899 = vpack.c.b16 %v8758, %v8755
        %v8900 = vpack.c.b16 %v8759, %v8756
        %v8901 = vpack.c.b16 %v8763, %v8760
        %v8902 = vpack.c.b16 %v8764, %v8761
        %v8903 = vpack.c.b16 %v8765, %v8762
        %v8904 = vpack.c.b16 %v8769, %v8766
        %v8905 = vpack.c.b16 %v8770, %v8767
        %v8906 = vpack.c.b16 %v8771, %v8768
        %v8907 = vpack.c.b16 %v8775, %v8772
        %v8908 = vpack.c.b16 %v8776, %v8773
        %v8909 = vpack.c.b16 %v8777, %v8774
        %v8910 = vpack.c.b16 %v8781, %v8778
        %v8911 = vpack.c.b16 %v8782, %v8779
        %v8912 = vpack.c.b16 %v8783, %v8780
        %v8913 = vpack.c.b16 %v8787, %v8784
        %v8914 = vpack.c.b16 %v8788, %v8785
        %v8915 = vpack.c.b16 %v8789, %v8786
        %v8916 = vpack.c.b16 %v8793, %v8790
        %v8917 = vpack.c.b16 %v8794, %v8791
        %v8918 = vpack.c.b16 %v8795, %v8792
        %v8919 = vpack.c.b16 %v8799, %v8796
        %v8920 = vpack.c.b16 %v8800, %v8797
        %v8921 = vpack.c.b16 %v8801, %v8798
        %v8922 = vpack.c.b16 %v8805, %v8802
        %v8923 = vpack.c.b16 %v8806, %v8803
        %v8924 = vpack.c.b16 %v8807, %v8804
        %v8925 = vpack.c.b16 %v8811, %v8808
        %v8926 = vpack.c.b16 %v8812, %v8809
        %v8927 = vpack.c.b16 %v8813, %v8810
        %v8928 = vpack.c.b16 %v8817, %v8814
        %v8929 = vpack.c.b16 %v8818, %v8815
        %v8930 = vpack.c.b16 %v8819, %v8816
        %v8931 = vpack.c.b16 %v8823, %v8820
        %v8932 = vpack.c.b16 %v8824, %v8821
        %v8933 = vpack.c.b16 %v8825, %v8822
        %v8934 = vpack.c.b16 %v8829, %v8826
        %v8935 = vpack.c.b16 %v8830, %v8827
        %v8936 = vpack.c.b16 %v8831, %v8828
        %v8937 = vpack.c.b16 %v8835, %v8832
        %v8938 = vpack.c.b16 %v8836, %v8833
        %v8939 = vpack.c.b16 %v8837, %v8834
        %v8940 = vpack.c.b16 %v8841, %v8838
        %v8941 = vpack.c.b16 %v8842, %v8839
        %v8942 = vpack.c.b16 %v8843, %v8840
        %v8943 = vpack.c.b16 %v8847, %v8844
        %v8944 = vpack.c.b16 %v8848, %v8845
        %v8945 = vpack.c.b16 %v8849, %v8846
        %v8946 = vpack.c.b16 %v8853, %v8850
        %v8947 = vpack.c.b16 %v8854, %v8851
        %v8948 = vpack.c.b16 %v8855, %v8852
        %v8949 = vpack.c.b16 %v8859, %v8856
        %v8950 = vpack.c.b16 %v8860, %v8857
        %v8951 = vpack.c.b16 %v8861, %v8858
        %v8952 = vpack.c.b16 %v8865, %v8862
        %v8953 = vpack.c.b16 %v8866, %v8863
        %v8954 = vpack.c.b16 %v8867, %v8864
        %v8955 = vpack.c.b16 %v8871, %v8868
        %v8956 = vpack.c.b16 %v8872, %v8869
        %v8957 = vpack.c.b16 %v8873, %v8870
        %v8958 = vpack.c.b16 %v8877, %v8874
        %v8959 = vpack.c.b16 %v8878, %v8875
        %v8960 = vpack.c.b16 %v8879, %v8876
        %v8961 = vpack.c.b16 %v8883, %v8880
        %v8962 = vpack.c.b16 %v8884, %v8881
        %v8963 = vpack.c.b16 %v8885, %v8882
        %v8964 = vpack.c.b16 %v8889, %v8886
        %v8965 = vpack.c.b16 %v8890, %v8887
        %v8966 = vpack.c.b16 %v8891, %v8888
        %v8967 = vpack.c.b16 %v8895, %v8892
        %v8968 = vpack.c.b16 %v8896, %v8893
        %v8969 = vpack.c.b16 %v8897, %v8894
        %9042 = vmatprep.subr.bf16.mxu0 %v8920
        %9043 = vmatpush1.bf16.msra.mxu0 %v8919
        %9044 = vmatprep.subr.bf16.mxu0 %v8917
        %9045 = vmatpush1.bf16.msra.mxu0 %v8916
        %9046 = vmatprep.subr.bf16.mxu0 %v8914
        %9047 = vmatpush1.bf16.msra.mxu0 %v8913
        %9048 = vmatprep.subr.bf16.mxu0 %v8911
        %9049 = vmatpush1.bf16.msra.mxu0 %v8910
        %9050 = vmatprep.subr.bf16.mxu0 %v8908
        %9051 = vmatpush1.bf16.msra.mxu0 %v8907
        %9052 = vmatprep.subr.bf16.mxu0 %v8905
        %9053 = vmatpush1.bf16.msra.mxu0 %v8904
        %9054 = vmatprep.subr.bf16.mxu0 %v8902
        %9055 = vmatpush1.bf16.msra.mxu0 %v8901
        %9056 = vmatprep.subr.bf16.mxu0 %v8899
        %9057 = vmatpush1.bf16.msra.mxu0 %v8898
        %9058 = vmatprep.subr.bf16.mxu0 %v8944
        %9059 = vmatpush2.bf16.msra.mxu0 %v8943
        %9060 = vmatprep.subr.bf16.mxu0 %v8941
        %9061 = vmatpush2.bf16.msra.mxu0 %v8940
        %9062 = vmatprep.subr.bf16.mxu0 %v8938
        %9063 = vmatpush2.bf16.msra.mxu0 %v8937
        %9064 = vmatprep.subr.bf16.mxu0 %v8935
        %9065 = vmatpush2.bf16.msra.mxu0 %v8934
        %9066 = vmatprep.subr.bf16.mxu0 %v8932
        %9067 = vmatpush2.bf16.msra.mxu0 %v8931
        %9068 = vmatprep.subr.bf16.mxu0 %v8929
        %9069 = vmatpush2.bf16.msra.mxu0 %v8928
        %9070 = vmatprep.subr.bf16.mxu0 %v8926
        %9071 = vmatpush2.bf16.msra.mxu0 %v8925
        %9072 = vmatprep.subr.bf16.mxu0 %v8923
        %9073 = vmatpush2.bf16.msra.mxu0 %v8922
        %9074 = vmatprep.mubr.bf16.mxu0 %v8611
        %9075 = vmatmul.mubr.bf16.gmra.mxu0 %v8610
        %v9076 = vpop.f32.mrf.mxu0
        %v9077 = vadd.f32 %v8518, %v9076
        %v9078 = vpop.f32.mrf.mxu0
        %v9079 = vadd.f32 %v8522, %v9078
        %v9080 = vpop.f32.mrf.mxu0
        %v9081 = vadd.f32 %v8518, %v9080
        %v9082 = vpop.f32.mrf.mxu0
        %v9083 = vadd.f32 %v8522, %v9082
        %9084 = vmatprep.mubr.bf16.mxu0 %v8614
        %9085 = vmatmul.mubr.bf16.gmra.mxu0 %v8613
        %v9086 = vpop.f32.mrf.mxu0
        %v9087 = vadd.f32 %v8518, %v9086
        %v9088 = vpop.f32.mrf.mxu0
        %v9089 = vadd.f32 %v8522, %v9088
        %v9090 = vpop.f32.mrf.mxu0
        %v9091 = vadd.f32 %v8518, %v9090
        %v9092 = vpop.f32.mrf.mxu0
        %v9093 = vadd.f32 %v8522, %v9092
        %9094 = vmatprep.mubr.bf16.mxu0 %v8617
        %9095 = vmatmul.mubr.bf16.gmra.mxu0 %v8616
        %v9096 = vpop.f32.mrf.mxu0
        %v9097 = vadd.f32 %v8518, %v9096
        %v9098 = vpop.f32.mrf.mxu0
        %v9099 = vadd.f32 %v8522, %v9098
        %v9100 = vpop.f32.mrf.mxu0
        %v9101 = vadd.f32 %v8518, %v9100
        %v9102 = vpop.f32.mrf.mxu0
        %v9103 = vadd.f32 %v8522, %v9102
        %9104 = vmatprep.mubr.bf16.mxu0 %v8620
        %9105 = vmatmul.mubr.bf16.gmra.mxu0 %v8619
        %v9106 = vpop.f32.mrf.mxu0
        %v9107 = vadd.f32 %v8518, %v9106
        %v9108 = vpop.f32.mrf.mxu0
        %v9109 = vadd.f32 %v8522, %v9108
        %v9110 = vpop.f32.mrf.mxu0
        %v9111 = vadd.f32 %v8518, %v9110
        %v9112 = vpop.f32.mrf.mxu0
        %v9113 = vadd.f32 %v8522, %v9112
        %9114 = vmatprep.mubr.bf16.mxu0 %v8623
        %9115 = vmatmul.mubr.bf16.gmra.mxu0 %v8622
        %v9116 = vpop.f32.mrf.mxu0
        %v9117 = vadd.f32 %v8518, %v9116
        %v9118 = vpop.f32.mrf.mxu0
        %v9119 = vadd.f32 %v8522, %v9118
        %v9120 = vpop.f32.mrf.mxu0
        %v9121 = vadd.f32 %v8518, %v9120
        %v9122 = vpop.f32.mrf.mxu0
        %v9123 = vadd.f32 %v8522, %v9122
        %9124 = vmatprep.mubr.bf16.mxu0 %v8626
        %9125 = vmatmul.mubr.bf16.gmra.mxu0 %v8625
        %v9126 = vpop.f32.mrf.mxu0
        %v9127 = vadd.f32 %v8518, %v9126
        %v9128 = vpop.f32.mrf.mxu0
        %v9129 = vadd.f32 %v8522, %v9128
        %v9130 = vpop.f32.mrf.mxu0
        %v9131 = vadd.f32 %v8518, %v9130
        %v9132 = vpop.f32.mrf.mxu0
        %v9133 = vadd.f32 %v8522, %v9132
        %9134 = vmatprep.mubr.bf16.mxu0 %v8629
        %9135 = vmatmul.mubr.bf16.gmra.mxu0 %v8628
        %v9136 = vpop.f32.mrf.mxu0
        %v9137 = vadd.f32 %v8518, %v9136
        %v9138 = vpop.f32.mrf.mxu0
        %v9139 = vadd.f32 %v8522, %v9138
        %v9140 = vpop.f32.mrf.mxu0
        %v9141 = vadd.f32 %v8518, %v9140
        %v9142 = vpop.f32.mrf.mxu0
        %v9143 = vadd.f32 %v8522, %v9142
        %9144 = vmatprep.mubr.bf16.mxu0 %v8632
        %9145 = vmatmul.mubr.bf16.gmra.mxu0 %v8631
        %v9146 = vpop.f32.mrf.mxu0
        %v9147 = vadd.f32 %v8518, %v9146
        %v9148 = vpop.f32.mrf.mxu0
        %v9149 = vadd.f32 %v8522, %v9148
        %v9150 = vpop.f32.mrf.mxu0
        %v9151 = vadd.f32 %v8518, %v9150
        %v9152 = vpop.f32.mrf.mxu0
        %v9153 = vadd.f32 %v8522, %v9152
        %9154 = vdwg.mxu0
        %9155 = vmatprep.subr.bf16.mxu0 %v8968
        %9156 = vmatpush1.bf16.msra.mxu0 %v8967
        %9157 = vmatprep.subr.bf16.mxu0 %v8965
        %9158 = vmatpush1.bf16.msra.mxu0 %v8964
        %9159 = vmatprep.subr.bf16.mxu0 %v8962
        %9160 = vmatpush1.bf16.msra.mxu0 %v8961
        %9161 = vmatprep.subr.bf16.mxu0 %v8959
        %9162 = vmatpush1.bf16.msra.mxu0 %v8958
        %9163 = vmatprep.subr.bf16.mxu0 %v8956
        %9164 = vmatpush1.bf16.msra.mxu0 %v8955
        %9165 = vmatprep.subr.bf16.mxu0 %v8953
        %9166 = vmatpush1.bf16.msra.mxu0 %v8952
        %9167 = vmatprep.subr.bf16.mxu0 %v8950
        %9168 = vmatpush1.bf16.msra.mxu0 %v8949
        %9169 = vmatprep.subr.bf16.mxu0 %v8947
        %9170 = vmatpush1.bf16.msra.mxu0 %v8946
        %9171 = vmatprep.subr.bf16.mxu0 0
        %9172 = vmatpush2.bf16.msra.mxu0 0
        %9173 = vmatprep.subr.bf16.mxu0 0
        %9174 = vmatpush2.bf16.msra.mxu0 0
        %9175 = vmatprep.subr.bf16.mxu0 0
        %9176 = vmatpush2.bf16.msra.mxu0 0
        %9177 = vmatprep.subr.bf16.mxu0 0
        %9178 = vmatpush2.bf16.msra.mxu0 0
        %9179 = vmatprep.subr.bf16.mxu0 0
        %9180 = vmatpush2.bf16.msra.mxu0 0
        %9181 = vmatprep.subr.bf16.mxu0 0
        %9182 = vmatpush2.bf16.msra.mxu0 0
        %9183 = vmatprep.subr.bf16.mxu0 0
        %9184 = vmatpush2.bf16.msra.mxu0 0
        %9185 = vmatprep.subr.bf16.mxu0 0
        %9186 = vmatpush2.bf16.msra.mxu0 0
        %9187 = vmatprep.mubr.bf16.mxu0 0
        %9188 = vmatmul.mubr.bf16.gmra.mxu0 %v8612
        %v9189 = vpop.f32.mrf.mxu0
        %v9190 = vadd.f32 %v9077, %v9189
        %v9191 = vpop.f32.mrf.mxu0
        %v9192 = vadd.f32 %v9079, %v9191
        %v9193 = vpop.f32.mrf.mxu0
        %v9194 = vadd.f32 %v9081, %v9193
        %v9195 = vpop.f32.mrf.mxu0
        %v9196 = vadd.f32 %v9083, %v9195
        %9197 = vmatprep.mubr.bf16.mxu0 0
        %9198 = vmatmul.mubr.bf16.gmra.mxu0 %v8615
        %v9199 = vpop.f32.mrf.mxu0
        %v9200 = vadd.f32 %v9087, %v9199
        %v9201 = vpop.f32.mrf.mxu0
        %v9202 = vadd.f32 %v9089, %v9201
        %v9203 = vpop.f32.mrf.mxu0
        %v9204 = vadd.f32 %v9091, %v9203
        %v9205 = vpop.f32.mrf.mxu0
        %v9206 = vadd.f32 %v9093, %v9205
        %9207 = vmatprep.mubr.bf16.mxu0 0
        %9208 = vmatmul.mubr.bf16.gmra.mxu0 %v8618
        %v9209 = vpop.f32.mrf.mxu0
        %v9210 = vadd.f32 %v9097, %v9209
        %v9211 = vpop.f32.mrf.mxu0
        %v9212 = vadd.f32 %v9099, %v9211
        %v9213 = vpop.f32.mrf.mxu0
        %v9214 = vadd.f32 %v9101, %v9213
        %v9215 = vpop.f32.mrf.mxu0
        %v9216 = vadd.f32 %v9103, %v9215
        %9217 = vmatprep.mubr.bf16.mxu0 0
        %9218 = vmatmul.mubr.bf16.gmra.mxu0 %v8621
        %v9219 = vpop.f32.mrf.mxu0
        %v9220 = vadd.f32 %v9107, %v9219
        %v9221 = vpop.f32.mrf.mxu0
        %v9222 = vadd.f32 %v9109, %v9221
        %v9223 = vpop.f32.mrf.mxu0
        %v9224 = vadd.f32 %v9111, %v9223
        %v9225 = vpop.f32.mrf.mxu0
        %v9226 = vadd.f32 %v9113, %v9225
        %9227 = vmatprep.mubr.bf16.mxu0 0
        %9228 = vmatmul.mubr.bf16.gmra.mxu0 %v8624
        %v9229 = vpop.f32.mrf.mxu0
        %v9230 = vadd.f32 %v9117, %v9229
        %v9231 = vpop.f32.mrf.mxu0
        %v9232 = vadd.f32 %v9119, %v9231
        %v9233 = vpop.f32.mrf.mxu0
        %v9234 = vadd.f32 %v9121, %v9233
        %v9235 = vpop.f32.mrf.mxu0
        %v9236 = vadd.f32 %v9123, %v9235
        %9237 = vmatprep.mubr.bf16.mxu0 0
        %9238 = vmatmul.mubr.bf16.gmra.mxu0 %v8627
        %v9239 = vpop.f32.mrf.mxu0
        %v9240 = vadd.f32 %v9127, %v9239
        %v9241 = vpop.f32.mrf.mxu0
        %v9242 = vadd.f32 %v9129, %v9241
        %v9243 = vpop.f32.mrf.mxu0
        %v9244 = vadd.f32 %v9131, %v9243
        %v9245 = vpop.f32.mrf.mxu0
        %v9246 = vadd.f32 %v9133, %v9245
        %9247 = vmatprep.mubr.bf16.mxu0 0
        %9248 = vmatmul.mubr.bf16.gmra.mxu0 %v8630
        %v9249 = vpop.f32.mrf.mxu0
        %v9250 = vadd.f32 %v9137, %v9249
        %v9251 = vpop.f32.mrf.mxu0
        %v9252 = vadd.f32 %v9139, %v9251
        %v9253 = vpop.f32.mrf.mxu0
        %v9254 = vadd.f32 %v9141, %v9253
        %v9255 = vpop.f32.mrf.mxu0
        %v9256 = vadd.f32 %v9143, %v9255
        %9257 = vmatprep.mubr.bf16.mxu0 0
        %9258 = vmatmul.mubr.bf16.gmra.mxu0 %v8633
        %v9259 = vpop.f32.mrf.mxu0
        %v9260 = vadd.f32 %v9147, %v9259
        %v9261 = vpop.f32.mrf.mxu0
        %v9262 = vadd.f32 %v9149, %v9261
        %v9263 = vpop.f32.mrf.mxu0
        %v9264 = vadd.f32 %v9151, %v9263
        %v9265 = vpop.f32.mrf.mxu0
        %v9266 = vadd.f32 %v9153, %v9265
        %9267 = vdwg.mxu0
        %9268 = vmatprep.subr.bf16.mxu0 0
        %9269 = vmatpush1.bf16.msra.mxu0 %v8921
        %9270 = vmatprep.subr.bf16.mxu0 0
        %9271 = vmatpush1.bf16.msra.mxu0 %v8918
        %9272 = vmatprep.subr.bf16.mxu0 0
        %9273 = vmatpush1.bf16.msra.mxu0 %v8915
        %9274 = vmatprep.subr.bf16.mxu0 0
        %9275 = vmatpush1.bf16.msra.mxu0 %v8912
        %9276 = vmatprep.subr.bf16.mxu0 0
        %9277 = vmatpush1.bf16.msra.mxu0 %v8909
        %9278 = vmatprep.subr.bf16.mxu0 0
        %9279 = vmatpush1.bf16.msra.mxu0 %v8906
        %9280 = vmatprep.subr.bf16.mxu0 0
        %9281 = vmatpush1.bf16.msra.mxu0 %v8903
        %9282 = vmatprep.subr.bf16.mxu0 0
        %9283 = vmatpush1.bf16.msra.mxu0 %v8900
        %9284 = vmatprep.subr.bf16.mxu0 0
        %9285 = vmatpush2.bf16.msra.mxu0 %v8945
        %9286 = vmatprep.subr.bf16.mxu0 0
        %9287 = vmatpush2.bf16.msra.mxu0 %v8942
        %9288 = vmatprep.subr.bf16.mxu0 0
        %9289 = vmatpush2.bf16.msra.mxu0 %v8939
        %9290 = vmatprep.subr.bf16.mxu0 0
        %9291 = vmatpush2.bf16.msra.mxu0 %v8936
        %9292 = vmatprep.subr.bf16.mxu0 0
        %9293 = vmatpush2.bf16.msra.mxu0 %v8933
        %9294 = vmatprep.subr.bf16.mxu0 0
        %9295 = vmatpush2.bf16.msra.mxu0 %v8930
        %9296 = vmatprep.subr.bf16.mxu0 0
        %9297 = vmatpush2.bf16.msra.mxu0 %v8927
        %9298 = vmatprep.subr.bf16.mxu0 0
        %9299 = vmatpush2.bf16.msra.mxu0 %v8924
        %9300 = vmatprep.mubr.bf16.mxu0 %v8611
        %9301 = vmatmul.mubr.bf16.gmra.mxu0 %v8610
        %v9302 = vpop.f32.mrf.mxu0
        %v9303 = vadd.f32 %v8526, %v9302
        %v9304 = vpop.f32.mrf.mxu0
        %v9305 = vpop.f32.mrf.mxu0
        %v9306 = vadd.f32 %v8526, %v9305
        %v9307 = vpop.f32.mrf.mxu0
        %9308 = vmatprep.mubr.bf16.mxu0 %v8614
        %9309 = vmatmul.mubr.bf16.gmra.mxu0 %v8613
        %v9310 = vpop.f32.mrf.mxu0
        %v9311 = vadd.f32 %v8526, %v9310
        %v9312 = vpop.f32.mrf.mxu0
        %v9313 = vpop.f32.mrf.mxu0
        %v9314 = vadd.f32 %v8526, %v9313
        %v9315 = vpop.f32.mrf.mxu0
        %9316 = vmatprep.mubr.bf16.mxu0 %v8617
        %9317 = vmatmul.mubr.bf16.gmra.mxu0 %v8616
        %v9318 = vpop.f32.mrf.mxu0
        %v9319 = vadd.f32 %v8526, %v9318
        %v9320 = vpop.f32.mrf.mxu0
        %v9321 = vpop.f32.mrf.mxu0
        %v9322 = vadd.f32 %v8526, %v9321
        %v9323 = vpop.f32.mrf.mxu0
        %9324 = vmatprep.mubr.bf16.mxu0 %v8620
        %9325 = vmatmul.mubr.bf16.gmra.mxu0 %v8619
        %v9326 = vpop.f32.mrf.mxu0
        %v9327 = vadd.f32 %v8526, %v9326
        %v9328 = vpop.f32.mrf.mxu0
        %v9329 = vpop.f32.mrf.mxu0
        %v9330 = vadd.f32 %v8526, %v9329
        %v9331 = vpop.f32.mrf.mxu0
        %9332 = vmatprep.mubr.bf16.mxu0 %v8623
        %9333 = vmatmul.mubr.bf16.gmra.mxu0 %v8622
        %v9334 = vpop.f32.mrf.mxu0
        %v9335 = vadd.f32 %v8526, %v9334
        %v9336 = vpop.f32.mrf.mxu0
        %v9337 = vpop.f32.mrf.mxu0
        %v9338 = vadd.f32 %v8526, %v9337
        %v9339 = vpop.f32.mrf.mxu0
        %9340 = vmatprep.mubr.bf16.mxu0 %v8626
        %9341 = vmatmul.mubr.bf16.gmra.mxu0 %v8625
        %v9342 = vpop.f32.mrf.mxu0
        %v9343 = vadd.f32 %v8526, %v9342
        %v9344 = vpop.f32.mrf.mxu0
        %v9345 = vpop.f32.mrf.mxu0
        %v9346 = vadd.f32 %v8526, %v9345
        %v9347 = vpop.f32.mrf.mxu0
        %9348 = vmatprep.mubr.bf16.mxu0 %v8629
        %9349 = vmatmul.mubr.bf16.gmra.mxu0 %v8628
        %v9350 = vpop.f32.mrf.mxu0
        %v9351 = vadd.f32 %v8526, %v9350
        %v9352 = vpop.f32.mrf.mxu0
        %v9353 = vpop.f32.mrf.mxu0
        %v9354 = vadd.f32 %v8526, %v9353
        %v9355 = vpop.f32.mrf.mxu0
        %9356 = vmatprep.mubr.bf16.mxu0 %v8632
        %9357 = vmatmul.mubr.bf16.gmra.mxu0 %v8631
        %v9358 = vpop.f32.mrf.mxu0
        %v9359 = vadd.f32 %v8526, %v9358
        %v9360 = vpop.f32.mrf.mxu0
        %v9361 = vpop.f32.mrf.mxu0
        %v9362 = vadd.f32 %v8526, %v9361
        %v9363 = vpop.f32.mrf.mxu0
        %9364 = vdwg.mxu0
        %9365 = vmatprep.subr.bf16.mxu0 0
        %9366 = vmatpush1.bf16.msra.mxu0 %v8969
        %9367 = vmatprep.subr.bf16.mxu0 0
        %9368 = vmatpush1.bf16.msra.mxu0 %v8966
        %9369 = vmatprep.subr.bf16.mxu0 0
        %9370 = vmatpush1.bf16.msra.mxu0 %v8963
        %9371 = vmatprep.subr.bf16.mxu0 0
        %9372 = vmatpush1.bf16.msra.mxu0 %v8960
        %9373 = vmatprep.subr.bf16.mxu0 0
        %9374 = vmatpush1.bf16.msra.mxu0 %v8957
        %9375 = vmatprep.subr.bf16.mxu0 0
        %9376 = vmatpush1.bf16.msra.mxu0 %v8954
        %9377 = vmatprep.subr.bf16.mxu0 0
        %9378 = vmatpush1.bf16.msra.mxu0 %v8951
        %9379 = vmatprep.subr.bf16.mxu0 0
        %9380 = vmatpush1.bf16.msra.mxu0 %v8948
        %9381 = vmatprep.subr.bf16.mxu0 0
        %9382 = vmatpush2.bf16.msra.mxu0 0
        %9383 = vmatprep.subr.bf16.mxu0 0
        %9384 = vmatpush2.bf16.msra.mxu0 0
        %9385 = vmatprep.subr.bf16.mxu0 0
        %9386 = vmatpush2.bf16.msra.mxu0 0
        %9387 = vmatprep.subr.bf16.mxu0 0
        %9388 = vmatpush2.bf16.msra.mxu0 0
        %9389 = vmatprep.subr.bf16.mxu0 0
        %9390 = vmatpush2.bf16.msra.mxu0 0
        %9391 = vmatprep.subr.bf16.mxu0 0
        %9392 = vmatpush2.bf16.msra.mxu0 0
        %9393 = vmatprep.subr.bf16.mxu0 0
        %9394 = vmatpush2.bf16.msra.mxu0 0
        %9395 = vmatprep.subr.bf16.mxu0 0
        %9396 = vmatpush2.bf16.msra.mxu0 0
        %9397 = vmatprep.mubr.bf16.mxu0 0
        %9398 = vmatmul.mubr.bf16.gmra.mxu0 %v8612
        %v9399 = vpop.f32.mrf.mxu0
        %v9400 = vadd.f32 %v9303, %v9399
        %v9401 = vpop.f32.mrf.mxu0
        %v9402 = vpop.f32.mrf.mxu0
        %v9403 = vadd.f32 %v9306, %v9402
        %v9404 = vpop.f32.mrf.mxu0
        %9405 = vmatprep.mubr.bf16.mxu0 0
        %9406 = vmatmul.mubr.bf16.gmra.mxu0 %v8615
        %v9407 = vpop.f32.mrf.mxu0
        %v9408 = vadd.f32 %v9311, %v9407
        %v9409 = vpop.f32.mrf.mxu0
        %v9410 = vpop.f32.mrf.mxu0
        %v9411 = vadd.f32 %v9314, %v9410
        %v9412 = vpop.f32.mrf.mxu0
        %9413 = vmatprep.mubr.bf16.mxu0 0
        %9414 = vmatmul.mubr.bf16.gmra.mxu0 %v8618
        %v9415 = vpop.f32.mrf.mxu0
        %v9416 = vadd.f32 %v9319, %v9415
        %v9417 = vpop.f32.mrf.mxu0
        %v9418 = vpop.f32.mrf.mxu0
        %v9419 = vadd.f32 %v9322, %v9418
        %v9420 = vpop.f32.mrf.mxu0
        %9421 = vmatprep.mubr.bf16.mxu0 0
        %9422 = vmatmul.mubr.bf16.gmra.mxu0 %v8621
        %v9423 = vpop.f32.mrf.mxu0
        %v9424 = vadd.f32 %v9327, %v9423
        %v9425 = vpop.f32.mrf.mxu0
        %v9426 = vpop.f32.mrf.mxu0
        %v9427 = vadd.f32 %v9330, %v9426
        %v9428 = vpop.f32.mrf.mxu0
        %9429 = vmatprep.mubr.bf16.mxu0 0
        %9430 = vmatmul.mubr.bf16.gmra.mxu0 %v8624
        %v9431 = vpop.f32.mrf.mxu0
        %v9432 = vadd.f32 %v9335, %v9431
        %v9433 = vpop.f32.mrf.mxu0
        %v9434 = vpop.f32.mrf.mxu0
        %v9435 = vadd.f32 %v9338, %v9434
        %v9436 = vpop.f32.mrf.mxu0
        %9437 = vmatprep.mubr.bf16.mxu0 0
        %9438 = vmatmul.mubr.bf16.gmra.mxu0 %v8627
        %v9439 = vpop.f32.mrf.mxu0
        %v9440 = vadd.f32 %v9343, %v9439
        %v9441 = vpop.f32.mrf.mxu0
        %v9442 = vpop.f32.mrf.mxu0
        %v9443 = vadd.f32 %v9346, %v9442
        %v9444 = vpop.f32.mrf.mxu0
        %9445 = vmatprep.mubr.bf16.mxu0 0
        %9446 = vmatmul.mubr.bf16.gmra.mxu0 %v8630
        %v9447 = vpop.f32.mrf.mxu0
        %v9448 = vadd.f32 %v9351, %v9447
        %v9449 = vpop.f32.mrf.mxu0
        %v9450 = vpop.f32.mrf.mxu0
        %v9451 = vadd.f32 %v9354, %v9450
        %v9452 = vpop.f32.mrf.mxu0
        %9453 = vmatprep.mubr.bf16.mxu0 0
        %9454 = vmatmul.mubr.bf16.gmra.mxu0 %v8633
        %v9455 = vpop.f32.mrf.mxu0
        %v9456 = vadd.f32 %v9359, %v9455
        %v9457 = vpop.f32.mrf.mxu0
        %v9458 = vpop.f32.mrf.mxu0
        %v9459 = vadd.f32 %v9362, %v9458
        %v9460 = vpop.f32.mrf.mxu0
        %9461 = vdwg.mxu0
        %9462 = vst [vmem:[%s245] sm:$0xff] %v9190
        %9463 = vst [vmem:[%s245 + $0x8] sm:$0xff] %v9192
        %9464 = vst [vmem:[%s245 + $0x10] sm:$0xff] %v9400
        %9465 = vst [vmem:[%s245 + $0x18] sm:$0xff] %v9194
        %9466 = vst [vmem:[%s245 + $0x20] sm:$0xff] %v9196
        %9467 = vst [vmem:[%s245 + $0x28] sm:$0xff] %v9403
        %9468 = vst [vmem:[%s245 + $0x30] sm:$0xff] %v9200
        %9469 = vst [vmem:[%s245 + $0x38] sm:$0xff] %v9202
        %9470 = vst [vmem:[%s245 + $0x40] sm:$0xff] %v9408
        %9471 = vst [vmem:[%s245 + $0x48] sm:$0xff] %v9204
        %9472 = vst [vmem:[%s245 + $0x50] sm:$0xff] %v9206
        %9473 = vst [vmem:[%s245 + $0x58] sm:$0xff] %v9411
        %9474 = vst [vmem:[%s245 + $0x60] sm:$0xff] %v9210
        %9475 = vst [vmem:[%s245 + $0x68] sm:$0xff] %v9212
        %9476 = vst [vmem:[%s245 + $0x70] sm:$0xff] %v9416
        %9477 = vst [vmem:[%s245 + $0x78] sm:$0xff] %v9214
        %9478 = vst [vmem:[%s245 + $0x80] sm:$0xff] %v9216
        %9479 = vst [vmem:[%s245 + $0x88] sm:$0xff] %v9419
        %9480 = vst [vmem:[%s245 + $0x90] sm:$0xff] %v9220
        %9481 = vst [vmem:[%s245 + $0x98] sm:$0xff] %v9222
        %9482 = vst [vmem:[%s245 + $0xa0] sm:$0xff] %v9424
        %9483 = vst [vmem:[%s245 + $0xa8] sm:$0xff] %v9224
        %9484 = vst [vmem:[%s245 + $0xb0] sm:$0xff] %v9226
        %9485 = vst [vmem:[%s245 + $0xb8] sm:$0xff] %v9427
        %9486 = vst [vmem:[%s245 + $0xc0] sm:$0xff] %v9230
        %9487 = vst [vmem:[%s245 + $0xc8] sm:$0xff] %v9232
        %9488 = vst [vmem:[%s245 + $0xd0] sm:$0xff] %v9432
        %9489 = vst [vmem:[%s245 + $0xd8] sm:$0xff] %v9234
        %9490 = vst [vmem:[%s245 + $0xe0] sm:$0xff] %v9236
        %9491 = vst [vmem:[%s245 + $0xe8] sm:$0xff] %v9435
        %9492 = vst [vmem:[%s245 + $0xf0] sm:$0xff] %v9240
        %9493 = vst [vmem:[%s245 + $0xf8] sm:$0xff] %v9242
        %9494 = vst [vmem:[%s245 + $0x100] sm:$0xff] %v9440
        %9495 = vst [vmem:[%s245 + $0x108] sm:$0xff] %v9244
        %9496 = vst [vmem:[%s245 + $0x110] sm:$0xff] %v9246
        %9497 = vst [vmem:[%s245 + $0x118] sm:$0xff] %v9443
        %9498 = vst [vmem:[%s245 + $0x120] sm:$0xff] %v9250
        %9499 = vst [vmem:[%s245 + $0x128] sm:$0xff] %v9252
        %9500 = vst [vmem:[%s245 + $0x130] sm:$0xff] %v9448
        %9501 = vst [vmem:[%s245 + $0x138] sm:$0xff] %v9254
        %9502 = vst [vmem:[%s245 + $0x140] sm:$0xff] %v9256
        %9503 = vst [vmem:[%s245 + $0x148] sm:$0xff] %v9451
        %9504 = vst [vmem:[%s245 + $0x150] sm:$0xff] %v9260
        %9505 = vst [vmem:[%s245 + $0x158] sm:$0xff] %v9262
        %9506 = vst [vmem:[%s245 + $0x160] sm:$0xff] %v9456
        %9507 = vst [vmem:[%s245 + $0x168] sm:$0xff] %v9264
        %9508 = vst [vmem:[%s245 + $0x170] sm:$0xff] %v9266
        %9509 = vst [vmem:[%s245 + $0x178] sm:$0xff] %v9459
        %s9510 = sand.u32 %s119, 1
        %s9511 = scalar_lea.sflag [#allocation6], %s9510
        %s9512 = sand.u32 %s119, 1
        %s9513 = smul.addr %s9512, 384
        %s9514 = scalar_lea.vmem [#allocation10], %s9513
        // Predicated region
        $region49: #{tpu_custom_call.1} parent=35 // pred_check
          %p9515 = pneg %p129
        $region50: #{tpu_custom_call.1} parent=35 // pred_check_branch
          %9517 = sbr.rel (%p9515) target = $region52
        $region51: #{tpu_custom_call.1} parent=35 // pred_region
          %s9518 = smul.u32 2, %s22
          %s9520 = ssub.s32 6144, 6144
          %9521 = vsyncadd %s9511, %s9520
          %s9522 = smul.addr %s9518, 24
          %s9523 = smul.addr %s9522, 128
          %s9524 = scalar_lea.hbm %s4, %s9523
          %s9525 = sshll.u32 %s9514, 4
          %s9526 = int_to_ptr.vmem [resolvable:$true] %s9525
          %9531 = dma.vmem_to_hbm [thread:$0]  %s9526, 6144, %s9524, %s9511, 384, 384, 24
        $region52: #{tpu_custom_call.1} parent=35 // pred_fallthru
          _
      $region36: #{tpu_custom_call.1} parent=5 // pred_fallthru
        _
      %p9532 = scmp.le.s32.totalorder 2, %s17
      // Predicated region
      $region53: #{tpu_custom_call.1} parent=5 // pred_check
        %p9533 = pneg %p9532
      $region54: #{tpu_custom_call.1} parent=5 // pred_check_branch
        %9535 = sbr.rel (%p9533) target = $region56
      $region55: #{tpu_custom_call.1} parent=5 // pred_region
        %s9536 = ssub.s32 %s17, 2
        // Predicated region
        $region57: #{tpu_custom_call.1} parent=55 // pred_check
          %p9537 = pneg %p135
        $region58: #{tpu_custom_call.1} parent=55 // pred_check_branch
          %9539 = sbr.rel (%p9537) target = $region60
        $region59: #{tpu_custom_call.1} parent=55 // pred_region
          %s9540 = sand.u32 %s120, 1
          %s9541 = scalar_lea.sflag [#allocation6], %s9540
          %s9542 = sand.u32 %s120, 1
          %s9543 = smul.addr %s9542, 384
          %s9544 = scalar_lea.vmem [#allocation10], %s9543
          %9545 = dma.done %s9541, 6144
        $region60: #{tpu_custom_call.1} parent=55 // pred_fallthru
          _
      $region56: #{tpu_custom_call.1} parent=5 // pred_fallthru
        _
    $region6: #{tpu_custom_call.1} parent=1 // loop_footer
      %s21 = sadd.s32 1, %s17
    $region7: #{tpu_custom_call.1} parent=1 // loop_footer_branch
      %16 = sbr.rel target = $region3
    $region8: #{tpu_custom_call.1} parent=1 // loop_exit
      _
    %9546 = vsyncpa [#allocation5], 1
    %s9547 = scalar_lea.sflag [#allocation5], 1
    %9548 = vsyncpa %s9547, 1
    %9549 = vsyncpa [#allocation8], 1
    %9550 = vsyncpa [#allocation6], 1
    %s9551 = scalar_lea.sflag [#allocation6], 1
    %9552 = vsyncpa %s9551, 1

</llo_original>
